<compile_context>
chip_gen: v5e
topology: v5e:2x2
jax: 0.10.0
libtpu: 0.0.40
codegen_flags: <defaults>
</compile_context>

<pallas_src>
import functools

import jax
import jax.numpy as jnp
from jax.experimental import pallas as pl
from jax.experimental.pallas import tpu as pltpu


VMEM_LIMIT_BYTES = 32 * 1024 * 1024  # fits v5e/v6e/v7x; actual usage ~6 MiB


# ----------------------------------------------------------------------------
# Kernel A: fused song_decoder
#   grid=(2,), step j computes the j-th column half of layer-2's output.
#   Layer 1 is tiny (2 x 32 x 1600 MACs) and is recomputed per step so the grid
#   stays fully "parallel" (each step self-contained -> megacore-friendly).
#   w1/x/s1/sh1 use constant block indices, so they stay VMEM-resident.
# ----------------------------------------------------------------------------
def song_decoder_kernel(x_ref, w1_ref, s1_ref, sh1_ref,
                        w2_ref, s2_ref, sh2_ref, o_ref):
    # layer 1: Linear -> folded BN affine -> ReLU
    y1 = jnp.dot(x_ref[...].astype(jnp.bfloat16), w1_ref[...],
                 preferred_element_type=jnp.float32)
    y1 = jnp.maximum(y1 * s1_ref[...] + sh1_ref[...], 0.0)
    # layer 2 (this step's column half): Linear -> folded BN affine -> ReLU
    y2 = jnp.dot(y1.astype(jnp.bfloat16), w2_ref[0],
                 preferred_element_type=jnp.float32)
    y2 = jnp.maximum(y2 * s2_ref[0] + sh2_ref[0], 0.0)
    o_ref[0] = y2


# ----------------------------------------------------------------------------
# Kernel B: fused frame_decoder (TimeDistributed MLP head)
#   grid=(n4,), step j computes the j-th column tile of the final output.
#   Layer 3 is recomputed per step (16 x 200 x 2000 MACs, negligible); w3 and
#   the (16, 200) input use constant block indices so they stay resident.
# ----------------------------------------------------------------------------
def frame_decoder_kernel(x_ref, w3_ref, s3_ref, sh3_ref, w4_ref, b4_ref, o_ref):
    y3 = jnp.dot(x_ref[...].astype(jnp.bfloat16), w3_ref[...],
                 preferred_element_type=jnp.float32)
    y3 = jnp.maximum(y3 * s3_ref[...] + sh3_ref[...], 0.0)
    y4 = jnp.dot(y3.astype(jnp.bfloat16), w4_ref[...],
                 preferred_element_type=jnp.float32)
    o_ref[...] = jax.nn.sigmoid(y4 + b4_ref[...])


# ----------------------------------------------------------------------------
# Parameter construction (deterministic, PyTorch-default-like init).
# All BN folding, bf16 casting and weight re-layout happens HERE, once.
# ----------------------------------------------------------------------------
def _linear_params(key, fan_in, fan_out):
    kw, kb = jax.random.split(key)
    bound = 1.0 / jnp.sqrt(fan_in)
    w = jax.random.uniform(kw, (fan_in, fan_out), jnp.float32, -bound, bound)
    b = jax.random.uniform(kb, (fan_out,), jnp.float32, -bound, bound)
    return w, b


def _bn_fold(bias, n, eps=1e-5):
    # Freshly initialized BatchNorm1d (eval): gamma=1, beta=0, mean=0, var=1.
    gamma = jnp.ones((n,), jnp.float32)
    beta = jnp.zeros((n,), jnp.float32)
    mean = jnp.zeros((n,), jnp.float32)
    var = jnp.ones((n,), jnp.float32)
    scale = gamma / jnp.sqrt(var + eps)
    shift = scale * (bias - mean) + beta          # BN(xW + b) = scale*(xW) + shift
    return scale, shift


def make_decoder_params(key, size, latent_size):
    t, h, w = size
    k1, k2, k3, k4 = jax.random.split(key, 4)
    p = {}

    # layer 1: Linear(latent, 1600) + BN
    w1, b1 = _linear_params(k1, latent_size, 1600)
    s1, sh1 = _bn_fold(b1, 1600)
    p["w1"] = w1.astype(jnp.bfloat16)
    p["s1"] = s1.reshape(1, -1)
    p["sh1"] = sh1.reshape(1, -1)

    # layer 2: Linear(1600, t*200) + BN, pre-split into 2 column halves
    n2_out = t * 200
    half2 = n2_out // 2
    w2, b2 = _linear_params(k2, 1600, n2_out)
    s2, sh2 = _bn_fold(b2, n2_out)
    p["w2r"] = w2.astype(jnp.bfloat16).reshape(1600, 2, half2).transpose(1, 0, 2)
    p["s2r"] = s2.reshape(1, 2, half2).transpose(1, 0, 2)    # (2, 1, half2)
    p["sh2r"] = sh2.reshape(1, 2, half2).transpose(1, 0, 2)  # (2, 1, half2)

    # layer 3: Linear(200, 2000) + BN
    w3, b3 = _linear_params(k3, 200, 2000)
    s3, sh3 = _bn_fold(b3, 2000)
    p["w3"] = w3.astype(jnp.bfloat16)
    p["s3"] = s3.reshape(1, -1)
    p["sh3"] = sh3.reshape(1, -1)

    # layer 4: Linear(2000, h*w), no BN
    w4, b4 = _linear_params(k4, 2000, h * w)
    p["w4"] = w4.astype(jnp.bfloat16)
    p["b4"] = b4.reshape(1, -1)
    return p


# ----------------------------------------------------------------------------
# Decoder forward: two fused pallas_calls
# ----------------------------------------------------------------------------
def decoder_forward(x, params, size):
    t, h, w = size
    B, L = x.shape

    # ---- song_decoder (layers 1 + 2) ----
    n2, K2, half2 = params["w2r"].shape
    yA = pl.pallas_call(
        song_decoder_kernel,
        out_shape=jax.ShapeDtypeStruct((n2, B, half2), jnp.float32),
        grid_spec=pltpu.PrefetchScalarGridSpec(
            num_scalar_prefetch=0,
            grid=(n2,),
            in_specs=[
                pl.BlockSpec((B, L), lambda j: (0, 0)),                 # x (resident)
                pl.BlockSpec(params["w1"].shape, lambda j: (0, 0)),     # w1 (resident)
                pl.BlockSpec(params["s1"].shape, lambda j: (0, 0)),     # s1
                pl.BlockSpec(params["sh1"].shape, lambda j: (0, 0)),    # sh1
                pl.BlockSpec((1, K2, half2), lambda j: (j, 0, 0)),      # w2 column half
                pl.BlockSpec((1, 1, half2), lambda j: (j, 0, 0)),       # s2 half
                pl.BlockSpec((1, 1, half2), lambda j: (j, 0, 0)),       # sh2 half
            ],
            out_specs=pl.BlockSpec((1, B, half2), lambda j: (j, 0, 0)),
        ),
        compiler_params=pltpu.CompilerParams(
            dimension_semantics=("parallel",),
            vmem_limit_bytes=VMEM_LIMIT_BYTES,
        ),
    )(x, params["w1"], params["s1"], params["sh1"],
      params["w2r"], params["s2r"], params["sh2r"])

    # UnFlatten((t, 200)) + TimeDistributed flatten: tiny (~13 KB) lane-crossing
    # reshape done in XLA between the two fused calls.
    x3 = yA.transpose(1, 0, 2).reshape(B, t * 200).reshape(B * t, 200)

    # ---- frame_decoder (layers 3 + 4) ----
    HW = h * w
    n4 = 2 if HW % 256 == 0 else 1      # >=2 parallel steps when tiles stay 128-aligned
    tn4 = HW // n4
    y = pl.pallas_call(
        frame_decoder_kernel,
        out_shape=jax.ShapeDtypeStruct((B * t, HW), jnp.float32),
        grid_spec=pltpu.PrefetchScalarGridSpec(
            num_scalar_prefetch=0,
            grid=(n4,),
            in_specs=[
                pl.BlockSpec((B * t, 200), lambda j: (0, 0)),           # x3 (resident)
                pl.BlockSpec(params["w3"].shape, lambda j: (0, 0)),     # w3 (resident)
                pl.BlockSpec(params["s3"].shape, lambda j: (0, 0)),     # s3
                pl.BlockSpec(params["sh3"].shape, lambda j: (0, 0)),    # sh3
                pl.BlockSpec((2000, tn4), lambda j: (0, j)),            # w4 column tile
                pl.BlockSpec((1, tn4), lambda j: (0, j)),               # b4 tile
            ],
            out_specs=pl.BlockSpec((B * t, tn4), lambda j: (0, j)),
        ),
        compiler_params=pltpu.CompilerParams(
            dimension_semantics=("parallel",),
            vmem_limit_bytes=VMEM_LIMIT_BYTES,
        ),
    )(x3, params["w3"], params["s3"], params["sh3"], params["w4"], params["b4"])

    # UnFlatten((t, h, w))
    return y.reshape(B, t, h, w)


# ----------------------------------------------------------------------------
# Pure-JAX reference with identical numerics (bf16 weights, f32 accumulation)
# ----------------------------------------------------------------------------
def decoder_reference(x, params, size):
    t, h, w = size
    B = x.shape[0]

    def dot_bf16(a, wgt):
        return jnp.dot(a.astype(jnp.bfloat16), wgt,
                       preferred_element_type=jnp.float32)

    y1 = jnp.maximum(dot_bf16(x, params["w1"]) * params["s1"] + params["sh1"], 0.0)

    # reassemble w2 / s2 / sh2 from the pre-split (2, K, half) layout
    w2 = params["w2r"].transpose(1, 0, 2).reshape(params["w2r"].shape[1], -1)
    s2 = params["s2r"].transpose(1, 0, 2).reshape(1, -1)
    sh2 = params["sh2r"].transpose(1, 0, 2).reshape(1, -1)
    y2 = jnp.maximum(dot_bf16(y1, w2) * s2 + sh2, 0.0)

    y = y2.reshape(B * t, 200)
    y3 = jnp.maximum(dot_bf16(y, params["w3"]) * params["s3"] + params["sh3"], 0.0)
    y4 = jax.nn.sigmoid(dot_bf16(y3, params["w4"]) + params["b4"])
    return y4.reshape(B, t, h, w)


if __name__ == "__main__":
    # Small, module-consistent shapes
    size = (8, 16, 16)          # (t, h, w)
    latent_size = 32
    batch = 2

    key = jax.random.PRNGKey(0)
    k_params, k_x = jax.random.split(key)
    params = make_decoder_params(k_params, size, latent_size)
    x = jax.random.normal(k_x, (batch, latent_size), jnp.float32)

    fwd = jax.jit(functools.partial(decoder_forward, size=size))
    out = jax.block_until_ready(fwd(x, params))

    ref = jax.block_until_ready(decoder_reference(x, params, size))
    assert out.shape == (batch, size[0], size[1], size[2])
    assert jnp.allclose(out, ref, atol=1e-4, rtol=1e-4), "Pallas output mismatch vs reference"

    print("KERNEL_OK")
</pallas_src>

<mosaic_0001>
module attributes {stable_mosaic.version = 11 : i64} {
  func.func @frame_decoder_kernel(%arg0: i32, %arg1: memref<16x200xf32, #tpu.memory_space<vmem>>, %arg2: memref<200x2000xbf16, #tpu.memory_space<vmem>>, %arg3: memref<1x2000xf32, #tpu.memory_space<vmem>>, %arg4: memref<1x2000xf32, #tpu.memory_space<vmem>>, %arg5: memref<2000x128xbf16, #tpu.memory_space<vmem>>, %arg6: memref<1x128xf32, #tpu.memory_space<vmem>>, %arg7: memref<16x128xf32, #tpu.memory_space<vmem>>) attributes {dimension_semantics = [#tpu.dimension_semantics<parallel>], iteration_bounds = array<i64: 2>, scalar_prefetch = 0 : i64, scratch_operands = 0 : i64, tpu.core_type = #tpu.core_type<tc>, window_params = [{pipeline_mode = #tpu.pipeline_mode<synchronous>, transform_indices = @transform_0, window_bounds = array<i64: 16, 200>}, {pipeline_mode = #tpu.pipeline_mode<synchronous>, transform_indices = @transform_1, window_bounds = array<i64: 200, 2000>}, {pipeline_mode = #tpu.pipeline_mode<synchronous>, transform_indices = @transform_2, window_bounds = array<i64: 1, 2000>}, {pipeline_mode = #tpu.pipeline_mode<synchronous>, transform_indices = @transform_3, window_bounds = array<i64: 1, 2000>}, {transform_indices = @transform_4, window_bounds = array<i64: 2000, 128>}, {transform_indices = @transform_5, window_bounds = array<i64: 1, 128>}, {transform_indices = @transform_6, window_bounds = array<i64: 16, 128>}]} {
    %c0 = arith.constant 0 : index
    %c0_0 = arith.constant 0 : index
    %0 = vector.load %arg1[%c0, %c0_0] : memref<16x200xf32, #tpu.memory_space<vmem>>, vector<16x200xf32>
    %1 = arith.truncf %0 : vector<16x200xf32> to vector<16x200xbf16>
    %c0_1 = arith.constant 0 : index
    %c0_2 = arith.constant 0 : index
    %2 = vector.load %arg2[%c0_1, %c0_2] : memref<200x2000xbf16, #tpu.memory_space<vmem>>, vector<200x2000xbf16>
    %cst = arith.constant dense<0.000000e+00> : vector<16x2000xf32>
    %3 = tpu.matmul %1, %2, %cst {dimension_numbers = #tpu.dot_dimension_numbers<[1], [0], [0], [1], [0, 0, 1, 1], [], []>} : vector<16x200xbf16>, vector<200x2000xbf16>, vector<16x2000xf32> -> vector<16x2000xf32>
    %c0_3 = arith.constant 0 : index
    %c0_4 = arith.constant 0 : index
    %4 = vector.load %arg3[%c0_3, %c0_4] : memref<1x2000xf32, #tpu.memory_space<vmem>>, vector<1x2000xf32>
    %5 = vector.broadcast %4 : vector<1x2000xf32> to vector<16x2000xf32>
    %6 = arith.mulf %3, %5 : vector<16x2000xf32>
    %c0_5 = arith.constant 0 : index
    %c0_6 = arith.constant 0 : index
    %7 = vector.load %arg4[%c0_5, %c0_6] : memref<1x2000xf32, #tpu.memory_space<vmem>>, vector<1x2000xf32>
    %8 = vector.broadcast %7 : vector<1x2000xf32> to vector<16x2000xf32>
    %9 = arith.addf %6, %8 : vector<16x2000xf32>
    %cst_7 = arith.constant 0.000000e+00 : f32
    %10 = vector.broadcast %cst_7 : f32 to vector<16x2000xf32>
    %11 = arith.maximumf %9, %10 : vector<16x2000xf32>
    %12 = arith.truncf %11 : vector<16x2000xf32> to vector<16x2000xbf16>
    %c0_8 = arith.constant 0 : index
    %c0_9 = arith.constant 0 : index
    %13 = vector.load %arg5[%c0_8, %c0_9] : memref<2000x128xbf16, #tpu.memory_space<vmem>>, vector<2000x128xbf16>
    %cst_10 = arith.constant dense<0.000000e+00> : vector<16x128xf32>
    %14 = tpu.matmul %12, %13, %cst_10 {dimension_numbers = #tpu.dot_dimension_numbers<[1], [0], [0], [1], [0, 0, 1, 1], [], []>} : vector<16x2000xbf16>, vector<2000x128xbf16>, vector<16x128xf32> -> vector<16x128xf32>
    %c0_11 = arith.constant 0 : index
    %c0_12 = arith.constant 0 : index
    %15 = vector.load %arg6[%c0_11, %c0_12] : memref<1x128xf32, #tpu.memory_space<vmem>>, vector<1x128xf32>
    %16 = vector.broadcast %15 : vector<1x128xf32> to vector<16x128xf32>
    %17 = arith.addf %14, %16 : vector<16x128xf32>
    %18 = arith.negf %17 : vector<16x128xf32>
    %19 = math.exp %18 : vector<16x128xf32>
    %cst_13 = arith.constant 1.000000e+00 : f32
    %20 = vector.broadcast %cst_13 : f32 to vector<16x128xf32>
    %21 = arith.addf %20, %19 : vector<16x128xf32>
    %22 = arith.divf %20, %21 : vector<16x128xf32>
    %c0_14 = arith.constant 0 : index
    %c0_15 = arith.constant 0 : index
    %23 = vector.load %arg7[%c0_14, %c0_15] : memref<16x128xf32, #tpu.memory_space<vmem>>, vector<16x128xf32>
    tpu.vector_store %arg7[%c0_14, %c0_15], %22 {strides = array<i32>} : memref<16x128xf32, #tpu.memory_space<vmem>>, vector<16x128xf32>,
    return
  }
  func.func @transform_0(%arg0: i32) -> (i32, i32) {
    %c0_i32 = arith.constant 0 : i32
    %c0_i32_0 = arith.constant 0 : i32
    %c0_i32_1 = arith.constant 0 : i32
    return %c0_i32, %c0_i32_0 : i32, i32
  }
  func.func @transform_1(%arg0: i32) -> (i32, i32) {
    %c0_i32 = arith.constant 0 : i32
    %c0_i32_0 = arith.constant 0 : i32
    %c0_i32_1 = arith.constant 0 : i32
    return %c0_i32, %c0_i32_0 : i32, i32
  }
  func.func @transform_2(%arg0: i32) -> (i32, i32) {
    %c0_i32 = arith.constant 0 : i32
    %c0_i32_0 = arith.constant 0 : i32
    %c0_i32_1 = arith.constant 0 : i32
    return %c0_i32, %c0_i32_0 : i32, i32
  }
  func.func @transform_3(%arg0: i32) -> (i32, i32) {
    %c0_i32 = arith.constant 0 : i32
    %c0_i32_0 = arith.constant 0 : i32
    %c0_i32_1 = arith.constant 0 : i32
    return %c0_i32, %c0_i32_0 : i32, i32
  }
  func.func @transform_4(%arg0: i32) -> (i32, i32) {
    %c0_i32 = arith.constant 0 : i32
    %c0_i32_0 = arith.constant 0 : i32
    return %c0_i32, %arg0 : i32, i32
  }
  func.func @transform_5(%arg0: i32) -> (i32, i32) {
    %c0_i32 = arith.constant 0 : i32
    %c0_i32_0 = arith.constant 0 : i32
    return %c0_i32, %arg0 : i32, i32
  }
  func.func @transform_6(%arg0: i32) -> (i32, i32) {
    %c0_i32 = arith.constant 0 : i32
    %c0_i32_0 = arith.constant 0 : i32
    return %c0_i32, %arg0 : i32, i32
  }
}

module attributes {stable_mosaic.version = 11 : i64} {
  func.func @song_decoder_kernel(%arg0: i32, %arg1: memref<2x32xf32, #tpu.memory_space<vmem>>, %arg2: memref<32x1600xbf16, #tpu.memory_space<vmem>>, %arg3: memref<1x1600xf32, #tpu.memory_space<vmem>>, %arg4: memref<1x1600xf32, #tpu.memory_space<vmem>>, %arg5: memref<1x1600x800xbf16, #tpu.memory_space<vmem>>, %arg6: memref<1x1x800xf32, #tpu.memory_space<vmem>>, %arg7: memref<1x1x800xf32, #tpu.memory_space<vmem>>, %arg8: memref<1x2x800xf32, #tpu.memory_space<vmem>>) attributes {dimension_semantics = [#tpu.dimension_semantics<parallel>], iteration_bounds = array<i64: 2>, scalar_prefetch = 0 : i64, scratch_operands = 0 : i64, tpu.core_type = #tpu.core_type<tc>, window_params = [{pipeline_mode = #tpu.pipeline_mode<synchronous>, transform_indices = @transform_0, window_bounds = array<i64: 2, 32>}, {pipeline_mode = #tpu.pipeline_mode<synchronous>, transform_indices = @transform_1, window_bounds = array<i64: 32, 1600>}, {pipeline_mode = #tpu.pipeline_mode<synchronous>, transform_indices = @transform_2, window_bounds = array<i64: 1, 1600>}, {pipeline_mode = #tpu.pipeline_mode<synchronous>, transform_indices = @transform_3, window_bounds = array<i64: 1, 1600>}, {transform_indices = @transform_4, window_bounds = array<i64: 1, 1600, 800>}, {transform_indices = @transform_5, window_bounds = array<i64: 1, 1, 800>}, {transform_indices = @transform_6, window_bounds = array<i64: 1, 1, 800>}, {transform_indices = @transform_7, window_bounds = array<i64: 1, 2, 800>}]} {
    %c0 = arith.constant 0 : index
    %c0_0 = arith.constant 0 : index
    %0 = vector.load %arg1[%c0, %c0_0] : memref<2x32xf32, #tpu.memory_space<vmem>>, vector<2x32xf32>
    %1 = arith.truncf %0 : vector<2x32xf32> to vector<2x32xbf16>
    %c0_1 = arith.constant 0 : index
    %c0_2 = arith.constant 0 : index
    %2 = vector.load %arg2[%c0_1, %c0_2] : memref<32x1600xbf16, #tpu.memory_space<vmem>>, vector<32x1600xbf16>
    %cst = arith.constant dense<0.000000e+00> : vector<2x1600xf32>
    %3 = tpu.matmul %1, %2, %cst {dimension_numbers = #tpu.dot_dimension_numbers<[1], [0], [0], [1], [0, 0, 1, 1], [], []>} : vector<2x32xbf16>, vector<32x1600xbf16>, vector<2x1600xf32> -> vector<2x1600xf32>
    %c0_3 = arith.constant 0 : index
    %c0_4 = arith.constant 0 : index
    %4 = vector.load %arg3[%c0_3, %c0_4] : memref<1x1600xf32, #tpu.memory_space<vmem>>, vector<1x1600xf32>
    %5 = vector.broadcast %4 : vector<1x1600xf32> to vector<2x1600xf32>
    %6 = arith.mulf %3, %5 : vector<2x1600xf32>
    %c0_5 = arith.constant 0 : index
    %c0_6 = arith.constant 0 : index
    %7 = vector.load %arg4[%c0_5, %c0_6] : memref<1x1600xf32, #tpu.memory_space<vmem>>, vector<1x1600xf32>
    %8 = vector.broadcast %7 : vector<1x1600xf32> to vector<2x1600xf32>
    %9 = arith.addf %6, %8 : vector<2x1600xf32>
    %cst_7 = arith.constant 0.000000e+00 : f32
    %10 = vector.broadcast %cst_7 : f32 to vector<2x1600xf32>
    %11 = arith.maximumf %9, %10 : vector<2x1600xf32>
    %12 = arith.truncf %11 : vector<2x1600xf32> to vector<2x1600xbf16>
    %c0_8 = arith.constant 0 : index
    %c0_9 = arith.constant 0 : index
    %c0_10 = arith.constant 0 : index
    %13 = vector.load %arg5[%c0_8, %c0_9, %c0_10] : memref<1x1600x800xbf16, #tpu.memory_space<vmem>>, vector<1x1600x800xbf16>
    %14 = vector.shape_cast %13 : vector<1x1600x800xbf16> to vector<1600x800xbf16>
    %cst_11 = arith.constant dense<0.000000e+00> : vector<2x800xf32>
    %15 = tpu.matmul %12, %14, %cst_11 {dimension_numbers = #tpu.dot_dimension_numbers<[1], [0], [0], [1], [0, 0, 1, 1], [], []>} : vector<2x1600xbf16>, vector<1600x800xbf16>, vector<2x800xf32> -> vector<2x800xf32>
    %c0_12 = arith.constant 0 : index
    %c0_13 = arith.constant 0 : index
    %c0_14 = arith.constant 0 : index
    %16 = vector.load %arg6[%c0_12, %c0_13, %c0_14] : memref<1x1x800xf32, #tpu.memory_space<vmem>>, vector<1x1x800xf32>
    %17 = vector.shape_cast %16 : vector<1x1x800xf32> to vector<1x800xf32>
    %18 = vector.broadcast %17 : vector<1x800xf32> to vector<2x800xf32>
    %19 = arith.mulf %15, %18 : vector<2x800xf32>
    %c0_15 = arith.constant 0 : index
    %c0_16 = arith.constant 0 : index
    %c0_17 = arith.constant 0 : index
    %20 = vector.load %arg7[%c0_15, %c0_16, %c0_17] : memref<1x1x800xf32, #tpu.memory_space<vmem>>, vector<1x1x800xf32>
    %21 = vector.shape_cast %20 : vector<1x1x800xf32> to vector<1x800xf32>
    %22 = vector.broadcast %21 : vector<1x800xf32> to vector<2x800xf32>
    %23 = arith.addf %19, %22 : vector<2x800xf32>
    %cst_18 = arith.constant 0.000000e+00 : f32
    %24 = vector.broadcast %cst_18 : f32 to vector<2x800xf32>
    %25 = arith.maximumf %23, %24 : vector<2x800xf32>
    %c0_19 = arith.constant 0 : index
    %c0_20 = arith.constant 0 : index
    %c0_21 = arith.constant 0 : index
    %26 = vector.load %arg8[%c0_19, %c0_20, %c0_21] : memref<1x2x800xf32, #tpu.memory_space<vmem>>, vector<1x2x800xf32>
    %27 = vector.shape_cast %26 : vector<1x2x800xf32> to vector<2x800xf32>
    %28 = vector.shape_cast %25 : vector<2x800xf32> to vector<1x2x800xf32>
    tpu.vector_store %arg8[%c0_19, %c0_20, %c0_21], %28 {strides = array<i32>} : memref<1x2x800xf32, #tpu.memory_space<vmem>>, vector<1x2x800xf32>,
    return
  }
  func.func @transform_0(%arg0: i32) -> (i32, i32) {
    %c0_i32 = arith.constant 0 : i32
    %c0_i32_0 = arith.constant 0 : i32
    %c0_i32_1 = arith.constant 0 : i32
    return %c0_i32, %c0_i32_0 : i32, i32
  }
  func.func @transform_1(%arg0: i32) -> (i32, i32) {
    %c0_i32 = arith.constant 0 : i32
    %c0_i32_0 = arith.constant 0 : i32
    %c0_i32_1 = arith.constant 0 : i32
    return %c0_i32, %c0_i32_0 : i32, i32
  }
  func.func @transform_2(%arg0: i32) -> (i32, i32) {
    %c0_i32 = arith.constant 0 : i32
    %c0_i32_0 = arith.constant 0 : i32
    %c0_i32_1 = arith.constant 0 : i32
    return %c0_i32, %c0_i32_0 : i32, i32
  }
  func.func @transform_3(%arg0: i32) -> (i32, i32) {
    %c0_i32 = arith.constant 0 : i32
    %c0_i32_0 = arith.constant 0 : i32
    %c0_i32_1 = arith.constant 0 : i32
    return %c0_i32, %c0_i32_0 : i32, i32
  }
  func.func @transform_4(%arg0: i32) -> (i32, i32, i32) {
    %c0_i32 = arith.constant 0 : i32
    %c0_i32_0 = arith.constant 0 : i32
    %c0_i32_1 = arith.constant 0 : i32
    return %arg0, %c0_i32, %c0_i32_0 : i32, i32, i32
  }
  func.func @transform_5(%arg0: i32) -> (i32, i32, i32) {
    %c0_i32 = arith.constant 0 : i32
    %c0_i32_0 = arith.constant 0 : i32
    %c0_i32_1 = arith.constant 0 : i32
    return %arg0, %c0_i32, %c0_i32_0 : i32, i32, i32
  }
  func.func @transform_6(%arg0: i32) -> (i32, i32, i32) {
    %c0_i32 = arith.constant 0 : i32
    %c0_i32_0 = arith.constant 0 : i32
    %c0_i32_1 = arith.constant 0 : i32
    return %arg0, %c0_i32, %c0_i32_0 : i32, i32, i32
  }
  func.func @transform_7(%arg0: i32) -> (i32, i32, i32) {
    %c0_i32 = arith.constant 0 : i32
    %c0_i32_0 = arith.constant 0 : i32
    %c0_i32_1 = arith.constant 0 : i32
    return %arg0, %c0_i32, %c0_i32_0 : i32, i32, i32
  }
}

</mosaic_0001>

<llo_original>
// kernel: decoder_forward.3
$region0: #{decoder_forward.3}
  #allocation0 [shape = 'u32[]', space=smem, size = 0x4, offset = 0x4, fixed_abs, tag = 'smem constant byte address 0x4 - core index']
  #allocation1 [shape = 'u32[72,128]{1,0:T(1,128)}', space=vmem, size = 0x9000, scoped, tag = 'internal scratch']
  %s0 = inlined_call_operand.vmem [shape: f32[16,200], index: 0, kind: input, shape index: {}]
  %s1 = inlined_call_operand.vmem [shape: bf16[200,2000], index: 1, kind: input, shape index: {}]
  %s2 = inlined_call_operand.vmem [shape: f32[1,2000], index: 2, kind: input, shape index: {}]
  %s3 = inlined_call_operand.vmem [shape: f32[1,2000], index: 3, kind: input, shape index: {}]
  %s4 = inlined_call_operand.vmem [shape: bf16[2000,256], index: 4, kind: input, shape index: {}]
  %s5 = inlined_call_operand.vmem [shape: f32[1,256], index: 5, kind: input, shape index: {}]
  %s6 = inlined_call_operand.vmem [shape: f32[16,256], index: 6, kind: output, shape index: {}]
  %s7 = sld [smem:[#allocation0]]
  $region132: #{decoder_forward.3} parent=0
    _
  %s9 = ssub.s32 1, %s7
  %s10 = scalar_select 0, %s9, %s7
  $region1: #{decoder_forward.3} parent=0
    #allocation2 [shape = 'u8[1024000]{0}', space=vmem, size = 0xfa000, scoped, tag = 'input window, operand 4']
    #allocation3 [shape = 'u8[16384]{0}', space=vmem, size = 0x4000, scoped, tag = 'output window, operand 0']
    loop: start=0, step=1, limit=4
    $region2: #{decoder_forward.3} parent=1 // loop_pre_header
      _
    $region3: #{decoder_forward.3} parent=1 // loop_header
      %s12 = sphi 0, %s16
      %p13 = scmp.ge.s32.totalorder %s12, 4
      %s20 = sphi 0, %s20
      %s22 = sphi 0, %s20
      %s23 = sphi 0, %s22
      %s37 = sphi 0, %s23
      %s41 = sphi 0, %s41
      %s43 = sphi 0, %s41
      %s44 = sphi 0, %s43
      %s58 = sphi 0, %s44
      %s62 = sphi 0, %s62
      %s64 = sphi 0, %s62
      %s65 = sphi 0, %s64
      %s79 = sphi 0, %s65
      %s83 = sphi 0, %s83
      %s85 = sphi 0, %s83
      %s86 = sphi 0, %s85
      %s100 = sphi 0, %s86
      %s106 = sphi 0, %s108
      %s109 = sphi 0, %s106
      %s110 = sphi 0, %s109
      %s126 = sphi 0, %s110
      %s132 = sphi 0, %s134
      %s135 = sphi 0, %s132
      %s136 = sphi 0, %s135
      %s152 = sphi 0, %s136
      %s158 = sphi 0, %s160
      %s161 = sphi 0, %s158
      %s162 = sphi 0, %s161
      %s178 = sphi 0, %s162
    $region4: #{decoder_forward.3} parent=1 // loop_header_branch
      %15 = sbr.rel (%p13) target = $region8
    $region5: #{decoder_forward.3} parent=1 // loop_body
      %s17 = ssub.s32 %s12, 1
      %s18 = ssub.s32 %s12, 2
      %s19 = sadd.s32 %s12, 1
      %s21 = sadd.s32 %s20, 1
      %p24 = scmp.eq.s32.totalorder %s12, 1
      %p25 = scmp.ne.s32.totalorder %s20, %s22
      %p26 = scmp.eq.s32.totalorder %s12, 0
      %p27 = por %p25, %p26
      %p28 = scmp.ne.s32.totalorder %s20, %s22
      %p29 = scmp.eq.s32.totalorder %s17, 1
      %p30 = por %p28, %p29
      %p31 = scmp.ne.s32.totalorder %s22, %s23
      %p32 = scmp.eq.s32.totalorder %s17, 0
      %p33 = por %p31, %p32
      %p34 = scmp.ne.s32.totalorder %s22, %s23
      %p35 = scmp.eq.s32.totalorder %s18, 1
      %p36 = por %p34, %p35
      %p38 = scmp.ne.s32.totalorder %s23, %s37
      %p39 = scmp.eq.s32.totalorder %s18, 0
      %p40 = por %p38, %p39
      %s42 = sadd.s32 %s41, 1
      %p45 = scmp.eq.s32.totalorder %s12, 1
      %p46 = scmp.ne.s32.totalorder %s41, %s43
      %p47 = scmp.eq.s32.totalorder %s12, 0
      %p48 = por %p46, %p47
      %p49 = scmp.ne.s32.totalorder %s41, %s43
      %p50 = scmp.eq.s32.totalorder %s17, 1
      %p51 = por %p49, %p50
      %p52 = scmp.ne.s32.totalorder %s43, %s44
      %p53 = scmp.eq.s32.totalorder %s17, 0
      %p54 = por %p52, %p53
      %p55 = scmp.ne.s32.totalorder %s43, %s44
      %p56 = scmp.eq.s32.totalorder %s18, 1
      %p57 = por %p55, %p56
      %p59 = scmp.ne.s32.totalorder %s44, %s58
      %p60 = scmp.eq.s32.totalorder %s18, 0
      %p61 = por %p59, %p60
      %s63 = sadd.s32 %s62, 1
      %p66 = scmp.eq.s32.totalorder %s12, 1
      %p67 = scmp.ne.s32.totalorder %s62, %s64
      %p68 = scmp.eq.s32.totalorder %s12, 0
      %p69 = por %p67, %p68
      %p70 = scmp.ne.s32.totalorder %s62, %s64
      %p71 = scmp.eq.s32.totalorder %s17, 1
      %p72 = por %p70, %p71
      %p73 = scmp.ne.s32.totalorder %s64, %s65
      %p74 = scmp.eq.s32.totalorder %s17, 0
      %p75 = por %p73, %p74
      %p76 = scmp.ne.s32.totalorder %s64, %s65
      %p77 = scmp.eq.s32.totalorder %s18, 1
      %p78 = por %p76, %p77
      %p80 = scmp.ne.s32.totalorder %s65, %s79
      %p81 = scmp.eq.s32.totalorder %s18, 0
      %p82 = por %p80, %p81
      %s84 = sadd.s32 %s83, 1
      %p87 = scmp.eq.s32.totalorder %s12, 1
      %p88 = scmp.ne.s32.totalorder %s83, %s85
      %p89 = scmp.eq.s32.totalorder %s12, 0
      %p90 = por %p88, %p89
      %p91 = scmp.ne.s32.totalorder %s83, %s85
      %p92 = scmp.eq.s32.totalorder %s17, 1
      %p93 = por %p91, %p92
      %p94 = scmp.ne.s32.totalorder %s85, %s86
      %p95 = scmp.eq.s32.totalorder %s17, 0
      %p96 = por %p94, %p95
      %p97 = scmp.ne.s32.totalorder %s85, %s86
      %p98 = scmp.eq.s32.totalorder %s18, 1
      %p99 = por %p97, %p98
      %p101 = scmp.ne.s32.totalorder %s86, %s100
      %p102 = scmp.eq.s32.totalorder %s18, 0
      %p103 = por %p101, %p102
      %s104 = ssub.s32 %s12, %s19
      %p105 = scmp.eq.s32.totalorder %s104, 0
      %s107 = sadd.s32 %s106, 1
      %s108 = scalar_select %p105, %s106, %s107
      %p111 = pneg %p105
      %p112 = scmp.eq.s32.totalorder %s12, 1
      %p113 = por %p111, %p112
      %p114 = scmp.ne.s32.totalorder %s106, %s109
      %p115 = scmp.eq.s32.totalorder %s12, 0
      %p116 = por %p114, %p115
      %p117 = scmp.ne.s32.totalorder %s106, %s109
      %p118 = scmp.eq.s32.totalorder %s17, 1
      %p119 = por %p117, %p118
      %p120 = scmp.ne.s32.totalorder %s109, %s110
      %p121 = scmp.eq.s32.totalorder %s17, 0
      %p122 = por %p120, %p121
      %p123 = scmp.ne.s32.totalorder %s109, %s110
      %p124 = scmp.eq.s32.totalorder %s18, 1
      %p125 = por %p123, %p124
      %p127 = scmp.ne.s32.totalorder %s110, %s126
      %p128 = scmp.eq.s32.totalorder %s18, 0
      %p129 = por %p127, %p128
      %s130 = ssub.s32 %s12, %s19
      %p131 = scmp.eq.s32.totalorder %s130, 0
      %s133 = sadd.s32 %s132, 1
      %s134 = scalar_select %p131, %s132, %s133
      %p137 = pneg %p131
      %p138 = scmp.eq.s32.totalorder %s12, 1
      %p139 = por %p137, %p138
      %p140 = scmp.ne.s32.totalorder %s132, %s135
      %p141 = scmp.eq.s32.totalorder %s12, 0
      %p142 = por %p140, %p141
      %p143 = scmp.ne.s32.totalorder %s132, %s135
      %p144 = scmp.eq.s32.totalorder %s17, 1
      %p145 = por %p143, %p144
      %p146 = scmp.ne.s32.totalorder %s135, %s136
      %p147 = scmp.eq.s32.totalorder %s17, 0
      %p148 = por %p146, %p147
      %p149 = scmp.ne.s32.totalorder %s135, %s136
      %p150 = scmp.eq.s32.totalorder %s18, 1
      %p151 = por %p149, %p150
      %p153 = scmp.ne.s32.totalorder %s136, %s152
      %p154 = scmp.eq.s32.totalorder %s18, 0
      %p155 = por %p153, %p154
      %s156 = ssub.s32 %s12, %s19
      %p157 = scmp.eq.s32.totalorder %s156, 0
      %s159 = sadd.s32 %s158, 1
      %s160 = scalar_select %p157, %s158, %s159
      %p163 = pneg %p157
      %p164 = scmp.eq.s32.totalorder %s12, 1
      %p165 = por %p163, %p164
      %p166 = scmp.ne.s32.totalorder %s158, %s161
      %p167 = scmp.eq.s32.totalorder %s12, 0
      %p168 = por %p166, %p167
      %p169 = scmp.ne.s32.totalorder %s158, %s161
      %p170 = scmp.eq.s32.totalorder %s17, 1
      %p171 = por %p169, %p170
      %p172 = scmp.ne.s32.totalorder %s161, %s162
      %p173 = scmp.eq.s32.totalorder %s17, 0
      %p174 = por %p172, %p173
      %p175 = scmp.ne.s32.totalorder %s161, %s162
      %p176 = scmp.eq.s32.totalorder %s18, 1
      %p177 = por %p175, %p176
      %p179 = scmp.ne.s32.totalorder %s162, %s178
      %p180 = scmp.eq.s32.totalorder %s18, 0
      %p181 = por %p179, %p180
      %p182 = scmp.le.s32.totalorder 1, %s12
      %p183 = scmp.lt.s32.totalorder %s12, 3
      %p184 = pnand %p182, %p183
      %p185 = pneg %p184
      // Predicated region
      $region9: #{decoder_forward.3} parent=5 // pred_check
        _
      $region10: #{decoder_forward.3} parent=5 // pred_check_branch
        %187 = sbr.rel (%p184) target = $region12
      $region11: #{decoder_forward.3} parent=5 // pred_region
        %s188 = ssub.s32 %s12, 1
        // Predicated region
        $region13: #{decoder_forward.3} parent=11 // pred_check
          %p189 = pneg %p33
        $region14: #{decoder_forward.3} parent=11 // pred_check_branch
          %191 = sbr.rel (%p189) target = $region16
        $region15: #{decoder_forward.3} parent=11 // pred_region
          _
        $region16: #{decoder_forward.3} parent=11 // pred_fallthru
          _
        // Predicated region
        $region17: #{decoder_forward.3} parent=11 // pred_check
          %p192 = pneg %p54
        $region18: #{decoder_forward.3} parent=11 // pred_check_branch
          %194 = sbr.rel (%p192) target = $region20
        $region19: #{decoder_forward.3} parent=11 // pred_region
          _
        $region20: #{decoder_forward.3} parent=11 // pred_fallthru
          _
        // Predicated region
        $region21: #{decoder_forward.3} parent=11 // pred_check
          %p195 = pneg %p75
        $region22: #{decoder_forward.3} parent=11 // pred_check_branch
          %197 = sbr.rel (%p195) target = $region24
        $region23: #{decoder_forward.3} parent=11 // pred_region
          _
        $region24: #{decoder_forward.3} parent=11 // pred_fallthru
          _
        // Predicated region
        $region25: #{decoder_forward.3} parent=11 // pred_check
          %p198 = pneg %p96
        $region26: #{decoder_forward.3} parent=11 // pred_check_branch
          %200 = sbr.rel (%p198) target = $region28
        $region27: #{decoder_forward.3} parent=11 // pred_region
          _
        $region28: #{decoder_forward.3} parent=11 // pred_fallthru
          _
      $region12: #{decoder_forward.3} parent=5 // pred_fallthru
        _
      %p201 = scmp.lt.s32.totalorder %s12, 2
      // Predicated region
      $region29: #{decoder_forward.3} parent=5 // pred_check
        %p202 = pneg %p201
      $region30: #{decoder_forward.3} parent=5 // pred_check_branch
        %204 = sbr.rel (%p202) target = $region32
      $region31: #{decoder_forward.3} parent=5 // pred_region
        // Predicated region
        $region33: #{decoder_forward.3} parent=31 // pred_check
          %p205 = pneg %p116
        $region34: #{decoder_forward.3} parent=31 // pred_check_branch
          %207 = sbr.rel (%p205) target = $region36
        $region35: #{decoder_forward.3} parent=31 // pred_region
          %s208 = sand.u32 %s106, 1
          %s209 = sand.u32 %s106, 1
          %s210 = smul.addr %s209, 1000
          %s211 = scalar_lea.vmem [#allocation2], %s210
          %s212 = smul.addr %s12, 4
          %s213 = scalar_lea.vmem %s4, %s212
          // Predicated region
          $region37: #{decoder_forward.3} parent=35 // pred_check
            _
          $region38: #{decoder_forward.3} parent=35 // pred_check_branch
            %215 = sbr.rel (0) target = $region40
          $region39: #{decoder_forward.3} parent=35 // pred_region
            // Predicated region
            $region41: #{decoder_forward.3} parent=39 // pred_check
              _
            $region42: #{decoder_forward.3} parent=39 // pred_check_branch
              %217 = sbr.rel target = $region44
            $region43: #{decoder_forward.3} parent=39 // pred_region
              // Predicated region
              $region56: #{decoder_forward.3} parent=43 // pred_check
                _
              $region57: #{decoder_forward.3} parent=43 // pred_check_branch
                %731 = sbr.rel (0) target = $region59
              $region58: #{decoder_forward.3} parent=43 // pred_region
                loop: start=0, step=1, limit=1
                $region60: #{decoder_forward.3} parent=58 // loop_pre_header
                  _
                $region61: #{decoder_forward.3} parent=58 // loop_header
                  %s733 = sphi 0, %s737
                  %p734 = scmp.ge.s32.totalorder %s733, 1
                  %s738 = sphi %s213, %s213
                  %s739 = sphi %s211, %s211
                $region62: #{decoder_forward.3} parent=58 // loop_header_branch
                  %736 = sbr.rel (%p734) target = $region66
                $region63: #{decoder_forward.3} parent=58 // loop_body
                  _
                $region64: #{decoder_forward.3} parent=58 // loop_footer
                  %s737 = sadd.s32 1, %s733
                $region65: #{decoder_forward.3} parent=58 // loop_footer_branch
                  %732 = sbr.rel target = $region61
                $region66: #{decoder_forward.3} parent=58 // loop_exit
                  _
                %s741 = ssub.s32 16, 1
                loop: start=0, step=1, limit=1
                $region67: #{decoder_forward.3} parent=58 // loop_pre_header
                  _
                $region68: #{decoder_forward.3} parent=58 // loop_header
                  %s743 = sphi 0, %s747
                  %p744 = scmp.ge.s32.totalorder %s743, 1
                  %s748 = sphi %s213, %s213
                  %s749 = sphi %s211, %s211
                $region69: #{decoder_forward.3} parent=58 // loop_header_branch
                  %746 = sbr.rel (%p744) target = $region73
                $region70: #{decoder_forward.3} parent=58 // loop_body
                  %v750 = vld [vmem:[%s748] sm:%s741]
                  %751 = vst [vmem:[%s749] sm:%s741] %v750
                  %v752 = vld [vmem:[%s748 + $0x8] sm:%s741]
                  %753 = vst [vmem:[%s749 + $0x4] sm:%s741] %v752
                  %v754 = vld [vmem:[%s748 + $0x10] sm:%s741]
                  %755 = vst [vmem:[%s749 + $0x8] sm:%s741] %v754
                  %v756 = vld [vmem:[%s748 + $0x18] sm:%s741]
                  %757 = vst [vmem:[%s749 + $0xc] sm:%s741] %v756
                  %v758 = vld [vmem:[%s748 + $0x20] sm:%s741]
                  %759 = vst [vmem:[%s749 + $0x10] sm:%s741] %v758
                  %v760 = vld [vmem:[%s748 + $0x28] sm:%s741]
                  %761 = vst [vmem:[%s749 + $0x14] sm:%s741] %v760
                  %v762 = vld [vmem:[%s748 + $0x30] sm:%s741]
                  %763 = vst [vmem:[%s749 + $0x18] sm:%s741] %v762
                  %v764 = vld [vmem:[%s748 + $0x38] sm:%s741]
                  %765 = vst [vmem:[%s749 + $0x1c] sm:%s741] %v764
                  %v766 = vld [vmem:[%s748 + $0x40] sm:%s741]
                  %767 = vst [vmem:[%s749 + $0x20] sm:%s741] %v766
                  %v768 = vld [vmem:[%s748 + $0x48] sm:%s741]
                  %769 = vst [vmem:[%s749 + $0x24] sm:%s741] %v768
                  %v770 = vld [vmem:[%s748 + $0x50] sm:%s741]
                  %771 = vst [vmem:[%s749 + $0x28] sm:%s741] %v770
                  %v772 = vld [vmem:[%s748 + $0x58] sm:%s741]
                  %773 = vst [vmem:[%s749 + $0x2c] sm:%s741] %v772
                  %v774 = vld [vmem:[%s748 + $0x60] sm:%s741]
                  %775 = vst [vmem:[%s749 + $0x30] sm:%s741] %v774
                  %v776 = vld [vmem:[%s748 + $0x68] sm:%s741]
                  %777 = vst [vmem:[%s749 + $0x34] sm:%s741] %v776
                  %v778 = vld [vmem:[%s748 + $0x70] sm:%s741]
                  %779 = vst [vmem:[%s749 + $0x38] sm:%s741] %v778
                  %v780 = vld [vmem:[%s748 + $0x78] sm:%s741]
                  %781 = vst [vmem:[%s749 + $0x3c] sm:%s741] %v780
                  %v782 = vld [vmem:[%s748 + $0x80] sm:%s741]
                  %783 = vst [vmem:[%s749 + $0x40] sm:%s741] %v782
                  %v784 = vld [vmem:[%s748 + $0x88] sm:%s741]
                  %785 = vst [vmem:[%s749 + $0x44] sm:%s741] %v784
                  %v786 = vld [vmem:[%s748 + $0x90] sm:%s741]
                  %787 = vst [vmem:[%s749 + $0x48] sm:%s741] %v786
                  %v788 = vld [vmem:[%s748 + $0x98] sm:%s741]
                  %789 = vst [vmem:[%s749 + $0x4c] sm:%s741] %v788
                  %v790 = vld [vmem:[%s748 + $0xa0] sm:%s741]
                  %791 = vst [vmem:[%s749 + $0x50] sm:%s741] %v790
                  %v792 = vld [vmem:[%s748 + $0xa8] sm:%s741]
                  %793 = vst [vmem:[%s749 + $0x54] sm:%s741] %v792
                  %v794 = vld [vmem:[%s748 + $0xb0] sm:%s741]
                  %795 = vst [vmem:[%s749 + $0x58] sm:%s741] %v794
                  %v796 = vld [vmem:[%s748 + $0xb8] sm:%s741]
                  %797 = vst [vmem:[%s749 + $0x5c] sm:%s741] %v796
                  %v798 = vld [vmem:[%s748 + $0xc0] sm:%s741]
                  %799 = vst [vmem:[%s749 + $0x60] sm:%s741] %v798
                  %v800 = vld [vmem:[%s748 + $0xc8] sm:%s741]
                  %801 = vst [vmem:[%s749 + $0x64] sm:%s741] %v800
                  %v802 = vld [vmem:[%s748 + $0xd0] sm:%s741]
                  %803 = vst [vmem:[%s749 + $0x68] sm:%s741] %v802
                  %v804 = vld [vmem:[%s748 + $0xd8] sm:%s741]
                  %805 = vst [vmem:[%s749 + $0x6c] sm:%s741] %v804
                  %v806 = vld [vmem:[%s748 + $0xe0] sm:%s741]
                  %807 = vst [vmem:[%s749 + $0x70] sm:%s741] %v806
                  %v808 = vld [vmem:[%s748 + $0xe8] sm:%s741]
                  %809 = vst [vmem:[%s749 + $0x74] sm:%s741] %v808
                  %v810 = vld [vmem:[%s748 + $0xf0] sm:%s741]
                  %811 = vst [vmem:[%s749 + $0x78] sm:%s741] %v810
                  %v812 = vld [vmem:[%s748 + $0xf8] sm:%s741]
                  %813 = vst [vmem:[%s749 + $0x7c] sm:%s741] %v812
                  %v814 = vld [vmem:[%s748 + $0x100] sm:%s741]
                  %815 = vst [vmem:[%s749 + $0x80] sm:%s741] %v814
                  %v816 = vld [vmem:[%s748 + $0x108] sm:%s741]
                  %817 = vst [vmem:[%s749 + $0x84] sm:%s741] %v816
                  %v818 = vld [vmem:[%s748 + $0x110] sm:%s741]
                  %819 = vst [vmem:[%s749 + $0x88] sm:%s741] %v818
                  %v820 = vld [vmem:[%s748 + $0x118] sm:%s741]
                  %821 = vst [vmem:[%s749 + $0x8c] sm:%s741] %v820
                  %v822 = vld [vmem:[%s748 + $0x120] sm:%s741]
                  %823 = vst [vmem:[%s749 + $0x90] sm:%s741] %v822
                  %v824 = vld [vmem:[%s748 + $0x128] sm:%s741]
                  %825 = vst [vmem:[%s749 + $0x94] sm:%s741] %v824
                  %v826 = vld [vmem:[%s748 + $0x130] sm:%s741]
                  %827 = vst [vmem:[%s749 + $0x98] sm:%s741] %v826
                  %v828 = vld [vmem:[%s748 + $0x138] sm:%s741]
                  %829 = vst [vmem:[%s749 + $0x9c] sm:%s741] %v828
                  %v830 = vld [vmem:[%s748 + $0x140] sm:%s741]
                  %831 = vst [vmem:[%s749 + $0xa0] sm:%s741] %v830
                  %v832 = vld [vmem:[%s748 + $0x148] sm:%s741]
                  %833 = vst [vmem:[%s749 + $0xa4] sm:%s741] %v832
                  %v834 = vld [vmem:[%s748 + $0x150] sm:%s741]
                  %835 = vst [vmem:[%s749 + $0xa8] sm:%s741] %v834
                  %v836 = vld [vmem:[%s748 + $0x158] sm:%s741]
                  %837 = vst [vmem:[%s749 + $0xac] sm:%s741] %v836
                  %v838 = vld [vmem:[%s748 + $0x160] sm:%s741]
                  %839 = vst [vmem:[%s749 + $0xb0] sm:%s741] %v838
                  %v840 = vld [vmem:[%s748 + $0x168] sm:%s741]
                  %841 = vst [vmem:[%s749 + $0xb4] sm:%s741] %v840
                  %v842 = vld [vmem:[%s748 + $0x170] sm:%s741]
                  %843 = vst [vmem:[%s749 + $0xb8] sm:%s741] %v842
                  %v844 = vld [vmem:[%s748 + $0x178] sm:%s741]
                  %845 = vst [vmem:[%s749 + $0xbc] sm:%s741] %v844
                  %v846 = vld [vmem:[%s748 + $0x180] sm:%s741]
                  %847 = vst [vmem:[%s749 + $0xc0] sm:%s741] %v846
                  %v848 = vld [vmem:[%s748 + $0x188] sm:%s741]
                  %849 = vst [vmem:[%s749 + $0xc4] sm:%s741] %v848
                  %v850 = vld [vmem:[%s748 + $0x190] sm:%s741]
                  %851 = vst [vmem:[%s749 + $0xc8] sm:%s741] %v850
                  %v852 = vld [vmem:[%s748 + $0x198] sm:%s741]
                  %853 = vst [vmem:[%s749 + $0xcc] sm:%s741] %v852
                  %v854 = vld [vmem:[%s748 + $0x1a0] sm:%s741]
                  %855 = vst [vmem:[%s749 + $0xd0] sm:%s741] %v854
                  %v856 = vld [vmem:[%s748 + $0x1a8] sm:%s741]
                  %857 = vst [vmem:[%s749 + $0xd4] sm:%s741] %v856
                  %v858 = vld [vmem:[%s748 + $0x1b0] sm:%s741]
                  %859 = vst [vmem:[%s749 + $0xd8] sm:%s741] %v858
                  %v860 = vld [vmem:[%s748 + $0x1b8] sm:%s741]
                  %861 = vst [vmem:[%s749 + $0xdc] sm:%s741] %v860
                  %v862 = vld [vmem:[%s748 + $0x1c0] sm:%s741]
                  %863 = vst [vmem:[%s749 + $0xe0] sm:%s741] %v862
                  %v864 = vld [vmem:[%s748 + $0x1c8] sm:%s741]
                  %865 = vst [vmem:[%s749 + $0xe4] sm:%s741] %v864
                  %v866 = vld [vmem:[%s748 + $0x1d0] sm:%s741]
                  %867 = vst [vmem:[%s749 + $0xe8] sm:%s741] %v866
                  %v868 = vld [vmem:[%s748 + $0x1d8] sm:%s741]
                  %869 = vst [vmem:[%s749 + $0xec] sm:%s741] %v868
                  %v870 = vld [vmem:[%s748 + $0x1e0] sm:%s741]
                  %871 = vst [vmem:[%s749 + $0xf0] sm:%s741] %v870
                  %v872 = vld [vmem:[%s748 + $0x1e8] sm:%s741]
                  %873 = vst [vmem:[%s749 + $0xf4] sm:%s741] %v872
                  %v874 = vld [vmem:[%s748 + $0x1f0] sm:%s741]
                  %875 = vst [vmem:[%s749 + $0xf8] sm:%s741] %v874
                  %v876 = vld [vmem:[%s748 + $0x1f8] sm:%s741]
                  %877 = vst [vmem:[%s749 + $0xfc] sm:%s741] %v876
                  %v878 = vld [vmem:[%s748 + $0x200] sm:%s741]
                  %879 = vst [vmem:[%s749 + $0x100] sm:%s741] %v878
                  %v880 = vld [vmem:[%s748 + $0x208] sm:%s741]
                  %881 = vst [vmem:[%s749 + $0x104] sm:%s741] %v880
                  %v882 = vld [vmem:[%s748 + $0x210] sm:%s741]
                  %883 = vst [vmem:[%s749 + $0x108] sm:%s741] %v882
                  %v884 = vld [vmem:[%s748 + $0x218] sm:%s741]
                  %885 = vst [vmem:[%s749 + $0x10c] sm:%s741] %v884
                  %v886 = vld [vmem:[%s748 + $0x220] sm:%s741]
                  %887 = vst [vmem:[%s749 + $0x110] sm:%s741] %v886
                  %v888 = vld [vmem:[%s748 + $0x228] sm:%s741]
                  %889 = vst [vmem:[%s749 + $0x114] sm:%s741] %v888
                  %v890 = vld [vmem:[%s748 + $0x230] sm:%s741]
                  %891 = vst [vmem:[%s749 + $0x118] sm:%s741] %v890
                  %v892 = vld [vmem:[%s748 + $0x238] sm:%s741]
                  %893 = vst [vmem:[%s749 + $0x11c] sm:%s741] %v892
                  %v894 = vld [vmem:[%s748 + $0x240] sm:%s741]
                  %895 = vst [vmem:[%s749 + $0x120] sm:%s741] %v894
                  %v896 = vld [vmem:[%s748 + $0x248] sm:%s741]
                  %897 = vst [vmem:[%s749 + $0x124] sm:%s741] %v896
                  %v898 = vld [vmem:[%s748 + $0x250] sm:%s741]
                  %899 = vst [vmem:[%s749 + $0x128] sm:%s741] %v898
                  %v900 = vld [vmem:[%s748 + $0x258] sm:%s741]
                  %901 = vst [vmem:[%s749 + $0x12c] sm:%s741] %v900
                  %v902 = vld [vmem:[%s748 + $0x260] sm:%s741]
                  %903 = vst [vmem:[%s749 + $0x130] sm:%s741] %v902
                  %v904 = vld [vmem:[%s748 + $0x268] sm:%s741]
                  %905 = vst [vmem:[%s749 + $0x134] sm:%s741] %v904
                  %v906 = vld [vmem:[%s748 + $0x270] sm:%s741]
                  %907 = vst [vmem:[%s749 + $0x138] sm:%s741] %v906
                  %v908 = vld [vmem:[%s748 + $0x278] sm:%s741]
                  %909 = vst [vmem:[%s749 + $0x13c] sm:%s741] %v908
                  %v910 = vld [vmem:[%s748 + $0x280] sm:%s741]
                  %911 = vst [vmem:[%s749 + $0x140] sm:%s741] %v910
                  %v912 = vld [vmem:[%s748 + $0x288] sm:%s741]
                  %913 = vst [vmem:[%s749 + $0x144] sm:%s741] %v912
                  %v914 = vld [vmem:[%s748 + $0x290] sm:%s741]
                  %915 = vst [vmem:[%s749 + $0x148] sm:%s741] %v914
                  %v916 = vld [vmem:[%s748 + $0x298] sm:%s741]
                  %917 = vst [vmem:[%s749 + $0x14c] sm:%s741] %v916
                  %v918 = vld [vmem:[%s748 + $0x2a0] sm:%s741]
                  %919 = vst [vmem:[%s749 + $0x150] sm:%s741] %v918
                  %v920 = vld [vmem:[%s748 + $0x2a8] sm:%s741]
                  %921 = vst [vmem:[%s749 + $0x154] sm:%s741] %v920
                  %v922 = vld [vmem:[%s748 + $0x2b0] sm:%s741]
                  %923 = vst [vmem:[%s749 + $0x158] sm:%s741] %v922
                  %v924 = vld [vmem:[%s748 + $0x2b8] sm:%s741]
                  %925 = vst [vmem:[%s749 + $0x15c] sm:%s741] %v924
                  %v926 = vld [vmem:[%s748 + $0x2c0] sm:%s741]
                  %927 = vst [vmem:[%s749 + $0x160] sm:%s741] %v926
                  %v928 = vld [vmem:[%s748 + $0x2c8] sm:%s741]
                  %929 = vst [vmem:[%s749 + $0x164] sm:%s741] %v928
                  %v930 = vld [vmem:[%s748 + $0x2d0] sm:%s741]
                  %931 = vst [vmem:[%s749 + $0x168] sm:%s741] %v930
                  %v932 = vld [vmem:[%s748 + $0x2d8] sm:%s741]
                  %933 = vst [vmem:[%s749 + $0x16c] sm:%s741] %v932
                  %v934 = vld [vmem:[%s748 + $0x2e0] sm:%s741]
                  %935 = vst [vmem:[%s749 + $0x170] sm:%s741] %v934
                  %v936 = vld [vmem:[%s748 + $0x2e8] sm:%s741]
                  %937 = vst [vmem:[%s749 + $0x174] sm:%s741] %v936
                  %v938 = vld [vmem:[%s748 + $0x2f0] sm:%s741]
                  %939 = vst [vmem:[%s749 + $0x178] sm:%s741] %v938
                  %v940 = vld [vmem:[%s748 + $0x2f8] sm:%s741]
                  %941 = vst [vmem:[%s749 + $0x17c] sm:%s741] %v940
                  %v942 = vld [vmem:[%s748 + $0x300] sm:%s741]
                  %943 = vst [vmem:[%s749 + $0x180] sm:%s741] %v942
                  %v944 = vld [vmem:[%s748 + $0x308] sm:%s741]
                  %945 = vst [vmem:[%s749 + $0x184] sm:%s741] %v944
                  %v946 = vld [vmem:[%s748 + $0x310] sm:%s741]
                  %947 = vst [vmem:[%s749 + $0x188] sm:%s741] %v946
                  %v948 = vld [vmem:[%s748 + $0x318] sm:%s741]
                  %949 = vst [vmem:[%s749 + $0x18c] sm:%s741] %v948
                  %v950 = vld [vmem:[%s748 + $0x320] sm:%s741]
                  %951 = vst [vmem:[%s749 + $0x190] sm:%s741] %v950
                  %v952 = vld [vmem:[%s748 + $0x328] sm:%s741]
                  %953 = vst [vmem:[%s749 + $0x194] sm:%s741] %v952
                  %v954 = vld [vmem:[%s748 + $0x330] sm:%s741]
                  %955 = vst [vmem:[%s749 + $0x198] sm:%s741] %v954
                  %v956 = vld [vmem:[%s748 + $0x338] sm:%s741]
                  %957 = vst [vmem:[%s749 + $0x19c] sm:%s741] %v956
                  %v958 = vld [vmem:[%s748 + $0x340] sm:%s741]
                  %959 = vst [vmem:[%s749 + $0x1a0] sm:%s741] %v958
                  %v960 = vld [vmem:[%s748 + $0x348] sm:%s741]
                  %961 = vst [vmem:[%s749 + $0x1a4] sm:%s741] %v960
                  %v962 = vld [vmem:[%s748 + $0x350] sm:%s741]
                  %963 = vst [vmem:[%s749 + $0x1a8] sm:%s741] %v962
                  %v964 = vld [vmem:[%s748 + $0x358] sm:%s741]
                  %965 = vst [vmem:[%s749 + $0x1ac] sm:%s741] %v964
                  %v966 = vld [vmem:[%s748 + $0x360] sm:%s741]
                  %967 = vst [vmem:[%s749 + $0x1b0] sm:%s741] %v966
                  %v968 = vld [vmem:[%s748 + $0x368] sm:%s741]
                  %969 = vst [vmem:[%s749 + $0x1b4] sm:%s741] %v968
                  %v970 = vld [vmem:[%s748 + $0x370] sm:%s741]
                  %971 = vst [vmem:[%s749 + $0x1b8] sm:%s741] %v970
                  %v972 = vld [vmem:[%s748 + $0x378] sm:%s741]
                  %973 = vst [vmem:[%s749 + $0x1bc] sm:%s741] %v972
                  %v974 = vld [vmem:[%s748 + $0x380] sm:%s741]
                  %975 = vst [vmem:[%s749 + $0x1c0] sm:%s741] %v974
                  %v976 = vld [vmem:[%s748 + $0x388] sm:%s741]
                  %977 = vst [vmem:[%s749 + $0x1c4] sm:%s741] %v976
                  %v978 = vld [vmem:[%s748 + $0x390] sm:%s741]
                  %979 = vst [vmem:[%s749 + $0x1c8] sm:%s741] %v978
                  %v980 = vld [vmem:[%s748 + $0x398] sm:%s741]
                  %981 = vst [vmem:[%s749 + $0x1cc] sm:%s741] %v980
                  %v982 = vld [vmem:[%s748 + $0x3a0] sm:%s741]
                  %983 = vst [vmem:[%s749 + $0x1d0] sm:%s741] %v982
                  %v984 = vld [vmem:[%s748 + $0x3a8] sm:%s741]
                  %985 = vst [vmem:[%s749 + $0x1d4] sm:%s741] %v984
                  %v986 = vld [vmem:[%s748 + $0x3b0] sm:%s741]
                  %987 = vst [vmem:[%s749 + $0x1d8] sm:%s741] %v986
                  %v988 = vld [vmem:[%s748 + $0x3b8] sm:%s741]
                  %989 = vst [vmem:[%s749 + $0x1dc] sm:%s741] %v988
                  %v990 = vld [vmem:[%s748 + $0x3c0] sm:%s741]
                  %991 = vst [vmem:[%s749 + $0x1e0] sm:%s741] %v990
                  %v992 = vld [vmem:[%s748 + $0x3c8] sm:%s741]
                  %993 = vst [vmem:[%s749 + $0x1e4] sm:%s741] %v992
                  %v994 = vld [vmem:[%s748 + $0x3d0] sm:%s741]
                  %995 = vst [vmem:[%s749 + $0x1e8] sm:%s741] %v994
                  %v996 = vld [vmem:[%s748 + $0x3d8] sm:%s741]
                  %997 = vst [vmem:[%s749 + $0x1ec] sm:%s741] %v996
                  %v998 = vld [vmem:[%s748 + $0x3e0] sm:%s741]
                  %999 = vst [vmem:[%s749 + $0x1f0] sm:%s741] %v998
                  %v1000 = vld [vmem:[%s748 + $0x3e8] sm:%s741]
                  %1001 = vst [vmem:[%s749 + $0x1f4] sm:%s741] %v1000
                  %v1002 = vld [vmem:[%s748 + $0x3f0] sm:%s741]
                  %1003 = vst [vmem:[%s749 + $0x1f8] sm:%s741] %v1002
                  %v1004 = vld [vmem:[%s748 + $0x3f8] sm:%s741]
                  %1005 = vst [vmem:[%s749 + $0x1fc] sm:%s741] %v1004
                  %v1006 = vld [vmem:[%s748 + $0x400] sm:%s741]
                  %1007 = vst [vmem:[%s749 + $0x200] sm:%s741] %v1006
                  %v1008 = vld [vmem:[%s748 + $0x408] sm:%s741]
                  %1009 = vst [vmem:[%s749 + $0x204] sm:%s741] %v1008
                  %v1010 = vld [vmem:[%s748 + $0x410] sm:%s741]
                  %1011 = vst [vmem:[%s749 + $0x208] sm:%s741] %v1010
                  %v1012 = vld [vmem:[%s748 + $0x418] sm:%s741]
                  %1013 = vst [vmem:[%s749 + $0x20c] sm:%s741] %v1012
                  %v1014 = vld [vmem:[%s748 + $0x420] sm:%s741]
                  %1015 = vst [vmem:[%s749 + $0x210] sm:%s741] %v1014
                  %v1016 = vld [vmem:[%s748 + $0x428] sm:%s741]
                  %1017 = vst [vmem:[%s749 + $0x214] sm:%s741] %v1016
                  %v1018 = vld [vmem:[%s748 + $0x430] sm:%s741]
                  %1019 = vst [vmem:[%s749 + $0x218] sm:%s741] %v1018
                  %v1020 = vld [vmem:[%s748 + $0x438] sm:%s741]
                  %1021 = vst [vmem:[%s749 + $0x21c] sm:%s741] %v1020
                  %v1022 = vld [vmem:[%s748 + $0x440] sm:%s741]
                  %1023 = vst [vmem:[%s749 + $0x220] sm:%s741] %v1022
                  %v1024 = vld [vmem:[%s748 + $0x448] sm:%s741]
                  %1025 = vst [vmem:[%s749 + $0x224] sm:%s741] %v1024
                  %v1026 = vld [vmem:[%s748 + $0x450] sm:%s741]
                  %1027 = vst [vmem:[%s749 + $0x228] sm:%s741] %v1026
                  %v1028 = vld [vmem:[%s748 + $0x458] sm:%s741]
                  %1029 = vst [vmem:[%s749 + $0x22c] sm:%s741] %v1028
                  %v1030 = vld [vmem:[%s748 + $0x460] sm:%s741]
                  %1031 = vst [vmem:[%s749 + $0x230] sm:%s741] %v1030
                  %v1032 = vld [vmem:[%s748 + $0x468] sm:%s741]
                  %1033 = vst [vmem:[%s749 + $0x234] sm:%s741] %v1032
                  %v1034 = vld [vmem:[%s748 + $0x470] sm:%s741]
                  %1035 = vst [vmem:[%s749 + $0x238] sm:%s741] %v1034
                  %v1036 = vld [vmem:[%s748 + $0x478] sm:%s741]
                  %1037 = vst [vmem:[%s749 + $0x23c] sm:%s741] %v1036
                  %v1038 = vld [vmem:[%s748 + $0x480] sm:%s741]
                  %1039 = vst [vmem:[%s749 + $0x240] sm:%s741] %v1038
                  %v1040 = vld [vmem:[%s748 + $0x488] sm:%s741]
                  %1041 = vst [vmem:[%s749 + $0x244] sm:%s741] %v1040
                  %v1042 = vld [vmem:[%s748 + $0x490] sm:%s741]
                  %1043 = vst [vmem:[%s749 + $0x248] sm:%s741] %v1042
                  %v1044 = vld [vmem:[%s748 + $0x498] sm:%s741]
                  %1045 = vst [vmem:[%s749 + $0x24c] sm:%s741] %v1044
                  %v1046 = vld [vmem:[%s748 + $0x4a0] sm:%s741]
                  %1047 = vst [vmem:[%s749 + $0x250] sm:%s741] %v1046
                  %v1048 = vld [vmem:[%s748 + $0x4a8] sm:%s741]
                  %1049 = vst [vmem:[%s749 + $0x254] sm:%s741] %v1048
                  %v1050 = vld [vmem:[%s748 + $0x4b0] sm:%s741]
                  %1051 = vst [vmem:[%s749 + $0x258] sm:%s741] %v1050
                  %v1052 = vld [vmem:[%s748 + $0x4b8] sm:%s741]
                  %1053 = vst [vmem:[%s749 + $0x25c] sm:%s741] %v1052
                  %v1054 = vld [vmem:[%s748 + $0x4c0] sm:%s741]
                  %1055 = vst [vmem:[%s749 + $0x260] sm:%s741] %v1054
                  %v1056 = vld [vmem:[%s748 + $0x4c8] sm:%s741]
                  %1057 = vst [vmem:[%s749 + $0x264] sm:%s741] %v1056
                  %v1058 = vld [vmem:[%s748 + $0x4d0] sm:%s741]
                  %1059 = vst [vmem:[%s749 + $0x268] sm:%s741] %v1058
                  %v1060 = vld [vmem:[%s748 + $0x4d8] sm:%s741]
                  %1061 = vst [vmem:[%s749 + $0x26c] sm:%s741] %v1060
                  %v1062 = vld [vmem:[%s748 + $0x4e0] sm:%s741]
                  %1063 = vst [vmem:[%s749 + $0x270] sm:%s741] %v1062
                  %v1064 = vld [vmem:[%s748 + $0x4e8] sm:%s741]
                  %1065 = vst [vmem:[%s749 + $0x274] sm:%s741] %v1064
                  %v1066 = vld [vmem:[%s748 + $0x4f0] sm:%s741]
                  %1067 = vst [vmem:[%s749 + $0x278] sm:%s741] %v1066
                  %v1068 = vld [vmem:[%s748 + $0x4f8] sm:%s741]
                  %1069 = vst [vmem:[%s749 + $0x27c] sm:%s741] %v1068
                  %v1070 = vld [vmem:[%s748 + $0x500] sm:%s741]
                  %1071 = vst [vmem:[%s749 + $0x280] sm:%s741] %v1070
                  %v1072 = vld [vmem:[%s748 + $0x508] sm:%s741]
                  %1073 = vst [vmem:[%s749 + $0x284] sm:%s741] %v1072
                  %v1074 = vld [vmem:[%s748 + $0x510] sm:%s741]
                  %1075 = vst [vmem:[%s749 + $0x288] sm:%s741] %v1074
                  %v1076 = vld [vmem:[%s748 + $0x518] sm:%s741]
                  %1077 = vst [vmem:[%s749 + $0x28c] sm:%s741] %v1076
                  %v1078 = vld [vmem:[%s748 + $0x520] sm:%s741]
                  %1079 = vst [vmem:[%s749 + $0x290] sm:%s741] %v1078
                  %v1080 = vld [vmem:[%s748 + $0x528] sm:%s741]
                  %1081 = vst [vmem:[%s749 + $0x294] sm:%s741] %v1080
                  %v1082 = vld [vmem:[%s748 + $0x530] sm:%s741]
                  %1083 = vst [vmem:[%s749 + $0x298] sm:%s741] %v1082
                  %v1084 = vld [vmem:[%s748 + $0x538] sm:%s741]
                  %1085 = vst [vmem:[%s749 + $0x29c] sm:%s741] %v1084
                  %v1086 = vld [vmem:[%s748 + $0x540] sm:%s741]
                  %1087 = vst [vmem:[%s749 + $0x2a0] sm:%s741] %v1086
                  %v1088 = vld [vmem:[%s748 + $0x548] sm:%s741]
                  %1089 = vst [vmem:[%s749 + $0x2a4] sm:%s741] %v1088
                  %v1090 = vld [vmem:[%s748 + $0x550] sm:%s741]
                  %1091 = vst [vmem:[%s749 + $0x2a8] sm:%s741] %v1090
                  %v1092 = vld [vmem:[%s748 + $0x558] sm:%s741]
                  %1093 = vst [vmem:[%s749 + $0x2ac] sm:%s741] %v1092
                  %v1094 = vld [vmem:[%s748 + $0x560] sm:%s741]
                  %1095 = vst [vmem:[%s749 + $0x2b0] sm:%s741] %v1094
                  %v1096 = vld [vmem:[%s748 + $0x568] sm:%s741]
                  %1097 = vst [vmem:[%s749 + $0x2b4] sm:%s741] %v1096
                  %v1098 = vld [vmem:[%s748 + $0x570] sm:%s741]
                  %1099 = vst [vmem:[%s749 + $0x2b8] sm:%s741] %v1098
                  %v1100 = vld [vmem:[%s748 + $0x578] sm:%s741]
                  %1101 = vst [vmem:[%s749 + $0x2bc] sm:%s741] %v1100
                  %v1102 = vld [vmem:[%s748 + $0x580] sm:%s741]
                  %1103 = vst [vmem:[%s749 + $0x2c0] sm:%s741] %v1102
                  %v1104 = vld [vmem:[%s748 + $0x588] sm:%s741]
                  %1105 = vst [vmem:[%s749 + $0x2c4] sm:%s741] %v1104
                  %v1106 = vld [vmem:[%s748 + $0x590] sm:%s741]
                  %1107 = vst [vmem:[%s749 + $0x2c8] sm:%s741] %v1106
                  %v1108 = vld [vmem:[%s748 + $0x598] sm:%s741]
                  %1109 = vst [vmem:[%s749 + $0x2cc] sm:%s741] %v1108
                  %v1110 = vld [vmem:[%s748 + $0x5a0] sm:%s741]
                  %1111 = vst [vmem:[%s749 + $0x2d0] sm:%s741] %v1110
                  %v1112 = vld [vmem:[%s748 + $0x5a8] sm:%s741]
                  %1113 = vst [vmem:[%s749 + $0x2d4] sm:%s741] %v1112
                  %v1114 = vld [vmem:[%s748 + $0x5b0] sm:%s741]
                  %1115 = vst [vmem:[%s749 + $0x2d8] sm:%s741] %v1114
                  %v1116 = vld [vmem:[%s748 + $0x5b8] sm:%s741]
                  %1117 = vst [vmem:[%s749 + $0x2dc] sm:%s741] %v1116
                  %v1118 = vld [vmem:[%s748 + $0x5c0] sm:%s741]
                  %1119 = vst [vmem:[%s749 + $0x2e0] sm:%s741] %v1118
                  %v1120 = vld [vmem:[%s748 + $0x5c8] sm:%s741]
                  %1121 = vst [vmem:[%s749 + $0x2e4] sm:%s741] %v1120
                  %v1122 = vld [vmem:[%s748 + $0x5d0] sm:%s741]
                  %1123 = vst [vmem:[%s749 + $0x2e8] sm:%s741] %v1122
                  %v1124 = vld [vmem:[%s748 + $0x5d8] sm:%s741]
                  %1125 = vst [vmem:[%s749 + $0x2ec] sm:%s741] %v1124
                  %v1126 = vld [vmem:[%s748 + $0x5e0] sm:%s741]
                  %1127 = vst [vmem:[%s749 + $0x2f0] sm:%s741] %v1126
                  %v1128 = vld [vmem:[%s748 + $0x5e8] sm:%s741]
                  %1129 = vst [vmem:[%s749 + $0x2f4] sm:%s741] %v1128
                  %v1130 = vld [vmem:[%s748 + $0x5f0] sm:%s741]
                  %1131 = vst [vmem:[%s749 + $0x2f8] sm:%s741] %v1130
                  %v1132 = vld [vmem:[%s748 + $0x5f8] sm:%s741]
                  %1133 = vst [vmem:[%s749 + $0x2fc] sm:%s741] %v1132
                  %v1134 = vld [vmem:[%s748 + $0x600] sm:%s741]
                  %1135 = vst [vmem:[%s749 + $0x300] sm:%s741] %v1134
                  %v1136 = vld [vmem:[%s748 + $0x608] sm:%s741]
                  %1137 = vst [vmem:[%s749 + $0x304] sm:%s741] %v1136
                  %v1138 = vld [vmem:[%s748 + $0x610] sm:%s741]
                  %1139 = vst [vmem:[%s749 + $0x308] sm:%s741] %v1138
                  %v1140 = vld [vmem:[%s748 + $0x618] sm:%s741]
                  %1141 = vst [vmem:[%s749 + $0x30c] sm:%s741] %v1140
                  %v1142 = vld [vmem:[%s748 + $0x620] sm:%s741]
                  %1143 = vst [vmem:[%s749 + $0x310] sm:%s741] %v1142
                  %v1144 = vld [vmem:[%s748 + $0x628] sm:%s741]
                  %1145 = vst [vmem:[%s749 + $0x314] sm:%s741] %v1144
                  %v1146 = vld [vmem:[%s748 + $0x630] sm:%s741]
                  %1147 = vst [vmem:[%s749 + $0x318] sm:%s741] %v1146
                  %v1148 = vld [vmem:[%s748 + $0x638] sm:%s741]
                  %1149 = vst [vmem:[%s749 + $0x31c] sm:%s741] %v1148
                  %v1150 = vld [vmem:[%s748 + $0x640] sm:%s741]
                  %1151 = vst [vmem:[%s749 + $0x320] sm:%s741] %v1150
                  %v1152 = vld [vmem:[%s748 + $0x648] sm:%s741]
                  %1153 = vst [vmem:[%s749 + $0x324] sm:%s741] %v1152
                  %v1154 = vld [vmem:[%s748 + $0x650] sm:%s741]
                  %1155 = vst [vmem:[%s749 + $0x328] sm:%s741] %v1154
                  %v1156 = vld [vmem:[%s748 + $0x658] sm:%s741]
                  %1157 = vst [vmem:[%s749 + $0x32c] sm:%s741] %v1156
                  %v1158 = vld [vmem:[%s748 + $0x660] sm:%s741]
                  %1159 = vst [vmem:[%s749 + $0x330] sm:%s741] %v1158
                  %v1160 = vld [vmem:[%s748 + $0x668] sm:%s741]
                  %1161 = vst [vmem:[%s749 + $0x334] sm:%s741] %v1160
                  %v1162 = vld [vmem:[%s748 + $0x670] sm:%s741]
                  %1163 = vst [vmem:[%s749 + $0x338] sm:%s741] %v1162
                  %v1164 = vld [vmem:[%s748 + $0x678] sm:%s741]
                  %1165 = vst [vmem:[%s749 + $0x33c] sm:%s741] %v1164
                  %v1166 = vld [vmem:[%s748 + $0x680] sm:%s741]
                  %1167 = vst [vmem:[%s749 + $0x340] sm:%s741] %v1166
                  %v1168 = vld [vmem:[%s748 + $0x688] sm:%s741]
                  %1169 = vst [vmem:[%s749 + $0x344] sm:%s741] %v1168
                  %v1170 = vld [vmem:[%s748 + $0x690] sm:%s741]
                  %1171 = vst [vmem:[%s749 + $0x348] sm:%s741] %v1170
                  %v1172 = vld [vmem:[%s748 + $0x698] sm:%s741]
                  %1173 = vst [vmem:[%s749 + $0x34c] sm:%s741] %v1172
                  %v1174 = vld [vmem:[%s748 + $0x6a0] sm:%s741]
                  %1175 = vst [vmem:[%s749 + $0x350] sm:%s741] %v1174
                  %v1176 = vld [vmem:[%s748 + $0x6a8] sm:%s741]
                  %1177 = vst [vmem:[%s749 + $0x354] sm:%s741] %v1176
                  %v1178 = vld [vmem:[%s748 + $0x6b0] sm:%s741]
                  %1179 = vst [vmem:[%s749 + $0x358] sm:%s741] %v1178
                  %v1180 = vld [vmem:[%s748 + $0x6b8] sm:%s741]
                  %1181 = vst [vmem:[%s749 + $0x35c] sm:%s741] %v1180
                  %v1182 = vld [vmem:[%s748 + $0x6c0] sm:%s741]
                  %1183 = vst [vmem:[%s749 + $0x360] sm:%s741] %v1182
                  %v1184 = vld [vmem:[%s748 + $0x6c8] sm:%s741]
                  %1185 = vst [vmem:[%s749 + $0x364] sm:%s741] %v1184
                  %v1186 = vld [vmem:[%s748 + $0x6d0] sm:%s741]
                  %1187 = vst [vmem:[%s749 + $0x368] sm:%s741] %v1186
                  %v1188 = vld [vmem:[%s748 + $0x6d8] sm:%s741]
                  %1189 = vst [vmem:[%s749 + $0x36c] sm:%s741] %v1188
                  %v1190 = vld [vmem:[%s748 + $0x6e0] sm:%s741]
                  %1191 = vst [vmem:[%s749 + $0x370] sm:%s741] %v1190
                  %v1192 = vld [vmem:[%s748 + $0x6e8] sm:%s741]
                  %1193 = vst [vmem:[%s749 + $0x374] sm:%s741] %v1192
                  %v1194 = vld [vmem:[%s748 + $0x6f0] sm:%s741]
                  %1195 = vst [vmem:[%s749 + $0x378] sm:%s741] %v1194
                  %v1196 = vld [vmem:[%s748 + $0x6f8] sm:%s741]
                  %1197 = vst [vmem:[%s749 + $0x37c] sm:%s741] %v1196
                  %v1198 = vld [vmem:[%s748 + $0x700] sm:%s741]
                  %1199 = vst [vmem:[%s749 + $0x380] sm:%s741] %v1198
                  %v1200 = vld [vmem:[%s748 + $0x708] sm:%s741]
                  %1201 = vst [vmem:[%s749 + $0x384] sm:%s741] %v1200
                  %v1202 = vld [vmem:[%s748 + $0x710] sm:%s741]
                  %1203 = vst [vmem:[%s749 + $0x388] sm:%s741] %v1202
                  %v1204 = vld [vmem:[%s748 + $0x718] sm:%s741]
                  %1205 = vst [vmem:[%s749 + $0x38c] sm:%s741] %v1204
                  %v1206 = vld [vmem:[%s748 + $0x720] sm:%s741]
                  %1207 = vst [vmem:[%s749 + $0x390] sm:%s741] %v1206
                  %v1208 = vld [vmem:[%s748 + $0x728] sm:%s741]
                  %1209 = vst [vmem:[%s749 + $0x394] sm:%s741] %v1208
                  %v1210 = vld [vmem:[%s748 + $0x730] sm:%s741]
                  %1211 = vst [vmem:[%s749 + $0x398] sm:%s741] %v1210
                  %v1212 = vld [vmem:[%s748 + $0x738] sm:%s741]
                  %1213 = vst [vmem:[%s749 + $0x39c] sm:%s741] %v1212
                  %v1214 = vld [vmem:[%s748 + $0x740] sm:%s741]
                  %1215 = vst [vmem:[%s749 + $0x3a0] sm:%s741] %v1214
                  %v1216 = vld [vmem:[%s748 + $0x748] sm:%s741]
                  %1217 = vst [vmem:[%s749 + $0x3a4] sm:%s741] %v1216
                  %v1218 = vld [vmem:[%s748 + $0x750] sm:%s741]
                  %1219 = vst [vmem:[%s749 + $0x3a8] sm:%s741] %v1218
                  %v1220 = vld [vmem:[%s748 + $0x758] sm:%s741]
                  %1221 = vst [vmem:[%s749 + $0x3ac] sm:%s741] %v1220
                  %v1222 = vld [vmem:[%s748 + $0x760] sm:%s741]
                  %1223 = vst [vmem:[%s749 + $0x3b0] sm:%s741] %v1222
                  %v1224 = vld [vmem:[%s748 + $0x768] sm:%s741]
                  %1225 = vst [vmem:[%s749 + $0x3b4] sm:%s741] %v1224
                  %v1226 = vld [vmem:[%s748 + $0x770] sm:%s741]
                  %1227 = vst [vmem:[%s749 + $0x3b8] sm:%s741] %v1226
                  %v1228 = vld [vmem:[%s748 + $0x778] sm:%s741]
                  %1229 = vst [vmem:[%s749 + $0x3bc] sm:%s741] %v1228
                  %v1230 = vld [vmem:[%s748 + $0x780] sm:%s741]
                  %1231 = vst [vmem:[%s749 + $0x3c0] sm:%s741] %v1230
                  %v1232 = vld [vmem:[%s748 + $0x788] sm:%s741]
                  %1233 = vst [vmem:[%s749 + $0x3c4] sm:%s741] %v1232
                  %v1234 = vld [vmem:[%s748 + $0x790] sm:%s741]
                  %1235 = vst [vmem:[%s749 + $0x3c8] sm:%s741] %v1234
                  %v1236 = vld [vmem:[%s748 + $0x798] sm:%s741]
                  %1237 = vst [vmem:[%s749 + $0x3cc] sm:%s741] %v1236
                  %v1238 = vld [vmem:[%s748 + $0x7a0] sm:%s741]
                  %1239 = vst [vmem:[%s749 + $0x3d0] sm:%s741] %v1238
                  %v1240 = vld [vmem:[%s748 + $0x7a8] sm:%s741]
                  %1241 = vst [vmem:[%s749 + $0x3d4] sm:%s741] %v1240
                  %v1242 = vld [vmem:[%s748 + $0x7b0] sm:%s741]
                  %1243 = vst [vmem:[%s749 + $0x3d8] sm:%s741] %v1242
                  %v1244 = vld [vmem:[%s748 + $0x7b8] sm:%s741]
                  %1245 = vst [vmem:[%s749 + $0x3dc] sm:%s741] %v1244
                  %v1246 = vld [vmem:[%s748 + $0x7c0] sm:%s741]
                  %1247 = vst [vmem:[%s749 + $0x3e0] sm:%s741] %v1246
                  %v1248 = vld [vmem:[%s748 + $0x7c8] sm:%s741]
                  %1249 = vst [vmem:[%s749 + $0x3e4] sm:%s741] %v1248
                $region71: #{decoder_forward.3} parent=58 // loop_footer
                  %s747 = sadd.s32 1, %s743
                $region72: #{decoder_forward.3} parent=58 // loop_footer_branch
                  %742 = sbr.rel target = $region68
                $region73: #{decoder_forward.3} parent=58 // loop_exit
                  _
              $region59: #{decoder_forward.3} parent=43 // pred_fallthru
                _
            $region44: #{decoder_forward.3} parent=39 // pred_fallthru
              _
            // Predicated region
            $region45: #{decoder_forward.3} parent=39 // pred_check
              _
            $region46: #{decoder_forward.3} parent=39 // pred_check_branch
              %219 = sbr.rel (0) target = $region48
            $region47: #{decoder_forward.3} parent=39 // pred_region
              %s221 = ssub.s32 16, 1
              loop: start=0, step=1, limit=1
              $region49: #{decoder_forward.3} parent=47 // loop_pre_header
                _
              $region50: #{decoder_forward.3} parent=47 // loop_header
                %s223 = sphi 0, %s227
                %p224 = scmp.ge.s32.totalorder %s223, 1
                %s228 = sphi %s213, %s213
                %s229 = sphi %s211, %s211
              $region51: #{decoder_forward.3} parent=47 // loop_header_branch
                %226 = sbr.rel (%p224) target = $region55
              $region52: #{decoder_forward.3} parent=47 // loop_body
                %v230 = vld [vmem:[%s228] sm:%s221]
                %231 = vst [vmem:[%s229] sm:%s221] %v230
                %v232 = vld [vmem:[%s228 + $0x8] sm:%s221]
                %233 = vst [vmem:[%s229 + $0x4] sm:%s221] %v232
                %v234 = vld [vmem:[%s228 + $0x10] sm:%s221]
                %235 = vst [vmem:[%s229 + $0x8] sm:%s221] %v234
                %v236 = vld [vmem:[%s228 + $0x18] sm:%s221]
                %237 = vst [vmem:[%s229 + $0xc] sm:%s221] %v236
                %v238 = vld [vmem:[%s228 + $0x20] sm:%s221]
                %239 = vst [vmem:[%s229 + $0x10] sm:%s221] %v238
                %v240 = vld [vmem:[%s228 + $0x28] sm:%s221]
                %241 = vst [vmem:[%s229 + $0x14] sm:%s221] %v240
                %v242 = vld [vmem:[%s228 + $0x30] sm:%s221]
                %243 = vst [vmem:[%s229 + $0x18] sm:%s221] %v242
                %v244 = vld [vmem:[%s228 + $0x38] sm:%s221]
                %245 = vst [vmem:[%s229 + $0x1c] sm:%s221] %v244
                %v246 = vld [vmem:[%s228 + $0x40] sm:%s221]
                %247 = vst [vmem:[%s229 + $0x20] sm:%s221] %v246
                %v248 = vld [vmem:[%s228 + $0x48] sm:%s221]
                %249 = vst [vmem:[%s229 + $0x24] sm:%s221] %v248
                %v250 = vld [vmem:[%s228 + $0x50] sm:%s221]
                %251 = vst [vmem:[%s229 + $0x28] sm:%s221] %v250
                %v252 = vld [vmem:[%s228 + $0x58] sm:%s221]
                %253 = vst [vmem:[%s229 + $0x2c] sm:%s221] %v252
                %v254 = vld [vmem:[%s228 + $0x60] sm:%s221]
                %255 = vst [vmem:[%s229 + $0x30] sm:%s221] %v254
                %v256 = vld [vmem:[%s228 + $0x68] sm:%s221]
                %257 = vst [vmem:[%s229 + $0x34] sm:%s221] %v256
                %v258 = vld [vmem:[%s228 + $0x70] sm:%s221]
                %259 = vst [vmem:[%s229 + $0x38] sm:%s221] %v258
                %v260 = vld [vmem:[%s228 + $0x78] sm:%s221]
                %261 = vst [vmem:[%s229 + $0x3c] sm:%s221] %v260
                %v262 = vld [vmem:[%s228 + $0x80] sm:%s221]
                %263 = vst [vmem:[%s229 + $0x40] sm:%s221] %v262
                %v264 = vld [vmem:[%s228 + $0x88] sm:%s221]
                %265 = vst [vmem:[%s229 + $0x44] sm:%s221] %v264
                %v266 = vld [vmem:[%s228 + $0x90] sm:%s221]
                %267 = vst [vmem:[%s229 + $0x48] sm:%s221] %v266
                %v268 = vld [vmem:[%s228 + $0x98] sm:%s221]
                %269 = vst [vmem:[%s229 + $0x4c] sm:%s221] %v268
                %v270 = vld [vmem:[%s228 + $0xa0] sm:%s221]
                %271 = vst [vmem:[%s229 + $0x50] sm:%s221] %v270
                %v272 = vld [vmem:[%s228 + $0xa8] sm:%s221]
                %273 = vst [vmem:[%s229 + $0x54] sm:%s221] %v272
                %v274 = vld [vmem:[%s228 + $0xb0] sm:%s221]
                %275 = vst [vmem:[%s229 + $0x58] sm:%s221] %v274
                %v276 = vld [vmem:[%s228 + $0xb8] sm:%s221]
                %277 = vst [vmem:[%s229 + $0x5c] sm:%s221] %v276
                %v278 = vld [vmem:[%s228 + $0xc0] sm:%s221]
                %279 = vst [vmem:[%s229 + $0x60] sm:%s221] %v278
                %v280 = vld [vmem:[%s228 + $0xc8] sm:%s221]
                %281 = vst [vmem:[%s229 + $0x64] sm:%s221] %v280
                %v282 = vld [vmem:[%s228 + $0xd0] sm:%s221]
                %283 = vst [vmem:[%s229 + $0x68] sm:%s221] %v282
                %v284 = vld [vmem:[%s228 + $0xd8] sm:%s221]
                %285 = vst [vmem:[%s229 + $0x6c] sm:%s221] %v284
                %v286 = vld [vmem:[%s228 + $0xe0] sm:%s221]
                %287 = vst [vmem:[%s229 + $0x70] sm:%s221] %v286
                %v288 = vld [vmem:[%s228 + $0xe8] sm:%s221]
                %289 = vst [vmem:[%s229 + $0x74] sm:%s221] %v288
                %v290 = vld [vmem:[%s228 + $0xf0] sm:%s221]
                %291 = vst [vmem:[%s229 + $0x78] sm:%s221] %v290
                %v292 = vld [vmem:[%s228 + $0xf8] sm:%s221]
                %293 = vst [vmem:[%s229 + $0x7c] sm:%s221] %v292
                %v294 = vld [vmem:[%s228 + $0x100] sm:%s221]
                %295 = vst [vmem:[%s229 + $0x80] sm:%s221] %v294
                %v296 = vld [vmem:[%s228 + $0x108] sm:%s221]
                %297 = vst [vmem:[%s229 + $0x84] sm:%s221] %v296
                %v298 = vld [vmem:[%s228 + $0x110] sm:%s221]
                %299 = vst [vmem:[%s229 + $0x88] sm:%s221] %v298
                %v300 = vld [vmem:[%s228 + $0x118] sm:%s221]
                %301 = vst [vmem:[%s229 + $0x8c] sm:%s221] %v300
                %v302 = vld [vmem:[%s228 + $0x120] sm:%s221]
                %303 = vst [vmem:[%s229 + $0x90] sm:%s221] %v302
                %v304 = vld [vmem:[%s228 + $0x128] sm:%s221]
                %305 = vst [vmem:[%s229 + $0x94] sm:%s221] %v304
                %v306 = vld [vmem:[%s228 + $0x130] sm:%s221]
                %307 = vst [vmem:[%s229 + $0x98] sm:%s221] %v306
                %v308 = vld [vmem:[%s228 + $0x138] sm:%s221]
                %309 = vst [vmem:[%s229 + $0x9c] sm:%s221] %v308
                %v310 = vld [vmem:[%s228 + $0x140] sm:%s221]
                %311 = vst [vmem:[%s229 + $0xa0] sm:%s221] %v310
                %v312 = vld [vmem:[%s228 + $0x148] sm:%s221]
                %313 = vst [vmem:[%s229 + $0xa4] sm:%s221] %v312
                %v314 = vld [vmem:[%s228 + $0x150] sm:%s221]
                %315 = vst [vmem:[%s229 + $0xa8] sm:%s221] %v314
                %v316 = vld [vmem:[%s228 + $0x158] sm:%s221]
                %317 = vst [vmem:[%s229 + $0xac] sm:%s221] %v316
                %v318 = vld [vmem:[%s228 + $0x160] sm:%s221]
                %319 = vst [vmem:[%s229 + $0xb0] sm:%s221] %v318
                %v320 = vld [vmem:[%s228 + $0x168] sm:%s221]
                %321 = vst [vmem:[%s229 + $0xb4] sm:%s221] %v320
                %v322 = vld [vmem:[%s228 + $0x170] sm:%s221]
                %323 = vst [vmem:[%s229 + $0xb8] sm:%s221] %v322
                %v324 = vld [vmem:[%s228 + $0x178] sm:%s221]
                %325 = vst [vmem:[%s229 + $0xbc] sm:%s221] %v324
                %v326 = vld [vmem:[%s228 + $0x180] sm:%s221]
                %327 = vst [vmem:[%s229 + $0xc0] sm:%s221] %v326
                %v328 = vld [vmem:[%s228 + $0x188] sm:%s221]
                %329 = vst [vmem:[%s229 + $0xc4] sm:%s221] %v328
                %v330 = vld [vmem:[%s228 + $0x190] sm:%s221]
                %331 = vst [vmem:[%s229 + $0xc8] sm:%s221] %v330
                %v332 = vld [vmem:[%s228 + $0x198] sm:%s221]
                %333 = vst [vmem:[%s229 + $0xcc] sm:%s221] %v332
                %v334 = vld [vmem:[%s228 + $0x1a0] sm:%s221]
                %335 = vst [vmem:[%s229 + $0xd0] sm:%s221] %v334
                %v336 = vld [vmem:[%s228 + $0x1a8] sm:%s221]
                %337 = vst [vmem:[%s229 + $0xd4] sm:%s221] %v336
                %v338 = vld [vmem:[%s228 + $0x1b0] sm:%s221]
                %339 = vst [vmem:[%s229 + $0xd8] sm:%s221] %v338
                %v340 = vld [vmem:[%s228 + $0x1b8] sm:%s221]
                %341 = vst [vmem:[%s229 + $0xdc] sm:%s221] %v340
                %v342 = vld [vmem:[%s228 + $0x1c0] sm:%s221]
                %343 = vst [vmem:[%s229 + $0xe0] sm:%s221] %v342
                %v344 = vld [vmem:[%s228 + $0x1c8] sm:%s221]
                %345 = vst [vmem:[%s229 + $0xe4] sm:%s221] %v344
                %v346 = vld [vmem:[%s228 + $0x1d0] sm:%s221]
                %347 = vst [vmem:[%s229 + $0xe8] sm:%s221] %v346
                %v348 = vld [vmem:[%s228 + $0x1d8] sm:%s221]
                %349 = vst [vmem:[%s229 + $0xec] sm:%s221] %v348
                %v350 = vld [vmem:[%s228 + $0x1e0] sm:%s221]
                %351 = vst [vmem:[%s229 + $0xf0] sm:%s221] %v350
                %v352 = vld [vmem:[%s228 + $0x1e8] sm:%s221]
                %353 = vst [vmem:[%s229 + $0xf4] sm:%s221] %v352
                %v354 = vld [vmem:[%s228 + $0x1f0] sm:%s221]
                %355 = vst [vmem:[%s229 + $0xf8] sm:%s221] %v354
                %v356 = vld [vmem:[%s228 + $0x1f8] sm:%s221]
                %357 = vst [vmem:[%s229 + $0xfc] sm:%s221] %v356
                %v358 = vld [vmem:[%s228 + $0x200] sm:%s221]
                %359 = vst [vmem:[%s229 + $0x100] sm:%s221] %v358
                %v360 = vld [vmem:[%s228 + $0x208] sm:%s221]
                %361 = vst [vmem:[%s229 + $0x104] sm:%s221] %v360
                %v362 = vld [vmem:[%s228 + $0x210] sm:%s221]
                %363 = vst [vmem:[%s229 + $0x108] sm:%s221] %v362
                %v364 = vld [vmem:[%s228 + $0x218] sm:%s221]
                %365 = vst [vmem:[%s229 + $0x10c] sm:%s221] %v364
                %v366 = vld [vmem:[%s228 + $0x220] sm:%s221]
                %367 = vst [vmem:[%s229 + $0x110] sm:%s221] %v366
                %v368 = vld [vmem:[%s228 + $0x228] sm:%s221]
                %369 = vst [vmem:[%s229 + $0x114] sm:%s221] %v368
                %v370 = vld [vmem:[%s228 + $0x230] sm:%s221]
                %371 = vst [vmem:[%s229 + $0x118] sm:%s221] %v370
                %v372 = vld [vmem:[%s228 + $0x238] sm:%s221]
                %373 = vst [vmem:[%s229 + $0x11c] sm:%s221] %v372
                %v374 = vld [vmem:[%s228 + $0x240] sm:%s221]
                %375 = vst [vmem:[%s229 + $0x120] sm:%s221] %v374
                %v376 = vld [vmem:[%s228 + $0x248] sm:%s221]
                %377 = vst [vmem:[%s229 + $0x124] sm:%s221] %v376
                %v378 = vld [vmem:[%s228 + $0x250] sm:%s221]
                %379 = vst [vmem:[%s229 + $0x128] sm:%s221] %v378
                %v380 = vld [vmem:[%s228 + $0x258] sm:%s221]
                %381 = vst [vmem:[%s229 + $0x12c] sm:%s221] %v380
                %v382 = vld [vmem:[%s228 + $0x260] sm:%s221]
                %383 = vst [vmem:[%s229 + $0x130] sm:%s221] %v382
                %v384 = vld [vmem:[%s228 + $0x268] sm:%s221]
                %385 = vst [vmem:[%s229 + $0x134] sm:%s221] %v384
                %v386 = vld [vmem:[%s228 + $0x270] sm:%s221]
                %387 = vst [vmem:[%s229 + $0x138] sm:%s221] %v386
                %v388 = vld [vmem:[%s228 + $0x278] sm:%s221]
                %389 = vst [vmem:[%s229 + $0x13c] sm:%s221] %v388
                %v390 = vld [vmem:[%s228 + $0x280] sm:%s221]
                %391 = vst [vmem:[%s229 + $0x140] sm:%s221] %v390
                %v392 = vld [vmem:[%s228 + $0x288] sm:%s221]
                %393 = vst [vmem:[%s229 + $0x144] sm:%s221] %v392
                %v394 = vld [vmem:[%s228 + $0x290] sm:%s221]
                %395 = vst [vmem:[%s229 + $0x148] sm:%s221] %v394
                %v396 = vld [vmem:[%s228 + $0x298] sm:%s221]
                %397 = vst [vmem:[%s229 + $0x14c] sm:%s221] %v396
                %v398 = vld [vmem:[%s228 + $0x2a0] sm:%s221]
                %399 = vst [vmem:[%s229 + $0x150] sm:%s221] %v398
                %v400 = vld [vmem:[%s228 + $0x2a8] sm:%s221]
                %401 = vst [vmem:[%s229 + $0x154] sm:%s221] %v400
                %v402 = vld [vmem:[%s228 + $0x2b0] sm:%s221]
                %403 = vst [vmem:[%s229 + $0x158] sm:%s221] %v402
                %v404 = vld [vmem:[%s228 + $0x2b8] sm:%s221]
                %405 = vst [vmem:[%s229 + $0x15c] sm:%s221] %v404
                %v406 = vld [vmem:[%s228 + $0x2c0] sm:%s221]
                %407 = vst [vmem:[%s229 + $0x160] sm:%s221] %v406
                %v408 = vld [vmem:[%s228 + $0x2c8] sm:%s221]
                %409 = vst [vmem:[%s229 + $0x164] sm:%s221] %v408
                %v410 = vld [vmem:[%s228 + $0x2d0] sm:%s221]
                %411 = vst [vmem:[%s229 + $0x168] sm:%s221] %v410
                %v412 = vld [vmem:[%s228 + $0x2d8] sm:%s221]
                %413 = vst [vmem:[%s229 + $0x16c] sm:%s221] %v412
                %v414 = vld [vmem:[%s228 + $0x2e0] sm:%s221]
                %415 = vst [vmem:[%s229 + $0x170] sm:%s221] %v414
                %v416 = vld [vmem:[%s228 + $0x2e8] sm:%s221]
                %417 = vst [vmem:[%s229 + $0x174] sm:%s221] %v416
                %v418 = vld [vmem:[%s228 + $0x2f0] sm:%s221]
                %419 = vst [vmem:[%s229 + $0x178] sm:%s221] %v418
                %v420 = vld [vmem:[%s228 + $0x2f8] sm:%s221]
                %421 = vst [vmem:[%s229 + $0x17c] sm:%s221] %v420
                %v422 = vld [vmem:[%s228 + $0x300] sm:%s221]
                %423 = vst [vmem:[%s229 + $0x180] sm:%s221] %v422
                %v424 = vld [vmem:[%s228 + $0x308] sm:%s221]
                %425 = vst [vmem:[%s229 + $0x184] sm:%s221] %v424
                %v426 = vld [vmem:[%s228 + $0x310] sm:%s221]
                %427 = vst [vmem:[%s229 + $0x188] sm:%s221] %v426
                %v428 = vld [vmem:[%s228 + $0x318] sm:%s221]
                %429 = vst [vmem:[%s229 + $0x18c] sm:%s221] %v428
                %v430 = vld [vmem:[%s228 + $0x320] sm:%s221]
                %431 = vst [vmem:[%s229 + $0x190] sm:%s221] %v430
                %v432 = vld [vmem:[%s228 + $0x328] sm:%s221]
                %433 = vst [vmem:[%s229 + $0x194] sm:%s221] %v432
                %v434 = vld [vmem:[%s228 + $0x330] sm:%s221]
                %435 = vst [vmem:[%s229 + $0x198] sm:%s221] %v434
                %v436 = vld [vmem:[%s228 + $0x338] sm:%s221]
                %437 = vst [vmem:[%s229 + $0x19c] sm:%s221] %v436
                %v438 = vld [vmem:[%s228 + $0x340] sm:%s221]
                %439 = vst [vmem:[%s229 + $0x1a0] sm:%s221] %v438
                %v440 = vld [vmem:[%s228 + $0x348] sm:%s221]
                %441 = vst [vmem:[%s229 + $0x1a4] sm:%s221] %v440
                %v442 = vld [vmem:[%s228 + $0x350] sm:%s221]
                %443 = vst [vmem:[%s229 + $0x1a8] sm:%s221] %v442
                %v444 = vld [vmem:[%s228 + $0x358] sm:%s221]
                %445 = vst [vmem:[%s229 + $0x1ac] sm:%s221] %v444
                %v446 = vld [vmem:[%s228 + $0x360] sm:%s221]
                %447 = vst [vmem:[%s229 + $0x1b0] sm:%s221] %v446
                %v448 = vld [vmem:[%s228 + $0x368] sm:%s221]
                %449 = vst [vmem:[%s229 + $0x1b4] sm:%s221] %v448
                %v450 = vld [vmem:[%s228 + $0x370] sm:%s221]
                %451 = vst [vmem:[%s229 + $0x1b8] sm:%s221] %v450
                %v452 = vld [vmem:[%s228 + $0x378] sm:%s221]
                %453 = vst [vmem:[%s229 + $0x1bc] sm:%s221] %v452
                %v454 = vld [vmem:[%s228 + $0x380] sm:%s221]
                %455 = vst [vmem:[%s229 + $0x1c0] sm:%s221] %v454
                %v456 = vld [vmem:[%s228 + $0x388] sm:%s221]
                %457 = vst [vmem:[%s229 + $0x1c4] sm:%s221] %v456
                %v458 = vld [vmem:[%s228 + $0x390] sm:%s221]
                %459 = vst [vmem:[%s229 + $0x1c8] sm:%s221] %v458
                %v460 = vld [vmem:[%s228 + $0x398] sm:%s221]
                %461 = vst [vmem:[%s229 + $0x1cc] sm:%s221] %v460
                %v462 = vld [vmem:[%s228 + $0x3a0] sm:%s221]
                %463 = vst [vmem:[%s229 + $0x1d0] sm:%s221] %v462
                %v464 = vld [vmem:[%s228 + $0x3a8] sm:%s221]
                %465 = vst [vmem:[%s229 + $0x1d4] sm:%s221] %v464
                %v466 = vld [vmem:[%s228 + $0x3b0] sm:%s221]
                %467 = vst [vmem:[%s229 + $0x1d8] sm:%s221] %v466
                %v468 = vld [vmem:[%s228 + $0x3b8] sm:%s221]
                %469 = vst [vmem:[%s229 + $0x1dc] sm:%s221] %v468
                %v470 = vld [vmem:[%s228 + $0x3c0] sm:%s221]
                %471 = vst [vmem:[%s229 + $0x1e0] sm:%s221] %v470
                %v472 = vld [vmem:[%s228 + $0x3c8] sm:%s221]
                %473 = vst [vmem:[%s229 + $0x1e4] sm:%s221] %v472
                %v474 = vld [vmem:[%s228 + $0x3d0] sm:%s221]
                %475 = vst [vmem:[%s229 + $0x1e8] sm:%s221] %v474
                %v476 = vld [vmem:[%s228 + $0x3d8] sm:%s221]
                %477 = vst [vmem:[%s229 + $0x1ec] sm:%s221] %v476
                %v478 = vld [vmem:[%s228 + $0x3e0] sm:%s221]
                %479 = vst [vmem:[%s229 + $0x1f0] sm:%s221] %v478
                %v480 = vld [vmem:[%s228 + $0x3e8] sm:%s221]
                %481 = vst [vmem:[%s229 + $0x1f4] sm:%s221] %v480
                %v482 = vld [vmem:[%s228 + $0x3f0] sm:%s221]
                %483 = vst [vmem:[%s229 + $0x1f8] sm:%s221] %v482
                %v484 = vld [vmem:[%s228 + $0x3f8] sm:%s221]
                %485 = vst [vmem:[%s229 + $0x1fc] sm:%s221] %v484
                %v486 = vld [vmem:[%s228 + $0x400] sm:%s221]
                %487 = vst [vmem:[%s229 + $0x200] sm:%s221] %v486
                %v488 = vld [vmem:[%s228 + $0x408] sm:%s221]
                %489 = vst [vmem:[%s229 + $0x204] sm:%s221] %v488
                %v490 = vld [vmem:[%s228 + $0x410] sm:%s221]
                %491 = vst [vmem:[%s229 + $0x208] sm:%s221] %v490
                %v492 = vld [vmem:[%s228 + $0x418] sm:%s221]
                %493 = vst [vmem:[%s229 + $0x20c] sm:%s221] %v492
                %v494 = vld [vmem:[%s228 + $0x420] sm:%s221]
                %495 = vst [vmem:[%s229 + $0x210] sm:%s221] %v494
                %v496 = vld [vmem:[%s228 + $0x428] sm:%s221]
                %497 = vst [vmem:[%s229 + $0x214] sm:%s221] %v496
                %v498 = vld [vmem:[%s228 + $0x430] sm:%s221]
                %499 = vst [vmem:[%s229 + $0x218] sm:%s221] %v498
                %v500 = vld [vmem:[%s228 + $0x438] sm:%s221]
                %501 = vst [vmem:[%s229 + $0x21c] sm:%s221] %v500
                %v502 = vld [vmem:[%s228 + $0x440] sm:%s221]
                %503 = vst [vmem:[%s229 + $0x220] sm:%s221] %v502
                %v504 = vld [vmem:[%s228 + $0x448] sm:%s221]
                %505 = vst [vmem:[%s229 + $0x224] sm:%s221] %v504
                %v506 = vld [vmem:[%s228 + $0x450] sm:%s221]
                %507 = vst [vmem:[%s229 + $0x228] sm:%s221] %v506
                %v508 = vld [vmem:[%s228 + $0x458] sm:%s221]
                %509 = vst [vmem:[%s229 + $0x22c] sm:%s221] %v508
                %v510 = vld [vmem:[%s228 + $0x460] sm:%s221]
                %511 = vst [vmem:[%s229 + $0x230] sm:%s221] %v510
                %v512 = vld [vmem:[%s228 + $0x468] sm:%s221]
                %513 = vst [vmem:[%s229 + $0x234] sm:%s221] %v512
                %v514 = vld [vmem:[%s228 + $0x470] sm:%s221]
                %515 = vst [vmem:[%s229 + $0x238] sm:%s221] %v514
                %v516 = vld [vmem:[%s228 + $0x478] sm:%s221]
                %517 = vst [vmem:[%s229 + $0x23c] sm:%s221] %v516
                %v518 = vld [vmem:[%s228 + $0x480] sm:%s221]
                %519 = vst [vmem:[%s229 + $0x240] sm:%s221] %v518
                %v520 = vld [vmem:[%s228 + $0x488] sm:%s221]
                %521 = vst [vmem:[%s229 + $0x244] sm:%s221] %v520
                %v522 = vld [vmem:[%s228 + $0x490] sm:%s221]
                %523 = vst [vmem:[%s229 + $0x248] sm:%s221] %v522
                %v524 = vld [vmem:[%s228 + $0x498] sm:%s221]
                %525 = vst [vmem:[%s229 + $0x24c] sm:%s221] %v524
                %v526 = vld [vmem:[%s228 + $0x4a0] sm:%s221]
                %527 = vst [vmem:[%s229 + $0x250] sm:%s221] %v526
                %v528 = vld [vmem:[%s228 + $0x4a8] sm:%s221]
                %529 = vst [vmem:[%s229 + $0x254] sm:%s221] %v528
                %v530 = vld [vmem:[%s228 + $0x4b0] sm:%s221]
                %531 = vst [vmem:[%s229 + $0x258] sm:%s221] %v530
                %v532 = vld [vmem:[%s228 + $0x4b8] sm:%s221]
                %533 = vst [vmem:[%s229 + $0x25c] sm:%s221] %v532
                %v534 = vld [vmem:[%s228 + $0x4c0] sm:%s221]
                %535 = vst [vmem:[%s229 + $0x260] sm:%s221] %v534
                %v536 = vld [vmem:[%s228 + $0x4c8] sm:%s221]
                %537 = vst [vmem:[%s229 + $0x264] sm:%s221] %v536
                %v538 = vld [vmem:[%s228 + $0x4d0] sm:%s221]
                %539 = vst [vmem:[%s229 + $0x268] sm:%s221] %v538
                %v540 = vld [vmem:[%s228 + $0x4d8] sm:%s221]
                %541 = vst [vmem:[%s229 + $0x26c] sm:%s221] %v540
                %v542 = vld [vmem:[%s228 + $0x4e0] sm:%s221]
                %543 = vst [vmem:[%s229 + $0x270] sm:%s221] %v542
                %v544 = vld [vmem:[%s228 + $0x4e8] sm:%s221]
                %545 = vst [vmem:[%s229 + $0x274] sm:%s221] %v544
                %v546 = vld [vmem:[%s228 + $0x4f0] sm:%s221]
                %547 = vst [vmem:[%s229 + $0x278] sm:%s221] %v546
                %v548 = vld [vmem:[%s228 + $0x4f8] sm:%s221]
                %549 = vst [vmem:[%s229 + $0x27c] sm:%s221] %v548
                %v550 = vld [vmem:[%s228 + $0x500] sm:%s221]
                %551 = vst [vmem:[%s229 + $0x280] sm:%s221] %v550
                %v552 = vld [vmem:[%s228 + $0x508] sm:%s221]
                %553 = vst [vmem:[%s229 + $0x284] sm:%s221] %v552
                %v554 = vld [vmem:[%s228 + $0x510] sm:%s221]
                %555 = vst [vmem:[%s229 + $0x288] sm:%s221] %v554
                %v556 = vld [vmem:[%s228 + $0x518] sm:%s221]
                %557 = vst [vmem:[%s229 + $0x28c] sm:%s221] %v556
                %v558 = vld [vmem:[%s228 + $0x520] sm:%s221]
                %559 = vst [vmem:[%s229 + $0x290] sm:%s221] %v558
                %v560 = vld [vmem:[%s228 + $0x528] sm:%s221]
                %561 = vst [vmem:[%s229 + $0x294] sm:%s221] %v560
                %v562 = vld [vmem:[%s228 + $0x530] sm:%s221]
                %563 = vst [vmem:[%s229 + $0x298] sm:%s221] %v562
                %v564 = vld [vmem:[%s228 + $0x538] sm:%s221]
                %565 = vst [vmem:[%s229 + $0x29c] sm:%s221] %v564
                %v566 = vld [vmem:[%s228 + $0x540] sm:%s221]
                %567 = vst [vmem:[%s229 + $0x2a0] sm:%s221] %v566
                %v568 = vld [vmem:[%s228 + $0x548] sm:%s221]
                %569 = vst [vmem:[%s229 + $0x2a4] sm:%s221] %v568
                %v570 = vld [vmem:[%s228 + $0x550] sm:%s221]
                %571 = vst [vmem:[%s229 + $0x2a8] sm:%s221] %v570
                %v572 = vld [vmem:[%s228 + $0x558] sm:%s221]
                %573 = vst [vmem:[%s229 + $0x2ac] sm:%s221] %v572
                %v574 = vld [vmem:[%s228 + $0x560] sm:%s221]
                %575 = vst [vmem:[%s229 + $0x2b0] sm:%s221] %v574
                %v576 = vld [vmem:[%s228 + $0x568] sm:%s221]
                %577 = vst [vmem:[%s229 + $0x2b4] sm:%s221] %v576
                %v578 = vld [vmem:[%s228 + $0x570] sm:%s221]
                %579 = vst [vmem:[%s229 + $0x2b8] sm:%s221] %v578
                %v580 = vld [vmem:[%s228 + $0x578] sm:%s221]
                %581 = vst [vmem:[%s229 + $0x2bc] sm:%s221] %v580
                %v582 = vld [vmem:[%s228 + $0x580] sm:%s221]
                %583 = vst [vmem:[%s229 + $0x2c0] sm:%s221] %v582
                %v584 = vld [vmem:[%s228 + $0x588] sm:%s221]
                %585 = vst [vmem:[%s229 + $0x2c4] sm:%s221] %v584
                %v586 = vld [vmem:[%s228 + $0x590] sm:%s221]
                %587 = vst [vmem:[%s229 + $0x2c8] sm:%s221] %v586
                %v588 = vld [vmem:[%s228 + $0x598] sm:%s221]
                %589 = vst [vmem:[%s229 + $0x2cc] sm:%s221] %v588
                %v590 = vld [vmem:[%s228 + $0x5a0] sm:%s221]
                %591 = vst [vmem:[%s229 + $0x2d0] sm:%s221] %v590
                %v592 = vld [vmem:[%s228 + $0x5a8] sm:%s221]
                %593 = vst [vmem:[%s229 + $0x2d4] sm:%s221] %v592
                %v594 = vld [vmem:[%s228 + $0x5b0] sm:%s221]
                %595 = vst [vmem:[%s229 + $0x2d8] sm:%s221] %v594
                %v596 = vld [vmem:[%s228 + $0x5b8] sm:%s221]
                %597 = vst [vmem:[%s229 + $0x2dc] sm:%s221] %v596
                %v598 = vld [vmem:[%s228 + $0x5c0] sm:%s221]
                %599 = vst [vmem:[%s229 + $0x2e0] sm:%s221] %v598
                %v600 = vld [vmem:[%s228 + $0x5c8] sm:%s221]
                %601 = vst [vmem:[%s229 + $0x2e4] sm:%s221] %v600
                %v602 = vld [vmem:[%s228 + $0x5d0] sm:%s221]
                %603 = vst [vmem:[%s229 + $0x2e8] sm:%s221] %v602
                %v604 = vld [vmem:[%s228 + $0x5d8] sm:%s221]
                %605 = vst [vmem:[%s229 + $0x2ec] sm:%s221] %v604
                %v606 = vld [vmem:[%s228 + $0x5e0] sm:%s221]
                %607 = vst [vmem:[%s229 + $0x2f0] sm:%s221] %v606
                %v608 = vld [vmem:[%s228 + $0x5e8] sm:%s221]
                %609 = vst [vmem:[%s229 + $0x2f4] sm:%s221] %v608
                %v610 = vld [vmem:[%s228 + $0x5f0] sm:%s221]
                %611 = vst [vmem:[%s229 + $0x2f8] sm:%s221] %v610
                %v612 = vld [vmem:[%s228 + $0x5f8] sm:%s221]
                %613 = vst [vmem:[%s229 + $0x2fc] sm:%s221] %v612
                %v614 = vld [vmem:[%s228 + $0x600] sm:%s221]
                %615 = vst [vmem:[%s229 + $0x300] sm:%s221] %v614
                %v616 = vld [vmem:[%s228 + $0x608] sm:%s221]
                %617 = vst [vmem:[%s229 + $0x304] sm:%s221] %v616
                %v618 = vld [vmem:[%s228 + $0x610] sm:%s221]
                %619 = vst [vmem:[%s229 + $0x308] sm:%s221] %v618
                %v620 = vld [vmem:[%s228 + $0x618] sm:%s221]
                %621 = vst [vmem:[%s229 + $0x30c] sm:%s221] %v620
                %v622 = vld [vmem:[%s228 + $0x620] sm:%s221]
                %623 = vst [vmem:[%s229 + $0x310] sm:%s221] %v622
                %v624 = vld [vmem:[%s228 + $0x628] sm:%s221]
                %625 = vst [vmem:[%s229 + $0x314] sm:%s221] %v624
                %v626 = vld [vmem:[%s228 + $0x630] sm:%s221]
                %627 = vst [vmem:[%s229 + $0x318] sm:%s221] %v626
                %v628 = vld [vmem:[%s228 + $0x638] sm:%s221]
                %629 = vst [vmem:[%s229 + $0x31c] sm:%s221] %v628
                %v630 = vld [vmem:[%s228 + $0x640] sm:%s221]
                %631 = vst [vmem:[%s229 + $0x320] sm:%s221] %v630
                %v632 = vld [vmem:[%s228 + $0x648] sm:%s221]
                %633 = vst [vmem:[%s229 + $0x324] sm:%s221] %v632
                %v634 = vld [vmem:[%s228 + $0x650] sm:%s221]
                %635 = vst [vmem:[%s229 + $0x328] sm:%s221] %v634
                %v636 = vld [vmem:[%s228 + $0x658] sm:%s221]
                %637 = vst [vmem:[%s229 + $0x32c] sm:%s221] %v636
                %v638 = vld [vmem:[%s228 + $0x660] sm:%s221]
                %639 = vst [vmem:[%s229 + $0x330] sm:%s221] %v638
                %v640 = vld [vmem:[%s228 + $0x668] sm:%s221]
                %641 = vst [vmem:[%s229 + $0x334] sm:%s221] %v640
                %v642 = vld [vmem:[%s228 + $0x670] sm:%s221]
                %643 = vst [vmem:[%s229 + $0x338] sm:%s221] %v642
                %v644 = vld [vmem:[%s228 + $0x678] sm:%s221]
                %645 = vst [vmem:[%s229 + $0x33c] sm:%s221] %v644
                %v646 = vld [vmem:[%s228 + $0x680] sm:%s221]
                %647 = vst [vmem:[%s229 + $0x340] sm:%s221] %v646
                %v648 = vld [vmem:[%s228 + $0x688] sm:%s221]
                %649 = vst [vmem:[%s229 + $0x344] sm:%s221] %v648
                %v650 = vld [vmem:[%s228 + $0x690] sm:%s221]
                %651 = vst [vmem:[%s229 + $0x348] sm:%s221] %v650
                %v652 = vld [vmem:[%s228 + $0x698] sm:%s221]
                %653 = vst [vmem:[%s229 + $0x34c] sm:%s221] %v652
                %v654 = vld [vmem:[%s228 + $0x6a0] sm:%s221]
                %655 = vst [vmem:[%s229 + $0x350] sm:%s221] %v654
                %v656 = vld [vmem:[%s228 + $0x6a8] sm:%s221]
                %657 = vst [vmem:[%s229 + $0x354] sm:%s221] %v656
                %v658 = vld [vmem:[%s228 + $0x6b0] sm:%s221]
                %659 = vst [vmem:[%s229 + $0x358] sm:%s221] %v658
                %v660 = vld [vmem:[%s228 + $0x6b8] sm:%s221]
                %661 = vst [vmem:[%s229 + $0x35c] sm:%s221] %v660
                %v662 = vld [vmem:[%s228 + $0x6c0] sm:%s221]
                %663 = vst [vmem:[%s229 + $0x360] sm:%s221] %v662
                %v664 = vld [vmem:[%s228 + $0x6c8] sm:%s221]
                %665 = vst [vmem:[%s229 + $0x364] sm:%s221] %v664
                %v666 = vld [vmem:[%s228 + $0x6d0] sm:%s221]
                %667 = vst [vmem:[%s229 + $0x368] sm:%s221] %v666
                %v668 = vld [vmem:[%s228 + $0x6d8] sm:%s221]
                %669 = vst [vmem:[%s229 + $0x36c] sm:%s221] %v668
                %v670 = vld [vmem:[%s228 + $0x6e0] sm:%s221]
                %671 = vst [vmem:[%s229 + $0x370] sm:%s221] %v670
                %v672 = vld [vmem:[%s228 + $0x6e8] sm:%s221]
                %673 = vst [vmem:[%s229 + $0x374] sm:%s221] %v672
                %v674 = vld [vmem:[%s228 + $0x6f0] sm:%s221]
                %675 = vst [vmem:[%s229 + $0x378] sm:%s221] %v674
                %v676 = vld [vmem:[%s228 + $0x6f8] sm:%s221]
                %677 = vst [vmem:[%s229 + $0x37c] sm:%s221] %v676
                %v678 = vld [vmem:[%s228 + $0x700] sm:%s221]
                %679 = vst [vmem:[%s229 + $0x380] sm:%s221] %v678
                %v680 = vld [vmem:[%s228 + $0x708] sm:%s221]
                %681 = vst [vmem:[%s229 + $0x384] sm:%s221] %v680
                %v682 = vld [vmem:[%s228 + $0x710] sm:%s221]
                %683 = vst [vmem:[%s229 + $0x388] sm:%s221] %v682
                %v684 = vld [vmem:[%s228 + $0x718] sm:%s221]
                %685 = vst [vmem:[%s229 + $0x38c] sm:%s221] %v684
                %v686 = vld [vmem:[%s228 + $0x720] sm:%s221]
                %687 = vst [vmem:[%s229 + $0x390] sm:%s221] %v686
                %v688 = vld [vmem:[%s228 + $0x728] sm:%s221]
                %689 = vst [vmem:[%s229 + $0x394] sm:%s221] %v688
                %v690 = vld [vmem:[%s228 + $0x730] sm:%s221]
                %691 = vst [vmem:[%s229 + $0x398] sm:%s221] %v690
                %v692 = vld [vmem:[%s228 + $0x738] sm:%s221]
                %693 = vst [vmem:[%s229 + $0x39c] sm:%s221] %v692
                %v694 = vld [vmem:[%s228 + $0x740] sm:%s221]
                %695 = vst [vmem:[%s229 + $0x3a0] sm:%s221] %v694
                %v696 = vld [vmem:[%s228 + $0x748] sm:%s221]
                %697 = vst [vmem:[%s229 + $0x3a4] sm:%s221] %v696
                %v698 = vld [vmem:[%s228 + $0x750] sm:%s221]
                %699 = vst [vmem:[%s229 + $0x3a8] sm:%s221] %v698
                %v700 = vld [vmem:[%s228 + $0x758] sm:%s221]
                %701 = vst [vmem:[%s229 + $0x3ac] sm:%s221] %v700
                %v702 = vld [vmem:[%s228 + $0x760] sm:%s221]
                %703 = vst [vmem:[%s229 + $0x3b0] sm:%s221] %v702
                %v704 = vld [vmem:[%s228 + $0x768] sm:%s221]
                %705 = vst [vmem:[%s229 + $0x3b4] sm:%s221] %v704
                %v706 = vld [vmem:[%s228 + $0x770] sm:%s221]
                %707 = vst [vmem:[%s229 + $0x3b8] sm:%s221] %v706
                %v708 = vld [vmem:[%s228 + $0x778] sm:%s221]
                %709 = vst [vmem:[%s229 + $0x3bc] sm:%s221] %v708
                %v710 = vld [vmem:[%s228 + $0x780] sm:%s221]
                %711 = vst [vmem:[%s229 + $0x3c0] sm:%s221] %v710
                %v712 = vld [vmem:[%s228 + $0x788] sm:%s221]
                %713 = vst [vmem:[%s229 + $0x3c4] sm:%s221] %v712
                %v714 = vld [vmem:[%s228 + $0x790] sm:%s221]
                %715 = vst [vmem:[%s229 + $0x3c8] sm:%s221] %v714
                %v716 = vld [vmem:[%s228 + $0x798] sm:%s221]
                %717 = vst [vmem:[%s229 + $0x3cc] sm:%s221] %v716
                %v718 = vld [vmem:[%s228 + $0x7a0] sm:%s221]
                %719 = vst [vmem:[%s229 + $0x3d0] sm:%s221] %v718
                %v720 = vld [vmem:[%s228 + $0x7a8] sm:%s221]
                %721 = vst [vmem:[%s229 + $0x3d4] sm:%s221] %v720
                %v722 = vld [vmem:[%s228 + $0x7b0] sm:%s221]
                %723 = vst [vmem:[%s229 + $0x3d8] sm:%s221] %v722
                %v724 = vld [vmem:[%s228 + $0x7b8] sm:%s221]
                %725 = vst [vmem:[%s229 + $0x3dc] sm:%s221] %v724
                %v726 = vld [vmem:[%s228 + $0x7c0] sm:%s221]
                %727 = vst [vmem:[%s229 + $0x3e0] sm:%s221] %v726
                %v728 = vld [vmem:[%s228 + $0x7c8] sm:%s221]
                %729 = vst [vmem:[%s229 + $0x3e4] sm:%s221] %v728
              $region53: #{decoder_forward.3} parent=47 // loop_footer
                %s227 = sadd.s32 1, %s223
              $region54: #{decoder_forward.3} parent=47 // loop_footer_branch
                %222 = sbr.rel target = $region50
              $region55: #{decoder_forward.3} parent=47 // loop_exit
                _
            $region48: #{decoder_forward.3} parent=39 // pred_fallthru
              _
          $region40: #{decoder_forward.3} parent=35 // pred_fallthru
            _
          %1250 = vnop
        $region36: #{decoder_forward.3} parent=31 // pred_fallthru
          _
        // Predicated region
        $region74: #{decoder_forward.3} parent=31 // pred_check
          %p1251 = pneg %p142
        $region75: #{decoder_forward.3} parent=31 // pred_check_branch
          %1253 = sbr.rel (%p1251) target = $region77
        $region76: #{decoder_forward.3} parent=31 // pred_region
          %p1254 = scmp.lt.s32.totalorder %s12, 1
          %s1255 = scalar_select %p1254, %s12, 1
          %s1256 = scalar_lea.vmem %s5, %s1255
        $region77: #{decoder_forward.3} parent=31 // pred_fallthru
          _
      $region32: #{decoder_forward.3} parent=5 // pred_fallthru
        _
      %p1257 = scmp.le.s32.totalorder 1, %s12
      %p1258 = scmp.lt.s32.totalorder %s12, 3
      %p1259 = pnand %p1257, %p1258
      %p1260 = pneg %p1259
      // Predicated region
      $region78: #{decoder_forward.3} parent=5 // pred_check
        _
      $region79: #{decoder_forward.3} parent=5 // pred_check_branch
        %1262 = sbr.rel (%p1259) target = $region81
      $region80: #{decoder_forward.3} parent=5 // pred_region
        %s1263 = ssub.s32 %s12, 1
        %s1264 = sand.u32 %s109, 1
        %s1265 = sand.u32 %s109, 1
        %s1266 = smul.addr %s1265, 1000
        %s1267 = scalar_lea.vmem [#allocation2], %s1266
        // Predicated region
        $region82: #{decoder_forward.3} parent=80 // pred_check
          %p1268 = pneg %p122
        $region83: #{decoder_forward.3} parent=80 // pred_check_branch
          %1270 = sbr.rel (%p1268) target = $region85
        $region84: #{decoder_forward.3} parent=80 // pred_region
          _
        $region85: #{decoder_forward.3} parent=80 // pred_fallthru
          _
        %p1271 = pneg %p33
        %p1272 = pneg %p30
        %p1273 = pneg %p54
        %p1274 = pneg %p51
        %p1275 = pneg %p75
        %p1276 = pneg %p72
        %p1277 = pneg %p96
        %p1278 = pneg %p93
        %s1279 = sand.u32 %s109, 1
        %s1280 = sand.u32 %s109, 1
        %s1281 = smul.addr %s1280, 1000
        %s1282 = scalar_lea.vmem [#allocation2], %s1281
        %p1283 = pneg %p122
        %p1284 = pneg %p119
        %p1285 = scmp.lt.s32.totalorder %s17, 1
        %s1286 = scalar_select %p1285, %s17, 1
        %s1287 = scalar_lea.vmem %s5, %s1286
        %p1288 = pneg %p148
        %p1289 = pneg %p145
        %p1290 = pneg %p174
        %p1291 = pneg %p171
        %s1292 = sand.u32 %s161, 1
        %s1293 = sand.u32 %s161, 1
        %s1294 = smul.addr %s1293, 16
        %s1295 = scalar_lea.vmem [#allocation3], %s1294
        %p1296 = scmp.lt.s32.totalorder %s17, 1
        %s1297 = scalar_select %p1296, %s17, 1
        %s1298 = scalar_lea.vmem %s5, %s1297
        %v1300 = vld [vmem:[%s0] sm:$0xff]
        %v1301 = vld [vmem:[%s0 + $0x8] sm:$0xff]
        %v1302 = vld [vmem:[%s0 + $0x10] sm:$0xff]
        %v1303 = vld [vmem:[%s0 + $0x18] sm:$0xff]
        %v1304 = vpack.c.bf16 %v1302, %v1300
        %v1305 = vpack.c.bf16 %v1303, %v1301
        %v1306 = vld [vmem:[%s1] sm:$0xff]
        %v1307 = vld [vmem:[%s1 + $0x8] sm:$0xff]
        %v1308 = vld [vmem:[%s1 + $0x10] sm:$0xff]
        %v1309 = vld [vmem:[%s1 + $0x18] sm:$0xff]
        %v1310 = vld [vmem:[%s1 + $0x20] sm:$0xff]
        %v1311 = vld [vmem:[%s1 + $0x28] sm:$0xff]
        %v1312 = vld [vmem:[%s1 + $0x30] sm:$0xff]
        %v1313 = vld [vmem:[%s1 + $0x38] sm:$0xff]
        %v1314 = vld [vmem:[%s1 + $0x40] sm:$0xff]
        %v1315 = vld [vmem:[%s1 + $0x48] sm:$0xff]
        %v1316 = vld [vmem:[%s1 + $0x50] sm:$0xff]
        %v1317 = vld [vmem:[%s1 + $0x58] sm:$0xff]
        %v1318 = vld [vmem:[%s1 + $0x60] sm:$0xff]
        %v1319 = vld [vmem:[%s1 + $0x68] sm:$0xff]
        %v1320 = vld [vmem:[%s1 + $0x70] sm:$0xff]
        %v1321 = vld [vmem:[%s1 + $0x78] sm:$0xff]
        %v1322 = vld [vmem:[%s1 + $0x80] sm:$0xff]
        %v1323 = vld [vmem:[%s1 + $0x88] sm:$0xff]
        %v1324 = vld [vmem:[%s1 + $0x90] sm:$0xff]
        %v1325 = vld [vmem:[%s1 + $0x98] sm:$0xff]
        %v1326 = vld [vmem:[%s1 + $0xa0] sm:$0xff]
        %v1327 = vld [vmem:[%s1 + $0xa8] sm:$0xff]
        %v1328 = vld [vmem:[%s1 + $0xb0] sm:$0xff]
        %v1329 = vld [vmem:[%s1 + $0xb8] sm:$0xff]
        %v1330 = vld [vmem:[%s1 + $0xc0] sm:$0xff]
        %v1331 = vld [vmem:[%s1 + $0xc8] sm:$0xff]
        %v1332 = vld [vmem:[%s1 + $0xd0] sm:$0xff]
        %v1333 = vld [vmem:[%s1 + $0xd8] sm:$0xff]
        %v1334 = vld [vmem:[%s1 + $0xe0] sm:$0xff]
        %v1335 = vld [vmem:[%s1 + $0xe8] sm:$0xff]
        %v1336 = vld [vmem:[%s1 + $0xf0] sm:$0xff]
        %v1337 = vld [vmem:[%s1 + $0xf8] sm:$0xff]
        %v1338 = vld [vmem:[%s1 + $0x100] sm:$0xff]
        %v1339 = vld [vmem:[%s1 + $0x108] sm:$0xff]
        %v1340 = vld [vmem:[%s1 + $0x110] sm:$0xff]
        %v1341 = vld [vmem:[%s1 + $0x118] sm:$0xff]
        %v1342 = vld [vmem:[%s1 + $0x120] sm:$0xff]
        %v1343 = vld [vmem:[%s1 + $0x128] sm:$0xff]
        %v1344 = vld [vmem:[%s1 + $0x130] sm:$0xff]
        %v1345 = vld [vmem:[%s1 + $0x138] sm:$0xff]
        %v1346 = vld [vmem:[%s1 + $0x140] sm:$0xff]
        %v1347 = vld [vmem:[%s1 + $0x148] sm:$0xff]
        %v1348 = vld [vmem:[%s1 + $0x150] sm:$0xff]
        %v1349 = vld [vmem:[%s1 + $0x158] sm:$0xff]
        %v1350 = vld [vmem:[%s1 + $0x160] sm:$0xff]
        %v1351 = vld [vmem:[%s1 + $0x168] sm:$0xff]
        %v1352 = vld [vmem:[%s1 + $0x170] sm:$0xff]
        %v1353 = vld [vmem:[%s1 + $0x178] sm:$0xff]
        %v1354 = vld [vmem:[%s1 + $0x180] sm:$0xff]
        %v1355 = vld [vmem:[%s1 + $0x188] sm:$0xff]
        %v1356 = vld [vmem:[%s1 + $0x190] sm:$0xff]
        %v1357 = vld [vmem:[%s1 + $0x198] sm:$0xff]
        %v1358 = vld [vmem:[%s1 + $0x1a0] sm:$0xff]
        %v1359 = vld [vmem:[%s1 + $0x1a8] sm:$0xff]
        %v1360 = vld [vmem:[%s1 + $0x1b0] sm:$0xff]
        %v1361 = vld [vmem:[%s1 + $0x1b8] sm:$0xff]
        %v1362 = vld [vmem:[%s1 + $0x1c0] sm:$0xff]
        %v1363 = vld [vmem:[%s1 + $0x1c8] sm:$0xff]
        %v1364 = vld [vmem:[%s1 + $0x1d0] sm:$0xff]
        %v1365 = vld [vmem:[%s1 + $0x1d8] sm:$0xff]
        %v1366 = vld [vmem:[%s1 + $0x1e0] sm:$0xff]
        %v1367 = vld [vmem:[%s1 + $0x1e8] sm:$0xff]
        %v1368 = vld [vmem:[%s1 + $0x1f0] sm:$0xff]
        %v1369 = vld [vmem:[%s1 + $0x1f8] sm:$0xff]
        %v1370 = vld [vmem:[%s1 + $0x200] sm:$0xff]
        %v1371 = vld [vmem:[%s1 + $0x208] sm:$0xff]
        %v1372 = vld [vmem:[%s1 + $0x210] sm:$0xff]
        %v1373 = vld [vmem:[%s1 + $0x218] sm:$0xff]
        %v1374 = vld [vmem:[%s1 + $0x220] sm:$0xff]
        %v1375 = vld [vmem:[%s1 + $0x228] sm:$0xff]
        %v1376 = vld [vmem:[%s1 + $0x230] sm:$0xff]
        %v1377 = vld [vmem:[%s1 + $0x238] sm:$0xff]
        %v1378 = vld [vmem:[%s1 + $0x240] sm:$0xff]
        %v1379 = vld [vmem:[%s1 + $0x248] sm:$0xff]
        %v1380 = vld [vmem:[%s1 + $0x250] sm:$0xff]
        %v1381 = vld [vmem:[%s1 + $0x258] sm:$0xff]
        %v1382 = vld [vmem:[%s1 + $0x260] sm:$0xff]
        %v1383 = vld [vmem:[%s1 + $0x268] sm:$0xff]
        %v1384 = vld [vmem:[%s1 + $0x270] sm:$0xff]
        %v1385 = vld [vmem:[%s1 + $0x278] sm:$0xff]
        %v1386 = vld [vmem:[%s1 + $0x280] sm:$0xff]
        %v1387 = vld [vmem:[%s1 + $0x288] sm:$0xff]
        %v1388 = vld [vmem:[%s1 + $0x290] sm:$0xff]
        %v1389 = vld [vmem:[%s1 + $0x298] sm:$0xff]
        %v1390 = vld [vmem:[%s1 + $0x2a0] sm:$0xff]
        %v1391 = vld [vmem:[%s1 + $0x2a8] sm:$0xff]
        %v1392 = vld [vmem:[%s1 + $0x2b0] sm:$0xff]
        %v1393 = vld [vmem:[%s1 + $0x2b8] sm:$0xff]
        %v1394 = vld [vmem:[%s1 + $0x2c0] sm:$0xff]
        %v1395 = vld [vmem:[%s1 + $0x2c8] sm:$0xff]
        %v1396 = vld [vmem:[%s1 + $0x2d0] sm:$0xff]
        %v1397 = vld [vmem:[%s1 + $0x2d8] sm:$0xff]
        %v1398 = vld [vmem:[%s1 + $0x2e0] sm:$0xff]
        %v1399 = vld [vmem:[%s1 + $0x2e8] sm:$0xff]
        %v1400 = vld [vmem:[%s1 + $0x2f0] sm:$0xff]
        %v1401 = vld [vmem:[%s1 + $0x2f8] sm:$0xff]
        %v1402 = vld [vmem:[%s1 + $0x300] sm:$0xff]
        %v1403 = vld [vmem:[%s1 + $0x308] sm:$0xff]
        %v1404 = vld [vmem:[%s1 + $0x310] sm:$0xff]
        %v1405 = vld [vmem:[%s1 + $0x318] sm:$0xff]
        %v1406 = vld [vmem:[%s1 + $0x320] sm:$0xff]
        %v1407 = vld [vmem:[%s1 + $0x328] sm:$0xff]
        %v1408 = vld [vmem:[%s1 + $0x330] sm:$0xff]
        %v1409 = vld [vmem:[%s1 + $0x338] sm:$0xff]
        %v1410 = vld [vmem:[%s1 + $0x340] sm:$0xff]
        %v1411 = vld [vmem:[%s1 + $0x348] sm:$0xff]
        %v1412 = vld [vmem:[%s1 + $0x350] sm:$0xff]
        %v1413 = vld [vmem:[%s1 + $0x358] sm:$0xff]
        %v1414 = vld [vmem:[%s1 + $0x360] sm:$0xff]
        %v1415 = vld [vmem:[%s1 + $0x368] sm:$0xff]
        %v1416 = vld [vmem:[%s1 + $0x370] sm:$0xff]
        %v1417 = vld [vmem:[%s1 + $0x378] sm:$0xff]
        %v1418 = vld [vmem:[%s1 + $0x380] sm:$0xff]
        %v1419 = vld [vmem:[%s1 + $0x388] sm:$0xff]
        %v1420 = vld [vmem:[%s1 + $0x390] sm:$0xff]
        %v1421 = vld [vmem:[%s1 + $0x398] sm:$0xff]
        %v1422 = vld [vmem:[%s1 + $0x3a0] sm:$0xff]
        %v1423 = vld [vmem:[%s1 + $0x3a8] sm:$0xff]
        %v1424 = vld [vmem:[%s1 + $0x3b0] sm:$0xff]
        %v1425 = vld [vmem:[%s1 + $0x3b8] sm:$0xff]
        %v1426 = vld [vmem:[%s1 + $0x3c0] sm:$0xff]
        %v1427 = vld [vmem:[%s1 + $0x3c8] sm:$0xff]
        %v1428 = vld [vmem:[%s1 + $0x3d0] sm:$0xff]
        %v1429 = vld [vmem:[%s1 + $0x3d8] sm:$0xff]
        %v1430 = vld [vmem:[%s1 + $0x3e0] sm:$0xff]
        %v1431 = vld [vmem:[%s1 + $0x3e8] sm:$0xff]
        %v1432 = vld [vmem:[%s1 + $0x3f0] sm:$0xff]
        %v1433 = vld [vmem:[%s1 + $0x3f8] sm:$0xff]
        %v1434 = vld [vmem:[%s1 + $0x400] sm:$0xff]
        %v1435 = vld [vmem:[%s1 + $0x408] sm:$0xff]
        %v1436 = vld [vmem:[%s1 + $0x410] sm:$0xff]
        %v1437 = vld [vmem:[%s1 + $0x418] sm:$0xff]
        %v1438 = vld [vmem:[%s1 + $0x420] sm:$0xff]
        %v1439 = vld [vmem:[%s1 + $0x428] sm:$0xff]
        %v1440 = vld [vmem:[%s1 + $0x430] sm:$0xff]
        %v1441 = vld [vmem:[%s1 + $0x438] sm:$0xff]
        %v1442 = vld [vmem:[%s1 + $0x440] sm:$0xff]
        %v1443 = vld [vmem:[%s1 + $0x448] sm:$0xff]
        %v1444 = vld [vmem:[%s1 + $0x450] sm:$0xff]
        %v1445 = vld [vmem:[%s1 + $0x458] sm:$0xff]
        %v1446 = vld [vmem:[%s1 + $0x460] sm:$0xff]
        %v1447 = vld [vmem:[%s1 + $0x468] sm:$0xff]
        %v1448 = vld [vmem:[%s1 + $0x470] sm:$0xff]
        %v1449 = vld [vmem:[%s1 + $0x478] sm:$0xff]
        %v1450 = vld [vmem:[%s1 + $0x480] sm:$0xff]
        %v1451 = vld [vmem:[%s1 + $0x488] sm:$0xff]
        %v1452 = vld [vmem:[%s1 + $0x490] sm:$0xff]
        %v1453 = vld [vmem:[%s1 + $0x498] sm:$0xff]
        %v1454 = vld [vmem:[%s1 + $0x4a0] sm:$0xff]
        %v1455 = vld [vmem:[%s1 + $0x4a8] sm:$0xff]
        %v1456 = vld [vmem:[%s1 + $0x4b0] sm:$0xff]
        %v1457 = vld [vmem:[%s1 + $0x4b8] sm:$0xff]
        %v1458 = vld [vmem:[%s1 + $0x4c0] sm:$0xff]
        %v1459 = vld [vmem:[%s1 + $0x4c8] sm:$0xff]
        %v1460 = vld [vmem:[%s1 + $0x4d0] sm:$0xff]
        %v1461 = vld [vmem:[%s1 + $0x4d8] sm:$0xff]
        %v1462 = vld [vmem:[%s1 + $0x4e0] sm:$0xff]
        %v1463 = vld [vmem:[%s1 + $0x4e8] sm:$0xff]
        %v1464 = vld [vmem:[%s1 + $0x4f0] sm:$0xff]
        %v1465 = vld [vmem:[%s1 + $0x4f8] sm:$0xff]
        %v1466 = vld [vmem:[%s1 + $0x500] sm:$0xff]
        %v1467 = vld [vmem:[%s1 + $0x508] sm:$0xff]
        %v1468 = vld [vmem:[%s1 + $0x510] sm:$0xff]
        %v1469 = vld [vmem:[%s1 + $0x518] sm:$0xff]
        %v1470 = vld [vmem:[%s1 + $0x520] sm:$0xff]
        %v1471 = vld [vmem:[%s1 + $0x528] sm:$0xff]
        %v1472 = vld [vmem:[%s1 + $0x530] sm:$0xff]
        %v1473 = vld [vmem:[%s1 + $0x538] sm:$0xff]
        %v1474 = vld [vmem:[%s1 + $0x540] sm:$0xff]
        %v1475 = vld [vmem:[%s1 + $0x548] sm:$0xff]
        %v1476 = vld [vmem:[%s1 + $0x550] sm:$0xff]
        %v1477 = vld [vmem:[%s1 + $0x558] sm:$0xff]
        %v1478 = vld [vmem:[%s1 + $0x560] sm:$0xff]
        %v1479 = vld [vmem:[%s1 + $0x568] sm:$0xff]
        %v1480 = vld [vmem:[%s1 + $0x570] sm:$0xff]
        %v1481 = vld [vmem:[%s1 + $0x578] sm:$0xff]
        %v1482 = vld [vmem:[%s1 + $0x580] sm:$0xff]
        %v1483 = vld [vmem:[%s1 + $0x588] sm:$0xff]
        %v1484 = vld [vmem:[%s1 + $0x590] sm:$0xff]
        %v1485 = vld [vmem:[%s1 + $0x598] sm:$0xff]
        %v1486 = vld [vmem:[%s1 + $0x5a0] sm:$0xff]
        %v1487 = vld [vmem:[%s1 + $0x5a8] sm:$0xff]
        %v1488 = vld [vmem:[%s1 + $0x5b0] sm:$0xff]
        %v1489 = vld [vmem:[%s1 + $0x5b8] sm:$0xff]
        %v1490 = vld [vmem:[%s1 + $0x5c0] sm:$0xff]
        %v1491 = vld [vmem:[%s1 + $0x5c8] sm:$0xff]
        %v1492 = vld [vmem:[%s1 + $0x5d0] sm:$0xff]
        %v1493 = vld [vmem:[%s1 + $0x5d8] sm:$0xff]
        %v1494 = vld [vmem:[%s1 + $0x5e0] sm:$0xff]
        %v1495 = vld [vmem:[%s1 + $0x5e8] sm:$0xff]
        %v1496 = vld [vmem:[%s1 + $0x5f0] sm:$0xff]
        %v1497 = vld [vmem:[%s1 + $0x5f8] sm:$0xff]
        %v1498 = vld [vmem:[%s1 + $0x600] sm:$0xff]
        %v1499 = vld [vmem:[%s1 + $0x608] sm:$0xff]
        %v1500 = vld [vmem:[%s1 + $0x610] sm:$0xff]
        %v1501 = vld [vmem:[%s1 + $0x618] sm:$0xff]
        %v1502 = vld [vmem:[%s1 + $0x620] sm:$0xff]
        %v1503 = vld [vmem:[%s1 + $0x628] sm:$0xff]
        %v1504 = vld [vmem:[%s1 + $0x630] sm:$0xff]
        %v1505 = vld [vmem:[%s1 + $0x638] sm:$0xff]
        %v1706 = vunpack.c.l.b16 %v1306
        %v1707 = vunpack.c.h.b16 %v1306
        %v1708 = vunpack.c.l.b16 %v1307
        %v1709 = vunpack.c.h.b16 %v1307
        %v1710 = vunpack.c.l.b16 %v1308
        %v1711 = vunpack.c.h.b16 %v1308
        %v1712 = vunpack.c.l.b16 %v1309
        %v1713 = vunpack.c.h.b16 %v1309
        %v1714 = vunpack.c.l.b16 %v1310
        %v1715 = vunpack.c.h.b16 %v1310
        %v1716 = vunpack.c.l.b16 %v1311
        %v1717 = vunpack.c.h.b16 %v1311
        %v1718 = vunpack.c.l.b16 %v1312
        %v1719 = vunpack.c.h.b16 %v1312
        %v1720 = vunpack.c.l.b16 %v1313
        %v1721 = vunpack.c.h.b16 %v1313
        %v1722 = vunpack.c.l.b16 %v1314
        %v1723 = vunpack.c.h.b16 %v1314
        %v1724 = vunpack.c.l.b16 %v1315
        %v1725 = vunpack.c.h.b16 %v1315
        %v1726 = vunpack.c.l.b16 %v1316
        %v1727 = vunpack.c.h.b16 %v1316
        %v1728 = vunpack.c.l.b16 %v1317
        %v1729 = vunpack.c.h.b16 %v1317
        %v1730 = vunpack.c.l.b16 %v1318
        %v1731 = vunpack.c.h.b16 %v1318
        %v1732 = vunpack.c.l.b16 %v1319
        %v1733 = vunpack.c.h.b16 %v1319
        %v1734 = vunpack.c.l.b16 %v1320
        %v1735 = vunpack.c.h.b16 %v1320
        %v1736 = vunpack.c.l.b16 %v1321
        %v1737 = vunpack.c.h.b16 %v1321
        %v1738 = vunpack.c.l.b16 %v1322
        %v1739 = vunpack.c.h.b16 %v1322
        %v1740 = vunpack.c.l.b16 %v1323
        %v1741 = vunpack.c.h.b16 %v1323
        %v1742 = vunpack.c.l.b16 %v1324
        %v1743 = vunpack.c.h.b16 %v1324
        %v1744 = vunpack.c.l.b16 %v1325
        %v1745 = vunpack.c.h.b16 %v1325
        %v1746 = vunpack.c.l.b16 %v1326
        %v1747 = vunpack.c.h.b16 %v1326
        %v1748 = vunpack.c.l.b16 %v1327
        %v1749 = vunpack.c.h.b16 %v1327
        %v1750 = vunpack.c.l.b16 %v1328
        %v1751 = vunpack.c.h.b16 %v1328
        %v1752 = vunpack.c.l.b16 %v1329
        %v1753 = vunpack.c.h.b16 %v1329
        %v1754 = vunpack.c.l.b16 %v1330
        %v1755 = vunpack.c.h.b16 %v1330
        %v1756 = vunpack.c.l.b16 %v1331
        %v1757 = vunpack.c.h.b16 %v1331
        %v1758 = vunpack.c.l.b16 %v1332
        %v1759 = vunpack.c.h.b16 %v1332
        %v1760 = vunpack.c.l.b16 %v1333
        %v1761 = vunpack.c.h.b16 %v1333
        %v1762 = vunpack.c.l.b16 %v1334
        %v1763 = vunpack.c.h.b16 %v1334
        %v1764 = vunpack.c.l.b16 %v1335
        %v1765 = vunpack.c.h.b16 %v1335
        %v1766 = vunpack.c.l.b16 %v1336
        %v1767 = vunpack.c.h.b16 %v1336
        %v1768 = vunpack.c.l.b16 %v1337
        %v1769 = vunpack.c.h.b16 %v1337
        %v1770 = vunpack.c.l.b16 %v1338
        %v1771 = vunpack.c.h.b16 %v1338
        %v1772 = vunpack.c.l.b16 %v1339
        %v1773 = vunpack.c.h.b16 %v1339
        %v1774 = vunpack.c.l.b16 %v1340
        %v1775 = vunpack.c.h.b16 %v1340
        %v1776 = vunpack.c.l.b16 %v1341
        %v1777 = vunpack.c.h.b16 %v1341
        %v1778 = vunpack.c.l.b16 %v1342
        %v1779 = vunpack.c.h.b16 %v1342
        %v1780 = vunpack.c.l.b16 %v1343
        %v1781 = vunpack.c.h.b16 %v1343
        %v1782 = vunpack.c.l.b16 %v1344
        %v1783 = vunpack.c.h.b16 %v1344
        %v1784 = vunpack.c.l.b16 %v1345
        %v1785 = vunpack.c.h.b16 %v1345
        %v1786 = vunpack.c.l.b16 %v1346
        %v1787 = vunpack.c.h.b16 %v1346
        %v1788 = vunpack.c.l.b16 %v1347
        %v1789 = vunpack.c.h.b16 %v1347
        %v1790 = vunpack.c.l.b16 %v1348
        %v1791 = vunpack.c.h.b16 %v1348
        %v1792 = vunpack.c.l.b16 %v1349
        %v1793 = vunpack.c.h.b16 %v1349
        %v1794 = vunpack.c.l.b16 %v1350
        %v1795 = vunpack.c.h.b16 %v1350
        %v1796 = vunpack.c.l.b16 %v1351
        %v1797 = vunpack.c.h.b16 %v1351
        %v1798 = vunpack.c.l.b16 %v1352
        %v1799 = vunpack.c.h.b16 %v1352
        %v1800 = vunpack.c.l.b16 %v1353
        %v1801 = vunpack.c.h.b16 %v1353
        %v1802 = vunpack.c.l.b16 %v1354
        %v1803 = vunpack.c.h.b16 %v1354
        %v1804 = vunpack.c.l.b16 %v1355
        %v1805 = vunpack.c.h.b16 %v1355
        %v1806 = vunpack.c.l.b16 %v1356
        %v1807 = vunpack.c.h.b16 %v1356
        %v1808 = vunpack.c.l.b16 %v1357
        %v1809 = vunpack.c.h.b16 %v1357
        %v1810 = vunpack.c.l.b16 %v1358
        %v1811 = vunpack.c.h.b16 %v1358
        %v1812 = vunpack.c.l.b16 %v1359
        %v1813 = vunpack.c.h.b16 %v1359
        %v1814 = vunpack.c.l.b16 %v1360
        %v1815 = vunpack.c.h.b16 %v1360
        %v1816 = vunpack.c.l.b16 %v1361
        %v1817 = vunpack.c.h.b16 %v1361
        %v1818 = vunpack.c.l.b16 %v1362
        %v1819 = vunpack.c.h.b16 %v1362
        %v1820 = vunpack.c.l.b16 %v1363
        %v1821 = vunpack.c.h.b16 %v1363
        %v1822 = vunpack.c.l.b16 %v1364
        %v1823 = vunpack.c.h.b16 %v1364
        %v1824 = vunpack.c.l.b16 %v1365
        %v1825 = vunpack.c.h.b16 %v1365
        %v1826 = vunpack.c.l.b16 %v1366
        %v1827 = vunpack.c.h.b16 %v1366
        %v1828 = vunpack.c.l.b16 %v1367
        %v1829 = vunpack.c.h.b16 %v1367
        %v1830 = vunpack.c.l.b16 %v1368
        %v1831 = vunpack.c.h.b16 %v1368
        %v1832 = vunpack.c.l.b16 %v1369
        %v1833 = vunpack.c.h.b16 %v1369
        %v1834 = vunpack.c.l.b16 %v1370
        %v1835 = vunpack.c.h.b16 %v1370
        %v1836 = vunpack.c.l.b16 %v1371
        %v1837 = vunpack.c.h.b16 %v1371
        %v1838 = vunpack.c.l.b16 %v1372
        %v1839 = vunpack.c.h.b16 %v1372
        %v1840 = vunpack.c.l.b16 %v1373
        %v1841 = vunpack.c.h.b16 %v1373
        %v1842 = vunpack.c.l.b16 %v1374
        %v1843 = vunpack.c.h.b16 %v1374
        %v1844 = vunpack.c.l.b16 %v1375
        %v1845 = vunpack.c.h.b16 %v1375
        %v1846 = vunpack.c.l.b16 %v1376
        %v1847 = vunpack.c.h.b16 %v1376
        %v1848 = vunpack.c.l.b16 %v1377
        %v1849 = vunpack.c.h.b16 %v1377
        %v1850 = vunpack.c.l.b16 %v1378
        %v1851 = vunpack.c.h.b16 %v1378
        %v1852 = vunpack.c.l.b16 %v1379
        %v1853 = vunpack.c.h.b16 %v1379
        %v1854 = vunpack.c.l.b16 %v1380
        %v1855 = vunpack.c.h.b16 %v1380
        %v1856 = vunpack.c.l.b16 %v1381
        %v1857 = vunpack.c.h.b16 %v1381
        %v1858 = vunpack.c.l.b16 %v1382
        %v1859 = vunpack.c.h.b16 %v1382
        %v1860 = vunpack.c.l.b16 %v1383
        %v1861 = vunpack.c.h.b16 %v1383
        %v1862 = vunpack.c.l.b16 %v1384
        %v1863 = vunpack.c.h.b16 %v1384
        %v1864 = vunpack.c.l.b16 %v1385
        %v1865 = vunpack.c.h.b16 %v1385
        %v1866 = vunpack.c.l.b16 %v1386
        %v1867 = vunpack.c.h.b16 %v1386
        %v1868 = vunpack.c.l.b16 %v1387
        %v1869 = vunpack.c.h.b16 %v1387
        %v1870 = vunpack.c.l.b16 %v1388
        %v1871 = vunpack.c.h.b16 %v1388
        %v1872 = vunpack.c.l.b16 %v1389
        %v1873 = vunpack.c.h.b16 %v1389
        %v1874 = vunpack.c.l.b16 %v1390
        %v1875 = vunpack.c.h.b16 %v1390
        %v1876 = vunpack.c.l.b16 %v1391
        %v1877 = vunpack.c.h.b16 %v1391
        %v1878 = vunpack.c.l.b16 %v1392
        %v1879 = vunpack.c.h.b16 %v1392
        %v1880 = vunpack.c.l.b16 %v1393
        %v1881 = vunpack.c.h.b16 %v1393
        %v1882 = vunpack.c.l.b16 %v1394
        %v1883 = vunpack.c.h.b16 %v1394
        %v1884 = vunpack.c.l.b16 %v1395
        %v1885 = vunpack.c.h.b16 %v1395
        %v1886 = vunpack.c.l.b16 %v1396
        %v1887 = vunpack.c.h.b16 %v1396
        %v1888 = vunpack.c.l.b16 %v1397
        %v1889 = vunpack.c.h.b16 %v1397
        %v1890 = vunpack.c.l.b16 %v1398
        %v1891 = vunpack.c.h.b16 %v1398
        %v1892 = vunpack.c.l.b16 %v1399
        %v1893 = vunpack.c.h.b16 %v1399
        %v1894 = vunpack.c.l.b16 %v1400
        %v1895 = vunpack.c.h.b16 %v1400
        %v1896 = vunpack.c.l.b16 %v1401
        %v1897 = vunpack.c.h.b16 %v1401
        %v1898 = vunpack.c.l.b16 %v1402
        %v1899 = vunpack.c.h.b16 %v1402
        %v1900 = vunpack.c.l.b16 %v1403
        %v1901 = vunpack.c.h.b16 %v1403
        %v1902 = vunpack.c.l.b16 %v1404
        %v1903 = vunpack.c.h.b16 %v1404
        %v1904 = vunpack.c.l.b16 %v1405
        %v1905 = vunpack.c.h.b16 %v1405
        %v1906 = vunpack.c.l.b16 %v1406
        %v1907 = vunpack.c.h.b16 %v1406
        %v1908 = vunpack.c.l.b16 %v1407
        %v1909 = vunpack.c.h.b16 %v1407
        %v1910 = vunpack.c.l.b16 %v1408
        %v1911 = vunpack.c.h.b16 %v1408
        %v1912 = vunpack.c.l.b16 %v1409
        %v1913 = vunpack.c.h.b16 %v1409
        %v1914 = vunpack.c.l.b16 %v1410
        %v1915 = vunpack.c.h.b16 %v1410
        %v1916 = vunpack.c.l.b16 %v1411
        %v1917 = vunpack.c.h.b16 %v1411
        %v1918 = vunpack.c.l.b16 %v1412
        %v1919 = vunpack.c.h.b16 %v1412
        %v1920 = vunpack.c.l.b16 %v1413
        %v1921 = vunpack.c.h.b16 %v1413
        %v1922 = vunpack.c.l.b16 %v1414
        %v1923 = vunpack.c.h.b16 %v1414
        %v1924 = vunpack.c.l.b16 %v1415
        %v1925 = vunpack.c.h.b16 %v1415
        %v1926 = vunpack.c.l.b16 %v1416
        %v1927 = vunpack.c.h.b16 %v1416
        %v1928 = vunpack.c.l.b16 %v1417
        %v1929 = vunpack.c.h.b16 %v1417
        %v1930 = vunpack.c.l.b16 %v1418
        %v1931 = vunpack.c.h.b16 %v1418
        %v1932 = vunpack.c.l.b16 %v1419
        %v1933 = vunpack.c.h.b16 %v1419
        %v1934 = vunpack.c.l.b16 %v1420
        %v1935 = vunpack.c.h.b16 %v1420
        %v1936 = vunpack.c.l.b16 %v1421
        %v1937 = vunpack.c.h.b16 %v1421
        %v1938 = vunpack.c.l.b16 %v1422
        %v1939 = vunpack.c.h.b16 %v1422
        %v1940 = vunpack.c.l.b16 %v1423
        %v1941 = vunpack.c.h.b16 %v1423
        %v1942 = vunpack.c.l.b16 %v1424
        %v1943 = vunpack.c.h.b16 %v1424
        %v1944 = vunpack.c.l.b16 %v1425
        %v1945 = vunpack.c.h.b16 %v1425
        %v1946 = vunpack.c.l.b16 %v1426
        %v1947 = vunpack.c.h.b16 %v1426
        %v1948 = vunpack.c.l.b16 %v1427
        %v1949 = vunpack.c.h.b16 %v1427
        %v1950 = vunpack.c.l.b16 %v1428
        %v1951 = vunpack.c.h.b16 %v1428
        %v1952 = vunpack.c.l.b16 %v1429
        %v1953 = vunpack.c.h.b16 %v1429
        %v1954 = vunpack.c.l.b16 %v1430
        %v1955 = vunpack.c.h.b16 %v1430
        %v1956 = vunpack.c.l.b16 %v1431
        %v1957 = vunpack.c.h.b16 %v1431
        %v1958 = vunpack.c.l.b16 %v1432
        %v1959 = vunpack.c.h.b16 %v1432
        %v1960 = vunpack.c.l.b16 %v1433
        %v1961 = vunpack.c.h.b16 %v1433
        %v1962 = vunpack.c.l.b16 %v1434
        %v1963 = vunpack.c.h.b16 %v1434
        %v1964 = vunpack.c.l.b16 %v1435
        %v1965 = vunpack.c.h.b16 %v1435
        %v1966 = vunpack.c.l.b16 %v1436
        %v1967 = vunpack.c.h.b16 %v1436
        %v1968 = vunpack.c.l.b16 %v1437
        %v1969 = vunpack.c.h.b16 %v1437
        %v1970 = vunpack.c.l.b16 %v1438
        %v1971 = vunpack.c.h.b16 %v1438
        %v1972 = vunpack.c.l.b16 %v1439
        %v1973 = vunpack.c.h.b16 %v1439
        %v1974 = vunpack.c.l.b16 %v1440
        %v1975 = vunpack.c.h.b16 %v1440
        %v1976 = vunpack.c.l.b16 %v1441
        %v1977 = vunpack.c.h.b16 %v1441
        %v1978 = vunpack.c.l.b16 %v1442
        %v1979 = vunpack.c.h.b16 %v1442
        %v1980 = vunpack.c.l.b16 %v1443
        %v1981 = vunpack.c.h.b16 %v1443
        %v1982 = vunpack.c.l.b16 %v1444
        %v1983 = vunpack.c.h.b16 %v1444
        %v1984 = vunpack.c.l.b16 %v1445
        %v1985 = vunpack.c.h.b16 %v1445
        %v1986 = vunpack.c.l.b16 %v1446
        %v1987 = vunpack.c.h.b16 %v1446
        %v1988 = vunpack.c.l.b16 %v1447
        %v1989 = vunpack.c.h.b16 %v1447
        %v1990 = vunpack.c.l.b16 %v1448
        %v1991 = vunpack.c.h.b16 %v1448
        %v1992 = vunpack.c.l.b16 %v1449
        %v1993 = vunpack.c.h.b16 %v1449
        %v1994 = vunpack.c.l.b16 %v1450
        %v1995 = vunpack.c.h.b16 %v1450
        %v1996 = vunpack.c.l.b16 %v1451
        %v1997 = vunpack.c.h.b16 %v1451
        %v1998 = vunpack.c.l.b16 %v1452
        %v1999 = vunpack.c.h.b16 %v1452
        %v2000 = vunpack.c.l.b16 %v1453
        %v2001 = vunpack.c.h.b16 %v1453
        %v2002 = vunpack.c.l.b16 %v1454
        %v2003 = vunpack.c.h.b16 %v1454
        %v2004 = vunpack.c.l.b16 %v1455
        %v2005 = vunpack.c.h.b16 %v1455
        %v2006 = vunpack.c.l.b16 %v1456
        %v2007 = vunpack.c.h.b16 %v1456
        %v2008 = vunpack.c.l.b16 %v1457
        %v2009 = vunpack.c.h.b16 %v1457
        %v2010 = vunpack.c.l.b16 %v1458
        %v2011 = vunpack.c.h.b16 %v1458
        %v2012 = vunpack.c.l.b16 %v1459
        %v2013 = vunpack.c.h.b16 %v1459
        %v2014 = vunpack.c.l.b16 %v1460
        %v2015 = vunpack.c.h.b16 %v1460
        %v2016 = vunpack.c.l.b16 %v1461
        %v2017 = vunpack.c.h.b16 %v1461
        %v2018 = vunpack.c.l.b16 %v1462
        %v2019 = vunpack.c.h.b16 %v1462
        %v2020 = vunpack.c.l.b16 %v1463
        %v2021 = vunpack.c.h.b16 %v1463
        %v2022 = vunpack.c.l.b16 %v1464
        %v2023 = vunpack.c.h.b16 %v1464
        %v2024 = vunpack.c.l.b16 %v1465
        %v2025 = vunpack.c.h.b16 %v1465
        %v2026 = vunpack.c.l.b16 %v1466
        %v2027 = vunpack.c.h.b16 %v1466
        %v2028 = vunpack.c.l.b16 %v1467
        %v2029 = vunpack.c.h.b16 %v1467
        %v2030 = vunpack.c.l.b16 %v1468
        %v2031 = vunpack.c.h.b16 %v1468
        %v2032 = vunpack.c.l.b16 %v1469
        %v2033 = vunpack.c.h.b16 %v1469
        %v2034 = vunpack.c.l.b16 %v1470
        %v2035 = vunpack.c.h.b16 %v1470
        %v2036 = vunpack.c.l.b16 %v1471
        %v2037 = vunpack.c.h.b16 %v1471
        %v2038 = vunpack.c.l.b16 %v1472
        %v2039 = vunpack.c.h.b16 %v1472
        %v2040 = vunpack.c.l.b16 %v1473
        %v2041 = vunpack.c.h.b16 %v1473
        %v2042 = vunpack.c.l.b16 %v1474
        %v2043 = vunpack.c.h.b16 %v1474
        %v2044 = vunpack.c.l.b16 %v1475
        %v2045 = vunpack.c.h.b16 %v1475
        %v2046 = vunpack.c.l.b16 %v1476
        %v2047 = vunpack.c.h.b16 %v1476
        %v2048 = vunpack.c.l.b16 %v1477
        %v2049 = vunpack.c.h.b16 %v1477
        %v2050 = vunpack.c.l.b16 %v1478
        %v2051 = vunpack.c.h.b16 %v1478
        %v2052 = vunpack.c.l.b16 %v1479
        %v2053 = vunpack.c.h.b16 %v1479
        %v2054 = vunpack.c.l.b16 %v1480
        %v2055 = vunpack.c.h.b16 %v1480
        %v2056 = vunpack.c.l.b16 %v1481
        %v2057 = vunpack.c.h.b16 %v1481
        %v2058 = vunpack.c.l.b16 %v1482
        %v2059 = vunpack.c.h.b16 %v1482
        %v2060 = vunpack.c.l.b16 %v1483
        %v2061 = vunpack.c.h.b16 %v1483
        %v2062 = vunpack.c.l.b16 %v1484
        %v2063 = vunpack.c.h.b16 %v1484
        %v2064 = vunpack.c.l.b16 %v1485
        %v2065 = vunpack.c.h.b16 %v1485
        %v2066 = vunpack.c.l.b16 %v1486
        %v2067 = vunpack.c.h.b16 %v1486
        %v2068 = vunpack.c.l.b16 %v1487
        %v2069 = vunpack.c.h.b16 %v1487
        %v2070 = vunpack.c.l.b16 %v1488
        %v2071 = vunpack.c.h.b16 %v1488
        %v2072 = vunpack.c.l.b16 %v1489
        %v2073 = vunpack.c.h.b16 %v1489
        %v2074 = vunpack.c.l.b16 %v1490
        %v2075 = vunpack.c.h.b16 %v1490
        %v2076 = vunpack.c.l.b16 %v1491
        %v2077 = vunpack.c.h.b16 %v1491
        %v2078 = vunpack.c.l.b16 %v1492
        %v2079 = vunpack.c.h.b16 %v1492
        %v2080 = vunpack.c.l.b16 %v1493
        %v2081 = vunpack.c.h.b16 %v1493
        %v2082 = vunpack.c.l.b16 %v1494
        %v2083 = vunpack.c.h.b16 %v1494
        %v2084 = vunpack.c.l.b16 %v1495
        %v2085 = vunpack.c.h.b16 %v1495
        %v2086 = vunpack.c.l.b16 %v1496
        %v2087 = vunpack.c.h.b16 %v1496
        %v2088 = vunpack.c.l.b16 %v1497
        %v2089 = vunpack.c.h.b16 %v1497
        %v2090 = vunpack.c.l.b16 %v1498
        %v2091 = vunpack.c.h.b16 %v1498
        %v2092 = vunpack.c.l.b16 %v1499
        %v2093 = vunpack.c.h.b16 %v1499
        %v2094 = vunpack.c.l.b16 %v1500
        %v2095 = vunpack.c.h.b16 %v1500
        %v2096 = vunpack.c.l.b16 %v1501
        %v2097 = vunpack.c.h.b16 %v1501
        %v2098 = vunpack.c.l.b16 %v1502
        %v2099 = vunpack.c.h.b16 %v1502
        %v2100 = vunpack.c.l.b16 %v1503
        %v2101 = vunpack.c.h.b16 %v1503
        %v2102 = vunpack.c.l.b16 %v1504
        %v2103 = vunpack.c.h.b16 %v1504
        %v2104 = vunpack.c.l.b16 %v1505
        %v2105 = vunpack.c.h.b16 %v1505
        %v2106 = vpack.c.b16 %v1722, %v1706
        %v2107 = vpack.c.b16 %v1723, %v1707
        %v2108 = vpack.c.b16 %v1724, %v1708
        %v2109 = vpack.c.b16 %v1725, %v1709
        %v2110 = vpack.c.b16 %v1726, %v1710
        %v2111 = vpack.c.b16 %v1727, %v1711
        %v2112 = vpack.c.b16 %v1728, %v1712
        %v2113 = vpack.c.b16 %v1729, %v1713
        %v2114 = vpack.c.b16 %v1730, %v1714
        %v2115 = vpack.c.b16 %v1731, %v1715
        %v2116 = vpack.c.b16 %v1732, %v1716
        %v2117 = vpack.c.b16 %v1733, %v1717
        %v2118 = vpack.c.b16 %v1734, %v1718
        %v2119 = vpack.c.b16 %v1735, %v1719
        %v2120 = vpack.c.b16 %v1736, %v1720
        %v2121 = vpack.c.b16 %v1737, %v1721
        %v2122 = vpack.c.b16 %v1754, %v1738
        %v2123 = vpack.c.b16 %v1755, %v1739
        %v2124 = vpack.c.b16 %v1756, %v1740
        %v2125 = vpack.c.b16 %v1757, %v1741
        %v2126 = vpack.c.b16 %v1758, %v1742
        %v2127 = vpack.c.b16 %v1759, %v1743
        %v2128 = vpack.c.b16 %v1760, %v1744
        %v2129 = vpack.c.b16 %v1761, %v1745
        %v2130 = vpack.c.b16 %v1762, %v1746
        %v2131 = vpack.c.b16 %v1763, %v1747
        %v2132 = vpack.c.b16 %v1764, %v1748
        %v2133 = vpack.c.b16 %v1765, %v1749
        %v2134 = vpack.c.b16 %v1766, %v1750
        %v2135 = vpack.c.b16 %v1767, %v1751
        %v2136 = vpack.c.b16 %v1768, %v1752
        %v2137 = vpack.c.b16 %v1769, %v1753
        %v2138 = vpack.c.b16 %v1786, %v1770
        %v2139 = vpack.c.b16 %v1787, %v1771
        %v2140 = vpack.c.b16 %v1788, %v1772
        %v2141 = vpack.c.b16 %v1789, %v1773
        %v2142 = vpack.c.b16 %v1790, %v1774
        %v2143 = vpack.c.b16 %v1791, %v1775
        %v2144 = vpack.c.b16 %v1792, %v1776
        %v2145 = vpack.c.b16 %v1793, %v1777
        %v2146 = vpack.c.b16 %v1794, %v1778
        %v2147 = vpack.c.b16 %v1795, %v1779
        %v2148 = vpack.c.b16 %v1796, %v1780
        %v2149 = vpack.c.b16 %v1797, %v1781
        %v2150 = vpack.c.b16 %v1798, %v1782
        %v2151 = vpack.c.b16 %v1799, %v1783
        %v2152 = vpack.c.b16 %v1800, %v1784
        %v2153 = vpack.c.b16 %v1801, %v1785
        %v2154 = vpack.c.b16 %v1818, %v1802
        %v2155 = vpack.c.b16 %v1819, %v1803
        %v2156 = vpack.c.b16 %v1820, %v1804
        %v2157 = vpack.c.b16 %v1821, %v1805
        %v2158 = vpack.c.b16 %v1822, %v1806
        %v2159 = vpack.c.b16 %v1823, %v1807
        %v2160 = vpack.c.b16 %v1824, %v1808
        %v2161 = vpack.c.b16 %v1825, %v1809
        %v2162 = vpack.c.b16 %v1826, %v1810
        %v2163 = vpack.c.b16 %v1827, %v1811
        %v2164 = vpack.c.b16 %v1828, %v1812
        %v2165 = vpack.c.b16 %v1829, %v1813
        %v2166 = vpack.c.b16 %v1830, %v1814
        %v2167 = vpack.c.b16 %v1831, %v1815
        %v2168 = vpack.c.b16 %v1832, %v1816
        %v2169 = vpack.c.b16 %v1833, %v1817
        %v2170 = vpack.c.b16 %v1850, %v1834
        %v2171 = vpack.c.b16 %v1851, %v1835
        %v2172 = vpack.c.b16 %v1852, %v1836
        %v2173 = vpack.c.b16 %v1853, %v1837
        %v2174 = vpack.c.b16 %v1854, %v1838
        %v2175 = vpack.c.b16 %v1855, %v1839
        %v2176 = vpack.c.b16 %v1856, %v1840
        %v2177 = vpack.c.b16 %v1857, %v1841
        %v2178 = vpack.c.b16 %v1858, %v1842
        %v2179 = vpack.c.b16 %v1859, %v1843
        %v2180 = vpack.c.b16 %v1860, %v1844
        %v2181 = vpack.c.b16 %v1861, %v1845
        %v2182 = vpack.c.b16 %v1862, %v1846
        %v2183 = vpack.c.b16 %v1863, %v1847
        %v2184 = vpack.c.b16 %v1864, %v1848
        %v2185 = vpack.c.b16 %v1865, %v1849
        %v2186 = vpack.c.b16 %v1882, %v1866
        %v2187 = vpack.c.b16 %v1883, %v1867
        %v2188 = vpack.c.b16 %v1884, %v1868
        %v2189 = vpack.c.b16 %v1885, %v1869
        %v2190 = vpack.c.b16 %v1886, %v1870
        %v2191 = vpack.c.b16 %v1887, %v1871
        %v2192 = vpack.c.b16 %v1888, %v1872
        %v2193 = vpack.c.b16 %v1889, %v1873
        %v2194 = vpack.c.b16 %v1890, %v1874
        %v2195 = vpack.c.b16 %v1891, %v1875
        %v2196 = vpack.c.b16 %v1892, %v1876
        %v2197 = vpack.c.b16 %v1893, %v1877
        %v2198 = vpack.c.b16 %v1894, %v1878
        %v2199 = vpack.c.b16 %v1895, %v1879
        %v2200 = vpack.c.b16 %v1896, %v1880
        %v2201 = vpack.c.b16 %v1897, %v1881
        %v2202 = vpack.c.b16 %v1914, %v1898
        %v2203 = vpack.c.b16 %v1915, %v1899
        %v2204 = vpack.c.b16 %v1916, %v1900
        %v2205 = vpack.c.b16 %v1917, %v1901
        %v2206 = vpack.c.b16 %v1918, %v1902
        %v2207 = vpack.c.b16 %v1919, %v1903
        %v2208 = vpack.c.b16 %v1920, %v1904
        %v2209 = vpack.c.b16 %v1921, %v1905
        %v2210 = vpack.c.b16 %v1922, %v1906
        %v2211 = vpack.c.b16 %v1923, %v1907
        %v2212 = vpack.c.b16 %v1924, %v1908
        %v2213 = vpack.c.b16 %v1925, %v1909
        %v2214 = vpack.c.b16 %v1926, %v1910
        %v2215 = vpack.c.b16 %v1927, %v1911
        %v2216 = vpack.c.b16 %v1928, %v1912
        %v2217 = vpack.c.b16 %v1929, %v1913
        %v2218 = vpack.c.b16 %v1946, %v1930
        %v2219 = vpack.c.b16 %v1947, %v1931
        %v2220 = vpack.c.b16 %v1948, %v1932
        %v2221 = vpack.c.b16 %v1949, %v1933
        %v2222 = vpack.c.b16 %v1950, %v1934
        %v2223 = vpack.c.b16 %v1951, %v1935
        %v2224 = vpack.c.b16 %v1952, %v1936
        %v2225 = vpack.c.b16 %v1953, %v1937
        %v2226 = vpack.c.b16 %v1954, %v1938
        %v2227 = vpack.c.b16 %v1955, %v1939
        %v2228 = vpack.c.b16 %v1956, %v1940
        %v2229 = vpack.c.b16 %v1957, %v1941
        %v2230 = vpack.c.b16 %v1958, %v1942
        %v2231 = vpack.c.b16 %v1959, %v1943
        %v2232 = vpack.c.b16 %v1960, %v1944
        %v2233 = vpack.c.b16 %v1961, %v1945
        %v2234 = vpack.c.b16 %v1978, %v1962
        %v2235 = vpack.c.b16 %v1979, %v1963
        %v2236 = vpack.c.b16 %v1980, %v1964
        %v2237 = vpack.c.b16 %v1981, %v1965
        %v2238 = vpack.c.b16 %v1982, %v1966
        %v2239 = vpack.c.b16 %v1983, %v1967
        %v2240 = vpack.c.b16 %v1984, %v1968
        %v2241 = vpack.c.b16 %v1985, %v1969
        %v2242 = vpack.c.b16 %v1986, %v1970
        %v2243 = vpack.c.b16 %v1987, %v1971
        %v2244 = vpack.c.b16 %v1988, %v1972
        %v2245 = vpack.c.b16 %v1989, %v1973
        %v2246 = vpack.c.b16 %v1990, %v1974
        %v2247 = vpack.c.b16 %v1991, %v1975
        %v2248 = vpack.c.b16 %v1992, %v1976
        %v2249 = vpack.c.b16 %v1993, %v1977
        %v2250 = vpack.c.b16 %v2010, %v1994
        %v2251 = vpack.c.b16 %v2011, %v1995
        %v2252 = vpack.c.b16 %v2012, %v1996
        %v2253 = vpack.c.b16 %v2013, %v1997
        %v2254 = vpack.c.b16 %v2014, %v1998
        %v2255 = vpack.c.b16 %v2015, %v1999
        %v2256 = vpack.c.b16 %v2016, %v2000
        %v2257 = vpack.c.b16 %v2017, %v2001
        %v2258 = vpack.c.b16 %v2018, %v2002
        %v2259 = vpack.c.b16 %v2019, %v2003
        %v2260 = vpack.c.b16 %v2020, %v2004
        %v2261 = vpack.c.b16 %v2021, %v2005
        %v2262 = vpack.c.b16 %v2022, %v2006
        %v2263 = vpack.c.b16 %v2023, %v2007
        %v2264 = vpack.c.b16 %v2024, %v2008
        %v2265 = vpack.c.b16 %v2025, %v2009
        %v2266 = vpack.c.b16 %v2042, %v2026
        %v2267 = vpack.c.b16 %v2043, %v2027
        %v2268 = vpack.c.b16 %v2044, %v2028
        %v2269 = vpack.c.b16 %v2045, %v2029
        %v2270 = vpack.c.b16 %v2046, %v2030
        %v2271 = vpack.c.b16 %v2047, %v2031
        %v2272 = vpack.c.b16 %v2048, %v2032
        %v2273 = vpack.c.b16 %v2049, %v2033
        %v2274 = vpack.c.b16 %v2050, %v2034
        %v2275 = vpack.c.b16 %v2051, %v2035
        %v2276 = vpack.c.b16 %v2052, %v2036
        %v2277 = vpack.c.b16 %v2053, %v2037
        %v2278 = vpack.c.b16 %v2054, %v2038
        %v2279 = vpack.c.b16 %v2055, %v2039
        %v2280 = vpack.c.b16 %v2056, %v2040
        %v2281 = vpack.c.b16 %v2057, %v2041
        %v2282 = vpack.c.b16 %v2074, %v2058
        %v2283 = vpack.c.b16 %v2075, %v2059
        %v2284 = vpack.c.b16 %v2076, %v2060
        %v2285 = vpack.c.b16 %v2077, %v2061
        %v2286 = vpack.c.b16 %v2078, %v2062
        %v2287 = vpack.c.b16 %v2079, %v2063
        %v2288 = vpack.c.b16 %v2080, %v2064
        %v2289 = vpack.c.b16 %v2081, %v2065
        %v2290 = vpack.c.b16 %v2082, %v2066
        %v2291 = vpack.c.b16 %v2083, %v2067
        %v2292 = vpack.c.b16 %v2084, %v2068
        %v2293 = vpack.c.b16 %v2085, %v2069
        %v2294 = vpack.c.b16 %v2086, %v2070
        %v2295 = vpack.c.b16 %v2087, %v2071
        %v2296 = vpack.c.b16 %v2088, %v2072
        %v2297 = vpack.c.b16 %v2089, %v2073
        %v2298 = vpack.c.b16 %v2090, %v2090
        %v2299 = vpack.c.b16 %v2091, %v2091
        %v2300 = vpack.c.b16 %v2092, %v2092
        %v2301 = vpack.c.b16 %v2093, %v2093
        %v2302 = vpack.c.b16 %v2094, %v2094
        %v2303 = vpack.c.b16 %v2095, %v2095
        %v2304 = vpack.c.b16 %v2096, %v2096
        %v2305 = vpack.c.b16 %v2097, %v2097
        %v2306 = vpack.c.b16 %v2098, %v2098
        %v2307 = vpack.c.b16 %v2099, %v2099
        %v2308 = vpack.c.b16 %v2100, %v2100
        %v2309 = vpack.c.b16 %v2101, %v2101
        %v2310 = vpack.c.b16 %v2102, %v2102
        %v2311 = vpack.c.b16 %v2103, %v2103
        %v2312 = vpack.c.b16 %v2104, %v2104
        %v2313 = vpack.c.b16 %v2105, %v2105
        %vm2506 = vcmask 588800
        %v2508 = vsel %vm2506, %v1305, 0
        %vm2510 = vcmask 1043456
        %v2512 = vsel %vm2510, %v2298, 0
        %v2515 = vsel %vm2510, %v2299, 0
        %v2518 = vsel %vm2510, %v2300, 0
        %v2521 = vsel %vm2510, %v2301, 0
        %v2524 = vsel %vm2510, %v2302, 0
        %v2527 = vsel %vm2510, %v2303, 0
        %v2530 = vsel %vm2510, %v2304, 0
        %v2533 = vsel %vm2510, %v2305, 0
        %v2536 = vsel %vm2510, %v2306, 0
        %v2539 = vsel %vm2510, %v2307, 0
        %v2542 = vsel %vm2510, %v2308, 0
        %v2545 = vsel %vm2510, %v2309, 0
        %v2548 = vsel %vm2510, %v2310, 0
        %v2551 = vsel %vm2510, %v2311, 0
        %v2554 = vsel %vm2510, %v2312, 0
        %v2557 = vsel %vm2510, %v2313, 0
        %2559 = vmatpush.bf16.msra.mxu0 %v2218
        %2560 = vmatpush.bf16.msra.mxu0 %v2202
        %2561 = vmatpush.bf16.msra.mxu0 %v2186
        %2562 = vmatpush.bf16.msra.mxu0 %v2170
        %2563 = vmatpush.bf16.msra.mxu0 %v2154
        %2564 = vmatpush.bf16.msra.mxu0 %v2138
        %2565 = vmatpush.bf16.msra.mxu0 %v2122
        %2566 = vmatpush.bf16.msra.mxu0 %v2106
        %2567 = vmatmul.bf16.gmra.mxu0 %v1304
        %v2568 = vpop.f32.mrf.mxu0
        %v2569 = vadd.f32 0.0, %v2568
        %v2570 = vpop.f32.mrf.mxu0
        %v2571 = vadd.f32 0.0, %v2570
        %2572 = vdwg.mxu0
        %2573 = vmatpush.bf16.msra.mxu0 0
        %2574 = vmatpush.bf16.msra.mxu0 0
        %2575 = vmatpush.bf16.msra.mxu0 0
        %2576 = vmatpush.bf16.msra.mxu0 %v2512
        %2577 = vmatpush.bf16.msra.mxu0 %v2282
        %2578 = vmatpush.bf16.msra.mxu0 %v2266
        %2579 = vmatpush.bf16.msra.mxu0 %v2250
        %2580 = vmatpush.bf16.msra.mxu0 %v2234
        %2581 = vmatmul.bf16.gmra.mxu0 %v2508
        %v2582 = vpop.f32.mrf.mxu0
        %v2583 = vadd.f32 %v2569, %v2582
        %v2584 = vpop.f32.mrf.mxu0
        %v2585 = vadd.f32 %v2571, %v2584
        %2586 = vdwg.mxu0
        %2587 = vmatpush.bf16.msra.mxu0 %v2219
        %2588 = vmatpush.bf16.msra.mxu0 %v2203
        %2589 = vmatpush.bf16.msra.mxu0 %v2187
        %2590 = vmatpush.bf16.msra.mxu0 %v2171
        %2591 = vmatpush.bf16.msra.mxu0 %v2155
        %2592 = vmatpush.bf16.msra.mxu0 %v2139
        %2593 = vmatpush.bf16.msra.mxu0 %v2123
        %2594 = vmatpush.bf16.msra.mxu0 %v2107
        %2595 = vmatmul.bf16.gmra.mxu0 %v1304
        %v2596 = vpop.f32.mrf.mxu0
        %v2597 = vadd.f32 0.0, %v2596
        %v2598 = vpop.f32.mrf.mxu0
        %v2599 = vadd.f32 0.0, %v2598
        %2600 = vdwg.mxu0
        %2601 = vmatpush.bf16.msra.mxu0 0
        %2602 = vmatpush.bf16.msra.mxu0 0
        %2603 = vmatpush.bf16.msra.mxu0 0
        %2604 = vmatpush.bf16.msra.mxu0 %v2515
        %2605 = vmatpush.bf16.msra.mxu0 %v2283
        %2606 = vmatpush.bf16.msra.mxu0 %v2267
        %2607 = vmatpush.bf16.msra.mxu0 %v2251
        %2608 = vmatpush.bf16.msra.mxu0 %v2235
        %2609 = vmatmul.bf16.gmra.mxu0 %v2508
        %v2610 = vpop.f32.mrf.mxu0
        %v2611 = vadd.f32 %v2597, %v2610
        %v2612 = vpop.f32.mrf.mxu0
        %v2613 = vadd.f32 %v2599, %v2612
        %2614 = vdwg.mxu0
        %2615 = vmatpush.bf16.msra.mxu0 %v2220
        %2616 = vmatpush.bf16.msra.mxu0 %v2204
        %2617 = vmatpush.bf16.msra.mxu0 %v2188
        %2618 = vmatpush.bf16.msra.mxu0 %v2172
        %2619 = vmatpush.bf16.msra.mxu0 %v2156
        %2620 = vmatpush.bf16.msra.mxu0 %v2140
        %2621 = vmatpush.bf16.msra.mxu0 %v2124
        %2622 = vmatpush.bf16.msra.mxu0 %v2108
        %2623 = vmatmul.bf16.gmra.mxu0 %v1304
        %v2624 = vpop.f32.mrf.mxu0
        %v2625 = vadd.f32 0.0, %v2624
        %v2626 = vpop.f32.mrf.mxu0
        %v2627 = vadd.f32 0.0, %v2626
        %2628 = vdwg.mxu0
        %2629 = vmatpush.bf16.msra.mxu0 0
        %2630 = vmatpush.bf16.msra.mxu0 0
        %2631 = vmatpush.bf16.msra.mxu0 0
        %2632 = vmatpush.bf16.msra.mxu0 %v2518
        %2633 = vmatpush.bf16.msra.mxu0 %v2284
        %2634 = vmatpush.bf16.msra.mxu0 %v2268
        %2635 = vmatpush.bf16.msra.mxu0 %v2252
        %2636 = vmatpush.bf16.msra.mxu0 %v2236
        %2637 = vmatmul.bf16.gmra.mxu0 %v2508
        %v2638 = vpop.f32.mrf.mxu0
        %v2639 = vadd.f32 %v2625, %v2638
        %v2640 = vpop.f32.mrf.mxu0
        %v2641 = vadd.f32 %v2627, %v2640
        %2642 = vdwg.mxu0
        %2643 = vmatpush.bf16.msra.mxu0 %v2221
        %2644 = vmatpush.bf16.msra.mxu0 %v2205
        %2645 = vmatpush.bf16.msra.mxu0 %v2189
        %2646 = vmatpush.bf16.msra.mxu0 %v2173
        %2647 = vmatpush.bf16.msra.mxu0 %v2157
        %2648 = vmatpush.bf16.msra.mxu0 %v2141
        %2649 = vmatpush.bf16.msra.mxu0 %v2125
        %2650 = vmatpush.bf16.msra.mxu0 %v2109
        %2651 = vmatmul.bf16.gmra.mxu0 %v1304
        %v2652 = vpop.f32.mrf.mxu0
        %v2653 = vadd.f32 0.0, %v2652
        %v2654 = vpop.f32.mrf.mxu0
        %v2655 = vadd.f32 0.0, %v2654
        %2656 = vdwg.mxu0
        %2657 = vmatpush.bf16.msra.mxu0 0
        %2658 = vmatpush.bf16.msra.mxu0 0
        %2659 = vmatpush.bf16.msra.mxu0 0
        %2660 = vmatpush.bf16.msra.mxu0 %v2521
        %2661 = vmatpush.bf16.msra.mxu0 %v2285
        %2662 = vmatpush.bf16.msra.mxu0 %v2269
        %2663 = vmatpush.bf16.msra.mxu0 %v2253
        %2664 = vmatpush.bf16.msra.mxu0 %v2237
        %2665 = vmatmul.bf16.gmra.mxu0 %v2508
        %v2666 = vpop.f32.mrf.mxu0
        %v2667 = vadd.f32 %v2653, %v2666
        %v2668 = vpop.f32.mrf.mxu0
        %v2669 = vadd.f32 %v2655, %v2668
        %2670 = vdwg.mxu0
        %2671 = vmatpush.bf16.msra.mxu0 %v2222
        %2672 = vmatpush.bf16.msra.mxu0 %v2206
        %2673 = vmatpush.bf16.msra.mxu0 %v2190
        %2674 = vmatpush.bf16.msra.mxu0 %v2174
        %2675 = vmatpush.bf16.msra.mxu0 %v2158
        %2676 = vmatpush.bf16.msra.mxu0 %v2142
        %2677 = vmatpush.bf16.msra.mxu0 %v2126
        %2678 = vmatpush.bf16.msra.mxu0 %v2110
        %2679 = vmatmul.bf16.gmra.mxu0 %v1304
        %v2680 = vpop.f32.mrf.mxu0
        %v2681 = vadd.f32 0.0, %v2680
        %v2682 = vpop.f32.mrf.mxu0
        %v2683 = vadd.f32 0.0, %v2682
        %2684 = vdwg.mxu0
        %2685 = vmatpush.bf16.msra.mxu0 0
        %2686 = vmatpush.bf16.msra.mxu0 0
        %2687 = vmatpush.bf16.msra.mxu0 0
        %2688 = vmatpush.bf16.msra.mxu0 %v2524
        %2689 = vmatpush.bf16.msra.mxu0 %v2286
        %2690 = vmatpush.bf16.msra.mxu0 %v2270
        %2691 = vmatpush.bf16.msra.mxu0 %v2254
        %2692 = vmatpush.bf16.msra.mxu0 %v2238
        %2693 = vmatmul.bf16.gmra.mxu0 %v2508
        %v2694 = vpop.f32.mrf.mxu0
        %v2695 = vadd.f32 %v2681, %v2694
        %v2696 = vpop.f32.mrf.mxu0
        %v2697 = vadd.f32 %v2683, %v2696
        %2698 = vdwg.mxu0
        %2699 = vmatpush.bf16.msra.mxu0 %v2223
        %2700 = vmatpush.bf16.msra.mxu0 %v2207
        %2701 = vmatpush.bf16.msra.mxu0 %v2191
        %2702 = vmatpush.bf16.msra.mxu0 %v2175
        %2703 = vmatpush.bf16.msra.mxu0 %v2159
        %2704 = vmatpush.bf16.msra.mxu0 %v2143
        %2705 = vmatpush.bf16.msra.mxu0 %v2127
        %2706 = vmatpush.bf16.msra.mxu0 %v2111
        %2707 = vmatmul.bf16.gmra.mxu0 %v1304
        %v2708 = vpop.f32.mrf.mxu0
        %v2709 = vadd.f32 0.0, %v2708
        %v2710 = vpop.f32.mrf.mxu0
        %v2711 = vadd.f32 0.0, %v2710
        %2712 = vdwg.mxu0
        %2713 = vmatpush.bf16.msra.mxu0 0
        %2714 = vmatpush.bf16.msra.mxu0 0
        %2715 = vmatpush.bf16.msra.mxu0 0
        %2716 = vmatpush.bf16.msra.mxu0 %v2527
        %2717 = vmatpush.bf16.msra.mxu0 %v2287
        %2718 = vmatpush.bf16.msra.mxu0 %v2271
        %2719 = vmatpush.bf16.msra.mxu0 %v2255
        %2720 = vmatpush.bf16.msra.mxu0 %v2239
        %2721 = vmatmul.bf16.gmra.mxu0 %v2508
        %v2722 = vpop.f32.mrf.mxu0
        %v2723 = vadd.f32 %v2709, %v2722
        %v2724 = vpop.f32.mrf.mxu0
        %v2725 = vadd.f32 %v2711, %v2724
        %2726 = vdwg.mxu0
        %2727 = vmatpush.bf16.msra.mxu0 %v2224
        %2728 = vmatpush.bf16.msra.mxu0 %v2208
        %2729 = vmatpush.bf16.msra.mxu0 %v2192
        %2730 = vmatpush.bf16.msra.mxu0 %v2176
        %2731 = vmatpush.bf16.msra.mxu0 %v2160
        %2732 = vmatpush.bf16.msra.mxu0 %v2144
        %2733 = vmatpush.bf16.msra.mxu0 %v2128
        %2734 = vmatpush.bf16.msra.mxu0 %v2112
        %2735 = vmatmul.bf16.gmra.mxu0 %v1304
        %v2736 = vpop.f32.mrf.mxu0
        %v2737 = vadd.f32 0.0, %v2736
        %v2738 = vpop.f32.mrf.mxu0
        %v2739 = vadd.f32 0.0, %v2738
        %2740 = vdwg.mxu0
        %2741 = vmatpush.bf16.msra.mxu0 0
        %2742 = vmatpush.bf16.msra.mxu0 0
        %2743 = vmatpush.bf16.msra.mxu0 0
        %2744 = vmatpush.bf16.msra.mxu0 %v2530
        %2745 = vmatpush.bf16.msra.mxu0 %v2288
        %2746 = vmatpush.bf16.msra.mxu0 %v2272
        %2747 = vmatpush.bf16.msra.mxu0 %v2256
        %2748 = vmatpush.bf16.msra.mxu0 %v2240
        %2749 = vmatmul.bf16.gmra.mxu0 %v2508
        %v2750 = vpop.f32.mrf.mxu0
        %v2751 = vadd.f32 %v2737, %v2750
        %v2752 = vpop.f32.mrf.mxu0
        %v2753 = vadd.f32 %v2739, %v2752
        %2754 = vdwg.mxu0
        %2755 = vmatpush.bf16.msra.mxu0 %v2225
        %2756 = vmatpush.bf16.msra.mxu0 %v2209
        %2757 = vmatpush.bf16.msra.mxu0 %v2193
        %2758 = vmatpush.bf16.msra.mxu0 %v2177
        %2759 = vmatpush.bf16.msra.mxu0 %v2161
        %2760 = vmatpush.bf16.msra.mxu0 %v2145
        %2761 = vmatpush.bf16.msra.mxu0 %v2129
        %2762 = vmatpush.bf16.msra.mxu0 %v2113
        %2763 = vmatmul.bf16.gmra.mxu0 %v1304
        %v2764 = vpop.f32.mrf.mxu0
        %v2765 = vadd.f32 0.0, %v2764
        %v2766 = vpop.f32.mrf.mxu0
        %v2767 = vadd.f32 0.0, %v2766
        %2768 = vdwg.mxu0
        %2769 = vmatpush.bf16.msra.mxu0 0
        %2770 = vmatpush.bf16.msra.mxu0 0
        %2771 = vmatpush.bf16.msra.mxu0 0
        %2772 = vmatpush.bf16.msra.mxu0 %v2533
        %2773 = vmatpush.bf16.msra.mxu0 %v2289
        %2774 = vmatpush.bf16.msra.mxu0 %v2273
        %2775 = vmatpush.bf16.msra.mxu0 %v2257
        %2776 = vmatpush.bf16.msra.mxu0 %v2241
        %2777 = vmatmul.bf16.gmra.mxu0 %v2508
        %v2778 = vpop.f32.mrf.mxu0
        %v2779 = vadd.f32 %v2765, %v2778
        %v2780 = vpop.f32.mrf.mxu0
        %v2781 = vadd.f32 %v2767, %v2780
        %2782 = vdwg.mxu0
        %2783 = vmatpush.bf16.msra.mxu0 %v2226
        %2784 = vmatpush.bf16.msra.mxu0 %v2210
        %2785 = vmatpush.bf16.msra.mxu0 %v2194
        %2786 = vmatpush.bf16.msra.mxu0 %v2178
        %2787 = vmatpush.bf16.msra.mxu0 %v2162
        %2788 = vmatpush.bf16.msra.mxu0 %v2146
        %2789 = vmatpush.bf16.msra.mxu0 %v2130
        %2790 = vmatpush.bf16.msra.mxu0 %v2114
        %2791 = vmatmul.bf16.gmra.mxu0 %v1304
        %v2792 = vpop.f32.mrf.mxu0
        %v2793 = vadd.f32 0.0, %v2792
        %v2794 = vpop.f32.mrf.mxu0
        %v2795 = vadd.f32 0.0, %v2794
        %2796 = vdwg.mxu0
        %2797 = vmatpush.bf16.msra.mxu0 0
        %2798 = vmatpush.bf16.msra.mxu0 0
        %2799 = vmatpush.bf16.msra.mxu0 0
        %2800 = vmatpush.bf16.msra.mxu0 %v2536
        %2801 = vmatpush.bf16.msra.mxu0 %v2290
        %2802 = vmatpush.bf16.msra.mxu0 %v2274
        %2803 = vmatpush.bf16.msra.mxu0 %v2258
        %2804 = vmatpush.bf16.msra.mxu0 %v2242
        %2805 = vmatmul.bf16.gmra.mxu0 %v2508
        %v2806 = vpop.f32.mrf.mxu0
        %v2807 = vadd.f32 %v2793, %v2806
        %v2808 = vpop.f32.mrf.mxu0
        %v2809 = vadd.f32 %v2795, %v2808
        %2810 = vdwg.mxu0
        %2811 = vmatpush.bf16.msra.mxu0 %v2227
        %2812 = vmatpush.bf16.msra.mxu0 %v2211
        %2813 = vmatpush.bf16.msra.mxu0 %v2195
        %2814 = vmatpush.bf16.msra.mxu0 %v2179
        %2815 = vmatpush.bf16.msra.mxu0 %v2163
        %2816 = vmatpush.bf16.msra.mxu0 %v2147
        %2817 = vmatpush.bf16.msra.mxu0 %v2131
        %2818 = vmatpush.bf16.msra.mxu0 %v2115
        %2819 = vmatmul.bf16.gmra.mxu0 %v1304
        %v2820 = vpop.f32.mrf.mxu0
        %v2821 = vadd.f32 0.0, %v2820
        %v2822 = vpop.f32.mrf.mxu0
        %v2823 = vadd.f32 0.0, %v2822
        %2824 = vdwg.mxu0
        %2825 = vmatpush.bf16.msra.mxu0 0
        %2826 = vmatpush.bf16.msra.mxu0 0
        %2827 = vmatpush.bf16.msra.mxu0 0
        %2828 = vmatpush.bf16.msra.mxu0 %v2539
        %2829 = vmatpush.bf16.msra.mxu0 %v2291
        %2830 = vmatpush.bf16.msra.mxu0 %v2275
        %2831 = vmatpush.bf16.msra.mxu0 %v2259
        %2832 = vmatpush.bf16.msra.mxu0 %v2243
        %2833 = vmatmul.bf16.gmra.mxu0 %v2508
        %v2834 = vpop.f32.mrf.mxu0
        %v2835 = vadd.f32 %v2821, %v2834
        %v2836 = vpop.f32.mrf.mxu0
        %v2837 = vadd.f32 %v2823, %v2836
        %2838 = vdwg.mxu0
        %2839 = vmatpush.bf16.msra.mxu0 %v2228
        %2840 = vmatpush.bf16.msra.mxu0 %v2212
        %2841 = vmatpush.bf16.msra.mxu0 %v2196
        %2842 = vmatpush.bf16.msra.mxu0 %v2180
        %2843 = vmatpush.bf16.msra.mxu0 %v2164
        %2844 = vmatpush.bf16.msra.mxu0 %v2148
        %2845 = vmatpush.bf16.msra.mxu0 %v2132
        %2846 = vmatpush.bf16.msra.mxu0 %v2116
        %2847 = vmatmul.bf16.gmra.mxu0 %v1304
        %v2848 = vpop.f32.mrf.mxu0
        %v2849 = vadd.f32 0.0, %v2848
        %v2850 = vpop.f32.mrf.mxu0
        %v2851 = vadd.f32 0.0, %v2850
        %2852 = vdwg.mxu0
        %2853 = vmatpush.bf16.msra.mxu0 0
        %2854 = vmatpush.bf16.msra.mxu0 0
        %2855 = vmatpush.bf16.msra.mxu0 0
        %2856 = vmatpush.bf16.msra.mxu0 %v2542
        %2857 = vmatpush.bf16.msra.mxu0 %v2292
        %2858 = vmatpush.bf16.msra.mxu0 %v2276
        %2859 = vmatpush.bf16.msra.mxu0 %v2260
        %2860 = vmatpush.bf16.msra.mxu0 %v2244
        %2861 = vmatmul.bf16.gmra.mxu0 %v2508
        %v2862 = vpop.f32.mrf.mxu0
        %v2863 = vadd.f32 %v2849, %v2862
        %v2864 = vpop.f32.mrf.mxu0
        %v2865 = vadd.f32 %v2851, %v2864
        %2866 = vdwg.mxu0
        %2867 = vmatpush.bf16.msra.mxu0 %v2229
        %2868 = vmatpush.bf16.msra.mxu0 %v2213
        %2869 = vmatpush.bf16.msra.mxu0 %v2197
        %2870 = vmatpush.bf16.msra.mxu0 %v2181
        %2871 = vmatpush.bf16.msra.mxu0 %v2165
        %2872 = vmatpush.bf16.msra.mxu0 %v2149
        %2873 = vmatpush.bf16.msra.mxu0 %v2133
        %2874 = vmatpush.bf16.msra.mxu0 %v2117
        %2875 = vmatmul.bf16.gmra.mxu0 %v1304
        %v2876 = vpop.f32.mrf.mxu0
        %v2877 = vadd.f32 0.0, %v2876
        %v2878 = vpop.f32.mrf.mxu0
        %v2879 = vadd.f32 0.0, %v2878
        %2880 = vdwg.mxu0
        %2881 = vmatpush.bf16.msra.mxu0 0
        %2882 = vmatpush.bf16.msra.mxu0 0
        %2883 = vmatpush.bf16.msra.mxu0 0
        %2884 = vmatpush.bf16.msra.mxu0 %v2545
        %2885 = vmatpush.bf16.msra.mxu0 %v2293
        %2886 = vmatpush.bf16.msra.mxu0 %v2277
        %2887 = vmatpush.bf16.msra.mxu0 %v2261
        %2888 = vmatpush.bf16.msra.mxu0 %v2245
        %2889 = vmatmul.bf16.gmra.mxu0 %v2508
        %v2890 = vpop.f32.mrf.mxu0
        %v2891 = vadd.f32 %v2877, %v2890
        %v2892 = vpop.f32.mrf.mxu0
        %v2893 = vadd.f32 %v2879, %v2892
        %2894 = vdwg.mxu0
        %2895 = vmatpush.bf16.msra.mxu0 %v2230
        %2896 = vmatpush.bf16.msra.mxu0 %v2214
        %2897 = vmatpush.bf16.msra.mxu0 %v2198
        %2898 = vmatpush.bf16.msra.mxu0 %v2182
        %2899 = vmatpush.bf16.msra.mxu0 %v2166
        %2900 = vmatpush.bf16.msra.mxu0 %v2150
        %2901 = vmatpush.bf16.msra.mxu0 %v2134
        %2902 = vmatpush.bf16.msra.mxu0 %v2118
        %2903 = vmatmul.bf16.gmra.mxu0 %v1304
        %v2904 = vpop.f32.mrf.mxu0
        %v2905 = vadd.f32 0.0, %v2904
        %v2906 = vpop.f32.mrf.mxu0
        %v2907 = vadd.f32 0.0, %v2906
        %2908 = vdwg.mxu0
        %2909 = vmatpush.bf16.msra.mxu0 0
        %2910 = vmatpush.bf16.msra.mxu0 0
        %2911 = vmatpush.bf16.msra.mxu0 0
        %2912 = vmatpush.bf16.msra.mxu0 %v2548
        %2913 = vmatpush.bf16.msra.mxu0 %v2294
        %2914 = vmatpush.bf16.msra.mxu0 %v2278
        %2915 = vmatpush.bf16.msra.mxu0 %v2262
        %2916 = vmatpush.bf16.msra.mxu0 %v2246
        %2917 = vmatmul.bf16.gmra.mxu0 %v2508
        %v2918 = vpop.f32.mrf.mxu0
        %v2919 = vadd.f32 %v2905, %v2918
        %v2920 = vpop.f32.mrf.mxu0
        %v2921 = vadd.f32 %v2907, %v2920
        %2922 = vdwg.mxu0
        %2923 = vmatpush.bf16.msra.mxu0 %v2231
        %2924 = vmatpush.bf16.msra.mxu0 %v2215
        %2925 = vmatpush.bf16.msra.mxu0 %v2199
        %2926 = vmatpush.bf16.msra.mxu0 %v2183
        %2927 = vmatpush.bf16.msra.mxu0 %v2167
        %2928 = vmatpush.bf16.msra.mxu0 %v2151
        %2929 = vmatpush.bf16.msra.mxu0 %v2135
        %2930 = vmatpush.bf16.msra.mxu0 %v2119
        %2931 = vmatmul.bf16.gmra.mxu0 %v1304
        %v2932 = vpop.f32.mrf.mxu0
        %v2933 = vadd.f32 0.0, %v2932
        %v2934 = vpop.f32.mrf.mxu0
        %v2935 = vadd.f32 0.0, %v2934
        %2936 = vdwg.mxu0
        %2937 = vmatpush.bf16.msra.mxu0 0
        %2938 = vmatpush.bf16.msra.mxu0 0
        %2939 = vmatpush.bf16.msra.mxu0 0
        %2940 = vmatpush.bf16.msra.mxu0 %v2551
        %2941 = vmatpush.bf16.msra.mxu0 %v2295
        %2942 = vmatpush.bf16.msra.mxu0 %v2279
        %2943 = vmatpush.bf16.msra.mxu0 %v2263
        %2944 = vmatpush.bf16.msra.mxu0 %v2247
        %2945 = vmatmul.bf16.gmra.mxu0 %v2508
        %v2946 = vpop.f32.mrf.mxu0
        %v2947 = vadd.f32 %v2933, %v2946
        %v2948 = vpop.f32.mrf.mxu0
        %v2949 = vadd.f32 %v2935, %v2948
        %2950 = vdwg.mxu0
        %2951 = vmatpush.bf16.msra.mxu0 %v2232
        %2952 = vmatpush.bf16.msra.mxu0 %v2216
        %2953 = vmatpush.bf16.msra.mxu0 %v2200
        %2954 = vmatpush.bf16.msra.mxu0 %v2184
        %2955 = vmatpush.bf16.msra.mxu0 %v2168
        %2956 = vmatpush.bf16.msra.mxu0 %v2152
        %2957 = vmatpush.bf16.msra.mxu0 %v2136
        %2958 = vmatpush.bf16.msra.mxu0 %v2120
        %2959 = vmatmul.bf16.gmra.mxu0 %v1304
        %v2960 = vpop.f32.mrf.mxu0
        %v2961 = vadd.f32 0.0, %v2960
        %v2962 = vpop.f32.mrf.mxu0
        %v2963 = vadd.f32 0.0, %v2962
        %2964 = vdwg.mxu0
        %2965 = vmatpush.bf16.msra.mxu0 0
        %2966 = vmatpush.bf16.msra.mxu0 0
        %2967 = vmatpush.bf16.msra.mxu0 0
        %2968 = vmatpush.bf16.msra.mxu0 %v2554
        %2969 = vmatpush.bf16.msra.mxu0 %v2296
        %2970 = vmatpush.bf16.msra.mxu0 %v2280
        %2971 = vmatpush.bf16.msra.mxu0 %v2264
        %2972 = vmatpush.bf16.msra.mxu0 %v2248
        %2973 = vmatmul.bf16.gmra.mxu0 %v2508
        %v2974 = vpop.f32.mrf.mxu0
        %v2975 = vadd.f32 %v2961, %v2974
        %v2976 = vpop.f32.mrf.mxu0
        %v2977 = vadd.f32 %v2963, %v2976
        %2978 = vdwg.mxu0
        %2979 = vmatpush.bf16.msra.mxu0 %v2233
        %2980 = vmatpush.bf16.msra.mxu0 %v2217
        %2981 = vmatpush.bf16.msra.mxu0 %v2201
        %2982 = vmatpush.bf16.msra.mxu0 %v2185
        %2983 = vmatpush.bf16.msra.mxu0 %v2169
        %2984 = vmatpush.bf16.msra.mxu0 %v2153
        %2985 = vmatpush.bf16.msra.mxu0 %v2137
        %2986 = vmatpush.bf16.msra.mxu0 %v2121
        %2987 = vmatmul.bf16.gmra.mxu0 %v1304
        %v2988 = vpop.f32.mrf.mxu0
        %v2989 = vadd.f32 0.0, %v2988
        %v2990 = vpop.f32.mrf.mxu0
        %v2991 = vadd.f32 0.0, %v2990
        %2992 = vdwg.mxu0
        %2993 = vmatpush.bf16.msra.mxu0 0
        %2994 = vmatpush.bf16.msra.mxu0 0
        %2995 = vmatpush.bf16.msra.mxu0 0
        %2996 = vmatpush.bf16.msra.mxu0 %v2557
        %2997 = vmatpush.bf16.msra.mxu0 %v2297
        %2998 = vmatpush.bf16.msra.mxu0 %v2281
        %2999 = vmatpush.bf16.msra.mxu0 %v2265
        %3000 = vmatpush.bf16.msra.mxu0 %v2249
        %3001 = vmatmul.bf16.gmra.mxu0 %v2508
        %v3002 = vpop.f32.mrf.mxu0
        %v3003 = vadd.f32 %v2989, %v3002
        %v3004 = vpop.f32.mrf.mxu0
        %v3005 = vadd.f32 %v2991, %v3004
        %3006 = vdwg.mxu0
        %v3007 = vld [vmem:[%s2] sm:$0xff]
        %v3008 = vld [vmem:[%s2 + $0x8] sm:$0xff]
        %v3011 = vperm.slane %v3007, 0
        %v3012 = vperm.slane %v3007, 1
        %v3013 = vperm.slane %v3007, 2
        %v3014 = vperm.slane %v3007, 3
        %v3015 = vperm.slane %v3007, 4
        %v3016 = vperm.slane %v3007, 5
        %v3017 = vperm.slane %v3007, 6
        %v3018 = vperm.slane %v3007, 7
        %v3019 = vperm.slane %v3008, 0
        %v3020 = vperm.slane %v3008, 1
        %v3021 = vperm.slane %v3008, 2
        %v3022 = vperm.slane %v3008, 3
        %v3023 = vperm.slane %v3008, 4
        %v3024 = vperm.slane %v3008, 5
        %v3025 = vperm.slane %v3008, 6
        %v3026 = vperm.slane %v3008, 7
        %v3043 = vmul.f32 %v2583, %v3011
        %v3044 = vmul.f32 %v2611, %v3012
        %v3045 = vmul.f32 %v2639, %v3013
        %v3046 = vmul.f32 %v2667, %v3014
        %v3047 = vmul.f32 %v2695, %v3015
        %v3048 = vmul.f32 %v2723, %v3016
        %v3049 = vmul.f32 %v2751, %v3017
        %v3050 = vmul.f32 %v2779, %v3018
        %v3051 = vmul.f32 %v2807, %v3019
        %v3052 = vmul.f32 %v2835, %v3020
        %v3053 = vmul.f32 %v2863, %v3021
        %v3054 = vmul.f32 %v2891, %v3022
        %v3055 = vmul.f32 %v2919, %v3023
        %v3056 = vmul.f32 %v2947, %v3024
        %v3057 = vmul.f32 %v2975, %v3025
        %v3058 = vmul.f32 %v3003, %v3026
        %v3059 = vmul.f32 %v2585, %v3011
        %v3060 = vmul.f32 %v2613, %v3012
        %v3061 = vmul.f32 %v2641, %v3013
        %v3062 = vmul.f32 %v2669, %v3014
        %v3063 = vmul.f32 %v2697, %v3015
        %v3064 = vmul.f32 %v2725, %v3016
        %v3065 = vmul.f32 %v2753, %v3017
        %v3066 = vmul.f32 %v2781, %v3018
        %v3067 = vmul.f32 %v2809, %v3019
        %v3068 = vmul.f32 %v2837, %v3020
        %v3069 = vmul.f32 %v2865, %v3021
        %v3070 = vmul.f32 %v2893, %v3022
        %v3071 = vmul.f32 %v2921, %v3023
        %v3072 = vmul.f32 %v2949, %v3024
        %v3073 = vmul.f32 %v2977, %v3025
        %v3074 = vmul.f32 %v3005, %v3026
        %v3075 = vld [vmem:[%s3] sm:$0xff]
        %v3076 = vld [vmem:[%s3 + $0x8] sm:$0xff]
        %v3079 = vperm.slane %v3075, 0
        %v3080 = vperm.slane %v3075, 1
        %v3081 = vperm.slane %v3075, 2
        %v3082 = vperm.slane %v3075, 3
        %v3083 = vperm.slane %v3075, 4
        %v3084 = vperm.slane %v3075, 5
        %v3085 = vperm.slane %v3075, 6
        %v3086 = vperm.slane %v3075, 7
        %v3087 = vperm.slane %v3076, 0
        %v3088 = vperm.slane %v3076, 1
        %v3089 = vperm.slane %v3076, 2
        %v3090 = vperm.slane %v3076, 3
        %v3091 = vperm.slane %v3076, 4
        %v3092 = vperm.slane %v3076, 5
        %v3093 = vperm.slane %v3076, 6
        %v3094 = vperm.slane %v3076, 7
        %v3111 = vadd.f32 %v3043, %v3079
        %v3112 = vadd.f32 %v3044, %v3080
        %v3113 = vadd.f32 %v3045, %v3081
        %v3114 = vadd.f32 %v3046, %v3082
        %v3115 = vadd.f32 %v3047, %v3083
        %v3116 = vadd.f32 %v3048, %v3084
        %v3117 = vadd.f32 %v3049, %v3085
        %v3118 = vadd.f32 %v3050, %v3086
        %v3119 = vadd.f32 %v3051, %v3087
        %v3120 = vadd.f32 %v3052, %v3088
        %v3121 = vadd.f32 %v3053, %v3089
        %v3122 = vadd.f32 %v3054, %v3090
        %v3123 = vadd.f32 %v3055, %v3091
        %v3124 = vadd.f32 %v3056, %v3092
        %v3125 = vadd.f32 %v3057, %v3093
        %v3126 = vadd.f32 %v3058, %v3094
        %v3127 = vadd.f32 %v3059, %v3079
        %v3128 = vadd.f32 %v3060, %v3080
        %v3129 = vadd.f32 %v3061, %v3081
        %v3130 = vadd.f32 %v3062, %v3082
        %v3131 = vadd.f32 %v3063, %v3083
        %v3132 = vadd.f32 %v3064, %v3084
        %v3133 = vadd.f32 %v3065, %v3085
        %v3134 = vadd.f32 %v3066, %v3086
        %v3135 = vadd.f32 %v3067, %v3087
        %v3136 = vadd.f32 %v3068, %v3088
        %v3137 = vadd.f32 %v3069, %v3089
        %v3138 = vadd.f32 %v3070, %v3090
        %v3139 = vadd.f32 %v3071, %v3091
        %v3140 = vadd.f32 %v3072, %v3092
        %v3141 = vadd.f32 %v3073, %v3093
        %v3142 = vadd.f32 %v3074, %v3094
        %v3143 = vmax.f32 %v3111, 0.0
        %v3144 = vmax.f32 %v3112, 0.0
        %v3145 = vmax.f32 %v3113, 0.0
        %v3146 = vmax.f32 %v3114, 0.0
        %v3147 = vmax.f32 %v3115, 0.0
        %v3148 = vmax.f32 %v3116, 0.0
        %v3149 = vmax.f32 %v3117, 0.0
        %v3150 = vmax.f32 %v3118, 0.0
        %v3151 = vmax.f32 %v3119, 0.0
        %v3152 = vmax.f32 %v3120, 0.0
        %v3153 = vmax.f32 %v3121, 0.0
        %v3154 = vmax.f32 %v3122, 0.0
        %v3155 = vmax.f32 %v3123, 0.0
        %v3156 = vmax.f32 %v3124, 0.0
        %v3157 = vmax.f32 %v3125, 0.0
        %v3158 = vmax.f32 %v3126, 0.0
        %v3159 = vmax.f32 %v3127, 0.0
        %v3160 = vmax.f32 %v3128, 0.0
        %v3161 = vmax.f32 %v3129, 0.0
        %v3162 = vmax.f32 %v3130, 0.0
        %v3163 = vmax.f32 %v3131, 0.0
        %v3164 = vmax.f32 %v3132, 0.0
        %v3165 = vmax.f32 %v3133, 0.0
        %v3166 = vmax.f32 %v3134, 0.0
        %v3167 = vmax.f32 %v3135, 0.0
        %v3168 = vmax.f32 %v3136, 0.0
        %v3169 = vmax.f32 %v3137, 0.0
        %v3170 = vmax.f32 %v3138, 0.0
        %v3171 = vmax.f32 %v3139, 0.0
        %v3172 = vmax.f32 %v3140, 0.0
        %v3173 = vmax.f32 %v3141, 0.0
        %v3174 = vmax.f32 %v3142, 0.0
        %v3175 = vpack.c.bf16 %v3159, %v3143
        %v3176 = vpack.c.bf16 %v3160, %v3144
        %v3177 = vpack.c.bf16 %v3161, %v3145
        %v3178 = vpack.c.bf16 %v3162, %v3146
        %v3179 = vpack.c.bf16 %v3163, %v3147
        %v3180 = vpack.c.bf16 %v3164, %v3148
        %v3181 = vpack.c.bf16 %v3165, %v3149
        %v3182 = vpack.c.bf16 %v3166, %v3150
        %v3183 = vpack.c.bf16 %v3167, %v3151
        %v3184 = vpack.c.bf16 %v3168, %v3152
        %v3185 = vpack.c.bf16 %v3169, %v3153
        %v3186 = vpack.c.bf16 %v3170, %v3154
        %v3187 = vpack.c.bf16 %v3171, %v3155
        %v3188 = vpack.c.bf16 %v3172, %v3156
        %v3189 = vpack.c.bf16 %v3173, %v3157
        %v3190 = vpack.c.bf16 %v3174, %v3158
        %v3191 = vld [vmem:[%s1267] sm:$0xf]
        %v3192 = vld [vmem:[%s1267 + $0x4] sm:$0xf]
        %v3193 = vld [vmem:[%s1267 + $0x8] sm:$0xf]
        %v3194 = vld [vmem:[%s1267 + $0xc] sm:$0xf]
        %v3195 = vld [vmem:[%s1267 + $0x10] sm:$0xf]
        %v3196 = vld [vmem:[%s1267 + $0x14] sm:$0xf]
        %v3197 = vld [vmem:[%s1267 + $0x18] sm:$0xf]
        %v3198 = vld [vmem:[%s1267 + $0x1c] sm:$0xf]
        %v3199 = vld [vmem:[%s1267 + $0x20] sm:$0xf]
        %v3200 = vld [vmem:[%s1267 + $0x24] sm:$0xf]
        %v3201 = vld [vmem:[%s1267 + $0x28] sm:$0xf]
        %v3202 = vld [vmem:[%s1267 + $0x2c] sm:$0xf]
        %v3203 = vld [vmem:[%s1267 + $0x30] sm:$0xf]
        %v3204 = vld [vmem:[%s1267 + $0x34] sm:$0xf]
        %v3205 = vld [vmem:[%s1267 + $0x38] sm:$0xf]
        %v3206 = vld [vmem:[%s1267 + $0x3c] sm:$0xf]
        %v3207 = vld [vmem:[%s1267 + $0x40] sm:$0xf]
        %v3208 = vld [vmem:[%s1267 + $0x44] sm:$0xf]
        %v3209 = vld [vmem:[%s1267 + $0x48] sm:$0xf]
        %v3210 = vld [vmem:[%s1267 + $0x4c] sm:$0xf]
        %v3211 = vld [vmem:[%s1267 + $0x50] sm:$0xf]
        %v3212 = vld [vmem:[%s1267 + $0x54] sm:$0xf]
        %v3213 = vld [vmem:[%s1267 + $0x58] sm:$0xf]
        %v3214 = vld [vmem:[%s1267 + $0x5c] sm:$0xf]
        %v3215 = vld [vmem:[%s1267 + $0x60] sm:$0xf]
        %v3216 = vld [vmem:[%s1267 + $0x64] sm:$0xf]
        %v3217 = vld [vmem:[%s1267 + $0x68] sm:$0xf]
        %v3218 = vld [vmem:[%s1267 + $0x6c] sm:$0xf]
        %v3219 = vld [vmem:[%s1267 + $0x70] sm:$0xf]
        %v3220 = vld [vmem:[%s1267 + $0x74] sm:$0xf]
        %v3221 = vld [vmem:[%s1267 + $0x78] sm:$0xf]
        %v3222 = vld [vmem:[%s1267 + $0x7c] sm:$0xf]
        %v3223 = vld [vmem:[%s1267 + $0x80] sm:$0xf]
        %v3224 = vld [vmem:[%s1267 + $0x84] sm:$0xf]
        %v3225 = vld [vmem:[%s1267 + $0x88] sm:$0xf]
        %v3226 = vld [vmem:[%s1267 + $0x8c] sm:$0xf]
        %v3227 = vld [vmem:[%s1267 + $0x90] sm:$0xf]
        %v3228 = vld [vmem:[%s1267 + $0x94] sm:$0xf]
        %v3229 = vld [vmem:[%s1267 + $0x98] sm:$0xf]
        %v3230 = vld [vmem:[%s1267 + $0x9c] sm:$0xf]
        %v3231 = vld [vmem:[%s1267 + $0xa0] sm:$0xf]
        %v3232 = vld [vmem:[%s1267 + $0xa4] sm:$0xf]
        %v3233 = vld [vmem:[%s1267 + $0xa8] sm:$0xf]
        %v3234 = vld [vmem:[%s1267 + $0xac] sm:$0xf]
        %v3235 = vld [vmem:[%s1267 + $0xb0] sm:$0xf]
        %v3236 = vld [vmem:[%s1267 + $0xb4] sm:$0xf]
        %v3237 = vld [vmem:[%s1267 + $0xb8] sm:$0xf]
        %v3238 = vld [vmem:[%s1267 + $0xbc] sm:$0xf]
        %v3239 = vld [vmem:[%s1267 + $0xc0] sm:$0xf]
        %v3240 = vld [vmem:[%s1267 + $0xc4] sm:$0xf]
        %v3241 = vld [vmem:[%s1267 + $0xc8] sm:$0xf]
        %v3242 = vld [vmem:[%s1267 + $0xcc] sm:$0xf]
        %v3243 = vld [vmem:[%s1267 + $0xd0] sm:$0xf]
        %v3244 = vld [vmem:[%s1267 + $0xd4] sm:$0xf]
        %v3245 = vld [vmem:[%s1267 + $0xd8] sm:$0xf]
        %v3246 = vld [vmem:[%s1267 + $0xdc] sm:$0xf]
        %v3247 = vld [vmem:[%s1267 + $0xe0] sm:$0xf]
        %v3248 = vld [vmem:[%s1267 + $0xe4] sm:$0xf]
        %v3249 = vld [vmem:[%s1267 + $0xe8] sm:$0xf]
        %v3250 = vld [vmem:[%s1267 + $0xec] sm:$0xf]
        %v3251 = vld [vmem:[%s1267 + $0xf0] sm:$0xf]
        %v3252 = vld [vmem:[%s1267 + $0xf4] sm:$0xf]
        %v3253 = vld [vmem:[%s1267 + $0xf8] sm:$0xf]
        %v3254 = vld [vmem:[%s1267 + $0xfc] sm:$0xf]
        %v3255 = vld [vmem:[%s1267 + $0x100] sm:$0xf]
        %v3256 = vld [vmem:[%s1267 + $0x104] sm:$0xf]
        %v3257 = vld [vmem:[%s1267 + $0x108] sm:$0xf]
        %v3258 = vld [vmem:[%s1267 + $0x10c] sm:$0xf]
        %v3259 = vld [vmem:[%s1267 + $0x110] sm:$0xf]
        %v3260 = vld [vmem:[%s1267 + $0x114] sm:$0xf]
        %v3261 = vld [vmem:[%s1267 + $0x118] sm:$0xf]
        %v3262 = vld [vmem:[%s1267 + $0x11c] sm:$0xf]
        %v3263 = vld [vmem:[%s1267 + $0x120] sm:$0xf]
        %v3264 = vld [vmem:[%s1267 + $0x124] sm:$0xf]
        %v3265 = vld [vmem:[%s1267 + $0x128] sm:$0xf]
        %v3266 = vld [vmem:[%s1267 + $0x12c] sm:$0xf]
        %v3267 = vld [vmem:[%s1267 + $0x130] sm:$0xf]
        %v3268 = vld [vmem:[%s1267 + $0x134] sm:$0xf]
        %v3269 = vld [vmem:[%s1267 + $0x138] sm:$0xf]
        %v3270 = vld [vmem:[%s1267 + $0x13c] sm:$0xf]
        %v3271 = vld [vmem:[%s1267 + $0x140] sm:$0xf]
        %v3272 = vld [vmem:[%s1267 + $0x144] sm:$0xf]
        %v3273 = vld [vmem:[%s1267 + $0x148] sm:$0xf]
        %v3274 = vld [vmem:[%s1267 + $0x14c] sm:$0xf]
        %v3275 = vld [vmem:[%s1267 + $0x150] sm:$0xf]
        %v3276 = vld [vmem:[%s1267 + $0x154] sm:$0xf]
        %v3277 = vld [vmem:[%s1267 + $0x158] sm:$0xf]
        %v3278 = vld [vmem:[%s1267 + $0x15c] sm:$0xf]
        %v3279 = vld [vmem:[%s1267 + $0x160] sm:$0xf]
        %v3280 = vld [vmem:[%s1267 + $0x164] sm:$0xf]
        %v3281 = vld [vmem:[%s1267 + $0x168] sm:$0xf]
        %v3282 = vld [vmem:[%s1267 + $0x16c] sm:$0xf]
        %v3283 = vld [vmem:[%s1267 + $0x170] sm:$0xf]
        %v3284 = vld [vmem:[%s1267 + $0x174] sm:$0xf]
        %v3285 = vld [vmem:[%s1267 + $0x178] sm:$0xf]
        %v3286 = vld [vmem:[%s1267 + $0x17c] sm:$0xf]
        %v3287 = vld [vmem:[%s1267 + $0x180] sm:$0xf]
        %v3288 = vld [vmem:[%s1267 + $0x184] sm:$0xf]
        %v3289 = vld [vmem:[%s1267 + $0x188] sm:$0xf]
        %v3290 = vld [vmem:[%s1267 + $0x18c] sm:$0xf]
        %v3291 = vld [vmem:[%s1267 + $0x190] sm:$0xf]
        %v3292 = vld [vmem:[%s1267 + $0x194] sm:$0xf]
        %v3293 = vld [vmem:[%s1267 + $0x198] sm:$0xf]
        %v3294 = vld [vmem:[%s1267 + $0x19c] sm:$0xf]
        %v3295 = vld [vmem:[%s1267 + $0x1a0] sm:$0xf]
        %v3296 = vld [vmem:[%s1267 + $0x1a4] sm:$0xf]
        %v3297 = vld [vmem:[%s1267 + $0x1a8] sm:$0xf]
        %v3298 = vld [vmem:[%s1267 + $0x1ac] sm:$0xf]
        %v3299 = vld [vmem:[%s1267 + $0x1b0] sm:$0xf]
        %v3300 = vld [vmem:[%s1267 + $0x1b4] sm:$0xf]
        %v3301 = vld [vmem:[%s1267 + $0x1b8] sm:$0xf]
        %v3302 = vld [vmem:[%s1267 + $0x1bc] sm:$0xf]
        %v3303 = vld [vmem:[%s1267 + $0x1c0] sm:$0xf]
        %v3304 = vld [vmem:[%s1267 + $0x1c4] sm:$0xf]
        %v3305 = vld [vmem:[%s1267 + $0x1c8] sm:$0xf]
        %v3306 = vld [vmem:[%s1267 + $0x1cc] sm:$0xf]
        %v3307 = vld [vmem:[%s1267 + $0x1d0] sm:$0xf]
        %v3308 = vld [vmem:[%s1267 + $0x1d4] sm:$0xf]
        %v3309 = vld [vmem:[%s1267 + $0x1d8] sm:$0xf]
        %v3310 = vld [vmem:[%s1267 + $0x1dc] sm:$0xf]
        %v3311 = vld [vmem:[%s1267 + $0x1e0] sm:$0xf]
        %v3312 = vld [vmem:[%s1267 + $0x1e4] sm:$0xf]
        %v3313 = vld [vmem:[%s1267 + $0x1e8] sm:$0xf]
        %v3314 = vld [vmem:[%s1267 + $0x1ec] sm:$0xf]
        %v3315 = vld [vmem:[%s1267 + $0x1f0] sm:$0xf]
        %v3316 = vld [vmem:[%s1267 + $0x1f4] sm:$0xf]
        %v3317 = vld [vmem:[%s1267 + $0x1f8] sm:$0xf]
        %v3318 = vld [vmem:[%s1267 + $0x1fc] sm:$0xf]
        %v3319 = vld [vmem:[%s1267 + $0x200] sm:$0xf]
        %v3320 = vld [vmem:[%s1267 + $0x204] sm:$0xf]
        %v3321 = vld [vmem:[%s1267 + $0x208] sm:$0xf]
        %v3322 = vld [vmem:[%s1267 + $0x20c] sm:$0xf]
        %v3323 = vld [vmem:[%s1267 + $0x210] sm:$0xf]
        %v3324 = vld [vmem:[%s1267 + $0x214] sm:$0xf]
        %v3325 = vld [vmem:[%s1267 + $0x218] sm:$0xf]
        %v3326 = vld [vmem:[%s1267 + $0x21c] sm:$0xf]
        %v3327 = vld [vmem:[%s1267 + $0x220] sm:$0xf]
        %v3328 = vld [vmem:[%s1267 + $0x224] sm:$0xf]
        %v3329 = vld [vmem:[%s1267 + $0x228] sm:$0xf]
        %v3330 = vld [vmem:[%s1267 + $0x22c] sm:$0xf]
        %v3331 = vld [vmem:[%s1267 + $0x230] sm:$0xf]
        %v3332 = vld [vmem:[%s1267 + $0x234] sm:$0xf]
        %v3333 = vld [vmem:[%s1267 + $0x238] sm:$0xf]
        %v3334 = vld [vmem:[%s1267 + $0x23c] sm:$0xf]
        %v3335 = vld [vmem:[%s1267 + $0x240] sm:$0xf]
        %v3336 = vld [vmem:[%s1267 + $0x244] sm:$0xf]
        %v3337 = vld [vmem:[%s1267 + $0x248] sm:$0xf]
        %v3338 = vld [vmem:[%s1267 + $0x24c] sm:$0xf]
        %v3339 = vld [vmem:[%s1267 + $0x250] sm:$0xf]
        %v3340 = vld [vmem:[%s1267 + $0x254] sm:$0xf]
        %v3341 = vld [vmem:[%s1267 + $0x258] sm:$0xf]
        %v3342 = vld [vmem:[%s1267 + $0x25c] sm:$0xf]
        %v3343 = vld [vmem:[%s1267 + $0x260] sm:$0xf]
        %v3344 = vld [vmem:[%s1267 + $0x264] sm:$0xf]
        %v3345 = vld [vmem:[%s1267 + $0x268] sm:$0xf]
        %v3346 = vld [vmem:[%s1267 + $0x26c] sm:$0xf]
        %v3347 = vld [vmem:[%s1267 + $0x270] sm:$0xf]
        %v3348 = vld [vmem:[%s1267 + $0x274] sm:$0xf]
        %v3349 = vld [vmem:[%s1267 + $0x278] sm:$0xf]
        %v3350 = vld [vmem:[%s1267 + $0x27c] sm:$0xf]
        %v3351 = vld [vmem:[%s1267 + $0x280] sm:$0xf]
        %v3352 = vld [vmem:[%s1267 + $0x284] sm:$0xf]
        %v3353 = vld [vmem:[%s1267 + $0x288] sm:$0xf]
        %v3354 = vld [vmem:[%s1267 + $0x28c] sm:$0xf]
        %v3355 = vld [vmem:[%s1267 + $0x290] sm:$0xf]
        %v3356 = vld [vmem:[%s1267 + $0x294] sm:$0xf]
        %v3357 = vld [vmem:[%s1267 + $0x298] sm:$0xf]
        %v3358 = vld [vmem:[%s1267 + $0x29c] sm:$0xf]
        %v3359 = vld [vmem:[%s1267 + $0x2a0] sm:$0xf]
        %v3360 = vld [vmem:[%s1267 + $0x2a4] sm:$0xf]
        %v3361 = vld [vmem:[%s1267 + $0x2a8] sm:$0xf]
        %v3362 = vld [vmem:[%s1267 + $0x2ac] sm:$0xf]
        %v3363 = vld [vmem:[%s1267 + $0x2b0] sm:$0xf]
        %v3364 = vld [vmem:[%s1267 + $0x2b4] sm:$0xf]
        %v3365 = vld [vmem:[%s1267 + $0x2b8] sm:$0xf]
        %v3366 = vld [vmem:[%s1267 + $0x2bc] sm:$0xf]
        %v3367 = vld [vmem:[%s1267 + $0x2c0] sm:$0xf]
        %v3368 = vld [vmem:[%s1267 + $0x2c4] sm:$0xf]
        %v3369 = vld [vmem:[%s1267 + $0x2c8] sm:$0xf]
        %v3370 = vld [vmem:[%s1267 + $0x2cc] sm:$0xf]
        %v3371 = vld [vmem:[%s1267 + $0x2d0] sm:$0xf]
        %v3372 = vld [vmem:[%s1267 + $0x2d4] sm:$0xf]
        %v3373 = vld [vmem:[%s1267 + $0x2d8] sm:$0xf]
        %v3374 = vld [vmem:[%s1267 + $0x2dc] sm:$0xf]
        %v3375 = vld [vmem:[%s1267 + $0x2e0] sm:$0xf]
        %v3376 = vld [vmem:[%s1267 + $0x2e4] sm:$0xf]
        %v3377 = vld [vmem:[%s1267 + $0x2e8] sm:$0xf]
        %v3378 = vld [vmem:[%s1267 + $0x2ec] sm:$0xf]
        %v3379 = vld [vmem:[%s1267 + $0x2f0] sm:$0xf]
        %v3380 = vld [vmem:[%s1267 + $0x2f4] sm:$0xf]
        %v3381 = vld [vmem:[%s1267 + $0x2f8] sm:$0xf]
        %v3382 = vld [vmem:[%s1267 + $0x2fc] sm:$0xf]
        %v3383 = vld [vmem:[%s1267 + $0x300] sm:$0xf]
        %v3384 = vld [vmem:[%s1267 + $0x304] sm:$0xf]
        %v3385 = vld [vmem:[%s1267 + $0x308] sm:$0xf]
        %v3386 = vld [vmem:[%s1267 + $0x30c] sm:$0xf]
        %v3387 = vld [vmem:[%s1267 + $0x310] sm:$0xf]
        %v3388 = vld [vmem:[%s1267 + $0x314] sm:$0xf]
        %v3389 = vld [vmem:[%s1267 + $0x318] sm:$0xf]
        %v3390 = vld [vmem:[%s1267 + $0x31c] sm:$0xf]
        %v3391 = vld [vmem:[%s1267 + $0x320] sm:$0xf]
        %v3392 = vld [vmem:[%s1267 + $0x324] sm:$0xf]
        %v3393 = vld [vmem:[%s1267 + $0x328] sm:$0xf]
        %v3394 = vld [vmem:[%s1267 + $0x32c] sm:$0xf]
        %v3395 = vld [vmem:[%s1267 + $0x330] sm:$0xf]
        %v3396 = vld [vmem:[%s1267 + $0x334] sm:$0xf]
        %v3397 = vld [vmem:[%s1267 + $0x338] sm:$0xf]
        %v3398 = vld [vmem:[%s1267 + $0x33c] sm:$0xf]
        %v3399 = vld [vmem:[%s1267 + $0x340] sm:$0xf]
        %v3400 = vld [vmem:[%s1267 + $0x344] sm:$0xf]
        %v3401 = vld [vmem:[%s1267 + $0x348] sm:$0xf]
        %v3402 = vld [vmem:[%s1267 + $0x34c] sm:$0xf]
        %v3403 = vld [vmem:[%s1267 + $0x350] sm:$0xf]
        %v3404 = vld [vmem:[%s1267 + $0x354] sm:$0xf]
        %v3405 = vld [vmem:[%s1267 + $0x358] sm:$0xf]
        %v3406 = vld [vmem:[%s1267 + $0x35c] sm:$0xf]
        %v3407 = vld [vmem:[%s1267 + $0x360] sm:$0xf]
        %v3408 = vld [vmem:[%s1267 + $0x364] sm:$0xf]
        %v3409 = vld [vmem:[%s1267 + $0x368] sm:$0xf]
        %v3410 = vld [vmem:[%s1267 + $0x36c] sm:$0xf]
        %v3411 = vld [vmem:[%s1267 + $0x370] sm:$0xf]
        %v3412 = vld [vmem:[%s1267 + $0x374] sm:$0xf]
        %v3413 = vld [vmem:[%s1267 + $0x378] sm:$0xf]
        %v3414 = vld [vmem:[%s1267 + $0x37c] sm:$0xf]
        %v3415 = vld [vmem:[%s1267 + $0x380] sm:$0xf]
        %v3416 = vld [vmem:[%s1267 + $0x384] sm:$0xf]
        %v3417 = vld [vmem:[%s1267 + $0x388] sm:$0xf]
        %v3418 = vld [vmem:[%s1267 + $0x38c] sm:$0xf]
        %v3419 = vld [vmem:[%s1267 + $0x390] sm:$0xf]
        %v3420 = vld [vmem:[%s1267 + $0x394] sm:$0xf]
        %v3421 = vld [vmem:[%s1267 + $0x398] sm:$0xf]
        %v3422 = vld [vmem:[%s1267 + $0x39c] sm:$0xf]
        %v3423 = vld [vmem:[%s1267 + $0x3a0] sm:$0xf]
        %v3424 = vld [vmem:[%s1267 + $0x3a4] sm:$0xf]
        %v3425 = vld [vmem:[%s1267 + $0x3a8] sm:$0xf]
        %v3426 = vld [vmem:[%s1267 + $0x3ac] sm:$0xf]
        %v3427 = vld [vmem:[%s1267 + $0x3b0] sm:$0xf]
        %v3428 = vld [vmem:[%s1267 + $0x3b4] sm:$0xf]
        %v3429 = vld [vmem:[%s1267 + $0x3b8] sm:$0xf]
        %v3430 = vld [vmem:[%s1267 + $0x3bc] sm:$0xf]
        %v3431 = vld [vmem:[%s1267 + $0x3c0] sm:$0xf]
        %v3432 = vld [vmem:[%s1267 + $0x3c4] sm:$0xf]
        %v3433 = vld [vmem:[%s1267 + $0x3c8] sm:$0xf]
        %v3434 = vld [vmem:[%s1267 + $0x3cc] sm:$0xf]
        %v3435 = vld [vmem:[%s1267 + $0x3d0] sm:$0xf]
        %v3436 = vld [vmem:[%s1267 + $0x3d4] sm:$0xf]
        %v3437 = vld [vmem:[%s1267 + $0x3d8] sm:$0xf]
        %v3438 = vld [vmem:[%s1267 + $0x3dc] sm:$0xf]
        %v3439 = vld [vmem:[%s1267 + $0x3e0] sm:$0xf]
        %v3440 = vld [vmem:[%s1267 + $0x3e4] sm:$0xf]
        %v3441 = vld [vmem:[%s1298] sm:$0x1]
        %v3443 = vperm.slane %v3441, 0
        %v3695 = vunpack.c.l.b16 %v3191
        %v3696 = vunpack.c.l.b16 %v3192
        %v3697 = vunpack.c.l.b16 %v3193
        %v3698 = vunpack.c.l.b16 %v3194
        %v3699 = vunpack.c.l.b16 %v3195
        %v3700 = vunpack.c.l.b16 %v3196
        %v3701 = vunpack.c.l.b16 %v3197
        %v3702 = vunpack.c.l.b16 %v3198
        %v3703 = vunpack.c.l.b16 %v3199
        %v3704 = vunpack.c.l.b16 %v3200
        %v3705 = vunpack.c.l.b16 %v3201
        %v3706 = vunpack.c.l.b16 %v3202
        %v3707 = vunpack.c.l.b16 %v3203
        %v3708 = vunpack.c.l.b16 %v3204
        %v3709 = vunpack.c.l.b16 %v3205
        %v3710 = vunpack.c.l.b16 %v3206
        %v3711 = vunpack.c.l.b16 %v3207
        %v3712 = vunpack.c.l.b16 %v3208
        %v3713 = vunpack.c.l.b16 %v3209
        %v3714 = vunpack.c.l.b16 %v3210
        %v3715 = vunpack.c.l.b16 %v3211
        %v3716 = vunpack.c.l.b16 %v3212
        %v3717 = vunpack.c.l.b16 %v3213
        %v3718 = vunpack.c.l.b16 %v3214
        %v3719 = vunpack.c.l.b16 %v3215
        %v3720 = vunpack.c.l.b16 %v3216
        %v3721 = vunpack.c.l.b16 %v3217
        %v3722 = vunpack.c.l.b16 %v3218
        %v3723 = vunpack.c.l.b16 %v3219
        %v3724 = vunpack.c.l.b16 %v3220
        %v3725 = vunpack.c.l.b16 %v3221
        %v3726 = vunpack.c.l.b16 %v3222
        %v3727 = vunpack.c.l.b16 %v3223
        %v3728 = vunpack.c.l.b16 %v3224
        %v3729 = vunpack.c.l.b16 %v3225
        %v3730 = vunpack.c.l.b16 %v3226
        %v3731 = vunpack.c.l.b16 %v3227
        %v3732 = vunpack.c.l.b16 %v3228
        %v3733 = vunpack.c.l.b16 %v3229
        %v3734 = vunpack.c.l.b16 %v3230
        %v3735 = vunpack.c.l.b16 %v3231
        %v3736 = vunpack.c.l.b16 %v3232
        %v3737 = vunpack.c.l.b16 %v3233
        %v3738 = vunpack.c.l.b16 %v3234
        %v3739 = vunpack.c.l.b16 %v3235
        %v3740 = vunpack.c.l.b16 %v3236
        %v3741 = vunpack.c.l.b16 %v3237
        %v3742 = vunpack.c.l.b16 %v3238
        %v3743 = vunpack.c.l.b16 %v3239
        %v3744 = vunpack.c.l.b16 %v3240
        %v3745 = vunpack.c.l.b16 %v3241
        %v3746 = vunpack.c.l.b16 %v3242
        %v3747 = vunpack.c.l.b16 %v3243
        %v3748 = vunpack.c.l.b16 %v3244
        %v3749 = vunpack.c.l.b16 %v3245
        %v3750 = vunpack.c.l.b16 %v3246
        %v3751 = vunpack.c.l.b16 %v3247
        %v3752 = vunpack.c.l.b16 %v3248
        %v3753 = vunpack.c.l.b16 %v3249
        %v3754 = vunpack.c.l.b16 %v3250
        %v3755 = vunpack.c.l.b16 %v3251
        %v3756 = vunpack.c.l.b16 %v3252
        %v3757 = vunpack.c.l.b16 %v3253
        %v3758 = vunpack.c.l.b16 %v3254
        %v3759 = vunpack.c.l.b16 %v3255
        %v3760 = vunpack.c.l.b16 %v3256
        %v3761 = vunpack.c.l.b16 %v3257
        %v3762 = vunpack.c.l.b16 %v3258
        %v3763 = vunpack.c.l.b16 %v3259
        %v3764 = vunpack.c.l.b16 %v3260
        %v3765 = vunpack.c.l.b16 %v3261
        %v3766 = vunpack.c.l.b16 %v3262
        %v3767 = vunpack.c.l.b16 %v3263
        %v3768 = vunpack.c.l.b16 %v3264
        %v3769 = vunpack.c.l.b16 %v3265
        %v3770 = vunpack.c.l.b16 %v3266
        %v3771 = vunpack.c.l.b16 %v3267
        %v3772 = vunpack.c.l.b16 %v3268
        %v3773 = vunpack.c.l.b16 %v3269
        %v3774 = vunpack.c.l.b16 %v3270
        %v3775 = vunpack.c.l.b16 %v3271
        %v3776 = vunpack.c.l.b16 %v3272
        %v3777 = vunpack.c.l.b16 %v3273
        %v3778 = vunpack.c.l.b16 %v3274
        %v3779 = vunpack.c.l.b16 %v3275
        %v3780 = vunpack.c.l.b16 %v3276
        %v3781 = vunpack.c.l.b16 %v3277
        %v3782 = vunpack.c.l.b16 %v3278
        %v3783 = vunpack.c.l.b16 %v3279
        %v3784 = vunpack.c.l.b16 %v3280
        %v3785 = vunpack.c.l.b16 %v3281
        %v3786 = vunpack.c.l.b16 %v3282
        %v3787 = vunpack.c.l.b16 %v3283
        %v3788 = vunpack.c.l.b16 %v3284
        %v3789 = vunpack.c.l.b16 %v3285
        %v3790 = vunpack.c.l.b16 %v3286
        %v3791 = vunpack.c.l.b16 %v3287
        %v3792 = vunpack.c.l.b16 %v3288
        %v3793 = vunpack.c.l.b16 %v3289
        %v3794 = vunpack.c.l.b16 %v3290
        %v3795 = vunpack.c.l.b16 %v3291
        %v3796 = vunpack.c.l.b16 %v3292
        %v3797 = vunpack.c.l.b16 %v3293
        %v3798 = vunpack.c.l.b16 %v3294
        %v3799 = vunpack.c.l.b16 %v3295
        %v3800 = vunpack.c.l.b16 %v3296
        %v3801 = vunpack.c.l.b16 %v3297
        %v3802 = vunpack.c.l.b16 %v3298
        %v3803 = vunpack.c.l.b16 %v3299
        %v3804 = vunpack.c.l.b16 %v3300
        %v3805 = vunpack.c.l.b16 %v3301
        %v3806 = vunpack.c.l.b16 %v3302
        %v3807 = vunpack.c.l.b16 %v3303
        %v3808 = vunpack.c.l.b16 %v3304
        %v3809 = vunpack.c.l.b16 %v3305
        %v3810 = vunpack.c.l.b16 %v3306
        %v3811 = vunpack.c.l.b16 %v3307
        %v3812 = vunpack.c.l.b16 %v3308
        %v3813 = vunpack.c.l.b16 %v3309
        %v3814 = vunpack.c.l.b16 %v3310
        %v3815 = vunpack.c.l.b16 %v3311
        %v3816 = vunpack.c.l.b16 %v3312
        %v3817 = vunpack.c.l.b16 %v3313
        %v3818 = vunpack.c.l.b16 %v3314
        %v3819 = vunpack.c.l.b16 %v3315
        %v3820 = vunpack.c.l.b16 %v3316
        %v3821 = vunpack.c.l.b16 %v3317
        %v3822 = vunpack.c.l.b16 %v3318
        %v3823 = vunpack.c.l.b16 %v3319
        %v3824 = vunpack.c.l.b16 %v3320
        %v3825 = vunpack.c.l.b16 %v3321
        %v3826 = vunpack.c.l.b16 %v3322
        %v3827 = vunpack.c.l.b16 %v3323
        %v3828 = vunpack.c.l.b16 %v3324
        %v3829 = vunpack.c.l.b16 %v3325
        %v3830 = vunpack.c.l.b16 %v3326
        %v3831 = vunpack.c.l.b16 %v3327
        %v3832 = vunpack.c.l.b16 %v3328
        %v3833 = vunpack.c.l.b16 %v3329
        %v3834 = vunpack.c.l.b16 %v3330
        %v3835 = vunpack.c.l.b16 %v3331
        %v3836 = vunpack.c.l.b16 %v3332
        %v3837 = vunpack.c.l.b16 %v3333
        %v3838 = vunpack.c.l.b16 %v3334
        %v3839 = vunpack.c.l.b16 %v3335
        %v3840 = vunpack.c.l.b16 %v3336
        %v3841 = vunpack.c.l.b16 %v3337
        %v3842 = vunpack.c.l.b16 %v3338
        %v3843 = vunpack.c.l.b16 %v3339
        %v3844 = vunpack.c.l.b16 %v3340
        %v3845 = vunpack.c.l.b16 %v3341
        %v3846 = vunpack.c.l.b16 %v3342
        %v3847 = vunpack.c.l.b16 %v3343
        %v3848 = vunpack.c.l.b16 %v3344
        %v3849 = vunpack.c.l.b16 %v3345
        %v3850 = vunpack.c.l.b16 %v3346
        %v3851 = vunpack.c.l.b16 %v3347
        %v3852 = vunpack.c.l.b16 %v3348
        %v3853 = vunpack.c.l.b16 %v3349
        %v3854 = vunpack.c.l.b16 %v3350
        %v3855 = vunpack.c.l.b16 %v3351
        %v3856 = vunpack.c.l.b16 %v3352
        %v3857 = vunpack.c.l.b16 %v3353
        %v3858 = vunpack.c.l.b16 %v3354
        %v3859 = vunpack.c.l.b16 %v3355
        %v3860 = vunpack.c.l.b16 %v3356
        %v3861 = vunpack.c.l.b16 %v3357
        %v3862 = vunpack.c.l.b16 %v3358
        %v3863 = vunpack.c.l.b16 %v3359
        %v3864 = vunpack.c.l.b16 %v3360
        %v3865 = vunpack.c.l.b16 %v3361
        %v3866 = vunpack.c.l.b16 %v3362
        %v3867 = vunpack.c.l.b16 %v3363
        %v3868 = vunpack.c.l.b16 %v3364
        %v3869 = vunpack.c.l.b16 %v3365
        %v3870 = vunpack.c.l.b16 %v3366
        %v3871 = vunpack.c.l.b16 %v3367
        %v3872 = vunpack.c.l.b16 %v3368
        %v3873 = vunpack.c.l.b16 %v3369
        %v3874 = vunpack.c.l.b16 %v3370
        %v3875 = vunpack.c.l.b16 %v3371
        %v3876 = vunpack.c.l.b16 %v3372
        %v3877 = vunpack.c.l.b16 %v3373
        %v3878 = vunpack.c.l.b16 %v3374
        %v3879 = vunpack.c.l.b16 %v3375
        %v3880 = vunpack.c.l.b16 %v3376
        %v3881 = vunpack.c.l.b16 %v3377
        %v3882 = vunpack.c.l.b16 %v3378
        %v3883 = vunpack.c.l.b16 %v3379
        %v3884 = vunpack.c.l.b16 %v3380
        %v3885 = vunpack.c.l.b16 %v3381
        %v3886 = vunpack.c.l.b16 %v3382
        %v3887 = vunpack.c.l.b16 %v3383
        %v3888 = vunpack.c.l.b16 %v3384
        %v3889 = vunpack.c.l.b16 %v3385
        %v3890 = vunpack.c.l.b16 %v3386
        %v3891 = vunpack.c.l.b16 %v3387
        %v3892 = vunpack.c.l.b16 %v3388
        %v3893 = vunpack.c.l.b16 %v3389
        %v3894 = vunpack.c.l.b16 %v3390
        %v3895 = vunpack.c.l.b16 %v3391
        %v3896 = vunpack.c.l.b16 %v3392
        %v3897 = vunpack.c.l.b16 %v3393
        %v3898 = vunpack.c.l.b16 %v3394
        %v3899 = vunpack.c.l.b16 %v3395
        %v3900 = vunpack.c.l.b16 %v3396
        %v3901 = vunpack.c.l.b16 %v3397
        %v3902 = vunpack.c.l.b16 %v3398
        %v3903 = vunpack.c.l.b16 %v3399
        %v3904 = vunpack.c.l.b16 %v3400
        %v3905 = vunpack.c.l.b16 %v3401
        %v3906 = vunpack.c.l.b16 %v3402
        %v3907 = vunpack.c.l.b16 %v3403
        %v3908 = vunpack.c.l.b16 %v3404
        %v3909 = vunpack.c.l.b16 %v3405
        %v3910 = vunpack.c.l.b16 %v3406
        %v3911 = vunpack.c.l.b16 %v3407
        %v3912 = vunpack.c.l.b16 %v3408
        %v3913 = vunpack.c.l.b16 %v3409
        %v3914 = vunpack.c.l.b16 %v3410
        %v3915 = vunpack.c.l.b16 %v3411
        %v3916 = vunpack.c.l.b16 %v3412
        %v3917 = vunpack.c.l.b16 %v3413
        %v3918 = vunpack.c.l.b16 %v3414
        %v3919 = vunpack.c.l.b16 %v3415
        %v3920 = vunpack.c.l.b16 %v3416
        %v3921 = vunpack.c.l.b16 %v3417
        %v3922 = vunpack.c.l.b16 %v3418
        %v3923 = vunpack.c.l.b16 %v3419
        %v3924 = vunpack.c.l.b16 %v3420
        %v3925 = vunpack.c.l.b16 %v3421
        %v3926 = vunpack.c.l.b16 %v3422
        %v3927 = vunpack.c.l.b16 %v3423
        %v3928 = vunpack.c.l.b16 %v3424
        %v3929 = vunpack.c.l.b16 %v3425
        %v3930 = vunpack.c.l.b16 %v3426
        %v3931 = vunpack.c.l.b16 %v3427
        %v3932 = vunpack.c.l.b16 %v3428
        %v3933 = vunpack.c.l.b16 %v3429
        %v3934 = vunpack.c.l.b16 %v3430
        %v3935 = vunpack.c.l.b16 %v3431
        %v3936 = vunpack.c.l.b16 %v3432
        %v3937 = vunpack.c.l.b16 %v3433
        %v3938 = vunpack.c.l.b16 %v3434
        %v3939 = vunpack.c.l.b16 %v3435
        %v3940 = vunpack.c.l.b16 %v3436
        %v3941 = vunpack.c.l.b16 %v3437
        %v3942 = vunpack.c.l.b16 %v3438
        %v3943 = vunpack.c.l.b16 %v3439
        %v3944 = vunpack.c.l.b16 %v3440
        %v3945 = vpack.c.b16 %v3696, %v3695
        %v3946 = vpack.c.b16 %v3698, %v3697
        %v3947 = vpack.c.b16 %v3700, %v3699
        %v3948 = vpack.c.b16 %v3702, %v3701
        %v3949 = vpack.c.b16 %v3704, %v3703
        %v3950 = vpack.c.b16 %v3706, %v3705
        %v3951 = vpack.c.b16 %v3708, %v3707
        %v3952 = vpack.c.b16 %v3710, %v3709
        %v3953 = vpack.c.b16 %v3712, %v3711
        %v3954 = vpack.c.b16 %v3714, %v3713
        %v3955 = vpack.c.b16 %v3716, %v3715
        %v3956 = vpack.c.b16 %v3718, %v3717
        %v3957 = vpack.c.b16 %v3720, %v3719
        %v3958 = vpack.c.b16 %v3722, %v3721
        %v3959 = vpack.c.b16 %v3724, %v3723
        %v3960 = vpack.c.b16 %v3726, %v3725
        %v3961 = vpack.c.b16 %v3728, %v3727
        %v3962 = vpack.c.b16 %v3730, %v3729
        %v3963 = vpack.c.b16 %v3732, %v3731
        %v3964 = vpack.c.b16 %v3734, %v3733
        %v3965 = vpack.c.b16 %v3736, %v3735
        %v3966 = vpack.c.b16 %v3738, %v3737
        %v3967 = vpack.c.b16 %v3740, %v3739
        %v3968 = vpack.c.b16 %v3742, %v3741
        %v3969 = vpack.c.b16 %v3744, %v3743
        %v3970 = vpack.c.b16 %v3746, %v3745
        %v3971 = vpack.c.b16 %v3748, %v3747
        %v3972 = vpack.c.b16 %v3750, %v3749
        %v3973 = vpack.c.b16 %v3752, %v3751
        %v3974 = vpack.c.b16 %v3754, %v3753
        %v3975 = vpack.c.b16 %v3756, %v3755
        %v3976 = vpack.c.b16 %v3758, %v3757
        %v3977 = vpack.c.b16 %v3760, %v3759
        %v3978 = vpack.c.b16 %v3762, %v3761
        %v3979 = vpack.c.b16 %v3764, %v3763
        %v3980 = vpack.c.b16 %v3766, %v3765
        %v3981 = vpack.c.b16 %v3768, %v3767
        %v3982 = vpack.c.b16 %v3770, %v3769
        %v3983 = vpack.c.b16 %v3772, %v3771
        %v3984 = vpack.c.b16 %v3774, %v3773
        %v3985 = vpack.c.b16 %v3776, %v3775
        %v3986 = vpack.c.b16 %v3778, %v3777
        %v3987 = vpack.c.b16 %v3780, %v3779
        %v3988 = vpack.c.b16 %v3782, %v3781
        %v3989 = vpack.c.b16 %v3784, %v3783
        %v3990 = vpack.c.b16 %v3786, %v3785
        %v3991 = vpack.c.b16 %v3788, %v3787
        %v3992 = vpack.c.b16 %v3790, %v3789
        %v3993 = vpack.c.b16 %v3792, %v3791
        %v3994 = vpack.c.b16 %v3794, %v3793
        %v3995 = vpack.c.b16 %v3796, %v3795
        %v3996 = vpack.c.b16 %v3798, %v3797
        %v3997 = vpack.c.b16 %v3800, %v3799
        %v3998 = vpack.c.b16 %v3802, %v3801
        %v3999 = vpack.c.b16 %v3804, %v3803
        %v4000 = vpack.c.b16 %v3806, %v3805
        %v4001 = vpack.c.b16 %v3808, %v3807
        %v4002 = vpack.c.b16 %v3810, %v3809
        %v4003 = vpack.c.b16 %v3812, %v3811
        %v4004 = vpack.c.b16 %v3814, %v3813
        %v4005 = vpack.c.b16 %v3816, %v3815
        %v4006 = vpack.c.b16 %v3818, %v3817
        %v4007 = vpack.c.b16 %v3820, %v3819
        %v4008 = vpack.c.b16 %v3822, %v3821
        %v4009 = vpack.c.b16 %v3824, %v3823
        %v4010 = vpack.c.b16 %v3826, %v3825
        %v4011 = vpack.c.b16 %v3828, %v3827
        %v4012 = vpack.c.b16 %v3830, %v3829
        %v4013 = vpack.c.b16 %v3832, %v3831
        %v4014 = vpack.c.b16 %v3834, %v3833
        %v4015 = vpack.c.b16 %v3836, %v3835
        %v4016 = vpack.c.b16 %v3838, %v3837
        %v4017 = vpack.c.b16 %v3840, %v3839
        %v4018 = vpack.c.b16 %v3842, %v3841
        %v4019 = vpack.c.b16 %v3844, %v3843
        %v4020 = vpack.c.b16 %v3846, %v3845
        %v4021 = vpack.c.b16 %v3848, %v3847
        %v4022 = vpack.c.b16 %v3850, %v3849
        %v4023 = vpack.c.b16 %v3852, %v3851
        %v4024 = vpack.c.b16 %v3854, %v3853
        %v4025 = vpack.c.b16 %v3856, %v3855
        %v4026 = vpack.c.b16 %v3858, %v3857
        %v4027 = vpack.c.b16 %v3860, %v3859
        %v4028 = vpack.c.b16 %v3862, %v3861
        %v4029 = vpack.c.b16 %v3864, %v3863
        %v4030 = vpack.c.b16 %v3866, %v3865
        %v4031 = vpack.c.b16 %v3868, %v3867
        %v4032 = vpack.c.b16 %v3870, %v3869
        %v4033 = vpack.c.b16 %v3872, %v3871
        %v4034 = vpack.c.b16 %v3874, %v3873
        %v4035 = vpack.c.b16 %v3876, %v3875
        %v4036 = vpack.c.b16 %v3878, %v3877
        %v4037 = vpack.c.b16 %v3880, %v3879
        %v4038 = vpack.c.b16 %v3882, %v3881
        %v4039 = vpack.c.b16 %v3884, %v3883
        %v4040 = vpack.c.b16 %v3886, %v3885
        %v4041 = vpack.c.b16 %v3888, %v3887
        %v4042 = vpack.c.b16 %v3890, %v3889
        %v4043 = vpack.c.b16 %v3892, %v3891
        %v4044 = vpack.c.b16 %v3894, %v3893
        %v4045 = vpack.c.b16 %v3896, %v3895
        %v4046 = vpack.c.b16 %v3898, %v3897
        %v4047 = vpack.c.b16 %v3900, %v3899
        %v4048 = vpack.c.b16 %v3902, %v3901
        %v4049 = vpack.c.b16 %v3904, %v3903
        %v4050 = vpack.c.b16 %v3906, %v3905
        %v4051 = vpack.c.b16 %v3908, %v3907
        %v4052 = vpack.c.b16 %v3910, %v3909
        %v4053 = vpack.c.b16 %v3912, %v3911
        %v4054 = vpack.c.b16 %v3914, %v3913
        %v4055 = vpack.c.b16 %v3916, %v3915
        %v4056 = vpack.c.b16 %v3918, %v3917
        %v4057 = vpack.c.b16 %v3920, %v3919
        %v4058 = vpack.c.b16 %v3922, %v3921
        %v4059 = vpack.c.b16 %v3924, %v3923
        %v4060 = vpack.c.b16 %v3926, %v3925
        %v4061 = vpack.c.b16 %v3928, %v3927
        %v4062 = vpack.c.b16 %v3930, %v3929
        %v4063 = vpack.c.b16 %v3932, %v3931
        %v4064 = vpack.c.b16 %v3934, %v3933
        %v4065 = vpack.c.b16 %v3936, %v3935
        %v4066 = vpack.c.b16 %v3938, %v3937
        %v4067 = vpack.c.b16 %v3940, %v3939
        %v4068 = vpack.c.b16 %v3942, %v3941
        %v4069 = vpack.c.b16 %v3944, %v3943
        %vm4195 = vcmask 654336
        %v4197 = vsel %vm4195, %v3190, 0
        %4199 = vmatpush.bf16.msra.mxu0 %v3952
        %4200 = vmatpush.bf16.msra.mxu0 %v3951
        %4201 = vmatpush.bf16.msra.mxu0 %v3950
        %4202 = vmatpush.bf16.msra.mxu0 %v3949
        %4203 = vmatpush.bf16.msra.mxu0 %v3948
        %4204 = vmatpush.bf16.msra.mxu0 %v3947
        %4205 = vmatpush.bf16.msra.mxu0 %v3946
        %4206 = vmatpush.bf16.msra.mxu0 %v3945
        %4207 = vmatmul.bf16.gmra.mxu0 %v3175
        %v4208 = vpop.f32.mrf.mxu0
        %v4209 = vadd.f32 %v3443, %v4208
        %v4210 = vpop.f32.mrf.mxu0
        %v4211 = vadd.f32 %v3443, %v4210
        %4212 = vdwg.mxu0
        %4213 = vmatpush.bf16.msra.mxu0 %v3960
        %4214 = vmatpush.bf16.msra.mxu0 %v3959
        %4215 = vmatpush.bf16.msra.mxu0 %v3958
        %4216 = vmatpush.bf16.msra.mxu0 %v3957
        %4217 = vmatpush.bf16.msra.mxu0 %v3956
        %4218 = vmatpush.bf16.msra.mxu0 %v3955
        %4219 = vmatpush.bf16.msra.mxu0 %v3954
        %4220 = vmatpush.bf16.msra.mxu0 %v3953
        %4221 = vmatmul.bf16.gmra.mxu0 %v3176
        %v4222 = vpop.f32.mrf.mxu0
        %v4223 = vadd.f32 %v4209, %v4222
        %v4224 = vpop.f32.mrf.mxu0
        %v4225 = vadd.f32 %v4211, %v4224
        %4226 = vdwg.mxu0
        %4227 = vmatpush.bf16.msra.mxu0 %v3968
        %4228 = vmatpush.bf16.msra.mxu0 %v3967
        %4229 = vmatpush.bf16.msra.mxu0 %v3966
        %4230 = vmatpush.bf16.msra.mxu0 %v3965
        %4231 = vmatpush.bf16.msra.mxu0 %v3964
        %4232 = vmatpush.bf16.msra.mxu0 %v3963
        %4233 = vmatpush.bf16.msra.mxu0 %v3962
        %4234 = vmatpush.bf16.msra.mxu0 %v3961
        %4235 = vmatmul.bf16.gmra.mxu0 %v3177
        %v4236 = vpop.f32.mrf.mxu0
        %v4237 = vadd.f32 %v4223, %v4236
        %v4238 = vpop.f32.mrf.mxu0
        %v4239 = vadd.f32 %v4225, %v4238
        %4240 = vdwg.mxu0
        %4241 = vmatpush.bf16.msra.mxu0 %v3976
        %4242 = vmatpush.bf16.msra.mxu0 %v3975
        %4243 = vmatpush.bf16.msra.mxu0 %v3974
        %4244 = vmatpush.bf16.msra.mxu0 %v3973
        %4245 = vmatpush.bf16.msra.mxu0 %v3972
        %4246 = vmatpush.bf16.msra.mxu0 %v3971
        %4247 = vmatpush.bf16.msra.mxu0 %v3970
        %4248 = vmatpush.bf16.msra.mxu0 %v3969
        %4249 = vmatmul.bf16.gmra.mxu0 %v3178
        %v4250 = vpop.f32.mrf.mxu0
        %v4251 = vadd.f32 %v4237, %v4250
        %v4252 = vpop.f32.mrf.mxu0
        %v4253 = vadd.f32 %v4239, %v4252
        %4254 = vdwg.mxu0
        %4255 = vmatpush.bf16.msra.mxu0 %v3984
        %4256 = vmatpush.bf16.msra.mxu0 %v3983
        %4257 = vmatpush.bf16.msra.mxu0 %v3982
        %4258 = vmatpush.bf16.msra.mxu0 %v3981
        %4259 = vmatpush.bf16.msra.mxu0 %v3980
        %4260 = vmatpush.bf16.msra.mxu0 %v3979
        %4261 = vmatpush.bf16.msra.mxu0 %v3978
        %4262 = vmatpush.bf16.msra.mxu0 %v3977
        %4263 = vmatmul.bf16.gmra.mxu0 %v3179
        %v4264 = vpop.f32.mrf.mxu0
        %v4265 = vadd.f32 %v4251, %v4264
        %v4266 = vpop.f32.mrf.mxu0
        %v4267 = vadd.f32 %v4253, %v4266
        %4268 = vdwg.mxu0
        %4269 = vmatpush.bf16.msra.mxu0 %v3992
        %4270 = vmatpush.bf16.msra.mxu0 %v3991
        %4271 = vmatpush.bf16.msra.mxu0 %v3990
        %4272 = vmatpush.bf16.msra.mxu0 %v3989
        %4273 = vmatpush.bf16.msra.mxu0 %v3988
        %4274 = vmatpush.bf16.msra.mxu0 %v3987
        %4275 = vmatpush.bf16.msra.mxu0 %v3986
        %4276 = vmatpush.bf16.msra.mxu0 %v3985
        %4277 = vmatmul.bf16.gmra.mxu0 %v3180
        %v4278 = vpop.f32.mrf.mxu0
        %v4279 = vadd.f32 %v4265, %v4278
        %v4280 = vpop.f32.mrf.mxu0
        %v4281 = vadd.f32 %v4267, %v4280
        %4282 = vdwg.mxu0
        %4283 = vmatpush.bf16.msra.mxu0 %v4000
        %4284 = vmatpush.bf16.msra.mxu0 %v3999
        %4285 = vmatpush.bf16.msra.mxu0 %v3998
        %4286 = vmatpush.bf16.msra.mxu0 %v3997
        %4287 = vmatpush.bf16.msra.mxu0 %v3996
        %4288 = vmatpush.bf16.msra.mxu0 %v3995
        %4289 = vmatpush.bf16.msra.mxu0 %v3994
        %4290 = vmatpush.bf16.msra.mxu0 %v3993
        %4291 = vmatmul.bf16.gmra.mxu0 %v3181
        %v4292 = vpop.f32.mrf.mxu0
        %v4293 = vadd.f32 %v4279, %v4292
        %v4294 = vpop.f32.mrf.mxu0
        %v4295 = vadd.f32 %v4281, %v4294
        %4296 = vdwg.mxu0
        %4297 = vmatpush.bf16.msra.mxu0 %v4008
        %4298 = vmatpush.bf16.msra.mxu0 %v4007
        %4299 = vmatpush.bf16.msra.mxu0 %v4006
        %4300 = vmatpush.bf16.msra.mxu0 %v4005
        %4301 = vmatpush.bf16.msra.mxu0 %v4004
        %4302 = vmatpush.bf16.msra.mxu0 %v4003
        %4303 = vmatpush.bf16.msra.mxu0 %v4002
        %4304 = vmatpush.bf16.msra.mxu0 %v4001
        %4305 = vmatmul.bf16.gmra.mxu0 %v3182
        %v4306 = vpop.f32.mrf.mxu0
        %v4307 = vadd.f32 %v4293, %v4306
        %v4308 = vpop.f32.mrf.mxu0
        %v4309 = vadd.f32 %v4295, %v4308
        %4310 = vdwg.mxu0
        %4311 = vmatpush.bf16.msra.mxu0 %v4016
        %4312 = vmatpush.bf16.msra.mxu0 %v4015
        %4313 = vmatpush.bf16.msra.mxu0 %v4014
        %4314 = vmatpush.bf16.msra.mxu0 %v4013
        %4315 = vmatpush.bf16.msra.mxu0 %v4012
        %4316 = vmatpush.bf16.msra.mxu0 %v4011
        %4317 = vmatpush.bf16.msra.mxu0 %v4010
        %4318 = vmatpush.bf16.msra.mxu0 %v4009
        %4319 = vmatmul.bf16.gmra.mxu0 %v3183
        %v4320 = vpop.f32.mrf.mxu0
        %v4321 = vadd.f32 %v4307, %v4320
        %v4322 = vpop.f32.mrf.mxu0
        %v4323 = vadd.f32 %v4309, %v4322
        %4324 = vdwg.mxu0
        %4325 = vmatpush.bf16.msra.mxu0 %v4024
        %4326 = vmatpush.bf16.msra.mxu0 %v4023
        %4327 = vmatpush.bf16.msra.mxu0 %v4022
        %4328 = vmatpush.bf16.msra.mxu0 %v4021
        %4329 = vmatpush.bf16.msra.mxu0 %v4020
        %4330 = vmatpush.bf16.msra.mxu0 %v4019
        %4331 = vmatpush.bf16.msra.mxu0 %v4018
        %4332 = vmatpush.bf16.msra.mxu0 %v4017
        %4333 = vmatmul.bf16.gmra.mxu0 %v3184
        %v4334 = vpop.f32.mrf.mxu0
        %v4335 = vadd.f32 %v4321, %v4334
        %v4336 = vpop.f32.mrf.mxu0
        %v4337 = vadd.f32 %v4323, %v4336
        %4338 = vdwg.mxu0
        %4339 = vmatpush.bf16.msra.mxu0 %v4032
        %4340 = vmatpush.bf16.msra.mxu0 %v4031
        %4341 = vmatpush.bf16.msra.mxu0 %v4030
        %4342 = vmatpush.bf16.msra.mxu0 %v4029
        %4343 = vmatpush.bf16.msra.mxu0 %v4028
        %4344 = vmatpush.bf16.msra.mxu0 %v4027
        %4345 = vmatpush.bf16.msra.mxu0 %v4026
        %4346 = vmatpush.bf16.msra.mxu0 %v4025
        %4347 = vmatmul.bf16.gmra.mxu0 %v3185
        %v4348 = vpop.f32.mrf.mxu0
        %v4349 = vadd.f32 %v4335, %v4348
        %v4350 = vpop.f32.mrf.mxu0
        %v4351 = vadd.f32 %v4337, %v4350
        %4352 = vdwg.mxu0
        %4353 = vmatpush.bf16.msra.mxu0 %v4040
        %4354 = vmatpush.bf16.msra.mxu0 %v4039
        %4355 = vmatpush.bf16.msra.mxu0 %v4038
        %4356 = vmatpush.bf16.msra.mxu0 %v4037
        %4357 = vmatpush.bf16.msra.mxu0 %v4036
        %4358 = vmatpush.bf16.msra.mxu0 %v4035
        %4359 = vmatpush.bf16.msra.mxu0 %v4034
        %4360 = vmatpush.bf16.msra.mxu0 %v4033
        %4361 = vmatmul.bf16.gmra.mxu0 %v3186
        %v4362 = vpop.f32.mrf.mxu0
        %v4363 = vadd.f32 %v4349, %v4362
        %v4364 = vpop.f32.mrf.mxu0
        %v4365 = vadd.f32 %v4351, %v4364
        %4366 = vdwg.mxu0
        %4367 = vmatpush.bf16.msra.mxu0 %v4048
        %4368 = vmatpush.bf16.msra.mxu0 %v4047
        %4369 = vmatpush.bf16.msra.mxu0 %v4046
        %4370 = vmatpush.bf16.msra.mxu0 %v4045
        %4371 = vmatpush.bf16.msra.mxu0 %v4044
        %4372 = vmatpush.bf16.msra.mxu0 %v4043
        %4373 = vmatpush.bf16.msra.mxu0 %v4042
        %4374 = vmatpush.bf16.msra.mxu0 %v4041
        %4375 = vmatmul.bf16.gmra.mxu0 %v3187
        %v4376 = vpop.f32.mrf.mxu0
        %v4377 = vadd.f32 %v4363, %v4376
        %v4378 = vpop.f32.mrf.mxu0
        %v4379 = vadd.f32 %v4365, %v4378
        %4380 = vdwg.mxu0
        %4381 = vmatpush.bf16.msra.mxu0 %v4056
        %4382 = vmatpush.bf16.msra.mxu0 %v4055
        %4383 = vmatpush.bf16.msra.mxu0 %v4054
        %4384 = vmatpush.bf16.msra.mxu0 %v4053
        %4385 = vmatpush.bf16.msra.mxu0 %v4052
        %4386 = vmatpush.bf16.msra.mxu0 %v4051
        %4387 = vmatpush.bf16.msra.mxu0 %v4050
        %4388 = vmatpush.bf16.msra.mxu0 %v4049
        %4389 = vmatmul.bf16.gmra.mxu0 %v3188
        %v4390 = vpop.f32.mrf.mxu0
        %v4391 = vadd.f32 %v4377, %v4390
        %v4392 = vpop.f32.mrf.mxu0
        %v4393 = vadd.f32 %v4379, %v4392
        %4394 = vdwg.mxu0
        %4395 = vmatpush.bf16.msra.mxu0 %v4064
        %4396 = vmatpush.bf16.msra.mxu0 %v4063
        %4397 = vmatpush.bf16.msra.mxu0 %v4062
        %4398 = vmatpush.bf16.msra.mxu0 %v4061
        %4399 = vmatpush.bf16.msra.mxu0 %v4060
        %4400 = vmatpush.bf16.msra.mxu0 %v4059
        %4401 = vmatpush.bf16.msra.mxu0 %v4058
        %4402 = vmatpush.bf16.msra.mxu0 %v4057
        %4403 = vmatmul.bf16.gmra.mxu0 %v3189
        %v4404 = vpop.f32.mrf.mxu0
        %v4405 = vadd.f32 %v4391, %v4404
        %v4406 = vpop.f32.mrf.mxu0
        %v4407 = vadd.f32 %v4393, %v4406
        %4408 = vdwg.mxu0
        %4409 = vmatpush.bf16.msra.mxu0 0
        %4410 = vmatpush.bf16.msra.mxu0 0
        %4411 = vmatpush.bf16.msra.mxu0 0
        %4412 = vmatpush.bf16.msra.mxu0 %v4069
        %4413 = vmatpush.bf16.msra.mxu0 %v4068
        %4414 = vmatpush.bf16.msra.mxu0 %v4067
        %4415 = vmatpush.bf16.msra.mxu0 %v4066
        %4416 = vmatpush.bf16.msra.mxu0 %v4065
        %4417 = vmatmul.bf16.gmra.mxu0 %v4197
        %v4418 = vpop.f32.mrf.mxu0
        %v4419 = vadd.f32 %v4405, %v4418
        %v4420 = vpop.f32.mrf.mxu0
        %v4421 = vadd.f32 %v4407, %v4420
        %4422 = vdwg.mxu0
        %v4423 = vxor.u32 %v4419, 2147483648
        %v4424 = vxor.u32 %v4421, 2147483648
        %v4425 = vmul.f32 %v4423, 1.442695
        %v4426 = vpow.pop %v4425
        %v4427 = vmul.f32 %v4424, 1.442695
        %v4428 = vpow.pop %v4427
        %v4429 = vadd.f32 %v4426, 1.0
        %v4430 = vadd.f32 %v4428, 1.0
        %v4431 = vrcp.pop %v4429
        %v4432 = vmul.f32 %v4429, %v4431
        %v4433 = vsub.f32 1.0, %v4432
        %v4434 = vmul.f32 %v4431, %v4433
        %v4435 = vadd.f32 %v4431, %v4434
        %vm4436 = vweird.f32 %v4429
        %vm4437 = vweird.f32 %v4431
        %vm4438 = vmor %vm4436, %vm4437
        %v4439 = vsel %vm4438, %v4431, %v4435
        %v4440 = vand.u32 2147483647, %v4429
        %vm4441 = vcmp.eq.f32.partialorder %v4440, 8.507059e+37
        %v4442 = vand.u32 %v4429, 2147483648
        %v4443 = vor.u32 1.1754944e-38, %v4442
        %v4444 = vsel %vm4441, %v4443, %v4439
        %v4445 = vmul.f32 1.0, %v4444
        %v4446 = vrcp.pop %v4430
        %v4447 = vmul.f32 %v4430, %v4446
        %v4448 = vsub.f32 1.0, %v4447
        %v4449 = vmul.f32 %v4446, %v4448
        %v4450 = vadd.f32 %v4446, %v4449
        %vm4451 = vweird.f32 %v4430
        %vm4452 = vweird.f32 %v4446
        %vm4453 = vmor %vm4451, %vm4452
        %v4454 = vsel %vm4453, %v4446, %v4450
        %v4455 = vand.u32 2147483647, %v4430
        %vm4456 = vcmp.eq.f32.partialorder %v4455, 8.507059e+37
        %v4457 = vand.u32 %v4430, 2147483648
        %v4458 = vor.u32 1.1754944e-38, %v4457
        %v4459 = vsel %vm4456, %v4458, %v4454
        %v4460 = vmul.f32 1.0, %v4459
        %4461 = vst [vmem:[%s1295] sm:$0xff] %v4445
        %4462 = vst [vmem:[%s1295 + $0x8] sm:$0xff] %v4460
        %s4463 = sand.u32 %s161, 1
        %s4464 = sand.u32 %s161, 1
        %s4465 = smul.addr %s4464, 16
        %s4466 = scalar_lea.vmem [#allocation3], %s4465
        // Predicated region
        $region86: #{decoder_forward.3} parent=80 // pred_check
          %p4467 = pneg %p171
        $region87: #{decoder_forward.3} parent=80 // pred_check_branch
          %4469 = sbr.rel (%p4467) target = $region89
        $region88: #{decoder_forward.3} parent=80 // pred_region
          %s4470 = smul.addr %s17, 8
          %s4471 = scalar_lea.vmem %s6, %s4470
          // Predicated region
          $region90: #{decoder_forward.3} parent=88 // pred_check
            _
          $region91: #{decoder_forward.3} parent=88 // pred_check_branch
            %4473 = sbr.rel (0) target = $region93
          $region92: #{decoder_forward.3} parent=88 // pred_region
            // Predicated region
            $region94: #{decoder_forward.3} parent=92 // pred_check
              _
            $region95: #{decoder_forward.3} parent=92 // pred_check_branch
              %4475 = sbr.rel (0) target = $region97
            $region96: #{decoder_forward.3} parent=92 // pred_region
              // Predicated region
              $region109: #{decoder_forward.3} parent=96 // pred_check
                _
              $region110: #{decoder_forward.3} parent=96 // pred_check_branch
                %4493 = sbr.rel (0) target = $region112
              $region111: #{decoder_forward.3} parent=96 // pred_region
                loop: start=0, step=1, limit=1
                $region113: #{decoder_forward.3} parent=111 // loop_pre_header
                  _
                $region114: #{decoder_forward.3} parent=111 // loop_header
                  %s4495 = sphi 0, %s4499
                  %p4496 = scmp.ge.s32.totalorder %s4495, 1
                  %s4500 = sphi %s4466, %s4466
                  %s4501 = sphi %s4471, %s4471
                $region115: #{decoder_forward.3} parent=111 // loop_header_branch
                  %4498 = sbr.rel (%p4496) target = $region119
                $region116: #{decoder_forward.3} parent=111 // loop_body
                  %v4502 = vld [vmem:[%s4500] sm:$0xff]
                  %4503 = vst [vmem:[%s4501] sm:$0xff] %v4502
                  %v4504 = vld [vmem:[%s4500 + $0x8] sm:$0xff]
                  %4505 = vst [vmem:[%s4501 + $0x10] sm:$0xff] %v4504
                $region117: #{decoder_forward.3} parent=111 // loop_footer
                  %s4499 = sadd.s32 1, %s4495
                $region118: #{decoder_forward.3} parent=111 // loop_footer_branch
                  %4494 = sbr.rel target = $region114
                $region119: #{decoder_forward.3} parent=111 // loop_exit
                  _
              $region112: #{decoder_forward.3} parent=96 // pred_fallthru
                _
              // Predicated region
              $region120: #{decoder_forward.3} parent=96 // pred_check
                _
              $region121: #{decoder_forward.3} parent=96 // pred_check_branch
                %4507 = sbr.rel target = $region123
              $region122: #{decoder_forward.3} parent=96 // pred_region
                _
              $region123: #{decoder_forward.3} parent=96 // pred_fallthru
                _
            $region97: #{decoder_forward.3} parent=92 // pred_fallthru
              _
            // Predicated region
            $region98: #{decoder_forward.3} parent=92 // pred_check
              _
            $region99: #{decoder_forward.3} parent=92 // pred_check_branch
              %4477 = sbr.rel target = $region101
            $region100: #{decoder_forward.3} parent=92 // pred_region
              %s4479 = ssub.s32 256, 1
              loop: start=0, step=1, limit=1
              $region102: #{decoder_forward.3} parent=100 // loop_pre_header
                _
              $region103: #{decoder_forward.3} parent=100 // loop_header
                %s4481 = sphi 0, %s4485
                %p4482 = scmp.ge.s32.totalorder %s4481, 1
                %s4486 = sphi %s4466, %s4466
                %s4487 = sphi %s4471, %s4471
              $region104: #{decoder_forward.3} parent=100 // loop_header_branch
                %4484 = sbr.rel (%p4482) target = $region108
              $region105: #{decoder_forward.3} parent=100 // loop_body
                %v4488 = vld [vmem:[%s4486] sm:%s4479]
                %4489 = vst [vmem:[%s4487] sm:%s4479] %v4488
                %v4490 = vld [vmem:[%s4486 + $0x8] sm:%s4479]
                %4491 = vst [vmem:[%s4487 + $0x10] sm:%s4479] %v4490
              $region106: #{decoder_forward.3} parent=100 // loop_footer
                %s4485 = sadd.s32 1, %s4481
              $region107: #{decoder_forward.3} parent=100 // loop_footer_branch
                %4480 = sbr.rel target = $region103
              $region108: #{decoder_forward.3} parent=100 // loop_exit
                _
            $region101: #{decoder_forward.3} parent=92 // pred_fallthru
              _
          $region93: #{decoder_forward.3} parent=88 // pred_fallthru
            _
          %4508 = vnop
        $region89: #{decoder_forward.3} parent=80 // pred_fallthru
          _
      $region81: #{decoder_forward.3} parent=5 // pred_fallthru
        _
      %p4509 = scmp.le.s32.totalorder 2, %s12
      // Predicated region
      $region124: #{decoder_forward.3} parent=5 // pred_check
        %p4510 = pneg %p4509
      $region125: #{decoder_forward.3} parent=5 // pred_check_branch
        %4512 = sbr.rel (%p4510) target = $region127
      $region126: #{decoder_forward.3} parent=5 // pred_region
        %s4513 = ssub.s32 %s12, 2
        // Predicated region
        $region128: #{decoder_forward.3} parent=126 // pred_check
          %p4514 = pneg %p177
        $region129: #{decoder_forward.3} parent=126 // pred_check_branch
          %4516 = sbr.rel (%p4514) target = $region131
        $region130: #{decoder_forward.3} parent=126 // pred_region
          %s4517 = sand.u32 %s162, 1
          %s4518 = sand.u32 %s162, 1
          %s4519 = smul.addr %s4518, 16
          %s4520 = scalar_lea.vmem [#allocation3], %s4519
        $region131: #{decoder_forward.3} parent=126 // pred_fallthru
          _
      $region127: #{decoder_forward.3} parent=5 // pred_fallthru
        _
    $region6: #{decoder_forward.3} parent=1 // loop_footer
      %s16 = sadd.s32 1, %s12
    $region7: #{decoder_forward.3} parent=1 // loop_footer_branch
      %11 = sbr.rel target = $region3
    $region8: #{decoder_forward.3} parent=1 // loop_exit
      _

// kernel: decoder_forward.2
$region0: #{decoder_forward.2}
  #allocation0 [shape = 'u32[]', space=smem, size = 0x4, offset = 0x4, fixed_abs, tag = 'smem constant byte address 0x4 - core index']
  #allocation1 [shape = 'u32[72,128]{1,0:T(1,128)}', space=vmem, size = 0x9000, scoped, tag = 'internal scratch']
  %s0 = inlined_call_operand.vmem [shape: f32[2,32], index: 0, kind: input, shape index: {}]
  %s1 = inlined_call_operand.vmem [shape: bf16[32,1600], index: 1, kind: input, shape index: {}]
  %s2 = inlined_call_operand.vmem [shape: f32[1,1600], index: 2, kind: input, shape index: {}]
  %s3 = inlined_call_operand.vmem [shape: f32[1,1600], index: 3, kind: input, shape index: {}]
  %s4 = inlined_call_operand.vmem [shape: bf16[2,1600,800], index: 4, kind: input, shape index: {}]
  %s5 = inlined_call_operand.vmem [shape: f32[2,1,800], index: 5, kind: input, shape index: {}]
  %s6 = inlined_call_operand.vmem [shape: f32[2,1,800], index: 6, kind: input, shape index: {}]
  %s7 = inlined_call_operand.vmem [shape: f32[2,2,800], index: 7, kind: output, shape index: {}]
  %s8 = sld [smem:[#allocation0]]
  $region61: #{decoder_forward.2} parent=0
    _
  %s10 = ssub.s32 1, %s8
  %s11 = scalar_select 0, %s10, %s8
  loop: start=0, step=1, limit=4
  $region2: #{decoder_forward.2} parent=0 // loop_pre_header
    _
  $region3: #{decoder_forward.2} parent=0 // loop_header
    %s13 = sphi 0, %s17
    %p14 = scmp.ge.s32.totalorder %s13, 4
    %s21 = sphi 0, %s21
    %s23 = sphi 0, %s21
    %s24 = sphi 0, %s23
    %s38 = sphi 0, %s24
    %s42 = sphi 0, %s42
    %s44 = sphi 0, %s42
    %s45 = sphi 0, %s44
    %s59 = sphi 0, %s45
    %s63 = sphi 0, %s63
    %s65 = sphi 0, %s63
    %s66 = sphi 0, %s65
    %s80 = sphi 0, %s66
    %s84 = sphi 0, %s84
    %s86 = sphi 0, %s84
    %s87 = sphi 0, %s86
    %s101 = sphi 0, %s87
    %s107 = sphi 0, %s109
    %s110 = sphi 0, %s107
    %s111 = sphi 0, %s110
    %s127 = sphi 0, %s111
    %s133 = sphi 0, %s135
    %s136 = sphi 0, %s133
    %s137 = sphi 0, %s136
    %s153 = sphi 0, %s137
    %s159 = sphi 0, %s161
    %s162 = sphi 0, %s159
    %s163 = sphi 0, %s162
    %s179 = sphi 0, %s163
    %s185 = sphi 0, %s187
    %s188 = sphi 0, %s185
    %s189 = sphi 0, %s188
    %s205 = sphi 0, %s189
  $region4: #{decoder_forward.2} parent=0 // loop_header_branch
    %16 = sbr.rel (%p14) target = $region8
  $region5: #{decoder_forward.2} parent=0 // loop_body
    %s18 = ssub.s32 %s13, 1
    %s19 = ssub.s32 %s13, 2
    %s20 = sadd.s32 %s13, 1
    %s22 = sadd.s32 %s21, 1
    %p25 = scmp.eq.s32.totalorder %s13, 1
    %p26 = scmp.ne.s32.totalorder %s21, %s23
    %p27 = scmp.eq.s32.totalorder %s13, 0
    %p28 = por %p26, %p27
    %p29 = scmp.ne.s32.totalorder %s21, %s23
    %p30 = scmp.eq.s32.totalorder %s18, 1
    %p31 = por %p29, %p30
    %p32 = scmp.ne.s32.totalorder %s23, %s24
    %p33 = scmp.eq.s32.totalorder %s18, 0
    %p34 = por %p32, %p33
    %p35 = scmp.ne.s32.totalorder %s23, %s24
    %p36 = scmp.eq.s32.totalorder %s19, 1
    %p37 = por %p35, %p36
    %p39 = scmp.ne.s32.totalorder %s24, %s38
    %p40 = scmp.eq.s32.totalorder %s19, 0
    %p41 = por %p39, %p40
    %s43 = sadd.s32 %s42, 1
    %p46 = scmp.eq.s32.totalorder %s13, 1
    %p47 = scmp.ne.s32.totalorder %s42, %s44
    %p48 = scmp.eq.s32.totalorder %s13, 0
    %p49 = por %p47, %p48
    %p50 = scmp.ne.s32.totalorder %s42, %s44
    %p51 = scmp.eq.s32.totalorder %s18, 1
    %p52 = por %p50, %p51
    %p53 = scmp.ne.s32.totalorder %s44, %s45
    %p54 = scmp.eq.s32.totalorder %s18, 0
    %p55 = por %p53, %p54
    %p56 = scmp.ne.s32.totalorder %s44, %s45
    %p57 = scmp.eq.s32.totalorder %s19, 1
    %p58 = por %p56, %p57
    %p60 = scmp.ne.s32.totalorder %s45, %s59
    %p61 = scmp.eq.s32.totalorder %s19, 0
    %p62 = por %p60, %p61
    %s64 = sadd.s32 %s63, 1
    %p67 = scmp.eq.s32.totalorder %s13, 1
    %p68 = scmp.ne.s32.totalorder %s63, %s65
    %p69 = scmp.eq.s32.totalorder %s13, 0
    %p70 = por %p68, %p69
    %p71 = scmp.ne.s32.totalorder %s63, %s65
    %p72 = scmp.eq.s32.totalorder %s18, 1
    %p73 = por %p71, %p72
    %p74 = scmp.ne.s32.totalorder %s65, %s66
    %p75 = scmp.eq.s32.totalorder %s18, 0
    %p76 = por %p74, %p75
    %p77 = scmp.ne.s32.totalorder %s65, %s66
    %p78 = scmp.eq.s32.totalorder %s19, 1
    %p79 = por %p77, %p78
    %p81 = scmp.ne.s32.totalorder %s66, %s80
    %p82 = scmp.eq.s32.totalorder %s19, 0
    %p83 = por %p81, %p82
    %s85 = sadd.s32 %s84, 1
    %p88 = scmp.eq.s32.totalorder %s13, 1
    %p89 = scmp.ne.s32.totalorder %s84, %s86
    %p90 = scmp.eq.s32.totalorder %s13, 0
    %p91 = por %p89, %p90
    %p92 = scmp.ne.s32.totalorder %s84, %s86
    %p93 = scmp.eq.s32.totalorder %s18, 1
    %p94 = por %p92, %p93
    %p95 = scmp.ne.s32.totalorder %s86, %s87
    %p96 = scmp.eq.s32.totalorder %s18, 0
    %p97 = por %p95, %p96
    %p98 = scmp.ne.s32.totalorder %s86, %s87
    %p99 = scmp.eq.s32.totalorder %s19, 1
    %p100 = por %p98, %p99
    %p102 = scmp.ne.s32.totalorder %s87, %s101
    %p103 = scmp.eq.s32.totalorder %s19, 0
    %p104 = por %p102, %p103
    %s105 = ssub.s32 %s13, %s20
    %p106 = scmp.eq.s32.totalorder %s105, 0
    %s108 = sadd.s32 %s107, 1
    %s109 = scalar_select %p106, %s107, %s108
    %p112 = pneg %p106
    %p113 = scmp.eq.s32.totalorder %s13, 1
    %p114 = por %p112, %p113
    %p115 = scmp.ne.s32.totalorder %s107, %s110
    %p116 = scmp.eq.s32.totalorder %s13, 0
    %p117 = por %p115, %p116
    %p118 = scmp.ne.s32.totalorder %s107, %s110
    %p119 = scmp.eq.s32.totalorder %s18, 1
    %p120 = por %p118, %p119
    %p121 = scmp.ne.s32.totalorder %s110, %s111
    %p122 = scmp.eq.s32.totalorder %s18, 0
    %p123 = por %p121, %p122
    %p124 = scmp.ne.s32.totalorder %s110, %s111
    %p125 = scmp.eq.s32.totalorder %s19, 1
    %p126 = por %p124, %p125
    %p128 = scmp.ne.s32.totalorder %s111, %s127
    %p129 = scmp.eq.s32.totalorder %s19, 0
    %p130 = por %p128, %p129
    %s131 = ssub.s32 %s13, %s20
    %p132 = scmp.eq.s32.totalorder %s131, 0
    %s134 = sadd.s32 %s133, 1
    %s135 = scalar_select %p132, %s133, %s134
    %p138 = pneg %p132
    %p139 = scmp.eq.s32.totalorder %s13, 1
    %p140 = por %p138, %p139
    %p141 = scmp.ne.s32.totalorder %s133, %s136
    %p142 = scmp.eq.s32.totalorder %s13, 0
    %p143 = por %p141, %p142
    %p144 = scmp.ne.s32.totalorder %s133, %s136
    %p145 = scmp.eq.s32.totalorder %s18, 1
    %p146 = por %p144, %p145
    %p147 = scmp.ne.s32.totalorder %s136, %s137
    %p148 = scmp.eq.s32.totalorder %s18, 0
    %p149 = por %p147, %p148
    %p150 = scmp.ne.s32.totalorder %s136, %s137
    %p151 = scmp.eq.s32.totalorder %s19, 1
    %p152 = por %p150, %p151
    %p154 = scmp.ne.s32.totalorder %s137, %s153
    %p155 = scmp.eq.s32.totalorder %s19, 0
    %p156 = por %p154, %p155
    %s157 = ssub.s32 %s13, %s20
    %p158 = scmp.eq.s32.totalorder %s157, 0
    %s160 = sadd.s32 %s159, 1
    %s161 = scalar_select %p158, %s159, %s160
    %p164 = pneg %p158
    %p165 = scmp.eq.s32.totalorder %s13, 1
    %p166 = por %p164, %p165
    %p167 = scmp.ne.s32.totalorder %s159, %s162
    %p168 = scmp.eq.s32.totalorder %s13, 0
    %p169 = por %p167, %p168
    %p170 = scmp.ne.s32.totalorder %s159, %s162
    %p171 = scmp.eq.s32.totalorder %s18, 1
    %p172 = por %p170, %p171
    %p173 = scmp.ne.s32.totalorder %s162, %s163
    %p174 = scmp.eq.s32.totalorder %s18, 0
    %p175 = por %p173, %p174
    %p176 = scmp.ne.s32.totalorder %s162, %s163
    %p177 = scmp.eq.s32.totalorder %s19, 1
    %p178 = por %p176, %p177
    %p180 = scmp.ne.s32.totalorder %s163, %s179
    %p181 = scmp.eq.s32.totalorder %s19, 0
    %p182 = por %p180, %p181
    %s183 = ssub.s32 %s13, %s20
    %p184 = scmp.eq.s32.totalorder %s183, 0
    %s186 = sadd.s32 %s185, 1
    %s187 = scalar_select %p184, %s185, %s186
    %p190 = pneg %p184
    %p191 = scmp.eq.s32.totalorder %s13, 1
    %p192 = por %p190, %p191
    %p193 = scmp.ne.s32.totalorder %s185, %s188
    %p194 = scmp.eq.s32.totalorder %s13, 0
    %p195 = por %p193, %p194
    %p196 = scmp.ne.s32.totalorder %s185, %s188
    %p197 = scmp.eq.s32.totalorder %s18, 1
    %p198 = por %p196, %p197
    %p199 = scmp.ne.s32.totalorder %s188, %s189
    %p200 = scmp.eq.s32.totalorder %s18, 0
    %p201 = por %p199, %p200
    %p202 = scmp.ne.s32.totalorder %s188, %s189
    %p203 = scmp.eq.s32.totalorder %s19, 1
    %p204 = por %p202, %p203
    %p206 = scmp.ne.s32.totalorder %s189, %s205
    %p207 = scmp.eq.s32.totalorder %s19, 0
    %p208 = por %p206, %p207
    %p209 = scmp.le.s32.totalorder 1, %s13
    %p210 = scmp.lt.s32.totalorder %s13, 3
    %p211 = pnand %p209, %p210
    %p212 = pneg %p211
    // Predicated region
    $region9: #{decoder_forward.2} parent=5 // pred_check
      _
    $region10: #{decoder_forward.2} parent=5 // pred_check_branch
      %214 = sbr.rel (%p211) target = $region12
    $region11: #{decoder_forward.2} parent=5 // pred_region
      %s215 = ssub.s32 %s13, 1
      // Predicated region
      $region13: #{decoder_forward.2} parent=11 // pred_check
        %p216 = pneg %p34
      $region14: #{decoder_forward.2} parent=11 // pred_check_branch
        %218 = sbr.rel (%p216) target = $region16
      $region15: #{decoder_forward.2} parent=11 // pred_region
        _
      $region16: #{decoder_forward.2} parent=11 // pred_fallthru
        _
      // Predicated region
      $region17: #{decoder_forward.2} parent=11 // pred_check
        %p219 = pneg %p55
      $region18: #{decoder_forward.2} parent=11 // pred_check_branch
        %221 = sbr.rel (%p219) target = $region20
      $region19: #{decoder_forward.2} parent=11 // pred_region
        _
      $region20: #{decoder_forward.2} parent=11 // pred_fallthru
        _
      // Predicated region
      $region21: #{decoder_forward.2} parent=11 // pred_check
        %p222 = pneg %p76
      $region22: #{decoder_forward.2} parent=11 // pred_check_branch
        %224 = sbr.rel (%p222) target = $region24
      $region23: #{decoder_forward.2} parent=11 // pred_region
        _
      $region24: #{decoder_forward.2} parent=11 // pred_fallthru
        _
      // Predicated region
      $region25: #{decoder_forward.2} parent=11 // pred_check
        %p225 = pneg %p97
      $region26: #{decoder_forward.2} parent=11 // pred_check_branch
        %227 = sbr.rel (%p225) target = $region28
      $region27: #{decoder_forward.2} parent=11 // pred_region
        _
      $region28: #{decoder_forward.2} parent=11 // pred_fallthru
        _
    $region12: #{decoder_forward.2} parent=5 // pred_fallthru
      _
    %p228 = scmp.lt.s32.totalorder %s13, 2
    // Predicated region
    $region29: #{decoder_forward.2} parent=5 // pred_check
      %p229 = pneg %p228
    $region30: #{decoder_forward.2} parent=5 // pred_check_branch
      %231 = sbr.rel (%p229) target = $region32
    $region31: #{decoder_forward.2} parent=5 // pred_region
      // Predicated region
      $region33: #{decoder_forward.2} parent=31 // pred_check
        %p232 = pneg %p117
      $region34: #{decoder_forward.2} parent=31 // pred_check_branch
        %234 = sbr.rel (%p232) target = $region36
      $region35: #{decoder_forward.2} parent=31 // pred_region
        %p235 = scmp.lt.s32.totalorder %s13, 1
        %s236 = scalar_select %p235, %s13, 1
        %s237 = smul.addr %s236, 1400
        %s238 = smul.addr %s237, 4
        %s239 = scalar_lea.vmem %s4, %s238
      $region36: #{decoder_forward.2} parent=31 // pred_fallthru
        _
      // Predicated region
      $region37: #{decoder_forward.2} parent=31 // pred_check
        %p240 = pneg %p143
      $region38: #{decoder_forward.2} parent=31 // pred_check_branch
        %242 = sbr.rel (%p240) target = $region40
      $region39: #{decoder_forward.2} parent=31 // pred_region
        %p243 = scmp.lt.s32.totalorder %s13, 1
        %s244 = scalar_select %p243, %s13, 1
        %s245 = smul.addr %s244, 7
        %s246 = scalar_lea.vmem %s5, %s245
      $region40: #{decoder_forward.2} parent=31 // pred_fallthru
        _
      // Predicated region
      $region41: #{decoder_forward.2} parent=31 // pred_check
        %p247 = pneg %p169
      $region42: #{decoder_forward.2} parent=31 // pred_check_branch
        %249 = sbr.rel (%p247) target = $region44
      $region43: #{decoder_forward.2} parent=31 // pred_region
        %p250 = scmp.lt.s32.totalorder %s13, 1
        %s251 = scalar_select %p250, %s13, 1
        %s252 = smul.addr %s251, 7
        %s253 = scalar_lea.vmem %s6, %s252
      $region44: #{decoder_forward.2} parent=31 // pred_fallthru
        _
    $region32: #{decoder_forward.2} parent=5 // pred_fallthru
      _
    %p254 = scmp.le.s32.totalorder 1, %s13
    %p255 = scmp.lt.s32.totalorder %s13, 3
    %p256 = pnand %p254, %p255
    %p257 = pneg %p256
    // Predicated region
    $region45: #{decoder_forward.2} parent=5 // pred_check
      _
    $region46: #{decoder_forward.2} parent=5 // pred_check_branch
      %259 = sbr.rel (%p256) target = $region48
    $region47: #{decoder_forward.2} parent=5 // pred_region
      %s260 = ssub.s32 %s13, 1
      %p261 = pneg %p34
      %p262 = pneg %p31
      %p263 = pneg %p55
      %p264 = pneg %p52
      %p265 = pneg %p76
      %p266 = pneg %p73
      %p267 = pneg %p97
      %p268 = pneg %p94
      %p269 = scmp.lt.s32.totalorder %s18, 1
      %s270 = scalar_select %p269, %s18, 1
      %s271 = smul.addr %s270, 1400
      %s272 = smul.addr %s271, 4
      %s273 = scalar_lea.vmem %s4, %s272
      %p274 = pneg %p123
      %p275 = pneg %p120
      %p276 = scmp.lt.s32.totalorder %s18, 1
      %s277 = scalar_select %p276, %s18, 1
      %s278 = smul.addr %s277, 7
      %s279 = scalar_lea.vmem %s5, %s278
      %p280 = pneg %p149
      %p281 = pneg %p146
      %p282 = scmp.lt.s32.totalorder %s18, 1
      %s283 = scalar_select %p282, %s18, 1
      %s284 = smul.addr %s283, 7
      %s285 = scalar_lea.vmem %s6, %s284
      %p286 = pneg %p175
      %p287 = pneg %p172
      %p288 = pneg %p201
      %p289 = pneg %p198
      %p290 = scmp.lt.s32.totalorder %s18, 1
      %s291 = scalar_select %p290, %s18, 1
      %s292 = smul.addr %s291, 7
      %s293 = smul.addr %s292, 2
      %s294 = scalar_lea.vmem %s7, %s293
      %p295 = scmp.lt.s32.totalorder %s18, 1
      %s296 = scalar_select %p295, %s18, 1
      %s297 = smul.addr %s296, 1400
      %s298 = smul.addr %s297, 4
      %s299 = scalar_lea.vmem %s4, %s298
      %p300 = scmp.lt.s32.totalorder %s18, 1
      %s301 = scalar_select %p300, %s18, 1
      %s302 = smul.addr %s301, 7
      %s303 = scalar_lea.vmem %s5, %s302
      %p304 = scmp.lt.s32.totalorder %s18, 1
      %s305 = scalar_select %p304, %s18, 1
      %s306 = smul.addr %s305, 7
      %s307 = scalar_lea.vmem %s6, %s306
      %p308 = scmp.lt.s32.totalorder %s18, 1
      %s309 = scalar_select %p308, %s18, 1
      %s310 = smul.addr %s309, 7
      %s311 = smul.addr %s310, 2
      %s312 = scalar_lea.vmem %s7, %s311
      %v314 = vld [vmem:[%s0] sm:$0x3]
      %v315 = vpack.c.bf16 %v314, %v314
      %v316 = vld [vmem:[%s1] sm:$0xff]
      %v317 = vld [vmem:[%s1 + $0x8] sm:$0xff]
      %v318 = vld [vmem:[%s1 + $0x10] sm:$0xff]
      %v319 = vld [vmem:[%s1 + $0x18] sm:$0xff]
      %v320 = vld [vmem:[%s1 + $0x20] sm:$0xff]
      %v321 = vld [vmem:[%s1 + $0x28] sm:$0xff]
      %v322 = vld [vmem:[%s1 + $0x30] sm:$0xf]
      %v323 = vld [vmem:[%s1 + $0x34] sm:$0xff]
      %v324 = vld [vmem:[%s1 + $0x3c] sm:$0xff]
      %v325 = vld [vmem:[%s1 + $0x44] sm:$0xff]
      %v326 = vld [vmem:[%s1 + $0x4c] sm:$0xff]
      %v327 = vld [vmem:[%s1 + $0x54] sm:$0xff]
      %v328 = vld [vmem:[%s1 + $0x5c] sm:$0xff]
      %v329 = vld [vmem:[%s1 + $0x64] sm:$0xf]
      %v330 = vld [vmem:[%s1 + $0x68] sm:$0xff]
      %v331 = vld [vmem:[%s1 + $0x70] sm:$0xff]
      %v332 = vld [vmem:[%s1 + $0x78] sm:$0xff]
      %v333 = vld [vmem:[%s1 + $0x80] sm:$0xff]
      %v334 = vld [vmem:[%s1 + $0x88] sm:$0xff]
      %v335 = vld [vmem:[%s1 + $0x90] sm:$0xff]
      %v336 = vld [vmem:[%s1 + $0x98] sm:$0xf]
      %v337 = vld [vmem:[%s1 + $0x9c] sm:$0xff]
      %v338 = vld [vmem:[%s1 + $0xa4] sm:$0xff]
      %v339 = vld [vmem:[%s1 + $0xac] sm:$0xff]
      %v340 = vld [vmem:[%s1 + $0xb4] sm:$0xff]
      %v341 = vld [vmem:[%s1 + $0xbc] sm:$0xff]
      %v342 = vld [vmem:[%s1 + $0xc4] sm:$0xff]
      %v343 = vld [vmem:[%s1 + $0xcc] sm:$0xf]
      %v372 = vunpack.c.l.b16 %v316
      %v373 = vunpack.c.h.b16 %v316
      %v374 = vunpack.c.l.b16 %v317
      %v375 = vunpack.c.h.b16 %v317
      %v376 = vunpack.c.l.b16 %v318
      %v377 = vunpack.c.h.b16 %v318
      %v378 = vunpack.c.l.b16 %v319
      %v379 = vunpack.c.h.b16 %v319
      %v380 = vunpack.c.l.b16 %v320
      %v381 = vunpack.c.h.b16 %v320
      %v382 = vunpack.c.l.b16 %v321
      %v383 = vunpack.c.h.b16 %v321
      %v384 = vunpack.c.l.b16 %v322
      %v385 = vunpack.c.l.b16 %v323
      %v386 = vunpack.c.h.b16 %v323
      %v387 = vunpack.c.l.b16 %v324
      %v388 = vunpack.c.h.b16 %v324
      %v389 = vunpack.c.l.b16 %v325
      %v390 = vunpack.c.h.b16 %v325
      %v391 = vunpack.c.l.b16 %v326
      %v392 = vunpack.c.h.b16 %v326
      %v393 = vunpack.c.l.b16 %v327
      %v394 = vunpack.c.h.b16 %v327
      %v395 = vunpack.c.l.b16 %v328
      %v396 = vunpack.c.h.b16 %v328
      %v397 = vunpack.c.l.b16 %v329
      %v398 = vunpack.c.l.b16 %v330
      %v399 = vunpack.c.h.b16 %v330
      %v400 = vunpack.c.l.b16 %v331
      %v401 = vunpack.c.h.b16 %v331
      %v402 = vunpack.c.l.b16 %v332
      %v403 = vunpack.c.h.b16 %v332
      %v404 = vunpack.c.l.b16 %v333
      %v405 = vunpack.c.h.b16 %v333
      %v406 = vunpack.c.l.b16 %v334
      %v407 = vunpack.c.h.b16 %v334
      %v408 = vunpack.c.l.b16 %v335
      %v409 = vunpack.c.h.b16 %v335
      %v410 = vunpack.c.l.b16 %v336
      %v411 = vunpack.c.l.b16 %v337
      %v412 = vunpack.c.h.b16 %v337
      %v413 = vunpack.c.l.b16 %v338
      %v414 = vunpack.c.h.b16 %v338
      %v415 = vunpack.c.l.b16 %v339
      %v416 = vunpack.c.h.b16 %v339
      %v417 = vunpack.c.l.b16 %v340
      %v418 = vunpack.c.h.b16 %v340
      %v419 = vunpack.c.l.b16 %v341
      %v420 = vunpack.c.h.b16 %v341
      %v421 = vunpack.c.l.b16 %v342
      %v422 = vunpack.c.h.b16 %v342
      %v423 = vunpack.c.l.b16 %v343
      %v424 = vpack.c.b16 %v385, %v372
      %v425 = vpack.c.b16 %v386, %v373
      %v426 = vpack.c.b16 %v387, %v374
      %v427 = vpack.c.b16 %v388, %v375
      %v428 = vpack.c.b16 %v389, %v376
      %v429 = vpack.c.b16 %v390, %v377
      %v430 = vpack.c.b16 %v391, %v378
      %v431 = vpack.c.b16 %v392, %v379
      %v432 = vpack.c.b16 %v393, %v380
      %v433 = vpack.c.b16 %v394, %v381
      %v434 = vpack.c.b16 %v395, %v382
      %v435 = vpack.c.b16 %v396, %v383
      %v436 = vpack.c.b16 %v397, %v384
      %v437 = vpack.c.b16 %v411, %v398
      %v438 = vpack.c.b16 %v412, %v399
      %v439 = vpack.c.b16 %v413, %v400
      %v440 = vpack.c.b16 %v414, %v401
      %v441 = vpack.c.b16 %v415, %v402
      %v442 = vpack.c.b16 %v416, %v403
      %v443 = vpack.c.b16 %v417, %v404
      %v444 = vpack.c.b16 %v418, %v405
      %v445 = vpack.c.b16 %v419, %v406
      %v446 = vpack.c.b16 %v420, %v407
      %v447 = vpack.c.b16 %v421, %v408
      %v448 = vpack.c.b16 %v422, %v409
      %v449 = vpack.c.b16 %v423, %v410
      %vm476 = vcmask 261120
      %v478 = vsel %vm476, %v315, 0
      %480 = vmatpush.bf16.msra.mxu0 0
      %481 = vmatpush.bf16.msra.mxu0 0
      %482 = vmatpush.bf16.msra.mxu0 0
      %483 = vmatpush.bf16.msra.mxu0 0
      %484 = vmatpush.bf16.msra.mxu0 0
      %485 = vmatpush.bf16.msra.mxu0 0
      %486 = vmatpush.bf16.msra.mxu0 %v437
      %487 = vmatpush.bf16.msra.mxu0 %v424
      %488 = vmatmul.bf16.gmra.mxu0 %v478
      %v489 = vpop.f32.mrf.mxu0
      %v490 = vadd.f32 0.0, %v489
      %v491 = vpop.f32.mrf.mxu0
      %492 = vdwg.mxu0
      %493 = vmatpush.bf16.msra.mxu0 0
      %494 = vmatpush.bf16.msra.mxu0 0
      %495 = vmatpush.bf16.msra.mxu0 0
      %496 = vmatpush.bf16.msra.mxu0 0
      %497 = vmatpush.bf16.msra.mxu0 0
      %498 = vmatpush.bf16.msra.mxu0 0
      %499 = vmatpush.bf16.msra.mxu0 %v438
      %500 = vmatpush.bf16.msra.mxu0 %v425
      %501 = vmatmul.bf16.gmra.mxu0 %v478
      %v502 = vpop.f32.mrf.mxu0
      %v503 = vadd.f32 0.0, %v502
      %v504 = vpop.f32.mrf.mxu0
      %505 = vdwg.mxu0
      %506 = vmatpush.bf16.msra.mxu0 0
      %507 = vmatpush.bf16.msra.mxu0 0
      %508 = vmatpush.bf16.msra.mxu0 0
      %509 = vmatpush.bf16.msra.mxu0 0
      %510 = vmatpush.bf16.msra.mxu0 0
      %511 = vmatpush.bf16.msra.mxu0 0
      %512 = vmatpush.bf16.msra.mxu0 %v439
      %513 = vmatpush.bf16.msra.mxu0 %v426
      %514 = vmatmul.bf16.gmra.mxu0 %v478
      %v515 = vpop.f32.mrf.mxu0
      %v516 = vadd.f32 0.0, %v515
      %v517 = vpop.f32.mrf.mxu0
      %518 = vdwg.mxu0
      %519 = vmatpush.bf16.msra.mxu0 0
      %520 = vmatpush.bf16.msra.mxu0 0
      %521 = vmatpush.bf16.msra.mxu0 0
      %522 = vmatpush.bf16.msra.mxu0 0
      %523 = vmatpush.bf16.msra.mxu0 0
      %524 = vmatpush.bf16.msra.mxu0 0
      %525 = vmatpush.bf16.msra.mxu0 %v440
      %526 = vmatpush.bf16.msra.mxu0 %v427
      %527 = vmatmul.bf16.gmra.mxu0 %v478
      %v528 = vpop.f32.mrf.mxu0
      %v529 = vadd.f32 0.0, %v528
      %v530 = vpop.f32.mrf.mxu0
      %531 = vdwg.mxu0
      %532 = vmatpush.bf16.msra.mxu0 0
      %533 = vmatpush.bf16.msra.mxu0 0
      %534 = vmatpush.bf16.msra.mxu0 0
      %535 = vmatpush.bf16.msra.mxu0 0
      %536 = vmatpush.bf16.msra.mxu0 0
      %537 = vmatpush.bf16.msra.mxu0 0
      %538 = vmatpush.bf16.msra.mxu0 %v441
      %539 = vmatpush.bf16.msra.mxu0 %v428
      %540 = vmatmul.bf16.gmra.mxu0 %v478
      %v541 = vpop.f32.mrf.mxu0
      %v542 = vadd.f32 0.0, %v541
      %v543 = vpop.f32.mrf.mxu0
      %544 = vdwg.mxu0
      %545 = vmatpush.bf16.msra.mxu0 0
      %546 = vmatpush.bf16.msra.mxu0 0
      %547 = vmatpush.bf16.msra.mxu0 0
      %548 = vmatpush.bf16.msra.mxu0 0
      %549 = vmatpush.bf16.msra.mxu0 0
      %550 = vmatpush.bf16.msra.mxu0 0
      %551 = vmatpush.bf16.msra.mxu0 %v442
      %552 = vmatpush.bf16.msra.mxu0 %v429
      %553 = vmatmul.bf16.gmra.mxu0 %v478
      %v554 = vpop.f32.mrf.mxu0
      %v555 = vadd.f32 0.0, %v554
      %v556 = vpop.f32.mrf.mxu0
      %557 = vdwg.mxu0
      %558 = vmatpush.bf16.msra.mxu0 0
      %559 = vmatpush.bf16.msra.mxu0 0
      %560 = vmatpush.bf16.msra.mxu0 0
      %561 = vmatpush.bf16.msra.mxu0 0
      %562 = vmatpush.bf16.msra.mxu0 0
      %563 = vmatpush.bf16.msra.mxu0 0
      %564 = vmatpush.bf16.msra.mxu0 %v443
      %565 = vmatpush.bf16.msra.mxu0 %v430
      %566 = vmatmul.bf16.gmra.mxu0 %v478
      %v567 = vpop.f32.mrf.mxu0
      %v568 = vadd.f32 0.0, %v567
      %v569 = vpop.f32.mrf.mxu0
      %570 = vdwg.mxu0
      %571 = vmatpush.bf16.msra.mxu0 0
      %572 = vmatpush.bf16.msra.mxu0 0
      %573 = vmatpush.bf16.msra.mxu0 0
      %574 = vmatpush.bf16.msra.mxu0 0
      %575 = vmatpush.bf16.msra.mxu0 0
      %576 = vmatpush.bf16.msra.mxu0 0
      %577 = vmatpush.bf16.msra.mxu0 %v444
      %578 = vmatpush.bf16.msra.mxu0 %v431
      %579 = vmatmul.bf16.gmra.mxu0 %v478
      %v580 = vpop.f32.mrf.mxu0
      %v581 = vadd.f32 0.0, %v580
      %v582 = vpop.f32.mrf.mxu0
      %583 = vdwg.mxu0
      %584 = vmatpush.bf16.msra.mxu0 0
      %585 = vmatpush.bf16.msra.mxu0 0
      %586 = vmatpush.bf16.msra.mxu0 0
      %587 = vmatpush.bf16.msra.mxu0 0
      %588 = vmatpush.bf16.msra.mxu0 0
      %589 = vmatpush.bf16.msra.mxu0 0
      %590 = vmatpush.bf16.msra.mxu0 %v445
      %591 = vmatpush.bf16.msra.mxu0 %v432
      %592 = vmatmul.bf16.gmra.mxu0 %v478
      %v593 = vpop.f32.mrf.mxu0
      %v594 = vadd.f32 0.0, %v593
      %v595 = vpop.f32.mrf.mxu0
      %596 = vdwg.mxu0
      %597 = vmatpush.bf16.msra.mxu0 0
      %598 = vmatpush.bf16.msra.mxu0 0
      %599 = vmatpush.bf16.msra.mxu0 0
      %600 = vmatpush.bf16.msra.mxu0 0
      %601 = vmatpush.bf16.msra.mxu0 0
      %602 = vmatpush.bf16.msra.mxu0 0
      %603 = vmatpush.bf16.msra.mxu0 %v446
      %604 = vmatpush.bf16.msra.mxu0 %v433
      %605 = vmatmul.bf16.gmra.mxu0 %v478
      %v606 = vpop.f32.mrf.mxu0
      %v607 = vadd.f32 0.0, %v606
      %v608 = vpop.f32.mrf.mxu0
      %609 = vdwg.mxu0
      %610 = vmatpush.bf16.msra.mxu0 0
      %611 = vmatpush.bf16.msra.mxu0 0
      %612 = vmatpush.bf16.msra.mxu0 0
      %613 = vmatpush.bf16.msra.mxu0 0
      %614 = vmatpush.bf16.msra.mxu0 0
      %615 = vmatpush.bf16.msra.mxu0 0
      %616 = vmatpush.bf16.msra.mxu0 %v447
      %617 = vmatpush.bf16.msra.mxu0 %v434
      %618 = vmatmul.bf16.gmra.mxu0 %v478
      %v619 = vpop.f32.mrf.mxu0
      %v620 = vadd.f32 0.0, %v619
      %v621 = vpop.f32.mrf.mxu0
      %622 = vdwg.mxu0
      %623 = vmatpush.bf16.msra.mxu0 0
      %624 = vmatpush.bf16.msra.mxu0 0
      %625 = vmatpush.bf16.msra.mxu0 0
      %626 = vmatpush.bf16.msra.mxu0 0
      %627 = vmatpush.bf16.msra.mxu0 0
      %628 = vmatpush.bf16.msra.mxu0 0
      %629 = vmatpush.bf16.msra.mxu0 %v448
      %630 = vmatpush.bf16.msra.mxu0 %v435
      %631 = vmatmul.bf16.gmra.mxu0 %v478
      %v632 = vpop.f32.mrf.mxu0
      %v633 = vadd.f32 0.0, %v632
      %v634 = vpop.f32.mrf.mxu0
      %635 = vdwg.mxu0
      %636 = vmatpush.bf16.msra.mxu0 0
      %637 = vmatpush.bf16.msra.mxu0 0
      %638 = vmatpush.bf16.msra.mxu0 0
      %639 = vmatpush.bf16.msra.mxu0 0
      %640 = vmatpush.bf16.msra.mxu0 0
      %641 = vmatpush.bf16.msra.mxu0 0
      %642 = vmatpush.bf16.msra.mxu0 %v449
      %643 = vmatpush.bf16.msra.mxu0 %v436
      %644 = vmatmul.bf16.gmra.mxu0 %v478
      %v645 = vpop.f32.mrf.mxu0
      %v646 = vadd.f32 0.0, %v645
      %v647 = vpop.f32.mrf.mxu0
      %648 = vdwg.mxu0
      %v649 = vld [vmem:[%s2] sm:$0xff]
      %v650 = vld [vmem:[%s2 + $0x8] sm:$0x1f]
      %v653 = vperm.slane %v649, 0
      %v654 = vperm.slane %v649, 1
      %v655 = vperm.slane %v649, 2
      %v656 = vperm.slane %v649, 3
      %v657 = vperm.slane %v649, 4
      %v658 = vperm.slane %v649, 5
      %v659 = vperm.slane %v649, 6
      %v660 = vperm.slane %v649, 7
      %v661 = vperm.slane %v650, 0
      %v662 = vperm.slane %v650, 1
      %v663 = vperm.slane %v650, 2
      %v664 = vperm.slane %v650, 3
      %v665 = vperm.slane %v650, 4
      %v679 = vmul.f32 %v490, %v653
      %v680 = vmul.f32 %v503, %v654
      %v681 = vmul.f32 %v516, %v655
      %v682 = vmul.f32 %v529, %v656
      %v683 = vmul.f32 %v542, %v657
      %v684 = vmul.f32 %v555, %v658
      %v685 = vmul.f32 %v568, %v659
      %v686 = vmul.f32 %v581, %v660
      %v687 = vmul.f32 %v594, %v661
      %v688 = vmul.f32 %v607, %v662
      %v689 = vmul.f32 %v620, %v663
      %v690 = vmul.f32 %v633, %v664
      %v691 = vmul.f32 %v646, %v665
      %v692 = vld [vmem:[%s3] sm:$0xff]
      %v693 = vld [vmem:[%s3 + $0x8] sm:$0x1f]
      %v696 = vperm.slane %v692, 0
      %v697 = vperm.slane %v692, 1
      %v698 = vperm.slane %v692, 2
      %v699 = vperm.slane %v692, 3
      %v700 = vperm.slane %v692, 4
      %v701 = vperm.slane %v692, 5
      %v702 = vperm.slane %v692, 6
      %v703 = vperm.slane %v692, 7
      %v704 = vperm.slane %v693, 0
      %v705 = vperm.slane %v693, 1
      %v706 = vperm.slane %v693, 2
      %v707 = vperm.slane %v693, 3
      %v708 = vperm.slane %v693, 4
      %v722 = vadd.f32 %v679, %v696
      %v723 = vadd.f32 %v680, %v697
      %v724 = vadd.f32 %v681, %v698
      %v725 = vadd.f32 %v682, %v699
      %v726 = vadd.f32 %v683, %v700
      %v727 = vadd.f32 %v684, %v701
      %v728 = vadd.f32 %v685, %v702
      %v729 = vadd.f32 %v686, %v703
      %v730 = vadd.f32 %v687, %v704
      %v731 = vadd.f32 %v688, %v705
      %v732 = vadd.f32 %v689, %v706
      %v733 = vadd.f32 %v690, %v707
      %v734 = vadd.f32 %v691, %v708
      %v735 = vmax.f32 %v722, 0.0
      %v736 = vmax.f32 %v723, 0.0
      %v737 = vmax.f32 %v724, 0.0
      %v738 = vmax.f32 %v725, 0.0
      %v739 = vmax.f32 %v726, 0.0
      %v740 = vmax.f32 %v727, 0.0
      %v741 = vmax.f32 %v728, 0.0
      %v742 = vmax.f32 %v729, 0.0
      %v743 = vmax.f32 %v730, 0.0
      %v744 = vmax.f32 %v731, 0.0
      %v745 = vmax.f32 %v732, 0.0
      %v746 = vmax.f32 %v733, 0.0
      %v747 = vmax.f32 %v734, 0.0
      %v748 = vpack.c.bf16 %v735, %v735
      %v749 = vpack.c.bf16 %v736, %v736
      %v750 = vpack.c.bf16 %v737, %v737
      %v751 = vpack.c.bf16 %v738, %v738
      %v752 = vpack.c.bf16 %v739, %v739
      %v753 = vpack.c.bf16 %v740, %v740
      %v754 = vpack.c.bf16 %v741, %v741
      %v755 = vpack.c.bf16 %v742, %v742
      %v756 = vpack.c.bf16 %v743, %v743
      %v757 = vpack.c.bf16 %v744, %v744
      %v758 = vpack.c.bf16 %v745, %v745
      %v759 = vpack.c.bf16 %v746, %v746
      %v760 = vpack.c.bf16 %v747, %v747
      %v761 = vld [vmem:[%s299] sm:$0xff]
      %v762 = vld [vmem:[%s299 + $0x8] sm:$0xff]
      %v763 = vld [vmem:[%s299 + $0x10] sm:$0xff]
      %v764 = vld [vmem:[%s299 + $0x18] sm:$0xf]
      %v765 = vld [vmem:[%s299 + $0x1c] sm:$0xff]
      %v766 = vld [vmem:[%s299 + $0x24] sm:$0xff]
      %v767 = vld [vmem:[%s299 + $0x2c] sm:$0xff]
      %v768 = vld [vmem:[%s299 + $0x34] sm:$0xf]
      %v769 = vld [vmem:[%s299 + $0x38] sm:$0xff]
      %v770 = vld [vmem:[%s299 + $0x40] sm:$0xff]
      %v771 = vld [vmem:[%s299 + $0x48] sm:$0xff]
      %v772 = vld [vmem:[%s299 + $0x50] sm:$0xf]
      %v773 = vld [vmem:[%s299 + $0x54] sm:$0xff]
      %v774 = vld [vmem:[%s299 + $0x5c] sm:$0xff]
      %v775 = vld [vmem:[%s299 + $0x64] sm:$0xff]
      %v776 = vld [vmem:[%s299 + $0x6c] sm:$0xf]
      %v777 = vld [vmem:[%s299 + $0x70] sm:$0xff]
      %v778 = vld [vmem:[%s299 + $0x78] sm:$0xff]
      %v779 = vld [vmem:[%s299 + $0x80] sm:$0xff]
      %v780 = vld [vmem:[%s299 + $0x88] sm:$0xf]
      %v781 = vld [vmem:[%s299 + $0x8c] sm:$0xff]
      %v782 = vld [vmem:[%s299 + $0x94] sm:$0xff]
      %v783 = vld [vmem:[%s299 + $0x9c] sm:$0xff]
      %v784 = vld [vmem:[%s299 + $0xa4] sm:$0xf]
      %v785 = vld [vmem:[%s299 + $0xa8] sm:$0xff]
      %v786 = vld [vmem:[%s299 + $0xb0] sm:$0xff]
      %v787 = vld [vmem:[%s299 + $0xb8] sm:$0xff]
      %v788 = vld [vmem:[%s299 + $0xc0] sm:$0xf]
      %v789 = vld [vmem:[%s299 + $0xc4] sm:$0xff]
      %v790 = vld [vmem:[%s299 + $0xcc] sm:$0xff]
      %v791 = vld [vmem:[%s299 + $0xd4] sm:$0xff]
      %v792 = vld [vmem:[%s299 + $0xdc] sm:$0xf]
      %v793 = vld [vmem:[%s299 + $0xe0] sm:$0xff]
      %v794 = vld [vmem:[%s299 + $0xe8] sm:$0xff]
      %v795 = vld [vmem:[%s299 + $0xf0] sm:$0xff]
      %v796 = vld [vmem:[%s299 + $0xf8] sm:$0xf]
      %v797 = vld [vmem:[%s299 + $0xfc] sm:$0xff]
      %v798 = vld [vmem:[%s299 + $0x104] sm:$0xff]
      %v799 = vld [vmem:[%s299 + $0x10c] sm:$0xff]
      %v800 = vld [vmem:[%s299 + $0x114] sm:$0xf]
      %v801 = vld [vmem:[%s299 + $0x118] sm:$0xff]
      %v802 = vld [vmem:[%s299 + $0x120] sm:$0xff]
      %v803 = vld [vmem:[%s299 + $0x128] sm:$0xff]
      %v804 = vld [vmem:[%s299 + $0x130] sm:$0xf]
      %v805 = vld [vmem:[%s299 + $0x134] sm:$0xff]
      %v806 = vld [vmem:[%s299 + $0x13c] sm:$0xff]
      %v807 = vld [vmem:[%s299 + $0x144] sm:$0xff]
      %v808 = vld [vmem:[%s299 + $0x14c] sm:$0xf]
      %v809 = vld [vmem:[%s299 + $0x150] sm:$0xff]
      %v810 = vld [vmem:[%s299 + $0x158] sm:$0xff]
      %v811 = vld [vmem:[%s299 + $0x160] sm:$0xff]
      %v812 = vld [vmem:[%s299 + $0x168] sm:$0xf]
      %v813 = vld [vmem:[%s299 + $0x16c] sm:$0xff]
      %v814 = vld [vmem:[%s299 + $0x174] sm:$0xff]
      %v815 = vld [vmem:[%s299 + $0x17c] sm:$0xff]
      %v816 = vld [vmem:[%s299 + $0x184] sm:$0xf]
      %v817 = vld [vmem:[%s299 + $0x188] sm:$0xff]
      %v818 = vld [vmem:[%s299 + $0x190] sm:$0xff]
      %v819 = vld [vmem:[%s299 + $0x198] sm:$0xff]
      %v820 = vld [vmem:[%s299 + $0x1a0] sm:$0xf]
      %v821 = vld [vmem:[%s299 + $0x1a4] sm:$0xff]
      %v822 = vld [vmem:[%s299 + $0x1ac] sm:$0xff]
      %v823 = vld [vmem:[%s299 + $0x1b4] sm:$0xff]
      %v824 = vld [vmem:[%s299 + $0x1bc] sm:$0xf]
      %v825 = vld [vmem:[%s299 + $0x1c0] sm:$0xff]
      %v826 = vld [vmem:[%s299 + $0x1c8] sm:$0xff]
      %v827 = vld [vmem:[%s299 + $0x1d0] sm:$0xff]
      %v828 = vld [vmem:[%s299 + $0x1d8] sm:$0xf]
      %v829 = vld [vmem:[%s299 + $0x1dc] sm:$0xff]
      %v830 = vld [vmem:[%s299 + $0x1e4] sm:$0xff]
      %v831 = vld [vmem:[%s299 + $0x1ec] sm:$0xff]
      %v832 = vld [vmem:[%s299 + $0x1f4] sm:$0xf]
      %v833 = vld [vmem:[%s299 + $0x1f8] sm:$0xff]
      %v834 = vld [vmem:[%s299 + $0x200] sm:$0xff]
      %v835 = vld [vmem:[%s299 + $0x208] sm:$0xff]
      %v836 = vld [vmem:[%s299 + $0x210] sm:$0xf]
      %v837 = vld [vmem:[%s299 + $0x214] sm:$0xff]
      %v838 = vld [vmem:[%s299 + $0x21c] sm:$0xff]
      %v839 = vld [vmem:[%s299 + $0x224] sm:$0xff]
      %v840 = vld [vmem:[%s299 + $0x22c] sm:$0xf]
      %v841 = vld [vmem:[%s299 + $0x230] sm:$0xff]
      %v842 = vld [vmem:[%s299 + $0x238] sm:$0xff]
      %v843 = vld [vmem:[%s299 + $0x240] sm:$0xff]
      %v844 = vld [vmem:[%s299 + $0x248] sm:$0xf]
      %v845 = vld [vmem:[%s299 + $0x24c] sm:$0xff]
      %v846 = vld [vmem:[%s299 + $0x254] sm:$0xff]
      %v847 = vld [vmem:[%s299 + $0x25c] sm:$0xff]
      %v848 = vld [vmem:[%s299 + $0x264] sm:$0xf]
      %v849 = vld [vmem:[%s299 + $0x268] sm:$0xff]
      %v850 = vld [vmem:[%s299 + $0x270] sm:$0xff]
      %v851 = vld [vmem:[%s299 + $0x278] sm:$0xff]
      %v852 = vld [vmem:[%s299 + $0x280] sm:$0xf]
      %v853 = vld [vmem:[%s299 + $0x284] sm:$0xff]
      %v854 = vld [vmem:[%s299 + $0x28c] sm:$0xff]
      %v855 = vld [vmem:[%s299 + $0x294] sm:$0xff]
      %v856 = vld [vmem:[%s299 + $0x29c] sm:$0xf]
      %v857 = vld [vmem:[%s299 + $0x2a0] sm:$0xff]
      %v858 = vld [vmem:[%s299 + $0x2a8] sm:$0xff]
      %v859 = vld [vmem:[%s299 + $0x2b0] sm:$0xff]
      %v860 = vld [vmem:[%s299 + $0x2b8] sm:$0xf]
      %v861 = vld [vmem:[%s299 + $0x2bc] sm:$0xff]
      %v862 = vld [vmem:[%s299 + $0x2c4] sm:$0xff]
      %v863 = vld [vmem:[%s299 + $0x2cc] sm:$0xff]
      %v864 = vld [vmem:[%s299 + $0x2d4] sm:$0xf]
      %v865 = vld [vmem:[%s299 + $0x2d8] sm:$0xff]
      %v866 = vld [vmem:[%s299 + $0x2e0] sm:$0xff]
      %v867 = vld [vmem:[%s299 + $0x2e8] sm:$0xff]
      %v868 = vld [vmem:[%s299 + $0x2f0] sm:$0xf]
      %v869 = vld [vmem:[%s299 + $0x2f4] sm:$0xff]
      %v870 = vld [vmem:[%s299 + $0x2fc] sm:$0xff]
      %v871 = vld [vmem:[%s299 + $0x304] sm:$0xff]
      %v872 = vld [vmem:[%s299 + $0x30c] sm:$0xf]
      %v873 = vld [vmem:[%s299 + $0x310] sm:$0xff]
      %v874 = vld [vmem:[%s299 + $0x318] sm:$0xff]
      %v875 = vld [vmem:[%s299 + $0x320] sm:$0xff]
      %v876 = vld [vmem:[%s299 + $0x328] sm:$0xf]
      %v877 = vld [vmem:[%s299 + $0x32c] sm:$0xff]
      %v878 = vld [vmem:[%s299 + $0x334] sm:$0xff]
      %v879 = vld [vmem:[%s299 + $0x33c] sm:$0xff]
      %v880 = vld [vmem:[%s299 + $0x344] sm:$0xf]
      %v881 = vld [vmem:[%s299 + $0x348] sm:$0xff]
      %v882 = vld [vmem:[%s299 + $0x350] sm:$0xff]
      %v883 = vld [vmem:[%s299 + $0x358] sm:$0xff]
      %v884 = vld [vmem:[%s299 + $0x360] sm:$0xf]
      %v885 = vld [vmem:[%s299 + $0x364] sm:$0xff]
      %v886 = vld [vmem:[%s299 + $0x36c] sm:$0xff]
      %v887 = vld [vmem:[%s299 + $0x374] sm:$0xff]
      %v888 = vld [vmem:[%s299 + $0x37c] sm:$0xf]
      %v889 = vld [vmem:[%s299 + $0x380] sm:$0xff]
      %v890 = vld [vmem:[%s299 + $0x388] sm:$0xff]
      %v891 = vld [vmem:[%s299 + $0x390] sm:$0xff]
      %v892 = vld [vmem:[%s299 + $0x398] sm:$0xf]
      %v893 = vld [vmem:[%s299 + $0x39c] sm:$0xff]
      %v894 = vld [vmem:[%s299 + $0x3a4] sm:$0xff]
      %v895 = vld [vmem:[%s299 + $0x3ac] sm:$0xff]
      %v896 = vld [vmem:[%s299 + $0x3b4] sm:$0xf]
      %v897 = vld [vmem:[%s299 + $0x3b8] sm:$0xff]
      %v898 = vld [vmem:[%s299 + $0x3c0] sm:$0xff]
      %v899 = vld [vmem:[%s299 + $0x3c8] sm:$0xff]
      %v900 = vld [vmem:[%s299 + $0x3d0] sm:$0xf]
      %v901 = vld [vmem:[%s299 + $0x3d4] sm:$0xff]
      %v902 = vld [vmem:[%s299 + $0x3dc] sm:$0xff]
      %v903 = vld [vmem:[%s299 + $0x3e4] sm:$0xff]
      %v904 = vld [vmem:[%s299 + $0x3ec] sm:$0xf]
      %v905 = vld [vmem:[%s299 + $0x3f0] sm:$0xff]
      %v906 = vld [vmem:[%s299 + $0x3f8] sm:$0xff]
      %v907 = vld [vmem:[%s299 + $0x400] sm:$0xff]
      %v908 = vld [vmem:[%s299 + $0x408] sm:$0xf]
      %v909 = vld [vmem:[%s299 + $0x40c] sm:$0xff]
      %v910 = vld [vmem:[%s299 + $0x414] sm:$0xff]
      %v911 = vld [vmem:[%s299 + $0x41c] sm:$0xff]
      %v912 = vld [vmem:[%s299 + $0x424] sm:$0xf]
      %v913 = vld [vmem:[%s299 + $0x428] sm:$0xff]
      %v914 = vld [vmem:[%s299 + $0x430] sm:$0xff]
      %v915 = vld [vmem:[%s299 + $0x438] sm:$0xff]
      %v916 = vld [vmem:[%s299 + $0x440] sm:$0xf]
      %v917 = vld [vmem:[%s299 + $0x444] sm:$0xff]
      %v918 = vld [vmem:[%s299 + $0x44c] sm:$0xff]
      %v919 = vld [vmem:[%s299 + $0x454] sm:$0xff]
      %v920 = vld [vmem:[%s299 + $0x45c] sm:$0xf]
      %v921 = vld [vmem:[%s299 + $0x460] sm:$0xff]
      %v922 = vld [vmem:[%s299 + $0x468] sm:$0xff]
      %v923 = vld [vmem:[%s299 + $0x470] sm:$0xff]
      %v924 = vld [vmem:[%s299 + $0x478] sm:$0xf]
      %v925 = vld [vmem:[%s299 + $0x47c] sm:$0xff]
      %v926 = vld [vmem:[%s299 + $0x484] sm:$0xff]
      %v927 = vld [vmem:[%s299 + $0x48c] sm:$0xff]
      %v928 = vld [vmem:[%s299 + $0x494] sm:$0xf]
      %v929 = vld [vmem:[%s299 + $0x498] sm:$0xff]
      %v930 = vld [vmem:[%s299 + $0x4a0] sm:$0xff]
      %v931 = vld [vmem:[%s299 + $0x4a8] sm:$0xff]
      %v932 = vld [vmem:[%s299 + $0x4b0] sm:$0xf]
      %v933 = vld [vmem:[%s299 + $0x4b4] sm:$0xff]
      %v934 = vld [vmem:[%s299 + $0x4bc] sm:$0xff]
      %v935 = vld [vmem:[%s299 + $0x4c4] sm:$0xff]
      %v936 = vld [vmem:[%s299 + $0x4cc] sm:$0xf]
      %v937 = vld [vmem:[%s299 + $0x4d0] sm:$0xff]
      %v938 = vld [vmem:[%s299 + $0x4d8] sm:$0xff]
      %v939 = vld [vmem:[%s299 + $0x4e0] sm:$0xff]
      %v940 = vld [vmem:[%s299 + $0x4e8] sm:$0xf]
      %v941 = vld [vmem:[%s299 + $0x4ec] sm:$0xff]
      %v942 = vld [vmem:[%s299 + $0x4f4] sm:$0xff]
      %v943 = vld [vmem:[%s299 + $0x4fc] sm:$0xff]
      %v944 = vld [vmem:[%s299 + $0x504] sm:$0xf]
      %v945 = vld [vmem:[%s299 + $0x508] sm:$0xff]
      %v946 = vld [vmem:[%s299 + $0x510] sm:$0xff]
      %v947 = vld [vmem:[%s299 + $0x518] sm:$0xff]
      %v948 = vld [vmem:[%s299 + $0x520] sm:$0xf]
      %v949 = vld [vmem:[%s299 + $0x524] sm:$0xff]
      %v950 = vld [vmem:[%s299 + $0x52c] sm:$0xff]
      %v951 = vld [vmem:[%s299 + $0x534] sm:$0xff]
      %v952 = vld [vmem:[%s299 + $0x53c] sm:$0xf]
      %v953 = vld [vmem:[%s299 + $0x540] sm:$0xff]
      %v954 = vld [vmem:[%s299 + $0x548] sm:$0xff]
      %v955 = vld [vmem:[%s299 + $0x550] sm:$0xff]
      %v956 = vld [vmem:[%s299 + $0x558] sm:$0xf]
      %v957 = vld [vmem:[%s299 + $0x55c] sm:$0xff]
      %v958 = vld [vmem:[%s299 + $0x564] sm:$0xff]
      %v959 = vld [vmem:[%s299 + $0x56c] sm:$0xff]
      %v960 = vld [vmem:[%s299 + $0x574] sm:$0xf]
      %v961 = vld [vmem:[%s299 + $0x578] sm:$0xff]
      %v962 = vld [vmem:[%s299 + $0x580] sm:$0xff]
      %v963 = vld [vmem:[%s299 + $0x588] sm:$0xff]
      %v964 = vld [vmem:[%s299 + $0x590] sm:$0xf]
      %v965 = vld [vmem:[%s299 + $0x594] sm:$0xff]
      %v966 = vld [vmem:[%s299 + $0x59c] sm:$0xff]
      %v967 = vld [vmem:[%s299 + $0x5a4] sm:$0xff]
      %v968 = vld [vmem:[%s299 + $0x5ac] sm:$0xf]
      %v969 = vld [vmem:[%s299 + $0x5b0] sm:$0xff]
      %v970 = vld [vmem:[%s299 + $0x5b8] sm:$0xff]
      %v971 = vld [vmem:[%s299 + $0x5c0] sm:$0xff]
      %v972 = vld [vmem:[%s299 + $0x5c8] sm:$0xf]
      %v973 = vld [vmem:[%s299 + $0x5cc] sm:$0xff]
      %v974 = vld [vmem:[%s299 + $0x5d4] sm:$0xff]
      %v975 = vld [vmem:[%s299 + $0x5dc] sm:$0xff]
      %v976 = vld [vmem:[%s299 + $0x5e4] sm:$0xf]
      %v977 = vld [vmem:[%s299 + $0x5e8] sm:$0xff]
      %v978 = vld [vmem:[%s299 + $0x5f0] sm:$0xff]
      %v979 = vld [vmem:[%s299 + $0x5f8] sm:$0xff]
      %v980 = vld [vmem:[%s299 + $0x600] sm:$0xf]
      %v981 = vld [vmem:[%s299 + $0x604] sm:$0xff]
      %v982 = vld [vmem:[%s299 + $0x60c] sm:$0xff]
      %v983 = vld [vmem:[%s299 + $0x614] sm:$0xff]
      %v984 = vld [vmem:[%s299 + $0x61c] sm:$0xf]
      %v985 = vld [vmem:[%s299 + $0x620] sm:$0xff]
      %v986 = vld [vmem:[%s299 + $0x628] sm:$0xff]
      %v987 = vld [vmem:[%s299 + $0x630] sm:$0xff]
      %v988 = vld [vmem:[%s299 + $0x638] sm:$0xf]
      %v989 = vld [vmem:[%s299 + $0x63c] sm:$0xff]
      %v990 = vld [vmem:[%s299 + $0x644] sm:$0xff]
      %v991 = vld [vmem:[%s299 + $0x64c] sm:$0xff]
      %v992 = vld [vmem:[%s299 + $0x654] sm:$0xf]
      %v993 = vld [vmem:[%s299 + $0x658] sm:$0xff]
      %v994 = vld [vmem:[%s299 + $0x660] sm:$0xff]
      %v995 = vld [vmem:[%s299 + $0x668] sm:$0xff]
      %v996 = vld [vmem:[%s299 + $0x670] sm:$0xf]
      %v997 = vld [vmem:[%s299 + $0x674] sm:$0xff]
      %v998 = vld [vmem:[%s299 + $0x67c] sm:$0xff]
      %v999 = vld [vmem:[%s299 + $0x684] sm:$0xff]
      %v1000 = vld [vmem:[%s299 + $0x68c] sm:$0xf]
      %v1001 = vld [vmem:[%s299 + $0x690] sm:$0xff]
      %v1002 = vld [vmem:[%s299 + $0x698] sm:$0xff]
      %v1003 = vld [vmem:[%s299 + $0x6a0] sm:$0xff]
      %v1004 = vld [vmem:[%s299 + $0x6a8] sm:$0xf]
      %v1005 = vld [vmem:[%s299 + $0x6ac] sm:$0xff]
      %v1006 = vld [vmem:[%s299 + $0x6b4] sm:$0xff]
      %v1007 = vld [vmem:[%s299 + $0x6bc] sm:$0xff]
      %v1008 = vld [vmem:[%s299 + $0x6c4] sm:$0xf]
      %v1009 = vld [vmem:[%s299 + $0x6c8] sm:$0xff]
      %v1010 = vld [vmem:[%s299 + $0x6d0] sm:$0xff]
      %v1011 = vld [vmem:[%s299 + $0x6d8] sm:$0xff]
      %v1012 = vld [vmem:[%s299 + $0x6e0] sm:$0xf]
      %v1013 = vld [vmem:[%s299 + $0x6e4] sm:$0xff]
      %v1014 = vld [vmem:[%s299 + $0x6ec] sm:$0xff]
      %v1015 = vld [vmem:[%s299 + $0x6f4] sm:$0xff]
      %v1016 = vld [vmem:[%s299 + $0x6fc] sm:$0xf]
      %v1017 = vld [vmem:[%s299 + $0x700] sm:$0xff]
      %v1018 = vld [vmem:[%s299 + $0x708] sm:$0xff]
      %v1019 = vld [vmem:[%s299 + $0x710] sm:$0xff]
      %v1020 = vld [vmem:[%s299 + $0x718] sm:$0xf]
      %v1021 = vld [vmem:[%s299 + $0x71c] sm:$0xff]
      %v1022 = vld [vmem:[%s299 + $0x724] sm:$0xff]
      %v1023 = vld [vmem:[%s299 + $0x72c] sm:$0xff]
      %v1024 = vld [vmem:[%s299 + $0x734] sm:$0xf]
      %v1025 = vld [vmem:[%s299 + $0x738] sm:$0xff]
      %v1026 = vld [vmem:[%s299 + $0x740] sm:$0xff]
      %v1027 = vld [vmem:[%s299 + $0x748] sm:$0xff]
      %v1028 = vld [vmem:[%s299 + $0x750] sm:$0xf]
      %v1029 = vld [vmem:[%s299 + $0x754] sm:$0xff]
      %v1030 = vld [vmem:[%s299 + $0x75c] sm:$0xff]
      %v1031 = vld [vmem:[%s299 + $0x764] sm:$0xff]
      %v1032 = vld [vmem:[%s299 + $0x76c] sm:$0xf]
      %v1033 = vld [vmem:[%s299 + $0x770] sm:$0xff]
      %v1034 = vld [vmem:[%s299 + $0x778] sm:$0xff]
      %v1035 = vld [vmem:[%s299 + $0x780] sm:$0xff]
      %v1036 = vld [vmem:[%s299 + $0x788] sm:$0xf]
      %v1037 = vld [vmem:[%s299 + $0x78c] sm:$0xff]
      %v1038 = vld [vmem:[%s299 + $0x794] sm:$0xff]
      %v1039 = vld [vmem:[%s299 + $0x79c] sm:$0xff]
      %v1040 = vld [vmem:[%s299 + $0x7a4] sm:$0xf]
      %v1041 = vld [vmem:[%s299 + $0x7a8] sm:$0xff]
      %v1042 = vld [vmem:[%s299 + $0x7b0] sm:$0xff]
      %v1043 = vld [vmem:[%s299 + $0x7b8] sm:$0xff]
      %v1044 = vld [vmem:[%s299 + $0x7c0] sm:$0xf]
      %v1045 = vld [vmem:[%s299 + $0x7c4] sm:$0xff]
      %v1046 = vld [vmem:[%s299 + $0x7cc] sm:$0xff]
      %v1047 = vld [vmem:[%s299 + $0x7d4] sm:$0xff]
      %v1048 = vld [vmem:[%s299 + $0x7dc] sm:$0xf]
      %v1049 = vld [vmem:[%s299 + $0x7e0] sm:$0xff]
      %v1050 = vld [vmem:[%s299 + $0x7e8] sm:$0xff]
      %v1051 = vld [vmem:[%s299 + $0x7f0] sm:$0xff]
      %v1052 = vld [vmem:[%s299 + $0x7f8] sm:$0xf]
      %v1053 = vld [vmem:[%s299 + $0x7fc] sm:$0xff]
      %v1054 = vld [vmem:[%s299 + $0x804] sm:$0xff]
      %v1055 = vld [vmem:[%s299 + $0x80c] sm:$0xff]
      %v1056 = vld [vmem:[%s299 + $0x814] sm:$0xf]
      %v1057 = vld [vmem:[%s299 + $0x818] sm:$0xff]
      %v1058 = vld [vmem:[%s299 + $0x820] sm:$0xff]
      %v1059 = vld [vmem:[%s299 + $0x828] sm:$0xff]
      %v1060 = vld [vmem:[%s299 + $0x830] sm:$0xf]
      %v1061 = vld [vmem:[%s299 + $0x834] sm:$0xff]
      %v1062 = vld [vmem:[%s299 + $0x83c] sm:$0xff]
      %v1063 = vld [vmem:[%s299 + $0x844] sm:$0xff]
      %v1064 = vld [vmem:[%s299 + $0x84c] sm:$0xf]
      %v1065 = vld [vmem:[%s299 + $0x850] sm:$0xff]
      %v1066 = vld [vmem:[%s299 + $0x858] sm:$0xff]
      %v1067 = vld [vmem:[%s299 + $0x860] sm:$0xff]
      %v1068 = vld [vmem:[%s299 + $0x868] sm:$0xf]
      %v1069 = vld [vmem:[%s299 + $0x86c] sm:$0xff]
      %v1070 = vld [vmem:[%s299 + $0x874] sm:$0xff]
      %v1071 = vld [vmem:[%s299 + $0x87c] sm:$0xff]
      %v1072 = vld [vmem:[%s299 + $0x884] sm:$0xf]
      %v1073 = vld [vmem:[%s299 + $0x888] sm:$0xff]
      %v1074 = vld [vmem:[%s299 + $0x890] sm:$0xff]
      %v1075 = vld [vmem:[%s299 + $0x898] sm:$0xff]
      %v1076 = vld [vmem:[%s299 + $0x8a0] sm:$0xf]
      %v1077 = vld [vmem:[%s299 + $0x8a4] sm:$0xff]
      %v1078 = vld [vmem:[%s299 + $0x8ac] sm:$0xff]
      %v1079 = vld [vmem:[%s299 + $0x8b4] sm:$0xff]
      %v1080 = vld [vmem:[%s299 + $0x8bc] sm:$0xf]
      %v1081 = vld [vmem:[%s299 + $0x8c0] sm:$0xff]
      %v1082 = vld [vmem:[%s299 + $0x8c8] sm:$0xff]
      %v1083 = vld [vmem:[%s299 + $0x8d0] sm:$0xff]
      %v1084 = vld [vmem:[%s299 + $0x8d8] sm:$0xf]
      %v1085 = vld [vmem:[%s299 + $0x8dc] sm:$0xff]
      %v1086 = vld [vmem:[%s299 + $0x8e4] sm:$0xff]
      %v1087 = vld [vmem:[%s299 + $0x8ec] sm:$0xff]
      %v1088 = vld [vmem:[%s299 + $0x8f4] sm:$0xf]
      %v1089 = vld [vmem:[%s299 + $0x8f8] sm:$0xff]
      %v1090 = vld [vmem:[%s299 + $0x900] sm:$0xff]
      %v1091 = vld [vmem:[%s299 + $0x908] sm:$0xff]
      %v1092 = vld [vmem:[%s299 + $0x910] sm:$0xf]
      %v1093 = vld [vmem:[%s299 + $0x914] sm:$0xff]
      %v1094 = vld [vmem:[%s299 + $0x91c] sm:$0xff]
      %v1095 = vld [vmem:[%s299 + $0x924] sm:$0xff]
      %v1096 = vld [vmem:[%s299 + $0x92c] sm:$0xf]
      %v1097 = vld [vmem:[%s299 + $0x930] sm:$0xff]
      %v1098 = vld [vmem:[%s299 + $0x938] sm:$0xff]
      %v1099 = vld [vmem:[%s299 + $0x940] sm:$0xff]
      %v1100 = vld [vmem:[%s299 + $0x948] sm:$0xf]
      %v1101 = vld [vmem:[%s299 + $0x94c] sm:$0xff]
      %v1102 = vld [vmem:[%s299 + $0x954] sm:$0xff]
      %v1103 = vld [vmem:[%s299 + $0x95c] sm:$0xff]
      %v1104 = vld [vmem:[%s299 + $0x964] sm:$0xf]
      %v1105 = vld [vmem:[%s299 + $0x968] sm:$0xff]
      %v1106 = vld [vmem:[%s299 + $0x970] sm:$0xff]
      %v1107 = vld [vmem:[%s299 + $0x978] sm:$0xff]
      %v1108 = vld [vmem:[%s299 + $0x980] sm:$0xf]
      %v1109 = vld [vmem:[%s299 + $0x984] sm:$0xff]
      %v1110 = vld [vmem:[%s299 + $0x98c] sm:$0xff]
      %v1111 = vld [vmem:[%s299 + $0x994] sm:$0xff]
      %v1112 = vld [vmem:[%s299 + $0x99c] sm:$0xf]
      %v1113 = vld [vmem:[%s299 + $0x9a0] sm:$0xff]
      %v1114 = vld [vmem:[%s299 + $0x9a8] sm:$0xff]
      %v1115 = vld [vmem:[%s299 + $0x9b0] sm:$0xff]
      %v1116 = vld [vmem:[%s299 + $0x9b8] sm:$0xf]
      %v1117 = vld [vmem:[%s299 + $0x9bc] sm:$0xff]
      %v1118 = vld [vmem:[%s299 + $0x9c4] sm:$0xff]
      %v1119 = vld [vmem:[%s299 + $0x9cc] sm:$0xff]
      %v1120 = vld [vmem:[%s299 + $0x9d4] sm:$0xf]
      %v1121 = vld [vmem:[%s299 + $0x9d8] sm:$0xff]
      %v1122 = vld [vmem:[%s299 + $0x9e0] sm:$0xff]
      %v1123 = vld [vmem:[%s299 + $0x9e8] sm:$0xff]
      %v1124 = vld [vmem:[%s299 + $0x9f0] sm:$0xf]
      %v1125 = vld [vmem:[%s299 + $0x9f4] sm:$0xff]
      %v1126 = vld [vmem:[%s299 + $0x9fc] sm:$0xff]
      %v1127 = vld [vmem:[%s299 + $0xa04] sm:$0xff]
      %v1128 = vld [vmem:[%s299 + $0xa0c] sm:$0xf]
      %v1129 = vld [vmem:[%s299 + $0xa10] sm:$0xff]
      %v1130 = vld [vmem:[%s299 + $0xa18] sm:$0xff]
      %v1131 = vld [vmem:[%s299 + $0xa20] sm:$0xff]
      %v1132 = vld [vmem:[%s299 + $0xa28] sm:$0xf]
      %v1133 = vld [vmem:[%s299 + $0xa2c] sm:$0xff]
      %v1134 = vld [vmem:[%s299 + $0xa34] sm:$0xff]
      %v1135 = vld [vmem:[%s299 + $0xa3c] sm:$0xff]
      %v1136 = vld [vmem:[%s299 + $0xa44] sm:$0xf]
      %v1137 = vld [vmem:[%s299 + $0xa48] sm:$0xff]
      %v1138 = vld [vmem:[%s299 + $0xa50] sm:$0xff]
      %v1139 = vld [vmem:[%s299 + $0xa58] sm:$0xff]
      %v1140 = vld [vmem:[%s299 + $0xa60] sm:$0xf]
      %v1141 = vld [vmem:[%s299 + $0xa64] sm:$0xff]
      %v1142 = vld [vmem:[%s299 + $0xa6c] sm:$0xff]
      %v1143 = vld [vmem:[%s299 + $0xa74] sm:$0xff]
      %v1144 = vld [vmem:[%s299 + $0xa7c] sm:$0xf]
      %v1145 = vld [vmem:[%s299 + $0xa80] sm:$0xff]
      %v1146 = vld [vmem:[%s299 + $0xa88] sm:$0xff]
      %v1147 = vld [vmem:[%s299 + $0xa90] sm:$0xff]
      %v1148 = vld [vmem:[%s299 + $0xa98] sm:$0xf]
      %v1149 = vld [vmem:[%s299 + $0xa9c] sm:$0xff]
      %v1150 = vld [vmem:[%s299 + $0xaa4] sm:$0xff]
      %v1151 = vld [vmem:[%s299 + $0xaac] sm:$0xff]
      %v1152 = vld [vmem:[%s299 + $0xab4] sm:$0xf]
      %v1153 = vld [vmem:[%s299 + $0xab8] sm:$0xff]
      %v1154 = vld [vmem:[%s299 + $0xac0] sm:$0xff]
      %v1155 = vld [vmem:[%s299 + $0xac8] sm:$0xff]
      %v1156 = vld [vmem:[%s299 + $0xad0] sm:$0xf]
      %v1157 = vld [vmem:[%s299 + $0xad4] sm:$0xff]
      %v1158 = vld [vmem:[%s299 + $0xadc] sm:$0xff]
      %v1159 = vld [vmem:[%s299 + $0xae4] sm:$0xff]
      %v1160 = vld [vmem:[%s299 + $0xaec] sm:$0xf]
      %v1161 = vld [vmem:[%s299 + $0xaf0] sm:$0xff]
      %v1162 = vld [vmem:[%s299 + $0xaf8] sm:$0xff]
      %v1163 = vld [vmem:[%s299 + $0xb00] sm:$0xff]
      %v1164 = vld [vmem:[%s299 + $0xb08] sm:$0xf]
      %v1165 = vld [vmem:[%s299 + $0xb0c] sm:$0xff]
      %v1166 = vld [vmem:[%s299 + $0xb14] sm:$0xff]
      %v1167 = vld [vmem:[%s299 + $0xb1c] sm:$0xff]
      %v1168 = vld [vmem:[%s299 + $0xb24] sm:$0xf]
      %v1169 = vld [vmem:[%s299 + $0xb28] sm:$0xff]
      %v1170 = vld [vmem:[%s299 + $0xb30] sm:$0xff]
      %v1171 = vld [vmem:[%s299 + $0xb38] sm:$0xff]
      %v1172 = vld [vmem:[%s299 + $0xb40] sm:$0xf]
      %v1173 = vld [vmem:[%s299 + $0xb44] sm:$0xff]
      %v1174 = vld [vmem:[%s299 + $0xb4c] sm:$0xff]
      %v1175 = vld [vmem:[%s299 + $0xb54] sm:$0xff]
      %v1176 = vld [vmem:[%s299 + $0xb5c] sm:$0xf]
      %v1177 = vld [vmem:[%s299 + $0xb60] sm:$0xff]
      %v1178 = vld [vmem:[%s299 + $0xb68] sm:$0xff]
      %v1179 = vld [vmem:[%s299 + $0xb70] sm:$0xff]
      %v1180 = vld [vmem:[%s299 + $0xb78] sm:$0xf]
      %v1181 = vld [vmem:[%s299 + $0xb7c] sm:$0xff]
      %v1182 = vld [vmem:[%s299 + $0xb84] sm:$0xff]
      %v1183 = vld [vmem:[%s299 + $0xb8c] sm:$0xff]
      %v1184 = vld [vmem:[%s299 + $0xb94] sm:$0xf]
      %v1185 = vld [vmem:[%s299 + $0xb98] sm:$0xff]
      %v1186 = vld [vmem:[%s299 + $0xba0] sm:$0xff]
      %v1187 = vld [vmem:[%s299 + $0xba8] sm:$0xff]
      %v1188 = vld [vmem:[%s299 + $0xbb0] sm:$0xf]
      %v1189 = vld [vmem:[%s299 + $0xbb4] sm:$0xff]
      %v1190 = vld [vmem:[%s299 + $0xbbc] sm:$0xff]
      %v1191 = vld [vmem:[%s299 + $0xbc4] sm:$0xff]
      %v1192 = vld [vmem:[%s299 + $0xbcc] sm:$0xf]
      %v1193 = vld [vmem:[%s299 + $0xbd0] sm:$0xff]
      %v1194 = vld [vmem:[%s299 + $0xbd8] sm:$0xff]
      %v1195 = vld [vmem:[%s299 + $0xbe0] sm:$0xff]
      %v1196 = vld [vmem:[%s299 + $0xbe8] sm:$0xf]
      %v1197 = vld [vmem:[%s299 + $0xbec] sm:$0xff]
      %v1198 = vld [vmem:[%s299 + $0xbf4] sm:$0xff]
      %v1199 = vld [vmem:[%s299 + $0xbfc] sm:$0xff]
      %v1200 = vld [vmem:[%s299 + $0xc04] sm:$0xf]
      %v1201 = vld [vmem:[%s299 + $0xc08] sm:$0xff]
      %v1202 = vld [vmem:[%s299 + $0xc10] sm:$0xff]
      %v1203 = vld [vmem:[%s299 + $0xc18] sm:$0xff]
      %v1204 = vld [vmem:[%s299 + $0xc20] sm:$0xf]
      %v1205 = vld [vmem:[%s299 + $0xc24] sm:$0xff]
      %v1206 = vld [vmem:[%s299 + $0xc2c] sm:$0xff]
      %v1207 = vld [vmem:[%s299 + $0xc34] sm:$0xff]
      %v1208 = vld [vmem:[%s299 + $0xc3c] sm:$0xf]
      %v1209 = vld [vmem:[%s299 + $0xc40] sm:$0xff]
      %v1210 = vld [vmem:[%s299 + $0xc48] sm:$0xff]
      %v1211 = vld [vmem:[%s299 + $0xc50] sm:$0xff]
      %v1212 = vld [vmem:[%s299 + $0xc58] sm:$0xf]
      %v1213 = vld [vmem:[%s299 + $0xc5c] sm:$0xff]
      %v1214 = vld [vmem:[%s299 + $0xc64] sm:$0xff]
      %v1215 = vld [vmem:[%s299 + $0xc6c] sm:$0xff]
      %v1216 = vld [vmem:[%s299 + $0xc74] sm:$0xf]
      %v1217 = vld [vmem:[%s299 + $0xc78] sm:$0xff]
      %v1218 = vld [vmem:[%s299 + $0xc80] sm:$0xff]
      %v1219 = vld [vmem:[%s299 + $0xc88] sm:$0xff]
      %v1220 = vld [vmem:[%s299 + $0xc90] sm:$0xf]
      %v1221 = vld [vmem:[%s299 + $0xc94] sm:$0xff]
      %v1222 = vld [vmem:[%s299 + $0xc9c] sm:$0xff]
      %v1223 = vld [vmem:[%s299 + $0xca4] sm:$0xff]
      %v1224 = vld [vmem:[%s299 + $0xcac] sm:$0xf]
      %v1225 = vld [vmem:[%s299 + $0xcb0] sm:$0xff]
      %v1226 = vld [vmem:[%s299 + $0xcb8] sm:$0xff]
      %v1227 = vld [vmem:[%s299 + $0xcc0] sm:$0xff]
      %v1228 = vld [vmem:[%s299 + $0xcc8] sm:$0xf]
      %v1229 = vld [vmem:[%s299 + $0xccc] sm:$0xff]
      %v1230 = vld [vmem:[%s299 + $0xcd4] sm:$0xff]
      %v1231 = vld [vmem:[%s299 + $0xcdc] sm:$0xff]
      %v1232 = vld [vmem:[%s299 + $0xce4] sm:$0xf]
      %v1233 = vld [vmem:[%s299 + $0xce8] sm:$0xff]
      %v1234 = vld [vmem:[%s299 + $0xcf0] sm:$0xff]
      %v1235 = vld [vmem:[%s299 + $0xcf8] sm:$0xff]
      %v1236 = vld [vmem:[%s299 + $0xd00] sm:$0xf]
      %v1237 = vld [vmem:[%s299 + $0xd04] sm:$0xff]
      %v1238 = vld [vmem:[%s299 + $0xd0c] sm:$0xff]
      %v1239 = vld [vmem:[%s299 + $0xd14] sm:$0xff]
      %v1240 = vld [vmem:[%s299 + $0xd1c] sm:$0xf]
      %v1241 = vld [vmem:[%s299 + $0xd20] sm:$0xff]
      %v1242 = vld [vmem:[%s299 + $0xd28] sm:$0xff]
      %v1243 = vld [vmem:[%s299 + $0xd30] sm:$0xff]
      %v1244 = vld [vmem:[%s299 + $0xd38] sm:$0xf]
      %v1245 = vld [vmem:[%s299 + $0xd3c] sm:$0xff]
      %v1246 = vld [vmem:[%s299 + $0xd44] sm:$0xff]
      %v1247 = vld [vmem:[%s299 + $0xd4c] sm:$0xff]
      %v1248 = vld [vmem:[%s299 + $0xd54] sm:$0xf]
      %v1249 = vld [vmem:[%s299 + $0xd58] sm:$0xff]
      %v1250 = vld [vmem:[%s299 + $0xd60] sm:$0xff]
      %v1251 = vld [vmem:[%s299 + $0xd68] sm:$0xff]
      %v1252 = vld [vmem:[%s299 + $0xd70] sm:$0xf]
      %v1253 = vld [vmem:[%s299 + $0xd74] sm:$0xff]
      %v1254 = vld [vmem:[%s299 + $0xd7c] sm:$0xff]
      %v1255 = vld [vmem:[%s299 + $0xd84] sm:$0xff]
      %v1256 = vld [vmem:[%s299 + $0xd8c] sm:$0xf]
      %v1257 = vld [vmem:[%s299 + $0xd90] sm:$0xff]
      %v1258 = vld [vmem:[%s299 + $0xd98] sm:$0xff]
      %v1259 = vld [vmem:[%s299 + $0xda0] sm:$0xff]
      %v1260 = vld [vmem:[%s299 + $0xda8] sm:$0xf]
      %v1261 = vld [vmem:[%s299 + $0xdac] sm:$0xff]
      %v1262 = vld [vmem:[%s299 + $0xdb4] sm:$0xff]
      %v1263 = vld [vmem:[%s299 + $0xdbc] sm:$0xff]
      %v1264 = vld [vmem:[%s299 + $0xdc4] sm:$0xf]
      %v1265 = vld [vmem:[%s299 + $0xdc8] sm:$0xff]
      %v1266 = vld [vmem:[%s299 + $0xdd0] sm:$0xff]
      %v1267 = vld [vmem:[%s299 + $0xdd8] sm:$0xff]
      %v1268 = vld [vmem:[%s299 + $0xde0] sm:$0xf]
      %v1269 = vld [vmem:[%s299 + $0xde4] sm:$0xff]
      %v1270 = vld [vmem:[%s299 + $0xdec] sm:$0xff]
      %v1271 = vld [vmem:[%s299 + $0xdf4] sm:$0xff]
      %v1272 = vld [vmem:[%s299 + $0xdfc] sm:$0xf]
      %v1273 = vld [vmem:[%s299 + $0xe00] sm:$0xff]
      %v1274 = vld [vmem:[%s299 + $0xe08] sm:$0xff]
      %v1275 = vld [vmem:[%s299 + $0xe10] sm:$0xff]
      %v1276 = vld [vmem:[%s299 + $0xe18] sm:$0xf]
      %v1277 = vld [vmem:[%s299 + $0xe1c] sm:$0xff]
      %v1278 = vld [vmem:[%s299 + $0xe24] sm:$0xff]
      %v1279 = vld [vmem:[%s299 + $0xe2c] sm:$0xff]
      %v1280 = vld [vmem:[%s299 + $0xe34] sm:$0xf]
      %v1281 = vld [vmem:[%s299 + $0xe38] sm:$0xff]
      %v1282 = vld [vmem:[%s299 + $0xe40] sm:$0xff]
      %v1283 = vld [vmem:[%s299 + $0xe48] sm:$0xff]
      %v1284 = vld [vmem:[%s299 + $0xe50] sm:$0xf]
      %v1285 = vld [vmem:[%s299 + $0xe54] sm:$0xff]
      %v1286 = vld [vmem:[%s299 + $0xe5c] sm:$0xff]
      %v1287 = vld [vmem:[%s299 + $0xe64] sm:$0xff]
      %v1288 = vld [vmem:[%s299 + $0xe6c] sm:$0xf]
      %v1289 = vld [vmem:[%s299 + $0xe70] sm:$0xff]
      %v1290 = vld [vmem:[%s299 + $0xe78] sm:$0xff]
      %v1291 = vld [vmem:[%s299 + $0xe80] sm:$0xff]
      %v1292 = vld [vmem:[%s299 + $0xe88] sm:$0xf]
      %v1293 = vld [vmem:[%s299 + $0xe8c] sm:$0xff]
      %v1294 = vld [vmem:[%s299 + $0xe94] sm:$0xff]
      %v1295 = vld [vmem:[%s299 + $0xe9c] sm:$0xff]
      %v1296 = vld [vmem:[%s299 + $0xea4] sm:$0xf]
      %v1297 = vld [vmem:[%s299 + $0xea8] sm:$0xff]
      %v1298 = vld [vmem:[%s299 + $0xeb0] sm:$0xff]
      %v1299 = vld [vmem:[%s299 + $0xeb8] sm:$0xff]
      %v1300 = vld [vmem:[%s299 + $0xec0] sm:$0xf]
      %v1301 = vld [vmem:[%s299 + $0xec4] sm:$0xff]
      %v1302 = vld [vmem:[%s299 + $0xecc] sm:$0xff]
      %v1303 = vld [vmem:[%s299 + $0xed4] sm:$0xff]
      %v1304 = vld [vmem:[%s299 + $0xedc] sm:$0xf]
      %v1305 = vld [vmem:[%s299 + $0xee0] sm:$0xff]
      %v1306 = vld [vmem:[%s299 + $0xee8] sm:$0xff]
      %v1307 = vld [vmem:[%s299 + $0xef0] sm:$0xff]
      %v1308 = vld [vmem:[%s299 + $0xef8] sm:$0xf]
      %v1309 = vld [vmem:[%s299 + $0xefc] sm:$0xff]
      %v1310 = vld [vmem:[%s299 + $0xf04] sm:$0xff]
      %v1311 = vld [vmem:[%s299 + $0xf0c] sm:$0xff]
      %v1312 = vld [vmem:[%s299 + $0xf14] sm:$0xf]
      %v1313 = vld [vmem:[%s299 + $0xf18] sm:$0xff]
      %v1314 = vld [vmem:[%s299 + $0xf20] sm:$0xff]
      %v1315 = vld [vmem:[%s299 + $0xf28] sm:$0xff]
      %v1316 = vld [vmem:[%s299 + $0xf30] sm:$0xf]
      %v1317 = vld [vmem:[%s299 + $0xf34] sm:$0xff]
      %v1318 = vld [vmem:[%s299 + $0xf3c] sm:$0xff]
      %v1319 = vld [vmem:[%s299 + $0xf44] sm:$0xff]
      %v1320 = vld [vmem:[%s299 + $0xf4c] sm:$0xf]
      %v1321 = vld [vmem:[%s299 + $0xf50] sm:$0xff]
      %v1322 = vld [vmem:[%s299 + $0xf58] sm:$0xff]
      %v1323 = vld [vmem:[%s299 + $0xf60] sm:$0xff]
      %v1324 = vld [vmem:[%s299 + $0xf68] sm:$0xf]
      %v1325 = vld [vmem:[%s299 + $0xf6c] sm:$0xff]
      %v1326 = vld [vmem:[%s299 + $0xf74] sm:$0xff]
      %v1327 = vld [vmem:[%s299 + $0xf7c] sm:$0xff]
      %v1328 = vld [vmem:[%s299 + $0xf84] sm:$0xf]
      %v1329 = vld [vmem:[%s299 + $0xf88] sm:$0xff]
      %v1330 = vld [vmem:[%s299 + $0xf90] sm:$0xff]
      %v1331 = vld [vmem:[%s299 + $0xf98] sm:$0xff]
      %v1332 = vld [vmem:[%s299 + $0xfa0] sm:$0xf]
      %v1333 = vld [vmem:[%s299 + $0xfa4] sm:$0xff]
      %v1334 = vld [vmem:[%s299 + $0xfac] sm:$0xff]
      %v1335 = vld [vmem:[%s299 + $0xfb4] sm:$0xff]
      %v1336 = vld [vmem:[%s299 + $0xfbc] sm:$0xf]
      %v1337 = vld [vmem:[%s299 + $0xfc0] sm:$0xff]
      %v1338 = vld [vmem:[%s299 + $0xfc8] sm:$0xff]
      %v1339 = vld [vmem:[%s299 + $0xfd0] sm:$0xff]
      %v1340 = vld [vmem:[%s299 + $0xfd8] sm:$0xf]
      %v1341 = vld [vmem:[%s299 + $0xfdc] sm:$0xff]
      %v1342 = vld [vmem:[%s299 + $0xfe4] sm:$0xff]
      %v1343 = vld [vmem:[%s299 + $0xfec] sm:$0xff]
      %v1344 = vld [vmem:[%s299 + $0xff4] sm:$0xf]
      %v1345 = vld [vmem:[%s299 + $0xff8] sm:$0xff]
      %v1346 = vld [vmem:[%s299 + $0x1000] sm:$0xff]
      %v1347 = vld [vmem:[%s299 + $0x1008] sm:$0xff]
      %v1348 = vld [vmem:[%s299 + $0x1010] sm:$0xf]
      %v1349 = vld [vmem:[%s299 + $0x1014] sm:$0xff]
      %v1350 = vld [vmem:[%s299 + $0x101c] sm:$0xff]
      %v1351 = vld [vmem:[%s299 + $0x1024] sm:$0xff]
      %v1352 = vld [vmem:[%s299 + $0x102c] sm:$0xf]
      %v1353 = vld [vmem:[%s299 + $0x1030] sm:$0xff]
      %v1354 = vld [vmem:[%s299 + $0x1038] sm:$0xff]
      %v1355 = vld [vmem:[%s299 + $0x1040] sm:$0xff]
      %v1356 = vld [vmem:[%s299 + $0x1048] sm:$0xf]
      %v1357 = vld [vmem:[%s299 + $0x104c] sm:$0xff]
      %v1358 = vld [vmem:[%s299 + $0x1054] sm:$0xff]
      %v1359 = vld [vmem:[%s299 + $0x105c] sm:$0xff]
      %v1360 = vld [vmem:[%s299 + $0x1064] sm:$0xf]
      %v1361 = vld [vmem:[%s299 + $0x1068] sm:$0xff]
      %v1362 = vld [vmem:[%s299 + $0x1070] sm:$0xff]
      %v1363 = vld [vmem:[%s299 + $0x1078] sm:$0xff]
      %v1364 = vld [vmem:[%s299 + $0x1080] sm:$0xf]
      %v1365 = vld [vmem:[%s299 + $0x1084] sm:$0xff]
      %v1366 = vld [vmem:[%s299 + $0x108c] sm:$0xff]
      %v1367 = vld [vmem:[%s299 + $0x1094] sm:$0xff]
      %v1368 = vld [vmem:[%s299 + $0x109c] sm:$0xf]
      %v1369 = vld [vmem:[%s299 + $0x10a0] sm:$0xff]
      %v1370 = vld [vmem:[%s299 + $0x10a8] sm:$0xff]
      %v1371 = vld [vmem:[%s299 + $0x10b0] sm:$0xff]
      %v1372 = vld [vmem:[%s299 + $0x10b8] sm:$0xf]
      %v1373 = vld [vmem:[%s299 + $0x10bc] sm:$0xff]
      %v1374 = vld [vmem:[%s299 + $0x10c4] sm:$0xff]
      %v1375 = vld [vmem:[%s299 + $0x10cc] sm:$0xff]
      %v1376 = vld [vmem:[%s299 + $0x10d4] sm:$0xf]
      %v1377 = vld [vmem:[%s299 + $0x10d8] sm:$0xff]
      %v1378 = vld [vmem:[%s299 + $0x10e0] sm:$0xff]
      %v1379 = vld [vmem:[%s299 + $0x10e8] sm:$0xff]
      %v1380 = vld [vmem:[%s299 + $0x10f0] sm:$0xf]
      %v1381 = vld [vmem:[%s299 + $0x10f4] sm:$0xff]
      %v1382 = vld [vmem:[%s299 + $0x10fc] sm:$0xff]
      %v1383 = vld [vmem:[%s299 + $0x1104] sm:$0xff]
      %v1384 = vld [vmem:[%s299 + $0x110c] sm:$0xf]
      %v1385 = vld [vmem:[%s299 + $0x1110] sm:$0xff]
      %v1386 = vld [vmem:[%s299 + $0x1118] sm:$0xff]
      %v1387 = vld [vmem:[%s299 + $0x1120] sm:$0xff]
      %v1388 = vld [vmem:[%s299 + $0x1128] sm:$0xf]
      %v1389 = vld [vmem:[%s299 + $0x112c] sm:$0xff]
      %v1390 = vld [vmem:[%s299 + $0x1134] sm:$0xff]
      %v1391 = vld [vmem:[%s299 + $0x113c] sm:$0xff]
      %v1392 = vld [vmem:[%s299 + $0x1144] sm:$0xf]
      %v1393 = vld [vmem:[%s299 + $0x1148] sm:$0xff]
      %v1394 = vld [vmem:[%s299 + $0x1150] sm:$0xff]
      %v1395 = vld [vmem:[%s299 + $0x1158] sm:$0xff]
      %v1396 = vld [vmem:[%s299 + $0x1160] sm:$0xf]
      %v1397 = vld [vmem:[%s299 + $0x1164] sm:$0xff]
      %v1398 = vld [vmem:[%s299 + $0x116c] sm:$0xff]
      %v1399 = vld [vmem:[%s299 + $0x1174] sm:$0xff]
      %v1400 = vld [vmem:[%s299 + $0x117c] sm:$0xf]
      %v1401 = vld [vmem:[%s299 + $0x1180] sm:$0xff]
      %v1402 = vld [vmem:[%s299 + $0x1188] sm:$0xff]
      %v1403 = vld [vmem:[%s299 + $0x1190] sm:$0xff]
      %v1404 = vld [vmem:[%s299 + $0x1198] sm:$0xf]
      %v1405 = vld [vmem:[%s299 + $0x119c] sm:$0xff]
      %v1406 = vld [vmem:[%s299 + $0x11a4] sm:$0xff]
      %v1407 = vld [vmem:[%s299 + $0x11ac] sm:$0xff]
      %v1408 = vld [vmem:[%s299 + $0x11b4] sm:$0xf]
      %v1409 = vld [vmem:[%s299 + $0x11b8] sm:$0xff]
      %v1410 = vld [vmem:[%s299 + $0x11c0] sm:$0xff]
      %v1411 = vld [vmem:[%s299 + $0x11c8] sm:$0xff]
      %v1412 = vld [vmem:[%s299 + $0x11d0] sm:$0xf]
      %v1413 = vld [vmem:[%s299 + $0x11d4] sm:$0xff]
      %v1414 = vld [vmem:[%s299 + $0x11dc] sm:$0xff]
      %v1415 = vld [vmem:[%s299 + $0x11e4] sm:$0xff]
      %v1416 = vld [vmem:[%s299 + $0x11ec] sm:$0xf]
      %v1417 = vld [vmem:[%s299 + $0x11f0] sm:$0xff]
      %v1418 = vld [vmem:[%s299 + $0x11f8] sm:$0xff]
      %v1419 = vld [vmem:[%s299 + $0x1200] sm:$0xff]
      %v1420 = vld [vmem:[%s299 + $0x1208] sm:$0xf]
      %v1421 = vld [vmem:[%s299 + $0x120c] sm:$0xff]
      %v1422 = vld [vmem:[%s299 + $0x1214] sm:$0xff]
      %v1423 = vld [vmem:[%s299 + $0x121c] sm:$0xff]
      %v1424 = vld [vmem:[%s299 + $0x1224] sm:$0xf]
      %v1425 = vld [vmem:[%s299 + $0x1228] sm:$0xff]
      %v1426 = vld [vmem:[%s299 + $0x1230] sm:$0xff]
      %v1427 = vld [vmem:[%s299 + $0x1238] sm:$0xff]
      %v1428 = vld [vmem:[%s299 + $0x1240] sm:$0xf]
      %v1429 = vld [vmem:[%s299 + $0x1244] sm:$0xff]
      %v1430 = vld [vmem:[%s299 + $0x124c] sm:$0xff]
      %v1431 = vld [vmem:[%s299 + $0x1254] sm:$0xff]
      %v1432 = vld [vmem:[%s299 + $0x125c] sm:$0xf]
      %v1433 = vld [vmem:[%s299 + $0x1260] sm:$0xff]
      %v1434 = vld [vmem:[%s299 + $0x1268] sm:$0xff]
      %v1435 = vld [vmem:[%s299 + $0x1270] sm:$0xff]
      %v1436 = vld [vmem:[%s299 + $0x1278] sm:$0xf]
      %v1437 = vld [vmem:[%s299 + $0x127c] sm:$0xff]
      %v1438 = vld [vmem:[%s299 + $0x1284] sm:$0xff]
      %v1439 = vld [vmem:[%s299 + $0x128c] sm:$0xff]
      %v1440 = vld [vmem:[%s299 + $0x1294] sm:$0xf]
      %v1441 = vld [vmem:[%s299 + $0x1298] sm:$0xff]
      %v1442 = vld [vmem:[%s299 + $0x12a0] sm:$0xff]
      %v1443 = vld [vmem:[%s299 + $0x12a8] sm:$0xff]
      %v1444 = vld [vmem:[%s299 + $0x12b0] sm:$0xf]
      %v1445 = vld [vmem:[%s299 + $0x12b4] sm:$0xff]
      %v1446 = vld [vmem:[%s299 + $0x12bc] sm:$0xff]
      %v1447 = vld [vmem:[%s299 + $0x12c4] sm:$0xff]
      %v1448 = vld [vmem:[%s299 + $0x12cc] sm:$0xf]
      %v1449 = vld [vmem:[%s299 + $0x12d0] sm:$0xff]
      %v1450 = vld [vmem:[%s299 + $0x12d8] sm:$0xff]
      %v1451 = vld [vmem:[%s299 + $0x12e0] sm:$0xff]
      %v1452 = vld [vmem:[%s299 + $0x12e8] sm:$0xf]
      %v1453 = vld [vmem:[%s299 + $0x12ec] sm:$0xff]
      %v1454 = vld [vmem:[%s299 + $0x12f4] sm:$0xff]
      %v1455 = vld [vmem:[%s299 + $0x12fc] sm:$0xff]
      %v1456 = vld [vmem:[%s299 + $0x1304] sm:$0xf]
      %v1457 = vld [vmem:[%s299 + $0x1308] sm:$0xff]
      %v1458 = vld [vmem:[%s299 + $0x1310] sm:$0xff]
      %v1459 = vld [vmem:[%s299 + $0x1318] sm:$0xff]
      %v1460 = vld [vmem:[%s299 + $0x1320] sm:$0xf]
      %v1461 = vld [vmem:[%s299 + $0x1324] sm:$0xff]
      %v1462 = vld [vmem:[%s299 + $0x132c] sm:$0xff]
      %v1463 = vld [vmem:[%s299 + $0x1334] sm:$0xff]
      %v1464 = vld [vmem:[%s299 + $0x133c] sm:$0xf]
      %v1465 = vld [vmem:[%s299 + $0x1340] sm:$0xff]
      %v1466 = vld [vmem:[%s299 + $0x1348] sm:$0xff]
      %v1467 = vld [vmem:[%s299 + $0x1350] sm:$0xff]
      %v1468 = vld [vmem:[%s299 + $0x1358] sm:$0xf]
      %v1469 = vld [vmem:[%s299 + $0x135c] sm:$0xff]
      %v1470 = vld [vmem:[%s299 + $0x1364] sm:$0xff]
      %v1471 = vld [vmem:[%s299 + $0x136c] sm:$0xff]
      %v1472 = vld [vmem:[%s299 + $0x1374] sm:$0xf]
      %v1473 = vld [vmem:[%s299 + $0x1378] sm:$0xff]
      %v1474 = vld [vmem:[%s299 + $0x1380] sm:$0xff]
      %v1475 = vld [vmem:[%s299 + $0x1388] sm:$0xff]
      %v1476 = vld [vmem:[%s299 + $0x1390] sm:$0xf]
      %v1477 = vld [vmem:[%s299 + $0x1394] sm:$0xff]
      %v1478 = vld [vmem:[%s299 + $0x139c] sm:$0xff]
      %v1479 = vld [vmem:[%s299 + $0x13a4] sm:$0xff]
      %v1480 = vld [vmem:[%s299 + $0x13ac] sm:$0xf]
      %v1481 = vld [vmem:[%s299 + $0x13b0] sm:$0xff]
      %v1482 = vld [vmem:[%s299 + $0x13b8] sm:$0xff]
      %v1483 = vld [vmem:[%s299 + $0x13c0] sm:$0xff]
      %v1484 = vld [vmem:[%s299 + $0x13c8] sm:$0xf]
      %v1485 = vld [vmem:[%s299 + $0x13cc] sm:$0xff]
      %v1486 = vld [vmem:[%s299 + $0x13d4] sm:$0xff]
      %v1487 = vld [vmem:[%s299 + $0x13dc] sm:$0xff]
      %v1488 = vld [vmem:[%s299 + $0x13e4] sm:$0xf]
      %v1489 = vld [vmem:[%s299 + $0x13e8] sm:$0xff]
      %v1490 = vld [vmem:[%s299 + $0x13f0] sm:$0xff]
      %v1491 = vld [vmem:[%s299 + $0x13f8] sm:$0xff]
      %v1492 = vld [vmem:[%s299 + $0x1400] sm:$0xf]
      %v1493 = vld [vmem:[%s299 + $0x1404] sm:$0xff]
      %v1494 = vld [vmem:[%s299 + $0x140c] sm:$0xff]
      %v1495 = vld [vmem:[%s299 + $0x1414] sm:$0xff]
      %v1496 = vld [vmem:[%s299 + $0x141c] sm:$0xf]
      %v1497 = vld [vmem:[%s299 + $0x1420] sm:$0xff]
      %v1498 = vld [vmem:[%s299 + $0x1428] sm:$0xff]
      %v1499 = vld [vmem:[%s299 + $0x1430] sm:$0xff]
      %v1500 = vld [vmem:[%s299 + $0x1438] sm:$0xf]
      %v1501 = vld [vmem:[%s299 + $0x143c] sm:$0xff]
      %v1502 = vld [vmem:[%s299 + $0x1444] sm:$0xff]
      %v1503 = vld [vmem:[%s299 + $0x144c] sm:$0xff]
      %v1504 = vld [vmem:[%s299 + $0x1454] sm:$0xf]
      %v1505 = vld [vmem:[%s299 + $0x1458] sm:$0xff]
      %v1506 = vld [vmem:[%s299 + $0x1460] sm:$0xff]
      %v1507 = vld [vmem:[%s299 + $0x1468] sm:$0xff]
      %v1508 = vld [vmem:[%s299 + $0x1470] sm:$0xf]
      %v1509 = vld [vmem:[%s299 + $0x1474] sm:$0xff]
      %v1510 = vld [vmem:[%s299 + $0x147c] sm:$0xff]
      %v1511 = vld [vmem:[%s299 + $0x1484] sm:$0xff]
      %v1512 = vld [vmem:[%s299 + $0x148c] sm:$0xf]
      %v1513 = vld [vmem:[%s299 + $0x1490] sm:$0xff]
      %v1514 = vld [vmem:[%s299 + $0x1498] sm:$0xff]
      %v1515 = vld [vmem:[%s299 + $0x14a0] sm:$0xff]
      %v1516 = vld [vmem:[%s299 + $0x14a8] sm:$0xf]
      %v1517 = vld [vmem:[%s299 + $0x14ac] sm:$0xff]
      %v1518 = vld [vmem:[%s299 + $0x14b4] sm:$0xff]
      %v1519 = vld [vmem:[%s299 + $0x14bc] sm:$0xff]
      %v1520 = vld [vmem:[%s299 + $0x14c4] sm:$0xf]
      %v1521 = vld [vmem:[%s299 + $0x14c8] sm:$0xff]
      %v1522 = vld [vmem:[%s299 + $0x14d0] sm:$0xff]
      %v1523 = vld [vmem:[%s299 + $0x14d8] sm:$0xff]
      %v1524 = vld [vmem:[%s299 + $0x14e0] sm:$0xf]
      %v1525 = vld [vmem:[%s299 + $0x14e4] sm:$0xff]
      %v1526 = vld [vmem:[%s299 + $0x14ec] sm:$0xff]
      %v1527 = vld [vmem:[%s299 + $0x14f4] sm:$0xff]
      %v1528 = vld [vmem:[%s299 + $0x14fc] sm:$0xf]
      %v1529 = vld [vmem:[%s299 + $0x1500] sm:$0xff]
      %v1530 = vld [vmem:[%s299 + $0x1508] sm:$0xff]
      %v1531 = vld [vmem:[%s299 + $0x1510] sm:$0xff]
      %v1532 = vld [vmem:[%s299 + $0x1518] sm:$0xf]
      %v1533 = vld [vmem:[%s299 + $0x151c] sm:$0xff]
      %v1534 = vld [vmem:[%s299 + $0x1524] sm:$0xff]
      %v1535 = vld [vmem:[%s299 + $0x152c] sm:$0xff]
      %v1536 = vld [vmem:[%s299 + $0x1534] sm:$0xf]
      %v1537 = vld [vmem:[%s299 + $0x1538] sm:$0xff]
      %v1538 = vld [vmem:[%s299 + $0x1540] sm:$0xff]
      %v1539 = vld [vmem:[%s299 + $0x1548] sm:$0xff]
      %v1540 = vld [vmem:[%s299 + $0x1550] sm:$0xf]
      %v1541 = vld [vmem:[%s299 + $0x1554] sm:$0xff]
      %v1542 = vld [vmem:[%s299 + $0x155c] sm:$0xff]
      %v1543 = vld [vmem:[%s299 + $0x1564] sm:$0xff]
      %v1544 = vld [vmem:[%s299 + $0x156c] sm:$0xf]
      %v1545 = vld [vmem:[%s299 + $0x1570] sm:$0xff]
      %v1546 = vld [vmem:[%s299 + $0x1578] sm:$0xff]
      %v1547 = vld [vmem:[%s299 + $0x1580] sm:$0xff]
      %v1548 = vld [vmem:[%s299 + $0x1588] sm:$0xf]
      %v1549 = vld [vmem:[%s299 + $0x158c] sm:$0xff]
      %v1550 = vld [vmem:[%s299 + $0x1594] sm:$0xff]
      %v1551 = vld [vmem:[%s299 + $0x159c] sm:$0xff]
      %v1552 = vld [vmem:[%s299 + $0x15a4] sm:$0xf]
      %v1553 = vld [vmem:[%s299 + $0x15a8] sm:$0xff]
      %v1554 = vld [vmem:[%s299 + $0x15b0] sm:$0xff]
      %v1555 = vld [vmem:[%s299 + $0x15b8] sm:$0xff]
      %v1556 = vld [vmem:[%s299 + $0x15c0] sm:$0xf]
      %v1557 = vld [vmem:[%s299 + $0x15c4] sm:$0xff]
      %v1558 = vld [vmem:[%s299 + $0x15cc] sm:$0xff]
      %v1559 = vld [vmem:[%s299 + $0x15d4] sm:$0xff]
      %v1560 = vld [vmem:[%s299 + $0x15dc] sm:$0xf]
      %v2361 = vunpack.c.l.b16 %v761
      %v2362 = vunpack.c.h.b16 %v761
      %v2363 = vunpack.c.l.b16 %v762
      %v2364 = vunpack.c.h.b16 %v762
      %v2365 = vunpack.c.l.b16 %v763
      %v2366 = vunpack.c.h.b16 %v763
      %v2367 = vunpack.c.l.b16 %v764
      %v2368 = vunpack.c.l.b16 %v765
      %v2369 = vunpack.c.h.b16 %v765
      %v2370 = vunpack.c.l.b16 %v766
      %v2371 = vunpack.c.h.b16 %v766
      %v2372 = vunpack.c.l.b16 %v767
      %v2373 = vunpack.c.h.b16 %v767
      %v2374 = vunpack.c.l.b16 %v768
      %v2375 = vunpack.c.l.b16 %v769
      %v2376 = vunpack.c.h.b16 %v769
      %v2377 = vunpack.c.l.b16 %v770
      %v2378 = vunpack.c.h.b16 %v770
      %v2379 = vunpack.c.l.b16 %v771
      %v2380 = vunpack.c.h.b16 %v771
      %v2381 = vunpack.c.l.b16 %v772
      %v2382 = vunpack.c.l.b16 %v773
      %v2383 = vunpack.c.h.b16 %v773
      %v2384 = vunpack.c.l.b16 %v774
      %v2385 = vunpack.c.h.b16 %v774
      %v2386 = vunpack.c.l.b16 %v775
      %v2387 = vunpack.c.h.b16 %v775
      %v2388 = vunpack.c.l.b16 %v776
      %v2389 = vunpack.c.l.b16 %v777
      %v2390 = vunpack.c.h.b16 %v777
      %v2391 = vunpack.c.l.b16 %v778
      %v2392 = vunpack.c.h.b16 %v778
      %v2393 = vunpack.c.l.b16 %v779
      %v2394 = vunpack.c.h.b16 %v779
      %v2395 = vunpack.c.l.b16 %v780
      %v2396 = vunpack.c.l.b16 %v781
      %v2397 = vunpack.c.h.b16 %v781
      %v2398 = vunpack.c.l.b16 %v782
      %v2399 = vunpack.c.h.b16 %v782
      %v2400 = vunpack.c.l.b16 %v783
      %v2401 = vunpack.c.h.b16 %v783
      %v2402 = vunpack.c.l.b16 %v784
      %v2403 = vunpack.c.l.b16 %v785
      %v2404 = vunpack.c.h.b16 %v785
      %v2405 = vunpack.c.l.b16 %v786
      %v2406 = vunpack.c.h.b16 %v786
      %v2407 = vunpack.c.l.b16 %v787
      %v2408 = vunpack.c.h.b16 %v787
      %v2409 = vunpack.c.l.b16 %v788
      %v2410 = vunpack.c.l.b16 %v789
      %v2411 = vunpack.c.h.b16 %v789
      %v2412 = vunpack.c.l.b16 %v790
      %v2413 = vunpack.c.h.b16 %v790
      %v2414 = vunpack.c.l.b16 %v791
      %v2415 = vunpack.c.h.b16 %v791
      %v2416 = vunpack.c.l.b16 %v792
      %v2417 = vunpack.c.l.b16 %v793
      %v2418 = vunpack.c.h.b16 %v793
      %v2419 = vunpack.c.l.b16 %v794
      %v2420 = vunpack.c.h.b16 %v794
      %v2421 = vunpack.c.l.b16 %v795
      %v2422 = vunpack.c.h.b16 %v795
      %v2423 = vunpack.c.l.b16 %v796
      %v2424 = vunpack.c.l.b16 %v797
      %v2425 = vunpack.c.h.b16 %v797
      %v2426 = vunpack.c.l.b16 %v798
      %v2427 = vunpack.c.h.b16 %v798
      %v2428 = vunpack.c.l.b16 %v799
      %v2429 = vunpack.c.h.b16 %v799
      %v2430 = vunpack.c.l.b16 %v800
      %v2431 = vunpack.c.l.b16 %v801
      %v2432 = vunpack.c.h.b16 %v801
      %v2433 = vunpack.c.l.b16 %v802
      %v2434 = vunpack.c.h.b16 %v802
      %v2435 = vunpack.c.l.b16 %v803
      %v2436 = vunpack.c.h.b16 %v803
      %v2437 = vunpack.c.l.b16 %v804
      %v2438 = vunpack.c.l.b16 %v805
      %v2439 = vunpack.c.h.b16 %v805
      %v2440 = vunpack.c.l.b16 %v806
      %v2441 = vunpack.c.h.b16 %v806
      %v2442 = vunpack.c.l.b16 %v807
      %v2443 = vunpack.c.h.b16 %v807
      %v2444 = vunpack.c.l.b16 %v808
      %v2445 = vunpack.c.l.b16 %v809
      %v2446 = vunpack.c.h.b16 %v809
      %v2447 = vunpack.c.l.b16 %v810
      %v2448 = vunpack.c.h.b16 %v810
      %v2449 = vunpack.c.l.b16 %v811
      %v2450 = vunpack.c.h.b16 %v811
      %v2451 = vunpack.c.l.b16 %v812
      %v2452 = vunpack.c.l.b16 %v813
      %v2453 = vunpack.c.h.b16 %v813
      %v2454 = vunpack.c.l.b16 %v814
      %v2455 = vunpack.c.h.b16 %v814
      %v2456 = vunpack.c.l.b16 %v815
      %v2457 = vunpack.c.h.b16 %v815
      %v2458 = vunpack.c.l.b16 %v816
      %v2459 = vunpack.c.l.b16 %v817
      %v2460 = vunpack.c.h.b16 %v817
      %v2461 = vunpack.c.l.b16 %v818
      %v2462 = vunpack.c.h.b16 %v818
      %v2463 = vunpack.c.l.b16 %v819
      %v2464 = vunpack.c.h.b16 %v819
      %v2465 = vunpack.c.l.b16 %v820
      %v2466 = vunpack.c.l.b16 %v821
      %v2467 = vunpack.c.h.b16 %v821
      %v2468 = vunpack.c.l.b16 %v822
      %v2469 = vunpack.c.h.b16 %v822
      %v2470 = vunpack.c.l.b16 %v823
      %v2471 = vunpack.c.h.b16 %v823
      %v2472 = vunpack.c.l.b16 %v824
      %v2473 = vunpack.c.l.b16 %v825
      %v2474 = vunpack.c.h.b16 %v825
      %v2475 = vunpack.c.l.b16 %v826
      %v2476 = vunpack.c.h.b16 %v826
      %v2477 = vunpack.c.l.b16 %v827
      %v2478 = vunpack.c.h.b16 %v827
      %v2479 = vunpack.c.l.b16 %v828
      %v2480 = vunpack.c.l.b16 %v829
      %v2481 = vunpack.c.h.b16 %v829
      %v2482 = vunpack.c.l.b16 %v830
      %v2483 = vunpack.c.h.b16 %v830
      %v2484 = vunpack.c.l.b16 %v831
      %v2485 = vunpack.c.h.b16 %v831
      %v2486 = vunpack.c.l.b16 %v832
      %v2487 = vunpack.c.l.b16 %v833
      %v2488 = vunpack.c.h.b16 %v833
      %v2489 = vunpack.c.l.b16 %v834
      %v2490 = vunpack.c.h.b16 %v834
      %v2491 = vunpack.c.l.b16 %v835
      %v2492 = vunpack.c.h.b16 %v835
      %v2493 = vunpack.c.l.b16 %v836
      %v2494 = vunpack.c.l.b16 %v837
      %v2495 = vunpack.c.h.b16 %v837
      %v2496 = vunpack.c.l.b16 %v838
      %v2497 = vunpack.c.h.b16 %v838
      %v2498 = vunpack.c.l.b16 %v839
      %v2499 = vunpack.c.h.b16 %v839
      %v2500 = vunpack.c.l.b16 %v840
      %v2501 = vunpack.c.l.b16 %v841
      %v2502 = vunpack.c.h.b16 %v841
      %v2503 = vunpack.c.l.b16 %v842
      %v2504 = vunpack.c.h.b16 %v842
      %v2505 = vunpack.c.l.b16 %v843
      %v2506 = vunpack.c.h.b16 %v843
      %v2507 = vunpack.c.l.b16 %v844
      %v2508 = vunpack.c.l.b16 %v845
      %v2509 = vunpack.c.h.b16 %v845
      %v2510 = vunpack.c.l.b16 %v846
      %v2511 = vunpack.c.h.b16 %v846
      %v2512 = vunpack.c.l.b16 %v847
      %v2513 = vunpack.c.h.b16 %v847
      %v2514 = vunpack.c.l.b16 %v848
      %v2515 = vunpack.c.l.b16 %v849
      %v2516 = vunpack.c.h.b16 %v849
      %v2517 = vunpack.c.l.b16 %v850
      %v2518 = vunpack.c.h.b16 %v850
      %v2519 = vunpack.c.l.b16 %v851
      %v2520 = vunpack.c.h.b16 %v851
      %v2521 = vunpack.c.l.b16 %v852
      %v2522 = vunpack.c.l.b16 %v853
      %v2523 = vunpack.c.h.b16 %v853
      %v2524 = vunpack.c.l.b16 %v854
      %v2525 = vunpack.c.h.b16 %v854
      %v2526 = vunpack.c.l.b16 %v855
      %v2527 = vunpack.c.h.b16 %v855
      %v2528 = vunpack.c.l.b16 %v856
      %v2529 = vunpack.c.l.b16 %v857
      %v2530 = vunpack.c.h.b16 %v857
      %v2531 = vunpack.c.l.b16 %v858
      %v2532 = vunpack.c.h.b16 %v858
      %v2533 = vunpack.c.l.b16 %v859
      %v2534 = vunpack.c.h.b16 %v859
      %v2535 = vunpack.c.l.b16 %v860
      %v2536 = vunpack.c.l.b16 %v861
      %v2537 = vunpack.c.h.b16 %v861
      %v2538 = vunpack.c.l.b16 %v862
      %v2539 = vunpack.c.h.b16 %v862
      %v2540 = vunpack.c.l.b16 %v863
      %v2541 = vunpack.c.h.b16 %v863
      %v2542 = vunpack.c.l.b16 %v864
      %v2543 = vunpack.c.l.b16 %v865
      %v2544 = vunpack.c.h.b16 %v865
      %v2545 = vunpack.c.l.b16 %v866
      %v2546 = vunpack.c.h.b16 %v866
      %v2547 = vunpack.c.l.b16 %v867
      %v2548 = vunpack.c.h.b16 %v867
      %v2549 = vunpack.c.l.b16 %v868
      %v2550 = vunpack.c.l.b16 %v869
      %v2551 = vunpack.c.h.b16 %v869
      %v2552 = vunpack.c.l.b16 %v870
      %v2553 = vunpack.c.h.b16 %v870
      %v2554 = vunpack.c.l.b16 %v871
      %v2555 = vunpack.c.h.b16 %v871
      %v2556 = vunpack.c.l.b16 %v872
      %v2557 = vunpack.c.l.b16 %v873
      %v2558 = vunpack.c.h.b16 %v873
      %v2559 = vunpack.c.l.b16 %v874
      %v2560 = vunpack.c.h.b16 %v874
      %v2561 = vunpack.c.l.b16 %v875
      %v2562 = vunpack.c.h.b16 %v875
      %v2563 = vunpack.c.l.b16 %v876
      %v2564 = vunpack.c.l.b16 %v877
      %v2565 = vunpack.c.h.b16 %v877
      %v2566 = vunpack.c.l.b16 %v878
      %v2567 = vunpack.c.h.b16 %v878
      %v2568 = vunpack.c.l.b16 %v879
      %v2569 = vunpack.c.h.b16 %v879
      %v2570 = vunpack.c.l.b16 %v880
      %v2571 = vunpack.c.l.b16 %v881
      %v2572 = vunpack.c.h.b16 %v881
      %v2573 = vunpack.c.l.b16 %v882
      %v2574 = vunpack.c.h.b16 %v882
      %v2575 = vunpack.c.l.b16 %v883
      %v2576 = vunpack.c.h.b16 %v883
      %v2577 = vunpack.c.l.b16 %v884
      %v2578 = vunpack.c.l.b16 %v885
      %v2579 = vunpack.c.h.b16 %v885
      %v2580 = vunpack.c.l.b16 %v886
      %v2581 = vunpack.c.h.b16 %v886
      %v2582 = vunpack.c.l.b16 %v887
      %v2583 = vunpack.c.h.b16 %v887
      %v2584 = vunpack.c.l.b16 %v888
      %v2585 = vunpack.c.l.b16 %v889
      %v2586 = vunpack.c.h.b16 %v889
      %v2587 = vunpack.c.l.b16 %v890
      %v2588 = vunpack.c.h.b16 %v890
      %v2589 = vunpack.c.l.b16 %v891
      %v2590 = vunpack.c.h.b16 %v891
      %v2591 = vunpack.c.l.b16 %v892
      %v2592 = vunpack.c.l.b16 %v893
      %v2593 = vunpack.c.h.b16 %v893
      %v2594 = vunpack.c.l.b16 %v894
      %v2595 = vunpack.c.h.b16 %v894
      %v2596 = vunpack.c.l.b16 %v895
      %v2597 = vunpack.c.h.b16 %v895
      %v2598 = vunpack.c.l.b16 %v896
      %v2599 = vunpack.c.l.b16 %v897
      %v2600 = vunpack.c.h.b16 %v897
      %v2601 = vunpack.c.l.b16 %v898
      %v2602 = vunpack.c.h.b16 %v898
      %v2603 = vunpack.c.l.b16 %v899
      %v2604 = vunpack.c.h.b16 %v899
      %v2605 = vunpack.c.l.b16 %v900
      %v2606 = vunpack.c.l.b16 %v901
      %v2607 = vunpack.c.h.b16 %v901
      %v2608 = vunpack.c.l.b16 %v902
      %v2609 = vunpack.c.h.b16 %v902
      %v2610 = vunpack.c.l.b16 %v903
      %v2611 = vunpack.c.h.b16 %v903
      %v2612 = vunpack.c.l.b16 %v904
      %v2613 = vunpack.c.l.b16 %v905
      %v2614 = vunpack.c.h.b16 %v905
      %v2615 = vunpack.c.l.b16 %v906
      %v2616 = vunpack.c.h.b16 %v906
      %v2617 = vunpack.c.l.b16 %v907
      %v2618 = vunpack.c.h.b16 %v907
      %v2619 = vunpack.c.l.b16 %v908
      %v2620 = vunpack.c.l.b16 %v909
      %v2621 = vunpack.c.h.b16 %v909
      %v2622 = vunpack.c.l.b16 %v910
      %v2623 = vunpack.c.h.b16 %v910
      %v2624 = vunpack.c.l.b16 %v911
      %v2625 = vunpack.c.h.b16 %v911
      %v2626 = vunpack.c.l.b16 %v912
      %v2627 = vunpack.c.l.b16 %v913
      %v2628 = vunpack.c.h.b16 %v913
      %v2629 = vunpack.c.l.b16 %v914
      %v2630 = vunpack.c.h.b16 %v914
      %v2631 = vunpack.c.l.b16 %v915
      %v2632 = vunpack.c.h.b16 %v915
      %v2633 = vunpack.c.l.b16 %v916
      %v2634 = vunpack.c.l.b16 %v917
      %v2635 = vunpack.c.h.b16 %v917
      %v2636 = vunpack.c.l.b16 %v918
      %v2637 = vunpack.c.h.b16 %v918
      %v2638 = vunpack.c.l.b16 %v919
      %v2639 = vunpack.c.h.b16 %v919
      %v2640 = vunpack.c.l.b16 %v920
      %v2641 = vunpack.c.l.b16 %v921
      %v2642 = vunpack.c.h.b16 %v921
      %v2643 = vunpack.c.l.b16 %v922
      %v2644 = vunpack.c.h.b16 %v922
      %v2645 = vunpack.c.l.b16 %v923
      %v2646 = vunpack.c.h.b16 %v923
      %v2647 = vunpack.c.l.b16 %v924
      %v2648 = vunpack.c.l.b16 %v925
      %v2649 = vunpack.c.h.b16 %v925
      %v2650 = vunpack.c.l.b16 %v926
      %v2651 = vunpack.c.h.b16 %v926
      %v2652 = vunpack.c.l.b16 %v927
      %v2653 = vunpack.c.h.b16 %v927
      %v2654 = vunpack.c.l.b16 %v928
      %v2655 = vunpack.c.l.b16 %v929
      %v2656 = vunpack.c.h.b16 %v929
      %v2657 = vunpack.c.l.b16 %v930
      %v2658 = vunpack.c.h.b16 %v930
      %v2659 = vunpack.c.l.b16 %v931
      %v2660 = vunpack.c.h.b16 %v931
      %v2661 = vunpack.c.l.b16 %v932
      %v2662 = vunpack.c.l.b16 %v933
      %v2663 = vunpack.c.h.b16 %v933
      %v2664 = vunpack.c.l.b16 %v934
      %v2665 = vunpack.c.h.b16 %v934
      %v2666 = vunpack.c.l.b16 %v935
      %v2667 = vunpack.c.h.b16 %v935
      %v2668 = vunpack.c.l.b16 %v936
      %v2669 = vunpack.c.l.b16 %v937
      %v2670 = vunpack.c.h.b16 %v937
      %v2671 = vunpack.c.l.b16 %v938
      %v2672 = vunpack.c.h.b16 %v938
      %v2673 = vunpack.c.l.b16 %v939
      %v2674 = vunpack.c.h.b16 %v939
      %v2675 = vunpack.c.l.b16 %v940
      %v2676 = vunpack.c.l.b16 %v941
      %v2677 = vunpack.c.h.b16 %v941
      %v2678 = vunpack.c.l.b16 %v942
      %v2679 = vunpack.c.h.b16 %v942
      %v2680 = vunpack.c.l.b16 %v943
      %v2681 = vunpack.c.h.b16 %v943
      %v2682 = vunpack.c.l.b16 %v944
      %v2683 = vunpack.c.l.b16 %v945
      %v2684 = vunpack.c.h.b16 %v945
      %v2685 = vunpack.c.l.b16 %v946
      %v2686 = vunpack.c.h.b16 %v946
      %v2687 = vunpack.c.l.b16 %v947
      %v2688 = vunpack.c.h.b16 %v947
      %v2689 = vunpack.c.l.b16 %v948
      %v2690 = vunpack.c.l.b16 %v949
      %v2691 = vunpack.c.h.b16 %v949
      %v2692 = vunpack.c.l.b16 %v950
      %v2693 = vunpack.c.h.b16 %v950
      %v2694 = vunpack.c.l.b16 %v951
      %v2695 = vunpack.c.h.b16 %v951
      %v2696 = vunpack.c.l.b16 %v952
      %v2697 = vunpack.c.l.b16 %v953
      %v2698 = vunpack.c.h.b16 %v953
      %v2699 = vunpack.c.l.b16 %v954
      %v2700 = vunpack.c.h.b16 %v954
      %v2701 = vunpack.c.l.b16 %v955
      %v2702 = vunpack.c.h.b16 %v955
      %v2703 = vunpack.c.l.b16 %v956
      %v2704 = vunpack.c.l.b16 %v957
      %v2705 = vunpack.c.h.b16 %v957
      %v2706 = vunpack.c.l.b16 %v958
      %v2707 = vunpack.c.h.b16 %v958
      %v2708 = vunpack.c.l.b16 %v959
      %v2709 = vunpack.c.h.b16 %v959
      %v2710 = vunpack.c.l.b16 %v960
      %v2711 = vunpack.c.l.b16 %v961
      %v2712 = vunpack.c.h.b16 %v961
      %v2713 = vunpack.c.l.b16 %v962
      %v2714 = vunpack.c.h.b16 %v962
      %v2715 = vunpack.c.l.b16 %v963
      %v2716 = vunpack.c.h.b16 %v963
      %v2717 = vunpack.c.l.b16 %v964
      %v2718 = vunpack.c.l.b16 %v965
      %v2719 = vunpack.c.h.b16 %v965
      %v2720 = vunpack.c.l.b16 %v966
      %v2721 = vunpack.c.h.b16 %v966
      %v2722 = vunpack.c.l.b16 %v967
      %v2723 = vunpack.c.h.b16 %v967
      %v2724 = vunpack.c.l.b16 %v968
      %v2725 = vunpack.c.l.b16 %v969
      %v2726 = vunpack.c.h.b16 %v969
      %v2727 = vunpack.c.l.b16 %v970
      %v2728 = vunpack.c.h.b16 %v970
      %v2729 = vunpack.c.l.b16 %v971
      %v2730 = vunpack.c.h.b16 %v971
      %v2731 = vunpack.c.l.b16 %v972
      %v2732 = vunpack.c.l.b16 %v973
      %v2733 = vunpack.c.h.b16 %v973
      %v2734 = vunpack.c.l.b16 %v974
      %v2735 = vunpack.c.h.b16 %v974
      %v2736 = vunpack.c.l.b16 %v975
      %v2737 = vunpack.c.h.b16 %v975
      %v2738 = vunpack.c.l.b16 %v976
      %v2739 = vunpack.c.l.b16 %v977
      %v2740 = vunpack.c.h.b16 %v977
      %v2741 = vunpack.c.l.b16 %v978
      %v2742 = vunpack.c.h.b16 %v978
      %v2743 = vunpack.c.l.b16 %v979
      %v2744 = vunpack.c.h.b16 %v979
      %v2745 = vunpack.c.l.b16 %v980
      %v2746 = vunpack.c.l.b16 %v981
      %v2747 = vunpack.c.h.b16 %v981
      %v2748 = vunpack.c.l.b16 %v982
      %v2749 = vunpack.c.h.b16 %v982
      %v2750 = vunpack.c.l.b16 %v983
      %v2751 = vunpack.c.h.b16 %v983
      %v2752 = vunpack.c.l.b16 %v984
      %v2753 = vunpack.c.l.b16 %v985
      %v2754 = vunpack.c.h.b16 %v985
      %v2755 = vunpack.c.l.b16 %v986
      %v2756 = vunpack.c.h.b16 %v986
      %v2757 = vunpack.c.l.b16 %v987
      %v2758 = vunpack.c.h.b16 %v987
      %v2759 = vunpack.c.l.b16 %v988
      %v2760 = vunpack.c.l.b16 %v989
      %v2761 = vunpack.c.h.b16 %v989
      %v2762 = vunpack.c.l.b16 %v990
      %v2763 = vunpack.c.h.b16 %v990
      %v2764 = vunpack.c.l.b16 %v991
      %v2765 = vunpack.c.h.b16 %v991
      %v2766 = vunpack.c.l.b16 %v992
      %v2767 = vunpack.c.l.b16 %v993
      %v2768 = vunpack.c.h.b16 %v993
      %v2769 = vunpack.c.l.b16 %v994
      %v2770 = vunpack.c.h.b16 %v994
      %v2771 = vunpack.c.l.b16 %v995
      %v2772 = vunpack.c.h.b16 %v995
      %v2773 = vunpack.c.l.b16 %v996
      %v2774 = vunpack.c.l.b16 %v997
      %v2775 = vunpack.c.h.b16 %v997
      %v2776 = vunpack.c.l.b16 %v998
      %v2777 = vunpack.c.h.b16 %v998
      %v2778 = vunpack.c.l.b16 %v999
      %v2779 = vunpack.c.h.b16 %v999
      %v2780 = vunpack.c.l.b16 %v1000
      %v2781 = vunpack.c.l.b16 %v1001
      %v2782 = vunpack.c.h.b16 %v1001
      %v2783 = vunpack.c.l.b16 %v1002
      %v2784 = vunpack.c.h.b16 %v1002
      %v2785 = vunpack.c.l.b16 %v1003
      %v2786 = vunpack.c.h.b16 %v1003
      %v2787 = vunpack.c.l.b16 %v1004
      %v2788 = vunpack.c.l.b16 %v1005
      %v2789 = vunpack.c.h.b16 %v1005
      %v2790 = vunpack.c.l.b16 %v1006
      %v2791 = vunpack.c.h.b16 %v1006
      %v2792 = vunpack.c.l.b16 %v1007
      %v2793 = vunpack.c.h.b16 %v1007
      %v2794 = vunpack.c.l.b16 %v1008
      %v2795 = vunpack.c.l.b16 %v1009
      %v2796 = vunpack.c.h.b16 %v1009
      %v2797 = vunpack.c.l.b16 %v1010
      %v2798 = vunpack.c.h.b16 %v1010
      %v2799 = vunpack.c.l.b16 %v1011
      %v2800 = vunpack.c.h.b16 %v1011
      %v2801 = vunpack.c.l.b16 %v1012
      %v2802 = vunpack.c.l.b16 %v1013
      %v2803 = vunpack.c.h.b16 %v1013
      %v2804 = vunpack.c.l.b16 %v1014
      %v2805 = vunpack.c.h.b16 %v1014
      %v2806 = vunpack.c.l.b16 %v1015
      %v2807 = vunpack.c.h.b16 %v1015
      %v2808 = vunpack.c.l.b16 %v1016
      %v2809 = vunpack.c.l.b16 %v1017
      %v2810 = vunpack.c.h.b16 %v1017
      %v2811 = vunpack.c.l.b16 %v1018
      %v2812 = vunpack.c.h.b16 %v1018
      %v2813 = vunpack.c.l.b16 %v1019
      %v2814 = vunpack.c.h.b16 %v1019
      %v2815 = vunpack.c.l.b16 %v1020
      %v2816 = vunpack.c.l.b16 %v1021
      %v2817 = vunpack.c.h.b16 %v1021
      %v2818 = vunpack.c.l.b16 %v1022
      %v2819 = vunpack.c.h.b16 %v1022
      %v2820 = vunpack.c.l.b16 %v1023
      %v2821 = vunpack.c.h.b16 %v1023
      %v2822 = vunpack.c.l.b16 %v1024
      %v2823 = vunpack.c.l.b16 %v1025
      %v2824 = vunpack.c.h.b16 %v1025
      %v2825 = vunpack.c.l.b16 %v1026
      %v2826 = vunpack.c.h.b16 %v1026
      %v2827 = vunpack.c.l.b16 %v1027
      %v2828 = vunpack.c.h.b16 %v1027
      %v2829 = vunpack.c.l.b16 %v1028
      %v2830 = vunpack.c.l.b16 %v1029
      %v2831 = vunpack.c.h.b16 %v1029
      %v2832 = vunpack.c.l.b16 %v1030
      %v2833 = vunpack.c.h.b16 %v1030
      %v2834 = vunpack.c.l.b16 %v1031
      %v2835 = vunpack.c.h.b16 %v1031
      %v2836 = vunpack.c.l.b16 %v1032
      %v2837 = vunpack.c.l.b16 %v1033
      %v2838 = vunpack.c.h.b16 %v1033
      %v2839 = vunpack.c.l.b16 %v1034
      %v2840 = vunpack.c.h.b16 %v1034
      %v2841 = vunpack.c.l.b16 %v1035
      %v2842 = vunpack.c.h.b16 %v1035
      %v2843 = vunpack.c.l.b16 %v1036
      %v2844 = vunpack.c.l.b16 %v1037
      %v2845 = vunpack.c.h.b16 %v1037
      %v2846 = vunpack.c.l.b16 %v1038
      %v2847 = vunpack.c.h.b16 %v1038
      %v2848 = vunpack.c.l.b16 %v1039
      %v2849 = vunpack.c.h.b16 %v1039
      %v2850 = vunpack.c.l.b16 %v1040
      %v2851 = vunpack.c.l.b16 %v1041
      %v2852 = vunpack.c.h.b16 %v1041
      %v2853 = vunpack.c.l.b16 %v1042
      %v2854 = vunpack.c.h.b16 %v1042
      %v2855 = vunpack.c.l.b16 %v1043
      %v2856 = vunpack.c.h.b16 %v1043
      %v2857 = vunpack.c.l.b16 %v1044
      %v2858 = vunpack.c.l.b16 %v1045
      %v2859 = vunpack.c.h.b16 %v1045
      %v2860 = vunpack.c.l.b16 %v1046
      %v2861 = vunpack.c.h.b16 %v1046
      %v2862 = vunpack.c.l.b16 %v1047
      %v2863 = vunpack.c.h.b16 %v1047
      %v2864 = vunpack.c.l.b16 %v1048
      %v2865 = vunpack.c.l.b16 %v1049
      %v2866 = vunpack.c.h.b16 %v1049
      %v2867 = vunpack.c.l.b16 %v1050
      %v2868 = vunpack.c.h.b16 %v1050
      %v2869 = vunpack.c.l.b16 %v1051
      %v2870 = vunpack.c.h.b16 %v1051
      %v2871 = vunpack.c.l.b16 %v1052
      %v2872 = vunpack.c.l.b16 %v1053
      %v2873 = vunpack.c.h.b16 %v1053
      %v2874 = vunpack.c.l.b16 %v1054
      %v2875 = vunpack.c.h.b16 %v1054
      %v2876 = vunpack.c.l.b16 %v1055
      %v2877 = vunpack.c.h.b16 %v1055
      %v2878 = vunpack.c.l.b16 %v1056
      %v2879 = vunpack.c.l.b16 %v1057
      %v2880 = vunpack.c.h.b16 %v1057
      %v2881 = vunpack.c.l.b16 %v1058
      %v2882 = vunpack.c.h.b16 %v1058
      %v2883 = vunpack.c.l.b16 %v1059
      %v2884 = vunpack.c.h.b16 %v1059
      %v2885 = vunpack.c.l.b16 %v1060
      %v2886 = vunpack.c.l.b16 %v1061
      %v2887 = vunpack.c.h.b16 %v1061
      %v2888 = vunpack.c.l.b16 %v1062
      %v2889 = vunpack.c.h.b16 %v1062
      %v2890 = vunpack.c.l.b16 %v1063
      %v2891 = vunpack.c.h.b16 %v1063
      %v2892 = vunpack.c.l.b16 %v1064
      %v2893 = vunpack.c.l.b16 %v1065
      %v2894 = vunpack.c.h.b16 %v1065
      %v2895 = vunpack.c.l.b16 %v1066
      %v2896 = vunpack.c.h.b16 %v1066
      %v2897 = vunpack.c.l.b16 %v1067
      %v2898 = vunpack.c.h.b16 %v1067
      %v2899 = vunpack.c.l.b16 %v1068
      %v2900 = vunpack.c.l.b16 %v1069
      %v2901 = vunpack.c.h.b16 %v1069
      %v2902 = vunpack.c.l.b16 %v1070
      %v2903 = vunpack.c.h.b16 %v1070
      %v2904 = vunpack.c.l.b16 %v1071
      %v2905 = vunpack.c.h.b16 %v1071
      %v2906 = vunpack.c.l.b16 %v1072
      %v2907 = vunpack.c.l.b16 %v1073
      %v2908 = vunpack.c.h.b16 %v1073
      %v2909 = vunpack.c.l.b16 %v1074
      %v2910 = vunpack.c.h.b16 %v1074
      %v2911 = vunpack.c.l.b16 %v1075
      %v2912 = vunpack.c.h.b16 %v1075
      %v2913 = vunpack.c.l.b16 %v1076
      %v2914 = vunpack.c.l.b16 %v1077
      %v2915 = vunpack.c.h.b16 %v1077
      %v2916 = vunpack.c.l.b16 %v1078
      %v2917 = vunpack.c.h.b16 %v1078
      %v2918 = vunpack.c.l.b16 %v1079
      %v2919 = vunpack.c.h.b16 %v1079
      %v2920 = vunpack.c.l.b16 %v1080
      %v2921 = vunpack.c.l.b16 %v1081
      %v2922 = vunpack.c.h.b16 %v1081
      %v2923 = vunpack.c.l.b16 %v1082
      %v2924 = vunpack.c.h.b16 %v1082
      %v2925 = vunpack.c.l.b16 %v1083
      %v2926 = vunpack.c.h.b16 %v1083
      %v2927 = vunpack.c.l.b16 %v1084
      %v2928 = vunpack.c.l.b16 %v1085
      %v2929 = vunpack.c.h.b16 %v1085
      %v2930 = vunpack.c.l.b16 %v1086
      %v2931 = vunpack.c.h.b16 %v1086
      %v2932 = vunpack.c.l.b16 %v1087
      %v2933 = vunpack.c.h.b16 %v1087
      %v2934 = vunpack.c.l.b16 %v1088
      %v2935 = vunpack.c.l.b16 %v1089
      %v2936 = vunpack.c.h.b16 %v1089
      %v2937 = vunpack.c.l.b16 %v1090
      %v2938 = vunpack.c.h.b16 %v1090
      %v2939 = vunpack.c.l.b16 %v1091
      %v2940 = vunpack.c.h.b16 %v1091
      %v2941 = vunpack.c.l.b16 %v1092
      %v2942 = vunpack.c.l.b16 %v1093
      %v2943 = vunpack.c.h.b16 %v1093
      %v2944 = vunpack.c.l.b16 %v1094
      %v2945 = vunpack.c.h.b16 %v1094
      %v2946 = vunpack.c.l.b16 %v1095
      %v2947 = vunpack.c.h.b16 %v1095
      %v2948 = vunpack.c.l.b16 %v1096
      %v2949 = vunpack.c.l.b16 %v1097
      %v2950 = vunpack.c.h.b16 %v1097
      %v2951 = vunpack.c.l.b16 %v1098
      %v2952 = vunpack.c.h.b16 %v1098
      %v2953 = vunpack.c.l.b16 %v1099
      %v2954 = vunpack.c.h.b16 %v1099
      %v2955 = vunpack.c.l.b16 %v1100
      %v2956 = vunpack.c.l.b16 %v1101
      %v2957 = vunpack.c.h.b16 %v1101
      %v2958 = vunpack.c.l.b16 %v1102
      %v2959 = vunpack.c.h.b16 %v1102
      %v2960 = vunpack.c.l.b16 %v1103
      %v2961 = vunpack.c.h.b16 %v1103
      %v2962 = vunpack.c.l.b16 %v1104
      %v2963 = vunpack.c.l.b16 %v1105
      %v2964 = vunpack.c.h.b16 %v1105
      %v2965 = vunpack.c.l.b16 %v1106
      %v2966 = vunpack.c.h.b16 %v1106
      %v2967 = vunpack.c.l.b16 %v1107
      %v2968 = vunpack.c.h.b16 %v1107
      %v2969 = vunpack.c.l.b16 %v1108
      %v2970 = vunpack.c.l.b16 %v1109
      %v2971 = vunpack.c.h.b16 %v1109
      %v2972 = vunpack.c.l.b16 %v1110
      %v2973 = vunpack.c.h.b16 %v1110
      %v2974 = vunpack.c.l.b16 %v1111
      %v2975 = vunpack.c.h.b16 %v1111
      %v2976 = vunpack.c.l.b16 %v1112
      %v2977 = vunpack.c.l.b16 %v1113
      %v2978 = vunpack.c.h.b16 %v1113
      %v2979 = vunpack.c.l.b16 %v1114
      %v2980 = vunpack.c.h.b16 %v1114
      %v2981 = vunpack.c.l.b16 %v1115
      %v2982 = vunpack.c.h.b16 %v1115
      %v2983 = vunpack.c.l.b16 %v1116
      %v2984 = vunpack.c.l.b16 %v1117
      %v2985 = vunpack.c.h.b16 %v1117
      %v2986 = vunpack.c.l.b16 %v1118
      %v2987 = vunpack.c.h.b16 %v1118
      %v2988 = vunpack.c.l.b16 %v1119
      %v2989 = vunpack.c.h.b16 %v1119
      %v2990 = vunpack.c.l.b16 %v1120
      %v2991 = vunpack.c.l.b16 %v1121
      %v2992 = vunpack.c.h.b16 %v1121
      %v2993 = vunpack.c.l.b16 %v1122
      %v2994 = vunpack.c.h.b16 %v1122
      %v2995 = vunpack.c.l.b16 %v1123
      %v2996 = vunpack.c.h.b16 %v1123
      %v2997 = vunpack.c.l.b16 %v1124
      %v2998 = vunpack.c.l.b16 %v1125
      %v2999 = vunpack.c.h.b16 %v1125
      %v3000 = vunpack.c.l.b16 %v1126
      %v3001 = vunpack.c.h.b16 %v1126
      %v3002 = vunpack.c.l.b16 %v1127
      %v3003 = vunpack.c.h.b16 %v1127
      %v3004 = vunpack.c.l.b16 %v1128
      %v3005 = vunpack.c.l.b16 %v1129
      %v3006 = vunpack.c.h.b16 %v1129
      %v3007 = vunpack.c.l.b16 %v1130
      %v3008 = vunpack.c.h.b16 %v1130
      %v3009 = vunpack.c.l.b16 %v1131
      %v3010 = vunpack.c.h.b16 %v1131
      %v3011 = vunpack.c.l.b16 %v1132
      %v3012 = vunpack.c.l.b16 %v1133
      %v3013 = vunpack.c.h.b16 %v1133
      %v3014 = vunpack.c.l.b16 %v1134
      %v3015 = vunpack.c.h.b16 %v1134
      %v3016 = vunpack.c.l.b16 %v1135
      %v3017 = vunpack.c.h.b16 %v1135
      %v3018 = vunpack.c.l.b16 %v1136
      %v3019 = vunpack.c.l.b16 %v1137
      %v3020 = vunpack.c.h.b16 %v1137
      %v3021 = vunpack.c.l.b16 %v1138
      %v3022 = vunpack.c.h.b16 %v1138
      %v3023 = vunpack.c.l.b16 %v1139
      %v3024 = vunpack.c.h.b16 %v1139
      %v3025 = vunpack.c.l.b16 %v1140
      %v3026 = vunpack.c.l.b16 %v1141
      %v3027 = vunpack.c.h.b16 %v1141
      %v3028 = vunpack.c.l.b16 %v1142
      %v3029 = vunpack.c.h.b16 %v1142
      %v3030 = vunpack.c.l.b16 %v1143
      %v3031 = vunpack.c.h.b16 %v1143
      %v3032 = vunpack.c.l.b16 %v1144
      %v3033 = vunpack.c.l.b16 %v1145
      %v3034 = vunpack.c.h.b16 %v1145
      %v3035 = vunpack.c.l.b16 %v1146
      %v3036 = vunpack.c.h.b16 %v1146
      %v3037 = vunpack.c.l.b16 %v1147
      %v3038 = vunpack.c.h.b16 %v1147
      %v3039 = vunpack.c.l.b16 %v1148
      %v3040 = vunpack.c.l.b16 %v1149
      %v3041 = vunpack.c.h.b16 %v1149
      %v3042 = vunpack.c.l.b16 %v1150
      %v3043 = vunpack.c.h.b16 %v1150
      %v3044 = vunpack.c.l.b16 %v1151
      %v3045 = vunpack.c.h.b16 %v1151
      %v3046 = vunpack.c.l.b16 %v1152
      %v3047 = vunpack.c.l.b16 %v1153
      %v3048 = vunpack.c.h.b16 %v1153
      %v3049 = vunpack.c.l.b16 %v1154
      %v3050 = vunpack.c.h.b16 %v1154
      %v3051 = vunpack.c.l.b16 %v1155
      %v3052 = vunpack.c.h.b16 %v1155
      %v3053 = vunpack.c.l.b16 %v1156
      %v3054 = vunpack.c.l.b16 %v1157
      %v3055 = vunpack.c.h.b16 %v1157
      %v3056 = vunpack.c.l.b16 %v1158
      %v3057 = vunpack.c.h.b16 %v1158
      %v3058 = vunpack.c.l.b16 %v1159
      %v3059 = vunpack.c.h.b16 %v1159
      %v3060 = vunpack.c.l.b16 %v1160
      %v3061 = vunpack.c.l.b16 %v1161
      %v3062 = vunpack.c.h.b16 %v1161
      %v3063 = vunpack.c.l.b16 %v1162
      %v3064 = vunpack.c.h.b16 %v1162
      %v3065 = vunpack.c.l.b16 %v1163
      %v3066 = vunpack.c.h.b16 %v1163
      %v3067 = vunpack.c.l.b16 %v1164
      %v3068 = vunpack.c.l.b16 %v1165
      %v3069 = vunpack.c.h.b16 %v1165
      %v3070 = vunpack.c.l.b16 %v1166
      %v3071 = vunpack.c.h.b16 %v1166
      %v3072 = vunpack.c.l.b16 %v1167
      %v3073 = vunpack.c.h.b16 %v1167
      %v3074 = vunpack.c.l.b16 %v1168
      %v3075 = vunpack.c.l.b16 %v1169
      %v3076 = vunpack.c.h.b16 %v1169
      %v3077 = vunpack.c.l.b16 %v1170
      %v3078 = vunpack.c.h.b16 %v1170
      %v3079 = vunpack.c.l.b16 %v1171
      %v3080 = vunpack.c.h.b16 %v1171
      %v3081 = vunpack.c.l.b16 %v1172
      %v3082 = vunpack.c.l.b16 %v1173
      %v3083 = vunpack.c.h.b16 %v1173
      %v3084 = vunpack.c.l.b16 %v1174
      %v3085 = vunpack.c.h.b16 %v1174
      %v3086 = vunpack.c.l.b16 %v1175
      %v3087 = vunpack.c.h.b16 %v1175
      %v3088 = vunpack.c.l.b16 %v1176
      %v3089 = vunpack.c.l.b16 %v1177
      %v3090 = vunpack.c.h.b16 %v1177
      %v3091 = vunpack.c.l.b16 %v1178
      %v3092 = vunpack.c.h.b16 %v1178
      %v3093 = vunpack.c.l.b16 %v1179
      %v3094 = vunpack.c.h.b16 %v1179
      %v3095 = vunpack.c.l.b16 %v1180
      %v3096 = vunpack.c.l.b16 %v1181
      %v3097 = vunpack.c.h.b16 %v1181
      %v3098 = vunpack.c.l.b16 %v1182
      %v3099 = vunpack.c.h.b16 %v1182
      %v3100 = vunpack.c.l.b16 %v1183
      %v3101 = vunpack.c.h.b16 %v1183
      %v3102 = vunpack.c.l.b16 %v1184
      %v3103 = vunpack.c.l.b16 %v1185
      %v3104 = vunpack.c.h.b16 %v1185
      %v3105 = vunpack.c.l.b16 %v1186
      %v3106 = vunpack.c.h.b16 %v1186
      %v3107 = vunpack.c.l.b16 %v1187
      %v3108 = vunpack.c.h.b16 %v1187
      %v3109 = vunpack.c.l.b16 %v1188
      %v3110 = vunpack.c.l.b16 %v1189
      %v3111 = vunpack.c.h.b16 %v1189
      %v3112 = vunpack.c.l.b16 %v1190
      %v3113 = vunpack.c.h.b16 %v1190
      %v3114 = vunpack.c.l.b16 %v1191
      %v3115 = vunpack.c.h.b16 %v1191
      %v3116 = vunpack.c.l.b16 %v1192
      %v3117 = vunpack.c.l.b16 %v1193
      %v3118 = vunpack.c.h.b16 %v1193
      %v3119 = vunpack.c.l.b16 %v1194
      %v3120 = vunpack.c.h.b16 %v1194
      %v3121 = vunpack.c.l.b16 %v1195
      %v3122 = vunpack.c.h.b16 %v1195
      %v3123 = vunpack.c.l.b16 %v1196
      %v3124 = vunpack.c.l.b16 %v1197
      %v3125 = vunpack.c.h.b16 %v1197
      %v3126 = vunpack.c.l.b16 %v1198
      %v3127 = vunpack.c.h.b16 %v1198
      %v3128 = vunpack.c.l.b16 %v1199
      %v3129 = vunpack.c.h.b16 %v1199
      %v3130 = vunpack.c.l.b16 %v1200
      %v3131 = vunpack.c.l.b16 %v1201
      %v3132 = vunpack.c.h.b16 %v1201
      %v3133 = vunpack.c.l.b16 %v1202
      %v3134 = vunpack.c.h.b16 %v1202
      %v3135 = vunpack.c.l.b16 %v1203
      %v3136 = vunpack.c.h.b16 %v1203
      %v3137 = vunpack.c.l.b16 %v1204
      %v3138 = vunpack.c.l.b16 %v1205
      %v3139 = vunpack.c.h.b16 %v1205
      %v3140 = vunpack.c.l.b16 %v1206
      %v3141 = vunpack.c.h.b16 %v1206
      %v3142 = vunpack.c.l.b16 %v1207
      %v3143 = vunpack.c.h.b16 %v1207
      %v3144 = vunpack.c.l.b16 %v1208
      %v3145 = vunpack.c.l.b16 %v1209
      %v3146 = vunpack.c.h.b16 %v1209
      %v3147 = vunpack.c.l.b16 %v1210
      %v3148 = vunpack.c.h.b16 %v1210
      %v3149 = vunpack.c.l.b16 %v1211
      %v3150 = vunpack.c.h.b16 %v1211
      %v3151 = vunpack.c.l.b16 %v1212
      %v3152 = vunpack.c.l.b16 %v1213
      %v3153 = vunpack.c.h.b16 %v1213
      %v3154 = vunpack.c.l.b16 %v1214
      %v3155 = vunpack.c.h.b16 %v1214
      %v3156 = vunpack.c.l.b16 %v1215
      %v3157 = vunpack.c.h.b16 %v1215
      %v3158 = vunpack.c.l.b16 %v1216
      %v3159 = vunpack.c.l.b16 %v1217
      %v3160 = vunpack.c.h.b16 %v1217
      %v3161 = vunpack.c.l.b16 %v1218
      %v3162 = vunpack.c.h.b16 %v1218
      %v3163 = vunpack.c.l.b16 %v1219
      %v3164 = vunpack.c.h.b16 %v1219
      %v3165 = vunpack.c.l.b16 %v1220
      %v3166 = vunpack.c.l.b16 %v1221
      %v3167 = vunpack.c.h.b16 %v1221
      %v3168 = vunpack.c.l.b16 %v1222
      %v3169 = vunpack.c.h.b16 %v1222
      %v3170 = vunpack.c.l.b16 %v1223
      %v3171 = vunpack.c.h.b16 %v1223
      %v3172 = vunpack.c.l.b16 %v1224
      %v3173 = vunpack.c.l.b16 %v1225
      %v3174 = vunpack.c.h.b16 %v1225
      %v3175 = vunpack.c.l.b16 %v1226
      %v3176 = vunpack.c.h.b16 %v1226
      %v3177 = vunpack.c.l.b16 %v1227
      %v3178 = vunpack.c.h.b16 %v1227
      %v3179 = vunpack.c.l.b16 %v1228
      %v3180 = vunpack.c.l.b16 %v1229
      %v3181 = vunpack.c.h.b16 %v1229
      %v3182 = vunpack.c.l.b16 %v1230
      %v3183 = vunpack.c.h.b16 %v1230
      %v3184 = vunpack.c.l.b16 %v1231
      %v3185 = vunpack.c.h.b16 %v1231
      %v3186 = vunpack.c.l.b16 %v1232
      %v3187 = vunpack.c.l.b16 %v1233
      %v3188 = vunpack.c.h.b16 %v1233
      %v3189 = vunpack.c.l.b16 %v1234
      %v3190 = vunpack.c.h.b16 %v1234
      %v3191 = vunpack.c.l.b16 %v1235
      %v3192 = vunpack.c.h.b16 %v1235
      %v3193 = vunpack.c.l.b16 %v1236
      %v3194 = vunpack.c.l.b16 %v1237
      %v3195 = vunpack.c.h.b16 %v1237
      %v3196 = vunpack.c.l.b16 %v1238
      %v3197 = vunpack.c.h.b16 %v1238
      %v3198 = vunpack.c.l.b16 %v1239
      %v3199 = vunpack.c.h.b16 %v1239
      %v3200 = vunpack.c.l.b16 %v1240
      %v3201 = vunpack.c.l.b16 %v1241
      %v3202 = vunpack.c.h.b16 %v1241
      %v3203 = vunpack.c.l.b16 %v1242
      %v3204 = vunpack.c.h.b16 %v1242
      %v3205 = vunpack.c.l.b16 %v1243
      %v3206 = vunpack.c.h.b16 %v1243
      %v3207 = vunpack.c.l.b16 %v1244
      %v3208 = vunpack.c.l.b16 %v1245
      %v3209 = vunpack.c.h.b16 %v1245
      %v3210 = vunpack.c.l.b16 %v1246
      %v3211 = vunpack.c.h.b16 %v1246
      %v3212 = vunpack.c.l.b16 %v1247
      %v3213 = vunpack.c.h.b16 %v1247
      %v3214 = vunpack.c.l.b16 %v1248
      %v3215 = vunpack.c.l.b16 %v1249
      %v3216 = vunpack.c.h.b16 %v1249
      %v3217 = vunpack.c.l.b16 %v1250
      %v3218 = vunpack.c.h.b16 %v1250
      %v3219 = vunpack.c.l.b16 %v1251
      %v3220 = vunpack.c.h.b16 %v1251
      %v3221 = vunpack.c.l.b16 %v1252
      %v3222 = vunpack.c.l.b16 %v1253
      %v3223 = vunpack.c.h.b16 %v1253
      %v3224 = vunpack.c.l.b16 %v1254
      %v3225 = vunpack.c.h.b16 %v1254
      %v3226 = vunpack.c.l.b16 %v1255
      %v3227 = vunpack.c.h.b16 %v1255
      %v3228 = vunpack.c.l.b16 %v1256
      %v3229 = vunpack.c.l.b16 %v1257
      %v3230 = vunpack.c.h.b16 %v1257
      %v3231 = vunpack.c.l.b16 %v1258
      %v3232 = vunpack.c.h.b16 %v1258
      %v3233 = vunpack.c.l.b16 %v1259
      %v3234 = vunpack.c.h.b16 %v1259
      %v3235 = vunpack.c.l.b16 %v1260
      %v3236 = vunpack.c.l.b16 %v1261
      %v3237 = vunpack.c.h.b16 %v1261
      %v3238 = vunpack.c.l.b16 %v1262
      %v3239 = vunpack.c.h.b16 %v1262
      %v3240 = vunpack.c.l.b16 %v1263
      %v3241 = vunpack.c.h.b16 %v1263
      %v3242 = vunpack.c.l.b16 %v1264
      %v3243 = vunpack.c.l.b16 %v1265
      %v3244 = vunpack.c.h.b16 %v1265
      %v3245 = vunpack.c.l.b16 %v1266
      %v3246 = vunpack.c.h.b16 %v1266
      %v3247 = vunpack.c.l.b16 %v1267
      %v3248 = vunpack.c.h.b16 %v1267
      %v3249 = vunpack.c.l.b16 %v1268
      %v3250 = vunpack.c.l.b16 %v1269
      %v3251 = vunpack.c.h.b16 %v1269
      %v3252 = vunpack.c.l.b16 %v1270
      %v3253 = vunpack.c.h.b16 %v1270
      %v3254 = vunpack.c.l.b16 %v1271
      %v3255 = vunpack.c.h.b16 %v1271
      %v3256 = vunpack.c.l.b16 %v1272
      %v3257 = vunpack.c.l.b16 %v1273
      %v3258 = vunpack.c.h.b16 %v1273
      %v3259 = vunpack.c.l.b16 %v1274
      %v3260 = vunpack.c.h.b16 %v1274
      %v3261 = vunpack.c.l.b16 %v1275
      %v3262 = vunpack.c.h.b16 %v1275
      %v3263 = vunpack.c.l.b16 %v1276
      %v3264 = vunpack.c.l.b16 %v1277
      %v3265 = vunpack.c.h.b16 %v1277
      %v3266 = vunpack.c.l.b16 %v1278
      %v3267 = vunpack.c.h.b16 %v1278
      %v3268 = vunpack.c.l.b16 %v1279
      %v3269 = vunpack.c.h.b16 %v1279
      %v3270 = vunpack.c.l.b16 %v1280
      %v3271 = vunpack.c.l.b16 %v1281
      %v3272 = vunpack.c.h.b16 %v1281
      %v3273 = vunpack.c.l.b16 %v1282
      %v3274 = vunpack.c.h.b16 %v1282
      %v3275 = vunpack.c.l.b16 %v1283
      %v3276 = vunpack.c.h.b16 %v1283
      %v3277 = vunpack.c.l.b16 %v1284
      %v3278 = vunpack.c.l.b16 %v1285
      %v3279 = vunpack.c.h.b16 %v1285
      %v3280 = vunpack.c.l.b16 %v1286
      %v3281 = vunpack.c.h.b16 %v1286
      %v3282 = vunpack.c.l.b16 %v1287
      %v3283 = vunpack.c.h.b16 %v1287
      %v3284 = vunpack.c.l.b16 %v1288
      %v3285 = vunpack.c.l.b16 %v1289
      %v3286 = vunpack.c.h.b16 %v1289
      %v3287 = vunpack.c.l.b16 %v1290
      %v3288 = vunpack.c.h.b16 %v1290
      %v3289 = vunpack.c.l.b16 %v1291
      %v3290 = vunpack.c.h.b16 %v1291
      %v3291 = vunpack.c.l.b16 %v1292
      %v3292 = vunpack.c.l.b16 %v1293
      %v3293 = vunpack.c.h.b16 %v1293
      %v3294 = vunpack.c.l.b16 %v1294
      %v3295 = vunpack.c.h.b16 %v1294
      %v3296 = vunpack.c.l.b16 %v1295
      %v3297 = vunpack.c.h.b16 %v1295
      %v3298 = vunpack.c.l.b16 %v1296
      %v3299 = vunpack.c.l.b16 %v1297
      %v3300 = vunpack.c.h.b16 %v1297
      %v3301 = vunpack.c.l.b16 %v1298
      %v3302 = vunpack.c.h.b16 %v1298
      %v3303 = vunpack.c.l.b16 %v1299
      %v3304 = vunpack.c.h.b16 %v1299
      %v3305 = vunpack.c.l.b16 %v1300
      %v3306 = vunpack.c.l.b16 %v1301
      %v3307 = vunpack.c.h.b16 %v1301
      %v3308 = vunpack.c.l.b16 %v1302
      %v3309 = vunpack.c.h.b16 %v1302
      %v3310 = vunpack.c.l.b16 %v1303
      %v3311 = vunpack.c.h.b16 %v1303
      %v3312 = vunpack.c.l.b16 %v1304
      %v3313 = vunpack.c.l.b16 %v1305
      %v3314 = vunpack.c.h.b16 %v1305
      %v3315 = vunpack.c.l.b16 %v1306
      %v3316 = vunpack.c.h.b16 %v1306
      %v3317 = vunpack.c.l.b16 %v1307
      %v3318 = vunpack.c.h.b16 %v1307
      %v3319 = vunpack.c.l.b16 %v1308
      %v3320 = vunpack.c.l.b16 %v1309
      %v3321 = vunpack.c.h.b16 %v1309
      %v3322 = vunpack.c.l.b16 %v1310
      %v3323 = vunpack.c.h.b16 %v1310
      %v3324 = vunpack.c.l.b16 %v1311
      %v3325 = vunpack.c.h.b16 %v1311
      %v3326 = vunpack.c.l.b16 %v1312
      %v3327 = vunpack.c.l.b16 %v1313
      %v3328 = vunpack.c.h.b16 %v1313
      %v3329 = vunpack.c.l.b16 %v1314
      %v3330 = vunpack.c.h.b16 %v1314
      %v3331 = vunpack.c.l.b16 %v1315
      %v3332 = vunpack.c.h.b16 %v1315
      %v3333 = vunpack.c.l.b16 %v1316
      %v3334 = vunpack.c.l.b16 %v1317
      %v3335 = vunpack.c.h.b16 %v1317
      %v3336 = vunpack.c.l.b16 %v1318
      %v3337 = vunpack.c.h.b16 %v1318
      %v3338 = vunpack.c.l.b16 %v1319
      %v3339 = vunpack.c.h.b16 %v1319
      %v3340 = vunpack.c.l.b16 %v1320
      %v3341 = vunpack.c.l.b16 %v1321
      %v3342 = vunpack.c.h.b16 %v1321
      %v3343 = vunpack.c.l.b16 %v1322
      %v3344 = vunpack.c.h.b16 %v1322
      %v3345 = vunpack.c.l.b16 %v1323
      %v3346 = vunpack.c.h.b16 %v1323
      %v3347 = vunpack.c.l.b16 %v1324
      %v3348 = vunpack.c.l.b16 %v1325
      %v3349 = vunpack.c.h.b16 %v1325
      %v3350 = vunpack.c.l.b16 %v1326
      %v3351 = vunpack.c.h.b16 %v1326
      %v3352 = vunpack.c.l.b16 %v1327
      %v3353 = vunpack.c.h.b16 %v1327
      %v3354 = vunpack.c.l.b16 %v1328
      %v3355 = vunpack.c.l.b16 %v1329
      %v3356 = vunpack.c.h.b16 %v1329
      %v3357 = vunpack.c.l.b16 %v1330
      %v3358 = vunpack.c.h.b16 %v1330
      %v3359 = vunpack.c.l.b16 %v1331
      %v3360 = vunpack.c.h.b16 %v1331
      %v3361 = vunpack.c.l.b16 %v1332
      %v3362 = vunpack.c.l.b16 %v1333
      %v3363 = vunpack.c.h.b16 %v1333
      %v3364 = vunpack.c.l.b16 %v1334
      %v3365 = vunpack.c.h.b16 %v1334
      %v3366 = vunpack.c.l.b16 %v1335
      %v3367 = vunpack.c.h.b16 %v1335
      %v3368 = vunpack.c.l.b16 %v1336
      %v3369 = vunpack.c.l.b16 %v1337
      %v3370 = vunpack.c.h.b16 %v1337
      %v3371 = vunpack.c.l.b16 %v1338
      %v3372 = vunpack.c.h.b16 %v1338
      %v3373 = vunpack.c.l.b16 %v1339
      %v3374 = vunpack.c.h.b16 %v1339
      %v3375 = vunpack.c.l.b16 %v1340
      %v3376 = vunpack.c.l.b16 %v1341
      %v3377 = vunpack.c.h.b16 %v1341
      %v3378 = vunpack.c.l.b16 %v1342
      %v3379 = vunpack.c.h.b16 %v1342
      %v3380 = vunpack.c.l.b16 %v1343
      %v3381 = vunpack.c.h.b16 %v1343
      %v3382 = vunpack.c.l.b16 %v1344
      %v3383 = vunpack.c.l.b16 %v1345
      %v3384 = vunpack.c.h.b16 %v1345
      %v3385 = vunpack.c.l.b16 %v1346
      %v3386 = vunpack.c.h.b16 %v1346
      %v3387 = vunpack.c.l.b16 %v1347
      %v3388 = vunpack.c.h.b16 %v1347
      %v3389 = vunpack.c.l.b16 %v1348
      %v3390 = vunpack.c.l.b16 %v1349
      %v3391 = vunpack.c.h.b16 %v1349
      %v3392 = vunpack.c.l.b16 %v1350
      %v3393 = vunpack.c.h.b16 %v1350
      %v3394 = vunpack.c.l.b16 %v1351
      %v3395 = vunpack.c.h.b16 %v1351
      %v3396 = vunpack.c.l.b16 %v1352
      %v3397 = vunpack.c.l.b16 %v1353
      %v3398 = vunpack.c.h.b16 %v1353
      %v3399 = vunpack.c.l.b16 %v1354
      %v3400 = vunpack.c.h.b16 %v1354
      %v3401 = vunpack.c.l.b16 %v1355
      %v3402 = vunpack.c.h.b16 %v1355
      %v3403 = vunpack.c.l.b16 %v1356
      %v3404 = vunpack.c.l.b16 %v1357
      %v3405 = vunpack.c.h.b16 %v1357
      %v3406 = vunpack.c.l.b16 %v1358
      %v3407 = vunpack.c.h.b16 %v1358
      %v3408 = vunpack.c.l.b16 %v1359
      %v3409 = vunpack.c.h.b16 %v1359
      %v3410 = vunpack.c.l.b16 %v1360
      %v3411 = vunpack.c.l.b16 %v1361
      %v3412 = vunpack.c.h.b16 %v1361
      %v3413 = vunpack.c.l.b16 %v1362
      %v3414 = vunpack.c.h.b16 %v1362
      %v3415 = vunpack.c.l.b16 %v1363
      %v3416 = vunpack.c.h.b16 %v1363
      %v3417 = vunpack.c.l.b16 %v1364
      %v3418 = vunpack.c.l.b16 %v1365
      %v3419 = vunpack.c.h.b16 %v1365
      %v3420 = vunpack.c.l.b16 %v1366
      %v3421 = vunpack.c.h.b16 %v1366
      %v3422 = vunpack.c.l.b16 %v1367
      %v3423 = vunpack.c.h.b16 %v1367
      %v3424 = vunpack.c.l.b16 %v1368
      %v3425 = vunpack.c.l.b16 %v1369
      %v3426 = vunpack.c.h.b16 %v1369
      %v3427 = vunpack.c.l.b16 %v1370
      %v3428 = vunpack.c.h.b16 %v1370
      %v3429 = vunpack.c.l.b16 %v1371
      %v3430 = vunpack.c.h.b16 %v1371
      %v3431 = vunpack.c.l.b16 %v1372
      %v3432 = vunpack.c.l.b16 %v1373
      %v3433 = vunpack.c.h.b16 %v1373
      %v3434 = vunpack.c.l.b16 %v1374
      %v3435 = vunpack.c.h.b16 %v1374
      %v3436 = vunpack.c.l.b16 %v1375
      %v3437 = vunpack.c.h.b16 %v1375
      %v3438 = vunpack.c.l.b16 %v1376
      %v3439 = vunpack.c.l.b16 %v1377
      %v3440 = vunpack.c.h.b16 %v1377
      %v3441 = vunpack.c.l.b16 %v1378
      %v3442 = vunpack.c.h.b16 %v1378
      %v3443 = vunpack.c.l.b16 %v1379
      %v3444 = vunpack.c.h.b16 %v1379
      %v3445 = vunpack.c.l.b16 %v1380
      %v3446 = vunpack.c.l.b16 %v1381
      %v3447 = vunpack.c.h.b16 %v1381
      %v3448 = vunpack.c.l.b16 %v1382
      %v3449 = vunpack.c.h.b16 %v1382
      %v3450 = vunpack.c.l.b16 %v1383
      %v3451 = vunpack.c.h.b16 %v1383
      %v3452 = vunpack.c.l.b16 %v1384
      %v3453 = vunpack.c.l.b16 %v1385
      %v3454 = vunpack.c.h.b16 %v1385
      %v3455 = vunpack.c.l.b16 %v1386
      %v3456 = vunpack.c.h.b16 %v1386
      %v3457 = vunpack.c.l.b16 %v1387
      %v3458 = vunpack.c.h.b16 %v1387
      %v3459 = vunpack.c.l.b16 %v1388
      %v3460 = vunpack.c.l.b16 %v1389
      %v3461 = vunpack.c.h.b16 %v1389
      %v3462 = vunpack.c.l.b16 %v1390
      %v3463 = vunpack.c.h.b16 %v1390
      %v3464 = vunpack.c.l.b16 %v1391
      %v3465 = vunpack.c.h.b16 %v1391
      %v3466 = vunpack.c.l.b16 %v1392
      %v3467 = vunpack.c.l.b16 %v1393
      %v3468 = vunpack.c.h.b16 %v1393
      %v3469 = vunpack.c.l.b16 %v1394
      %v3470 = vunpack.c.h.b16 %v1394
      %v3471 = vunpack.c.l.b16 %v1395
      %v3472 = vunpack.c.h.b16 %v1395
      %v3473 = vunpack.c.l.b16 %v1396
      %v3474 = vunpack.c.l.b16 %v1397
      %v3475 = vunpack.c.h.b16 %v1397
      %v3476 = vunpack.c.l.b16 %v1398
      %v3477 = vunpack.c.h.b16 %v1398
      %v3478 = vunpack.c.l.b16 %v1399
      %v3479 = vunpack.c.h.b16 %v1399
      %v3480 = vunpack.c.l.b16 %v1400
      %v3481 = vunpack.c.l.b16 %v1401
      %v3482 = vunpack.c.h.b16 %v1401
      %v3483 = vunpack.c.l.b16 %v1402
      %v3484 = vunpack.c.h.b16 %v1402
      %v3485 = vunpack.c.l.b16 %v1403
      %v3486 = vunpack.c.h.b16 %v1403
      %v3487 = vunpack.c.l.b16 %v1404
      %v3488 = vunpack.c.l.b16 %v1405
      %v3489 = vunpack.c.h.b16 %v1405
      %v3490 = vunpack.c.l.b16 %v1406
      %v3491 = vunpack.c.h.b16 %v1406
      %v3492 = vunpack.c.l.b16 %v1407
      %v3493 = vunpack.c.h.b16 %v1407
      %v3494 = vunpack.c.l.b16 %v1408
      %v3495 = vunpack.c.l.b16 %v1409
      %v3496 = vunpack.c.h.b16 %v1409
      %v3497 = vunpack.c.l.b16 %v1410
      %v3498 = vunpack.c.h.b16 %v1410
      %v3499 = vunpack.c.l.b16 %v1411
      %v3500 = vunpack.c.h.b16 %v1411
      %v3501 = vunpack.c.l.b16 %v1412
      %v3502 = vunpack.c.l.b16 %v1413
      %v3503 = vunpack.c.h.b16 %v1413
      %v3504 = vunpack.c.l.b16 %v1414
      %v3505 = vunpack.c.h.b16 %v1414
      %v3506 = vunpack.c.l.b16 %v1415
      %v3507 = vunpack.c.h.b16 %v1415
      %v3508 = vunpack.c.l.b16 %v1416
      %v3509 = vunpack.c.l.b16 %v1417
      %v3510 = vunpack.c.h.b16 %v1417
      %v3511 = vunpack.c.l.b16 %v1418
      %v3512 = vunpack.c.h.b16 %v1418
      %v3513 = vunpack.c.l.b16 %v1419
      %v3514 = vunpack.c.h.b16 %v1419
      %v3515 = vunpack.c.l.b16 %v1420
      %v3516 = vunpack.c.l.b16 %v1421
      %v3517 = vunpack.c.h.b16 %v1421
      %v3518 = vunpack.c.l.b16 %v1422
      %v3519 = vunpack.c.h.b16 %v1422
      %v3520 = vunpack.c.l.b16 %v1423
      %v3521 = vunpack.c.h.b16 %v1423
      %v3522 = vunpack.c.l.b16 %v1424
      %v3523 = vunpack.c.l.b16 %v1425
      %v3524 = vunpack.c.h.b16 %v1425
      %v3525 = vunpack.c.l.b16 %v1426
      %v3526 = vunpack.c.h.b16 %v1426
      %v3527 = vunpack.c.l.b16 %v1427
      %v3528 = vunpack.c.h.b16 %v1427
      %v3529 = vunpack.c.l.b16 %v1428
      %v3530 = vunpack.c.l.b16 %v1429
      %v3531 = vunpack.c.h.b16 %v1429
      %v3532 = vunpack.c.l.b16 %v1430
      %v3533 = vunpack.c.h.b16 %v1430
      %v3534 = vunpack.c.l.b16 %v1431
      %v3535 = vunpack.c.h.b16 %v1431
      %v3536 = vunpack.c.l.b16 %v1432
      %v3537 = vunpack.c.l.b16 %v1433
      %v3538 = vunpack.c.h.b16 %v1433
      %v3539 = vunpack.c.l.b16 %v1434
      %v3540 = vunpack.c.h.b16 %v1434
      %v3541 = vunpack.c.l.b16 %v1435
      %v3542 = vunpack.c.h.b16 %v1435
      %v3543 = vunpack.c.l.b16 %v1436
      %v3544 = vunpack.c.l.b16 %v1437
      %v3545 = vunpack.c.h.b16 %v1437
      %v3546 = vunpack.c.l.b16 %v1438
      %v3547 = vunpack.c.h.b16 %v1438
      %v3548 = vunpack.c.l.b16 %v1439
      %v3549 = vunpack.c.h.b16 %v1439
      %v3550 = vunpack.c.l.b16 %v1440
      %v3551 = vunpack.c.l.b16 %v1441
      %v3552 = vunpack.c.h.b16 %v1441
      %v3553 = vunpack.c.l.b16 %v1442
      %v3554 = vunpack.c.h.b16 %v1442
      %v3555 = vunpack.c.l.b16 %v1443
      %v3556 = vunpack.c.h.b16 %v1443
      %v3557 = vunpack.c.l.b16 %v1444
      %v3558 = vunpack.c.l.b16 %v1445
      %v3559 = vunpack.c.h.b16 %v1445
      %v3560 = vunpack.c.l.b16 %v1446
      %v3561 = vunpack.c.h.b16 %v1446
      %v3562 = vunpack.c.l.b16 %v1447
      %v3563 = vunpack.c.h.b16 %v1447
      %v3564 = vunpack.c.l.b16 %v1448
      %v3565 = vunpack.c.l.b16 %v1449
      %v3566 = vunpack.c.h.b16 %v1449
      %v3567 = vunpack.c.l.b16 %v1450
      %v3568 = vunpack.c.h.b16 %v1450
      %v3569 = vunpack.c.l.b16 %v1451
      %v3570 = vunpack.c.h.b16 %v1451
      %v3571 = vunpack.c.l.b16 %v1452
      %v3572 = vunpack.c.l.b16 %v1453
      %v3573 = vunpack.c.h.b16 %v1453
      %v3574 = vunpack.c.l.b16 %v1454
      %v3575 = vunpack.c.h.b16 %v1454
      %v3576 = vunpack.c.l.b16 %v1455
      %v3577 = vunpack.c.h.b16 %v1455
      %v3578 = vunpack.c.l.b16 %v1456
      %v3579 = vunpack.c.l.b16 %v1457
      %v3580 = vunpack.c.h.b16 %v1457
      %v3581 = vunpack.c.l.b16 %v1458
      %v3582 = vunpack.c.h.b16 %v1458
      %v3583 = vunpack.c.l.b16 %v1459
      %v3584 = vunpack.c.h.b16 %v1459
      %v3585 = vunpack.c.l.b16 %v1460
      %v3586 = vunpack.c.l.b16 %v1461
      %v3587 = vunpack.c.h.b16 %v1461
      %v3588 = vunpack.c.l.b16 %v1462
      %v3589 = vunpack.c.h.b16 %v1462
      %v3590 = vunpack.c.l.b16 %v1463
      %v3591 = vunpack.c.h.b16 %v1463
      %v3592 = vunpack.c.l.b16 %v1464
      %v3593 = vunpack.c.l.b16 %v1465
      %v3594 = vunpack.c.h.b16 %v1465
      %v3595 = vunpack.c.l.b16 %v1466
      %v3596 = vunpack.c.h.b16 %v1466
      %v3597 = vunpack.c.l.b16 %v1467
      %v3598 = vunpack.c.h.b16 %v1467
      %v3599 = vunpack.c.l.b16 %v1468
      %v3600 = vunpack.c.l.b16 %v1469
      %v3601 = vunpack.c.h.b16 %v1469
      %v3602 = vunpack.c.l.b16 %v1470
      %v3603 = vunpack.c.h.b16 %v1470
      %v3604 = vunpack.c.l.b16 %v1471
      %v3605 = vunpack.c.h.b16 %v1471
      %v3606 = vunpack.c.l.b16 %v1472
      %v3607 = vunpack.c.l.b16 %v1473
      %v3608 = vunpack.c.h.b16 %v1473
      %v3609 = vunpack.c.l.b16 %v1474
      %v3610 = vunpack.c.h.b16 %v1474
      %v3611 = vunpack.c.l.b16 %v1475
      %v3612 = vunpack.c.h.b16 %v1475
      %v3613 = vunpack.c.l.b16 %v1476
      %v3614 = vunpack.c.l.b16 %v1477
      %v3615 = vunpack.c.h.b16 %v1477
      %v3616 = vunpack.c.l.b16 %v1478
      %v3617 = vunpack.c.h.b16 %v1478
      %v3618 = vunpack.c.l.b16 %v1479
      %v3619 = vunpack.c.h.b16 %v1479
      %v3620 = vunpack.c.l.b16 %v1480
      %v3621 = vunpack.c.l.b16 %v1481
      %v3622 = vunpack.c.h.b16 %v1481
      %v3623 = vunpack.c.l.b16 %v1482
      %v3624 = vunpack.c.h.b16 %v1482
      %v3625 = vunpack.c.l.b16 %v1483
      %v3626 = vunpack.c.h.b16 %v1483
      %v3627 = vunpack.c.l.b16 %v1484
      %v3628 = vunpack.c.l.b16 %v1485
      %v3629 = vunpack.c.h.b16 %v1485
      %v3630 = vunpack.c.l.b16 %v1486
      %v3631 = vunpack.c.h.b16 %v1486
      %v3632 = vunpack.c.l.b16 %v1487
      %v3633 = vunpack.c.h.b16 %v1487
      %v3634 = vunpack.c.l.b16 %v1488
      %v3635 = vunpack.c.l.b16 %v1489
      %v3636 = vunpack.c.h.b16 %v1489
      %v3637 = vunpack.c.l.b16 %v1490
      %v3638 = vunpack.c.h.b16 %v1490
      %v3639 = vunpack.c.l.b16 %v1491
      %v3640 = vunpack.c.h.b16 %v1491
      %v3641 = vunpack.c.l.b16 %v1492
      %v3642 = vunpack.c.l.b16 %v1493
      %v3643 = vunpack.c.h.b16 %v1493
      %v3644 = vunpack.c.l.b16 %v1494
      %v3645 = vunpack.c.h.b16 %v1494
      %v3646 = vunpack.c.l.b16 %v1495
      %v3647 = vunpack.c.h.b16 %v1495
      %v3648 = vunpack.c.l.b16 %v1496
      %v3649 = vunpack.c.l.b16 %v1497
      %v3650 = vunpack.c.h.b16 %v1497
      %v3651 = vunpack.c.l.b16 %v1498
      %v3652 = vunpack.c.h.b16 %v1498
      %v3653 = vunpack.c.l.b16 %v1499
      %v3654 = vunpack.c.h.b16 %v1499
      %v3655 = vunpack.c.l.b16 %v1500
      %v3656 = vunpack.c.l.b16 %v1501
      %v3657 = vunpack.c.h.b16 %v1501
      %v3658 = vunpack.c.l.b16 %v1502
      %v3659 = vunpack.c.h.b16 %v1502
      %v3660 = vunpack.c.l.b16 %v1503
      %v3661 = vunpack.c.h.b16 %v1503
      %v3662 = vunpack.c.l.b16 %v1504
      %v3663 = vunpack.c.l.b16 %v1505
      %v3664 = vunpack.c.h.b16 %v1505
      %v3665 = vunpack.c.l.b16 %v1506
      %v3666 = vunpack.c.h.b16 %v1506
      %v3667 = vunpack.c.l.b16 %v1507
      %v3668 = vunpack.c.h.b16 %v1507
      %v3669 = vunpack.c.l.b16 %v1508
      %v3670 = vunpack.c.l.b16 %v1509
      %v3671 = vunpack.c.h.b16 %v1509
      %v3672 = vunpack.c.l.b16 %v1510
      %v3673 = vunpack.c.h.b16 %v1510
      %v3674 = vunpack.c.l.b16 %v1511
      %v3675 = vunpack.c.h.b16 %v1511
      %v3676 = vunpack.c.l.b16 %v1512
      %v3677 = vunpack.c.l.b16 %v1513
      %v3678 = vunpack.c.h.b16 %v1513
      %v3679 = vunpack.c.l.b16 %v1514
      %v3680 = vunpack.c.h.b16 %v1514
      %v3681 = vunpack.c.l.b16 %v1515
      %v3682 = vunpack.c.h.b16 %v1515
      %v3683 = vunpack.c.l.b16 %v1516
      %v3684 = vunpack.c.l.b16 %v1517
      %v3685 = vunpack.c.h.b16 %v1517
      %v3686 = vunpack.c.l.b16 %v1518
      %v3687 = vunpack.c.h.b16 %v1518
      %v3688 = vunpack.c.l.b16 %v1519
      %v3689 = vunpack.c.h.b16 %v1519
      %v3690 = vunpack.c.l.b16 %v1520
      %v3691 = vunpack.c.l.b16 %v1521
      %v3692 = vunpack.c.h.b16 %v1521
      %v3693 = vunpack.c.l.b16 %v1522
      %v3694 = vunpack.c.h.b16 %v1522
      %v3695 = vunpack.c.l.b16 %v1523
      %v3696 = vunpack.c.h.b16 %v1523
      %v3697 = vunpack.c.l.b16 %v1524
      %v3698 = vunpack.c.l.b16 %v1525
      %v3699 = vunpack.c.h.b16 %v1525
      %v3700 = vunpack.c.l.b16 %v1526
      %v3701 = vunpack.c.h.b16 %v1526
      %v3702 = vunpack.c.l.b16 %v1527
      %v3703 = vunpack.c.h.b16 %v1527
      %v3704 = vunpack.c.l.b16 %v1528
      %v3705 = vunpack.c.l.b16 %v1529
      %v3706 = vunpack.c.h.b16 %v1529
      %v3707 = vunpack.c.l.b16 %v1530
      %v3708 = vunpack.c.h.b16 %v1530
      %v3709 = vunpack.c.l.b16 %v1531
      %v3710 = vunpack.c.h.b16 %v1531
      %v3711 = vunpack.c.l.b16 %v1532
      %v3712 = vunpack.c.l.b16 %v1533
      %v3713 = vunpack.c.h.b16 %v1533
      %v3714 = vunpack.c.l.b16 %v1534
      %v3715 = vunpack.c.h.b16 %v1534
      %v3716 = vunpack.c.l.b16 %v1535
      %v3717 = vunpack.c.h.b16 %v1535
      %v3718 = vunpack.c.l.b16 %v1536
      %v3719 = vunpack.c.l.b16 %v1537
      %v3720 = vunpack.c.h.b16 %v1537
      %v3721 = vunpack.c.l.b16 %v1538
      %v3722 = vunpack.c.h.b16 %v1538
      %v3723 = vunpack.c.l.b16 %v1539
      %v3724 = vunpack.c.h.b16 %v1539
      %v3725 = vunpack.c.l.b16 %v1540
      %v3726 = vunpack.c.l.b16 %v1541
      %v3727 = vunpack.c.h.b16 %v1541
      %v3728 = vunpack.c.l.b16 %v1542
      %v3729 = vunpack.c.h.b16 %v1542
      %v3730 = vunpack.c.l.b16 %v1543
      %v3731 = vunpack.c.h.b16 %v1543
      %v3732 = vunpack.c.l.b16 %v1544
      %v3733 = vunpack.c.l.b16 %v1545
      %v3734 = vunpack.c.h.b16 %v1545
      %v3735 = vunpack.c.l.b16 %v1546
      %v3736 = vunpack.c.h.b16 %v1546
      %v3737 = vunpack.c.l.b16 %v1547
      %v3738 = vunpack.c.h.b16 %v1547
      %v3739 = vunpack.c.l.b16 %v1548
      %v3740 = vunpack.c.l.b16 %v1549
      %v3741 = vunpack.c.h.b16 %v1549
      %v3742 = vunpack.c.l.b16 %v1550
      %v3743 = vunpack.c.h.b16 %v1550
      %v3744 = vunpack.c.l.b16 %v1551
      %v3745 = vunpack.c.h.b16 %v1551
      %v3746 = vunpack.c.l.b16 %v1552
      %v3747 = vunpack.c.l.b16 %v1553
      %v3748 = vunpack.c.h.b16 %v1553
      %v3749 = vunpack.c.l.b16 %v1554
      %v3750 = vunpack.c.h.b16 %v1554
      %v3751 = vunpack.c.l.b16 %v1555
      %v3752 = vunpack.c.h.b16 %v1555
      %v3753 = vunpack.c.l.b16 %v1556
      %v3754 = vunpack.c.l.b16 %v1557
      %v3755 = vunpack.c.h.b16 %v1557
      %v3756 = vunpack.c.l.b16 %v1558
      %v3757 = vunpack.c.h.b16 %v1558
      %v3758 = vunpack.c.l.b16 %v1559
      %v3759 = vunpack.c.h.b16 %v1559
      %v3760 = vunpack.c.l.b16 %v1560
      %v3761 = vpack.c.b16 %v2368, %v2361
      %v3762 = vpack.c.b16 %v2369, %v2362
      %v3763 = vpack.c.b16 %v2370, %v2363
      %v3764 = vpack.c.b16 %v2371, %v2364
      %v3765 = vpack.c.b16 %v2372, %v2365
      %v3766 = vpack.c.b16 %v2373, %v2366
      %v3767 = vpack.c.b16 %v2374, %v2367
      %v3768 = vpack.c.b16 %v2382, %v2375
      %v3769 = vpack.c.b16 %v2383, %v2376
      %v3770 = vpack.c.b16 %v2384, %v2377
      %v3771 = vpack.c.b16 %v2385, %v2378
      %v3772 = vpack.c.b16 %v2386, %v2379
      %v3773 = vpack.c.b16 %v2387, %v2380
      %v3774 = vpack.c.b16 %v2388, %v2381
      %v3775 = vpack.c.b16 %v2396, %v2389
      %v3776 = vpack.c.b16 %v2397, %v2390
      %v3777 = vpack.c.b16 %v2398, %v2391
      %v3778 = vpack.c.b16 %v2399, %v2392
      %v3779 = vpack.c.b16 %v2400, %v2393
      %v3780 = vpack.c.b16 %v2401, %v2394
      %v3781 = vpack.c.b16 %v2402, %v2395
      %v3782 = vpack.c.b16 %v2410, %v2403
      %v3783 = vpack.c.b16 %v2411, %v2404
      %v3784 = vpack.c.b16 %v2412, %v2405
      %v3785 = vpack.c.b16 %v2413, %v2406
      %v3786 = vpack.c.b16 %v2414, %v2407
      %v3787 = vpack.c.b16 %v2415, %v2408
      %v3788 = vpack.c.b16 %v2416, %v2409
      %v3789 = vpack.c.b16 %v2424, %v2417
      %v3790 = vpack.c.b16 %v2425, %v2418
      %v3791 = vpack.c.b16 %v2426, %v2419
      %v3792 = vpack.c.b16 %v2427, %v2420
      %v3793 = vpack.c.b16 %v2428, %v2421
      %v3794 = vpack.c.b16 %v2429, %v2422
      %v3795 = vpack.c.b16 %v2430, %v2423
      %v3796 = vpack.c.b16 %v2438, %v2431
      %v3797 = vpack.c.b16 %v2439, %v2432
      %v3798 = vpack.c.b16 %v2440, %v2433
      %v3799 = vpack.c.b16 %v2441, %v2434
      %v3800 = vpack.c.b16 %v2442, %v2435
      %v3801 = vpack.c.b16 %v2443, %v2436
      %v3802 = vpack.c.b16 %v2444, %v2437
      %v3803 = vpack.c.b16 %v2452, %v2445
      %v3804 = vpack.c.b16 %v2453, %v2446
      %v3805 = vpack.c.b16 %v2454, %v2447
      %v3806 = vpack.c.b16 %v2455, %v2448
      %v3807 = vpack.c.b16 %v2456, %v2449
      %v3808 = vpack.c.b16 %v2457, %v2450
      %v3809 = vpack.c.b16 %v2458, %v2451
      %v3810 = vpack.c.b16 %v2466, %v2459
      %v3811 = vpack.c.b16 %v2467, %v2460
      %v3812 = vpack.c.b16 %v2468, %v2461
      %v3813 = vpack.c.b16 %v2469, %v2462
      %v3814 = vpack.c.b16 %v2470, %v2463
      %v3815 = vpack.c.b16 %v2471, %v2464
      %v3816 = vpack.c.b16 %v2472, %v2465
      %v3817 = vpack.c.b16 %v2480, %v2473
      %v3818 = vpack.c.b16 %v2481, %v2474
      %v3819 = vpack.c.b16 %v2482, %v2475
      %v3820 = vpack.c.b16 %v2483, %v2476
      %v3821 = vpack.c.b16 %v2484, %v2477
      %v3822 = vpack.c.b16 %v2485, %v2478
      %v3823 = vpack.c.b16 %v2486, %v2479
      %v3824 = vpack.c.b16 %v2494, %v2487
      %v3825 = vpack.c.b16 %v2495, %v2488
      %v3826 = vpack.c.b16 %v2496, %v2489
      %v3827 = vpack.c.b16 %v2497, %v2490
      %v3828 = vpack.c.b16 %v2498, %v2491
      %v3829 = vpack.c.b16 %v2499, %v2492
      %v3830 = vpack.c.b16 %v2500, %v2493
      %v3831 = vpack.c.b16 %v2508, %v2501
      %v3832 = vpack.c.b16 %v2509, %v2502
      %v3833 = vpack.c.b16 %v2510, %v2503
      %v3834 = vpack.c.b16 %v2511, %v2504
      %v3835 = vpack.c.b16 %v2512, %v2505
      %v3836 = vpack.c.b16 %v2513, %v2506
      %v3837 = vpack.c.b16 %v2514, %v2507
      %v3838 = vpack.c.b16 %v2522, %v2515
      %v3839 = vpack.c.b16 %v2523, %v2516
      %v3840 = vpack.c.b16 %v2524, %v2517
      %v3841 = vpack.c.b16 %v2525, %v2518
      %v3842 = vpack.c.b16 %v2526, %v2519
      %v3843 = vpack.c.b16 %v2527, %v2520
      %v3844 = vpack.c.b16 %v2528, %v2521
      %v3845 = vpack.c.b16 %v2536, %v2529
      %v3846 = vpack.c.b16 %v2537, %v2530
      %v3847 = vpack.c.b16 %v2538, %v2531
      %v3848 = vpack.c.b16 %v2539, %v2532
      %v3849 = vpack.c.b16 %v2540, %v2533
      %v3850 = vpack.c.b16 %v2541, %v2534
      %v3851 = vpack.c.b16 %v2542, %v2535
      %v3852 = vpack.c.b16 %v2550, %v2543
      %v3853 = vpack.c.b16 %v2551, %v2544
      %v3854 = vpack.c.b16 %v2552, %v2545
      %v3855 = vpack.c.b16 %v2553, %v2546
      %v3856 = vpack.c.b16 %v2554, %v2547
      %v3857 = vpack.c.b16 %v2555, %v2548
      %v3858 = vpack.c.b16 %v2556, %v2549
      %v3859 = vpack.c.b16 %v2564, %v2557
      %v3860 = vpack.c.b16 %v2565, %v2558
      %v3861 = vpack.c.b16 %v2566, %v2559
      %v3862 = vpack.c.b16 %v2567, %v2560
      %v3863 = vpack.c.b16 %v2568, %v2561
      %v3864 = vpack.c.b16 %v2569, %v2562
      %v3865 = vpack.c.b16 %v2570, %v2563
      %v3866 = vpack.c.b16 %v2578, %v2571
      %v3867 = vpack.c.b16 %v2579, %v2572
      %v3868 = vpack.c.b16 %v2580, %v2573
      %v3869 = vpack.c.b16 %v2581, %v2574
      %v3870 = vpack.c.b16 %v2582, %v2575
      %v3871 = vpack.c.b16 %v2583, %v2576
      %v3872 = vpack.c.b16 %v2584, %v2577
      %v3873 = vpack.c.b16 %v2592, %v2585
      %v3874 = vpack.c.b16 %v2593, %v2586
      %v3875 = vpack.c.b16 %v2594, %v2587
      %v3876 = vpack.c.b16 %v2595, %v2588
      %v3877 = vpack.c.b16 %v2596, %v2589
      %v3878 = vpack.c.b16 %v2597, %v2590
      %v3879 = vpack.c.b16 %v2598, %v2591
      %v3880 = vpack.c.b16 %v2606, %v2599
      %v3881 = vpack.c.b16 %v2607, %v2600
      %v3882 = vpack.c.b16 %v2608, %v2601
      %v3883 = vpack.c.b16 %v2609, %v2602
      %v3884 = vpack.c.b16 %v2610, %v2603
      %v3885 = vpack.c.b16 %v2611, %v2604
      %v3886 = vpack.c.b16 %v2612, %v2605
      %v3887 = vpack.c.b16 %v2620, %v2613
      %v3888 = vpack.c.b16 %v2621, %v2614
      %v3889 = vpack.c.b16 %v2622, %v2615
      %v3890 = vpack.c.b16 %v2623, %v2616
      %v3891 = vpack.c.b16 %v2624, %v2617
      %v3892 = vpack.c.b16 %v2625, %v2618
      %v3893 = vpack.c.b16 %v2626, %v2619
      %v3894 = vpack.c.b16 %v2634, %v2627
      %v3895 = vpack.c.b16 %v2635, %v2628
      %v3896 = vpack.c.b16 %v2636, %v2629
      %v3897 = vpack.c.b16 %v2637, %v2630
      %v3898 = vpack.c.b16 %v2638, %v2631
      %v3899 = vpack.c.b16 %v2639, %v2632
      %v3900 = vpack.c.b16 %v2640, %v2633
      %v3901 = vpack.c.b16 %v2648, %v2641
      %v3902 = vpack.c.b16 %v2649, %v2642
      %v3903 = vpack.c.b16 %v2650, %v2643
      %v3904 = vpack.c.b16 %v2651, %v2644
      %v3905 = vpack.c.b16 %v2652, %v2645
      %v3906 = vpack.c.b16 %v2653, %v2646
      %v3907 = vpack.c.b16 %v2654, %v2647
      %v3908 = vpack.c.b16 %v2662, %v2655
      %v3909 = vpack.c.b16 %v2663, %v2656
      %v3910 = vpack.c.b16 %v2664, %v2657
      %v3911 = vpack.c.b16 %v2665, %v2658
      %v3912 = vpack.c.b16 %v2666, %v2659
      %v3913 = vpack.c.b16 %v2667, %v2660
      %v3914 = vpack.c.b16 %v2668, %v2661
      %v3915 = vpack.c.b16 %v2676, %v2669
      %v3916 = vpack.c.b16 %v2677, %v2670
      %v3917 = vpack.c.b16 %v2678, %v2671
      %v3918 = vpack.c.b16 %v2679, %v2672
      %v3919 = vpack.c.b16 %v2680, %v2673
      %v3920 = vpack.c.b16 %v2681, %v2674
      %v3921 = vpack.c.b16 %v2682, %v2675
      %v3922 = vpack.c.b16 %v2690, %v2683
      %v3923 = vpack.c.b16 %v2691, %v2684
      %v3924 = vpack.c.b16 %v2692, %v2685
      %v3925 = vpack.c.b16 %v2693, %v2686
      %v3926 = vpack.c.b16 %v2694, %v2687
      %v3927 = vpack.c.b16 %v2695, %v2688
      %v3928 = vpack.c.b16 %v2696, %v2689
      %v3929 = vpack.c.b16 %v2704, %v2697
      %v3930 = vpack.c.b16 %v2705, %v2698
      %v3931 = vpack.c.b16 %v2706, %v2699
      %v3932 = vpack.c.b16 %v2707, %v2700
      %v3933 = vpack.c.b16 %v2708, %v2701
      %v3934 = vpack.c.b16 %v2709, %v2702
      %v3935 = vpack.c.b16 %v2710, %v2703
      %v3936 = vpack.c.b16 %v2718, %v2711
      %v3937 = vpack.c.b16 %v2719, %v2712
      %v3938 = vpack.c.b16 %v2720, %v2713
      %v3939 = vpack.c.b16 %v2721, %v2714
      %v3940 = vpack.c.b16 %v2722, %v2715
      %v3941 = vpack.c.b16 %v2723, %v2716
      %v3942 = vpack.c.b16 %v2724, %v2717
      %v3943 = vpack.c.b16 %v2732, %v2725
      %v3944 = vpack.c.b16 %v2733, %v2726
      %v3945 = vpack.c.b16 %v2734, %v2727
      %v3946 = vpack.c.b16 %v2735, %v2728
      %v3947 = vpack.c.b16 %v2736, %v2729
      %v3948 = vpack.c.b16 %v2737, %v2730
      %v3949 = vpack.c.b16 %v2738, %v2731
      %v3950 = vpack.c.b16 %v2746, %v2739
      %v3951 = vpack.c.b16 %v2747, %v2740
      %v3952 = vpack.c.b16 %v2748, %v2741
      %v3953 = vpack.c.b16 %v2749, %v2742
      %v3954 = vpack.c.b16 %v2750, %v2743
      %v3955 = vpack.c.b16 %v2751, %v2744
      %v3956 = vpack.c.b16 %v2752, %v2745
      %v3957 = vpack.c.b16 %v2760, %v2753
      %v3958 = vpack.c.b16 %v2761, %v2754
      %v3959 = vpack.c.b16 %v2762, %v2755
      %v3960 = vpack.c.b16 %v2763, %v2756
      %v3961 = vpack.c.b16 %v2764, %v2757
      %v3962 = vpack.c.b16 %v2765, %v2758
      %v3963 = vpack.c.b16 %v2766, %v2759
      %v3964 = vpack.c.b16 %v2774, %v2767
      %v3965 = vpack.c.b16 %v2775, %v2768
      %v3966 = vpack.c.b16 %v2776, %v2769
      %v3967 = vpack.c.b16 %v2777, %v2770
      %v3968 = vpack.c.b16 %v2778, %v2771
      %v3969 = vpack.c.b16 %v2779, %v2772
      %v3970 = vpack.c.b16 %v2780, %v2773
      %v3971 = vpack.c.b16 %v2788, %v2781
      %v3972 = vpack.c.b16 %v2789, %v2782
      %v3973 = vpack.c.b16 %v2790, %v2783
      %v3974 = vpack.c.b16 %v2791, %v2784
      %v3975 = vpack.c.b16 %v2792, %v2785
      %v3976 = vpack.c.b16 %v2793, %v2786
      %v3977 = vpack.c.b16 %v2794, %v2787
      %v3978 = vpack.c.b16 %v2802, %v2795
      %v3979 = vpack.c.b16 %v2803, %v2796
      %v3980 = vpack.c.b16 %v2804, %v2797
      %v3981 = vpack.c.b16 %v2805, %v2798
      %v3982 = vpack.c.b16 %v2806, %v2799
      %v3983 = vpack.c.b16 %v2807, %v2800
      %v3984 = vpack.c.b16 %v2808, %v2801
      %v3985 = vpack.c.b16 %v2816, %v2809
      %v3986 = vpack.c.b16 %v2817, %v2810
      %v3987 = vpack.c.b16 %v2818, %v2811
      %v3988 = vpack.c.b16 %v2819, %v2812
      %v3989 = vpack.c.b16 %v2820, %v2813
      %v3990 = vpack.c.b16 %v2821, %v2814
      %v3991 = vpack.c.b16 %v2822, %v2815
      %v3992 = vpack.c.b16 %v2830, %v2823
      %v3993 = vpack.c.b16 %v2831, %v2824
      %v3994 = vpack.c.b16 %v2832, %v2825
      %v3995 = vpack.c.b16 %v2833, %v2826
      %v3996 = vpack.c.b16 %v2834, %v2827
      %v3997 = vpack.c.b16 %v2835, %v2828
      %v3998 = vpack.c.b16 %v2836, %v2829
      %v3999 = vpack.c.b16 %v2844, %v2837
      %v4000 = vpack.c.b16 %v2845, %v2838
      %v4001 = vpack.c.b16 %v2846, %v2839
      %v4002 = vpack.c.b16 %v2847, %v2840
      %v4003 = vpack.c.b16 %v2848, %v2841
      %v4004 = vpack.c.b16 %v2849, %v2842
      %v4005 = vpack.c.b16 %v2850, %v2843
      %v4006 = vpack.c.b16 %v2858, %v2851
      %v4007 = vpack.c.b16 %v2859, %v2852
      %v4008 = vpack.c.b16 %v2860, %v2853
      %v4009 = vpack.c.b16 %v2861, %v2854
      %v4010 = vpack.c.b16 %v2862, %v2855
      %v4011 = vpack.c.b16 %v2863, %v2856
      %v4012 = vpack.c.b16 %v2864, %v2857
      %v4013 = vpack.c.b16 %v2872, %v2865
      %v4014 = vpack.c.b16 %v2873, %v2866
      %v4015 = vpack.c.b16 %v2874, %v2867
      %v4016 = vpack.c.b16 %v2875, %v2868
      %v4017 = vpack.c.b16 %v2876, %v2869
      %v4018 = vpack.c.b16 %v2877, %v2870
      %v4019 = vpack.c.b16 %v2878, %v2871
      %v4020 = vpack.c.b16 %v2886, %v2879
      %v4021 = vpack.c.b16 %v2887, %v2880
      %v4022 = vpack.c.b16 %v2888, %v2881
      %v4023 = vpack.c.b16 %v2889, %v2882
      %v4024 = vpack.c.b16 %v2890, %v2883
      %v4025 = vpack.c.b16 %v2891, %v2884
      %v4026 = vpack.c.b16 %v2892, %v2885
      %v4027 = vpack.c.b16 %v2900, %v2893
      %v4028 = vpack.c.b16 %v2901, %v2894
      %v4029 = vpack.c.b16 %v2902, %v2895
      %v4030 = vpack.c.b16 %v2903, %v2896
      %v4031 = vpack.c.b16 %v2904, %v2897
      %v4032 = vpack.c.b16 %v2905, %v2898
      %v4033 = vpack.c.b16 %v2906, %v2899
      %v4034 = vpack.c.b16 %v2914, %v2907
      %v4035 = vpack.c.b16 %v2915, %v2908
      %v4036 = vpack.c.b16 %v2916, %v2909
      %v4037 = vpack.c.b16 %v2917, %v2910
      %v4038 = vpack.c.b16 %v2918, %v2911
      %v4039 = vpack.c.b16 %v2919, %v2912
      %v4040 = vpack.c.b16 %v2920, %v2913
      %v4041 = vpack.c.b16 %v2928, %v2921
      %v4042 = vpack.c.b16 %v2929, %v2922
      %v4043 = vpack.c.b16 %v2930, %v2923
      %v4044 = vpack.c.b16 %v2931, %v2924
      %v4045 = vpack.c.b16 %v2932, %v2925
      %v4046 = vpack.c.b16 %v2933, %v2926
      %v4047 = vpack.c.b16 %v2934, %v2927
      %v4048 = vpack.c.b16 %v2942, %v2935
      %v4049 = vpack.c.b16 %v2943, %v2936
      %v4050 = vpack.c.b16 %v2944, %v2937
      %v4051 = vpack.c.b16 %v2945, %v2938
      %v4052 = vpack.c.b16 %v2946, %v2939
      %v4053 = vpack.c.b16 %v2947, %v2940
      %v4054 = vpack.c.b16 %v2948, %v2941
      %v4055 = vpack.c.b16 %v2956, %v2949
      %v4056 = vpack.c.b16 %v2957, %v2950
      %v4057 = vpack.c.b16 %v2958, %v2951
      %v4058 = vpack.c.b16 %v2959, %v2952
      %v4059 = vpack.c.b16 %v2960, %v2953
      %v4060 = vpack.c.b16 %v2961, %v2954
      %v4061 = vpack.c.b16 %v2962, %v2955
      %v4062 = vpack.c.b16 %v2970, %v2963
      %v4063 = vpack.c.b16 %v2971, %v2964
      %v4064 = vpack.c.b16 %v2972, %v2965
      %v4065 = vpack.c.b16 %v2973, %v2966
      %v4066 = vpack.c.b16 %v2974, %v2967
      %v4067 = vpack.c.b16 %v2975, %v2968
      %v4068 = vpack.c.b16 %v2976, %v2969
      %v4069 = vpack.c.b16 %v2984, %v2977
      %v4070 = vpack.c.b16 %v2985, %v2978
      %v4071 = vpack.c.b16 %v2986, %v2979
      %v4072 = vpack.c.b16 %v2987, %v2980
      %v4073 = vpack.c.b16 %v2988, %v2981
      %v4074 = vpack.c.b16 %v2989, %v2982
      %v4075 = vpack.c.b16 %v2990, %v2983
      %v4076 = vpack.c.b16 %v2998, %v2991
      %v4077 = vpack.c.b16 %v2999, %v2992
      %v4078 = vpack.c.b16 %v3000, %v2993
      %v4079 = vpack.c.b16 %v3001, %v2994
      %v4080 = vpack.c.b16 %v3002, %v2995
      %v4081 = vpack.c.b16 %v3003, %v2996
      %v4082 = vpack.c.b16 %v3004, %v2997
      %v4083 = vpack.c.b16 %v3012, %v3005
      %v4084 = vpack.c.b16 %v3013, %v3006
      %v4085 = vpack.c.b16 %v3014, %v3007
      %v4086 = vpack.c.b16 %v3015, %v3008
      %v4087 = vpack.c.b16 %v3016, %v3009
      %v4088 = vpack.c.b16 %v3017, %v3010
      %v4089 = vpack.c.b16 %v3018, %v3011
      %v4090 = vpack.c.b16 %v3026, %v3019
      %v4091 = vpack.c.b16 %v3027, %v3020
      %v4092 = vpack.c.b16 %v3028, %v3021
      %v4093 = vpack.c.b16 %v3029, %v3022
      %v4094 = vpack.c.b16 %v3030, %v3023
      %v4095 = vpack.c.b16 %v3031, %v3024
      %v4096 = vpack.c.b16 %v3032, %v3025
      %v4097 = vpack.c.b16 %v3040, %v3033
      %v4098 = vpack.c.b16 %v3041, %v3034
      %v4099 = vpack.c.b16 %v3042, %v3035
      %v4100 = vpack.c.b16 %v3043, %v3036
      %v4101 = vpack.c.b16 %v3044, %v3037
      %v4102 = vpack.c.b16 %v3045, %v3038
      %v4103 = vpack.c.b16 %v3046, %v3039
      %v4104 = vpack.c.b16 %v3054, %v3047
      %v4105 = vpack.c.b16 %v3055, %v3048
      %v4106 = vpack.c.b16 %v3056, %v3049
      %v4107 = vpack.c.b16 %v3057, %v3050
      %v4108 = vpack.c.b16 %v3058, %v3051
      %v4109 = vpack.c.b16 %v3059, %v3052
      %v4110 = vpack.c.b16 %v3060, %v3053
      %v4111 = vpack.c.b16 %v3068, %v3061
      %v4112 = vpack.c.b16 %v3069, %v3062
      %v4113 = vpack.c.b16 %v3070, %v3063
      %v4114 = vpack.c.b16 %v3071, %v3064
      %v4115 = vpack.c.b16 %v3072, %v3065
      %v4116 = vpack.c.b16 %v3073, %v3066
      %v4117 = vpack.c.b16 %v3074, %v3067
      %v4118 = vpack.c.b16 %v3082, %v3075
      %v4119 = vpack.c.b16 %v3083, %v3076
      %v4120 = vpack.c.b16 %v3084, %v3077
      %v4121 = vpack.c.b16 %v3085, %v3078
      %v4122 = vpack.c.b16 %v3086, %v3079
      %v4123 = vpack.c.b16 %v3087, %v3080
      %v4124 = vpack.c.b16 %v3088, %v3081
      %v4125 = vpack.c.b16 %v3096, %v3089
      %v4126 = vpack.c.b16 %v3097, %v3090
      %v4127 = vpack.c.b16 %v3098, %v3091
      %v4128 = vpack.c.b16 %v3099, %v3092
      %v4129 = vpack.c.b16 %v3100, %v3093
      %v4130 = vpack.c.b16 %v3101, %v3094
      %v4131 = vpack.c.b16 %v3102, %v3095
      %v4132 = vpack.c.b16 %v3110, %v3103
      %v4133 = vpack.c.b16 %v3111, %v3104
      %v4134 = vpack.c.b16 %v3112, %v3105
      %v4135 = vpack.c.b16 %v3113, %v3106
      %v4136 = vpack.c.b16 %v3114, %v3107
      %v4137 = vpack.c.b16 %v3115, %v3108
      %v4138 = vpack.c.b16 %v3116, %v3109
      %v4139 = vpack.c.b16 %v3124, %v3117
      %v4140 = vpack.c.b16 %v3125, %v3118
      %v4141 = vpack.c.b16 %v3126, %v3119
      %v4142 = vpack.c.b16 %v3127, %v3120
      %v4143 = vpack.c.b16 %v3128, %v3121
      %v4144 = vpack.c.b16 %v3129, %v3122
      %v4145 = vpack.c.b16 %v3130, %v3123
      %v4146 = vpack.c.b16 %v3138, %v3131
      %v4147 = vpack.c.b16 %v3139, %v3132
      %v4148 = vpack.c.b16 %v3140, %v3133
      %v4149 = vpack.c.b16 %v3141, %v3134
      %v4150 = vpack.c.b16 %v3142, %v3135
      %v4151 = vpack.c.b16 %v3143, %v3136
      %v4152 = vpack.c.b16 %v3144, %v3137
      %v4153 = vpack.c.b16 %v3152, %v3145
      %v4154 = vpack.c.b16 %v3153, %v3146
      %v4155 = vpack.c.b16 %v3154, %v3147
      %v4156 = vpack.c.b16 %v3155, %v3148
      %v4157 = vpack.c.b16 %v3156, %v3149
      %v4158 = vpack.c.b16 %v3157, %v3150
      %v4159 = vpack.c.b16 %v3158, %v3151
      %v4160 = vpack.c.b16 %v3166, %v3159
      %v4161 = vpack.c.b16 %v3167, %v3160
      %v4162 = vpack.c.b16 %v3168, %v3161
      %v4163 = vpack.c.b16 %v3169, %v3162
      %v4164 = vpack.c.b16 %v3170, %v3163
      %v4165 = vpack.c.b16 %v3171, %v3164
      %v4166 = vpack.c.b16 %v3172, %v3165
      %v4167 = vpack.c.b16 %v3180, %v3173
      %v4168 = vpack.c.b16 %v3181, %v3174
      %v4169 = vpack.c.b16 %v3182, %v3175
      %v4170 = vpack.c.b16 %v3183, %v3176
      %v4171 = vpack.c.b16 %v3184, %v3177
      %v4172 = vpack.c.b16 %v3185, %v3178
      %v4173 = vpack.c.b16 %v3186, %v3179
      %v4174 = vpack.c.b16 %v3194, %v3187
      %v4175 = vpack.c.b16 %v3195, %v3188
      %v4176 = vpack.c.b16 %v3196, %v3189
      %v4177 = vpack.c.b16 %v3197, %v3190
      %v4178 = vpack.c.b16 %v3198, %v3191
      %v4179 = vpack.c.b16 %v3199, %v3192
      %v4180 = vpack.c.b16 %v3200, %v3193
      %v4181 = vpack.c.b16 %v3208, %v3201
      %v4182 = vpack.c.b16 %v3209, %v3202
      %v4183 = vpack.c.b16 %v3210, %v3203
      %v4184 = vpack.c.b16 %v3211, %v3204
      %v4185 = vpack.c.b16 %v3212, %v3205
      %v4186 = vpack.c.b16 %v3213, %v3206
      %v4187 = vpack.c.b16 %v3214, %v3207
      %v4188 = vpack.c.b16 %v3222, %v3215
      %v4189 = vpack.c.b16 %v3223, %v3216
      %v4190 = vpack.c.b16 %v3224, %v3217
      %v4191 = vpack.c.b16 %v3225, %v3218
      %v4192 = vpack.c.b16 %v3226, %v3219
      %v4193 = vpack.c.b16 %v3227, %v3220
      %v4194 = vpack.c.b16 %v3228, %v3221
      %v4195 = vpack.c.b16 %v3236, %v3229
      %v4196 = vpack.c.b16 %v3237, %v3230
      %v4197 = vpack.c.b16 %v3238, %v3231
      %v4198 = vpack.c.b16 %v3239, %v3232
      %v4199 = vpack.c.b16 %v3240, %v3233
      %v4200 = vpack.c.b16 %v3241, %v3234
      %v4201 = vpack.c.b16 %v3242, %v3235
      %v4202 = vpack.c.b16 %v3250, %v3243
      %v4203 = vpack.c.b16 %v3251, %v3244
      %v4204 = vpack.c.b16 %v3252, %v3245
      %v4205 = vpack.c.b16 %v3253, %v3246
      %v4206 = vpack.c.b16 %v3254, %v3247
      %v4207 = vpack.c.b16 %v3255, %v3248
      %v4208 = vpack.c.b16 %v3256, %v3249
      %v4209 = vpack.c.b16 %v3264, %v3257
      %v4210 = vpack.c.b16 %v3265, %v3258
      %v4211 = vpack.c.b16 %v3266, %v3259
      %v4212 = vpack.c.b16 %v3267, %v3260
      %v4213 = vpack.c.b16 %v3268, %v3261
      %v4214 = vpack.c.b16 %v3269, %v3262
      %v4215 = vpack.c.b16 %v3270, %v3263
      %v4216 = vpack.c.b16 %v3278, %v3271
      %v4217 = vpack.c.b16 %v3279, %v3272
      %v4218 = vpack.c.b16 %v3280, %v3273
      %v4219 = vpack.c.b16 %v3281, %v3274
      %v4220 = vpack.c.b16 %v3282, %v3275
      %v4221 = vpack.c.b16 %v3283, %v3276
      %v4222 = vpack.c.b16 %v3284, %v3277
      %v4223 = vpack.c.b16 %v3292, %v3285
      %v4224 = vpack.c.b16 %v3293, %v3286
      %v4225 = vpack.c.b16 %v3294, %v3287
      %v4226 = vpack.c.b16 %v3295, %v3288
      %v4227 = vpack.c.b16 %v3296, %v3289
      %v4228 = vpack.c.b16 %v3297, %v3290
      %v4229 = vpack.c.b16 %v3298, %v3291
      %v4230 = vpack.c.b16 %v3306, %v3299
      %v4231 = vpack.c.b16 %v3307, %v3300
      %v4232 = vpack.c.b16 %v3308, %v3301
      %v4233 = vpack.c.b16 %v3309, %v3302
      %v4234 = vpack.c.b16 %v3310, %v3303
      %v4235 = vpack.c.b16 %v3311, %v3304
      %v4236 = vpack.c.b16 %v3312, %v3305
      %v4237 = vpack.c.b16 %v3320, %v3313
      %v4238 = vpack.c.b16 %v3321, %v3314
      %v4239 = vpack.c.b16 %v3322, %v3315
      %v4240 = vpack.c.b16 %v3323, %v3316
      %v4241 = vpack.c.b16 %v3324, %v3317
      %v4242 = vpack.c.b16 %v3325, %v3318
      %v4243 = vpack.c.b16 %v3326, %v3319
      %v4244 = vpack.c.b16 %v3334, %v3327
      %v4245 = vpack.c.b16 %v3335, %v3328
      %v4246 = vpack.c.b16 %v3336, %v3329
      %v4247 = vpack.c.b16 %v3337, %v3330
      %v4248 = vpack.c.b16 %v3338, %v3331
      %v4249 = vpack.c.b16 %v3339, %v3332
      %v4250 = vpack.c.b16 %v3340, %v3333
      %v4251 = vpack.c.b16 %v3348, %v3341
      %v4252 = vpack.c.b16 %v3349, %v3342
      %v4253 = vpack.c.b16 %v3350, %v3343
      %v4254 = vpack.c.b16 %v3351, %v3344
      %v4255 = vpack.c.b16 %v3352, %v3345
      %v4256 = vpack.c.b16 %v3353, %v3346
      %v4257 = vpack.c.b16 %v3354, %v3347
      %v4258 = vpack.c.b16 %v3362, %v3355
      %v4259 = vpack.c.b16 %v3363, %v3356
      %v4260 = vpack.c.b16 %v3364, %v3357
      %v4261 = vpack.c.b16 %v3365, %v3358
      %v4262 = vpack.c.b16 %v3366, %v3359
      %v4263 = vpack.c.b16 %v3367, %v3360
      %v4264 = vpack.c.b16 %v3368, %v3361
      %v4265 = vpack.c.b16 %v3376, %v3369
      %v4266 = vpack.c.b16 %v3377, %v3370
      %v4267 = vpack.c.b16 %v3378, %v3371
      %v4268 = vpack.c.b16 %v3379, %v3372
      %v4269 = vpack.c.b16 %v3380, %v3373
      %v4270 = vpack.c.b16 %v3381, %v3374
      %v4271 = vpack.c.b16 %v3382, %v3375
      %v4272 = vpack.c.b16 %v3390, %v3383
      %v4273 = vpack.c.b16 %v3391, %v3384
      %v4274 = vpack.c.b16 %v3392, %v3385
      %v4275 = vpack.c.b16 %v3393, %v3386
      %v4276 = vpack.c.b16 %v3394, %v3387
      %v4277 = vpack.c.b16 %v3395, %v3388
      %v4278 = vpack.c.b16 %v3396, %v3389
      %v4279 = vpack.c.b16 %v3404, %v3397
      %v4280 = vpack.c.b16 %v3405, %v3398
      %v4281 = vpack.c.b16 %v3406, %v3399
      %v4282 = vpack.c.b16 %v3407, %v3400
      %v4283 = vpack.c.b16 %v3408, %v3401
      %v4284 = vpack.c.b16 %v3409, %v3402
      %v4285 = vpack.c.b16 %v3410, %v3403
      %v4286 = vpack.c.b16 %v3418, %v3411
      %v4287 = vpack.c.b16 %v3419, %v3412
      %v4288 = vpack.c.b16 %v3420, %v3413
      %v4289 = vpack.c.b16 %v3421, %v3414
      %v4290 = vpack.c.b16 %v3422, %v3415
      %v4291 = vpack.c.b16 %v3423, %v3416
      %v4292 = vpack.c.b16 %v3424, %v3417
      %v4293 = vpack.c.b16 %v3432, %v3425
      %v4294 = vpack.c.b16 %v3433, %v3426
      %v4295 = vpack.c.b16 %v3434, %v3427
      %v4296 = vpack.c.b16 %v3435, %v3428
      %v4297 = vpack.c.b16 %v3436, %v3429
      %v4298 = vpack.c.b16 %v3437, %v3430
      %v4299 = vpack.c.b16 %v3438, %v3431
      %v4300 = vpack.c.b16 %v3446, %v3439
      %v4301 = vpack.c.b16 %v3447, %v3440
      %v4302 = vpack.c.b16 %v3448, %v3441
      %v4303 = vpack.c.b16 %v3449, %v3442
      %v4304 = vpack.c.b16 %v3450, %v3443
      %v4305 = vpack.c.b16 %v3451, %v3444
      %v4306 = vpack.c.b16 %v3452, %v3445
      %v4307 = vpack.c.b16 %v3460, %v3453
      %v4308 = vpack.c.b16 %v3461, %v3454
      %v4309 = vpack.c.b16 %v3462, %v3455
      %v4310 = vpack.c.b16 %v3463, %v3456
      %v4311 = vpack.c.b16 %v3464, %v3457
      %v4312 = vpack.c.b16 %v3465, %v3458
      %v4313 = vpack.c.b16 %v3466, %v3459
      %v4314 = vpack.c.b16 %v3474, %v3467
      %v4315 = vpack.c.b16 %v3475, %v3468
      %v4316 = vpack.c.b16 %v3476, %v3469
      %v4317 = vpack.c.b16 %v3477, %v3470
      %v4318 = vpack.c.b16 %v3478, %v3471
      %v4319 = vpack.c.b16 %v3479, %v3472
      %v4320 = vpack.c.b16 %v3480, %v3473
      %v4321 = vpack.c.b16 %v3488, %v3481
      %v4322 = vpack.c.b16 %v3489, %v3482
      %v4323 = vpack.c.b16 %v3490, %v3483
      %v4324 = vpack.c.b16 %v3491, %v3484
      %v4325 = vpack.c.b16 %v3492, %v3485
      %v4326 = vpack.c.b16 %v3493, %v3486
      %v4327 = vpack.c.b16 %v3494, %v3487
      %v4328 = vpack.c.b16 %v3502, %v3495
      %v4329 = vpack.c.b16 %v3503, %v3496
      %v4330 = vpack.c.b16 %v3504, %v3497
      %v4331 = vpack.c.b16 %v3505, %v3498
      %v4332 = vpack.c.b16 %v3506, %v3499
      %v4333 = vpack.c.b16 %v3507, %v3500
      %v4334 = vpack.c.b16 %v3508, %v3501
      %v4335 = vpack.c.b16 %v3516, %v3509
      %v4336 = vpack.c.b16 %v3517, %v3510
      %v4337 = vpack.c.b16 %v3518, %v3511
      %v4338 = vpack.c.b16 %v3519, %v3512
      %v4339 = vpack.c.b16 %v3520, %v3513
      %v4340 = vpack.c.b16 %v3521, %v3514
      %v4341 = vpack.c.b16 %v3522, %v3515
      %v4342 = vpack.c.b16 %v3530, %v3523
      %v4343 = vpack.c.b16 %v3531, %v3524
      %v4344 = vpack.c.b16 %v3532, %v3525
      %v4345 = vpack.c.b16 %v3533, %v3526
      %v4346 = vpack.c.b16 %v3534, %v3527
      %v4347 = vpack.c.b16 %v3535, %v3528
      %v4348 = vpack.c.b16 %v3536, %v3529
      %v4349 = vpack.c.b16 %v3544, %v3537
      %v4350 = vpack.c.b16 %v3545, %v3538
      %v4351 = vpack.c.b16 %v3546, %v3539
      %v4352 = vpack.c.b16 %v3547, %v3540
      %v4353 = vpack.c.b16 %v3548, %v3541
      %v4354 = vpack.c.b16 %v3549, %v3542
      %v4355 = vpack.c.b16 %v3550, %v3543
      %v4356 = vpack.c.b16 %v3558, %v3551
      %v4357 = vpack.c.b16 %v3559, %v3552
      %v4358 = vpack.c.b16 %v3560, %v3553
      %v4359 = vpack.c.b16 %v3561, %v3554
      %v4360 = vpack.c.b16 %v3562, %v3555
      %v4361 = vpack.c.b16 %v3563, %v3556
      %v4362 = vpack.c.b16 %v3564, %v3557
      %v4363 = vpack.c.b16 %v3572, %v3565
      %v4364 = vpack.c.b16 %v3573, %v3566
      %v4365 = vpack.c.b16 %v3574, %v3567
      %v4366 = vpack.c.b16 %v3575, %v3568
      %v4367 = vpack.c.b16 %v3576, %v3569
      %v4368 = vpack.c.b16 %v3577, %v3570
      %v4369 = vpack.c.b16 %v3578, %v3571
      %v4370 = vpack.c.b16 %v3586, %v3579
      %v4371 = vpack.c.b16 %v3587, %v3580
      %v4372 = vpack.c.b16 %v3588, %v3581
      %v4373 = vpack.c.b16 %v3589, %v3582
      %v4374 = vpack.c.b16 %v3590, %v3583
      %v4375 = vpack.c.b16 %v3591, %v3584
      %v4376 = vpack.c.b16 %v3592, %v3585
      %v4377 = vpack.c.b16 %v3600, %v3593
      %v4378 = vpack.c.b16 %v3601, %v3594
      %v4379 = vpack.c.b16 %v3602, %v3595
      %v4380 = vpack.c.b16 %v3603, %v3596
      %v4381 = vpack.c.b16 %v3604, %v3597
      %v4382 = vpack.c.b16 %v3605, %v3598
      %v4383 = vpack.c.b16 %v3606, %v3599
      %v4384 = vpack.c.b16 %v3614, %v3607
      %v4385 = vpack.c.b16 %v3615, %v3608
      %v4386 = vpack.c.b16 %v3616, %v3609
      %v4387 = vpack.c.b16 %v3617, %v3610
      %v4388 = vpack.c.b16 %v3618, %v3611
      %v4389 = vpack.c.b16 %v3619, %v3612
      %v4390 = vpack.c.b16 %v3620, %v3613
      %v4391 = vpack.c.b16 %v3628, %v3621
      %v4392 = vpack.c.b16 %v3629, %v3622
      %v4393 = vpack.c.b16 %v3630, %v3623
      %v4394 = vpack.c.b16 %v3631, %v3624
      %v4395 = vpack.c.b16 %v3632, %v3625
      %v4396 = vpack.c.b16 %v3633, %v3626
      %v4397 = vpack.c.b16 %v3634, %v3627
      %v4398 = vpack.c.b16 %v3642, %v3635
      %v4399 = vpack.c.b16 %v3643, %v3636
      %v4400 = vpack.c.b16 %v3644, %v3637
      %v4401 = vpack.c.b16 %v3645, %v3638
      %v4402 = vpack.c.b16 %v3646, %v3639
      %v4403 = vpack.c.b16 %v3647, %v3640
      %v4404 = vpack.c.b16 %v3648, %v3641
      %v4405 = vpack.c.b16 %v3656, %v3649
      %v4406 = vpack.c.b16 %v3657, %v3650
      %v4407 = vpack.c.b16 %v3658, %v3651
      %v4408 = vpack.c.b16 %v3659, %v3652
      %v4409 = vpack.c.b16 %v3660, %v3653
      %v4410 = vpack.c.b16 %v3661, %v3654
      %v4411 = vpack.c.b16 %v3662, %v3655
      %v4412 = vpack.c.b16 %v3670, %v3663
      %v4413 = vpack.c.b16 %v3671, %v3664
      %v4414 = vpack.c.b16 %v3672, %v3665
      %v4415 = vpack.c.b16 %v3673, %v3666
      %v4416 = vpack.c.b16 %v3674, %v3667
      %v4417 = vpack.c.b16 %v3675, %v3668
      %v4418 = vpack.c.b16 %v3676, %v3669
      %v4419 = vpack.c.b16 %v3684, %v3677
      %v4420 = vpack.c.b16 %v3685, %v3678
      %v4421 = vpack.c.b16 %v3686, %v3679
      %v4422 = vpack.c.b16 %v3687, %v3680
      %v4423 = vpack.c.b16 %v3688, %v3681
      %v4424 = vpack.c.b16 %v3689, %v3682
      %v4425 = vpack.c.b16 %v3690, %v3683
      %v4426 = vpack.c.b16 %v3698, %v3691
      %v4427 = vpack.c.b16 %v3699, %v3692
      %v4428 = vpack.c.b16 %v3700, %v3693
      %v4429 = vpack.c.b16 %v3701, %v3694
      %v4430 = vpack.c.b16 %v3702, %v3695
      %v4431 = vpack.c.b16 %v3703, %v3696
      %v4432 = vpack.c.b16 %v3704, %v3697
      %v4433 = vpack.c.b16 %v3712, %v3705
      %v4434 = vpack.c.b16 %v3713, %v3706
      %v4435 = vpack.c.b16 %v3714, %v3707
      %v4436 = vpack.c.b16 %v3715, %v3708
      %v4437 = vpack.c.b16 %v3716, %v3709
      %v4438 = vpack.c.b16 %v3717, %v3710
      %v4439 = vpack.c.b16 %v3718, %v3711
      %v4440 = vpack.c.b16 %v3726, %v3719
      %v4441 = vpack.c.b16 %v3727, %v3720
      %v4442 = vpack.c.b16 %v3728, %v3721
      %v4443 = vpack.c.b16 %v3729, %v3722
      %v4444 = vpack.c.b16 %v3730, %v3723
      %v4445 = vpack.c.b16 %v3731, %v3724
      %v4446 = vpack.c.b16 %v3732, %v3725
      %v4447 = vpack.c.b16 %v3740, %v3733
      %v4448 = vpack.c.b16 %v3741, %v3734
      %v4449 = vpack.c.b16 %v3742, %v3735
      %v4450 = vpack.c.b16 %v3743, %v3736
      %v4451 = vpack.c.b16 %v3744, %v3737
      %v4452 = vpack.c.b16 %v3745, %v3738
      %v4453 = vpack.c.b16 %v3746, %v3739
      %v4454 = vpack.c.b16 %v3754, %v3747
      %v4455 = vpack.c.b16 %v3755, %v3748
      %v4456 = vpack.c.b16 %v3756, %v3749
      %v4457 = vpack.c.b16 %v3757, %v3750
      %v4458 = vpack.c.b16 %v3758, %v3751
      %v4459 = vpack.c.b16 %v3759, %v3752
      %v4460 = vpack.c.b16 %v3760, %v3753
      %vm5161 = vcmask 523264
      %v5163 = vsel %vm5161, %v760, 0
      %5165 = vmatpush.bf16.msra.mxu0 %v3810
      %5166 = vmatpush.bf16.msra.mxu0 %v3803
      %5167 = vmatpush.bf16.msra.mxu0 %v3796
      %5168 = vmatpush.bf16.msra.mxu0 %v3789
      %5169 = vmatpush.bf16.msra.mxu0 %v3782
      %5170 = vmatpush.bf16.msra.mxu0 %v3775
      %5171 = vmatpush.bf16.msra.mxu0 %v3768
      %5172 = vmatpush.bf16.msra.mxu0 %v3761
      %5173 = vmatmul.bf16.gmra.mxu0 %v748
      %v5174 = vpop.f32.mrf.mxu0
      %v5175 = vadd.f32 0.0, %v5174
      %v5176 = vpop.f32.mrf.mxu0
      %5177 = vdwg.mxu0
      %5178 = vmatpush.bf16.msra.mxu0 %v3866
      %5179 = vmatpush.bf16.msra.mxu0 %v3859
      %5180 = vmatpush.bf16.msra.mxu0 %v3852
      %5181 = vmatpush.bf16.msra.mxu0 %v3845
      %5182 = vmatpush.bf16.msra.mxu0 %v3838
      %5183 = vmatpush.bf16.msra.mxu0 %v3831
      %5184 = vmatpush.bf16.msra.mxu0 %v3824
      %5185 = vmatpush.bf16.msra.mxu0 %v3817
      %5186 = vmatmul.bf16.gmra.mxu0 %v749
      %v5187 = vpop.f32.mrf.mxu0
      %v5188 = vadd.f32 %v5175, %v5187
      %v5189 = vpop.f32.mrf.mxu0
      %5190 = vdwg.mxu0
      %5191 = vmatpush.bf16.msra.mxu0 %v3922
      %5192 = vmatpush.bf16.msra.mxu0 %v3915
      %5193 = vmatpush.bf16.msra.mxu0 %v3908
      %5194 = vmatpush.bf16.msra.mxu0 %v3901
      %5195 = vmatpush.bf16.msra.mxu0 %v3894
      %5196 = vmatpush.bf16.msra.mxu0 %v3887
      %5197 = vmatpush.bf16.msra.mxu0 %v3880
      %5198 = vmatpush.bf16.msra.mxu0 %v3873
      %5199 = vmatmul.bf16.gmra.mxu0 %v750
      %v5200 = vpop.f32.mrf.mxu0
      %v5201 = vadd.f32 %v5188, %v5200
      %v5202 = vpop.f32.mrf.mxu0
      %5203 = vdwg.mxu0
      %5204 = vmatpush.bf16.msra.mxu0 %v3978
      %5205 = vmatpush.bf16.msra.mxu0 %v3971
      %5206 = vmatpush.bf16.msra.mxu0 %v3964
      %5207 = vmatpush.bf16.msra.mxu0 %v3957
      %5208 = vmatpush.bf16.msra.mxu0 %v3950
      %5209 = vmatpush.bf16.msra.mxu0 %v3943
      %5210 = vmatpush.bf16.msra.mxu0 %v3936
      %5211 = vmatpush.bf16.msra.mxu0 %v3929
      %5212 = vmatmul.bf16.gmra.mxu0 %v751
      %v5213 = vpop.f32.mrf.mxu0
      %v5214 = vadd.f32 %v5201, %v5213
      %v5215 = vpop.f32.mrf.mxu0
      %5216 = vdwg.mxu0
      %5217 = vmatpush.bf16.msra.mxu0 %v4034
      %5218 = vmatpush.bf16.msra.mxu0 %v4027
      %5219 = vmatpush.bf16.msra.mxu0 %v4020
      %5220 = vmatpush.bf16.msra.mxu0 %v4013
      %5221 = vmatpush.bf16.msra.mxu0 %v4006
      %5222 = vmatpush.bf16.msra.mxu0 %v3999
      %5223 = vmatpush.bf16.msra.mxu0 %v3992
      %5224 = vmatpush.bf16.msra.mxu0 %v3985
      %5225 = vmatmul.bf16.gmra.mxu0 %v752
      %v5226 = vpop.f32.mrf.mxu0
      %v5227 = vadd.f32 %v5214, %v5226
      %v5228 = vpop.f32.mrf.mxu0
      %5229 = vdwg.mxu0
      %5230 = vmatpush.bf16.msra.mxu0 %v4090
      %5231 = vmatpush.bf16.msra.mxu0 %v4083
      %5232 = vmatpush.bf16.msra.mxu0 %v4076
      %5233 = vmatpush.bf16.msra.mxu0 %v4069
      %5234 = vmatpush.bf16.msra.mxu0 %v4062
      %5235 = vmatpush.bf16.msra.mxu0 %v4055
      %5236 = vmatpush.bf16.msra.mxu0 %v4048
      %5237 = vmatpush.bf16.msra.mxu0 %v4041
      %5238 = vmatmul.bf16.gmra.mxu0 %v753
      %v5239 = vpop.f32.mrf.mxu0
      %v5240 = vadd.f32 %v5227, %v5239
      %v5241 = vpop.f32.mrf.mxu0
      %5242 = vdwg.mxu0
      %5243 = vmatpush.bf16.msra.mxu0 %v4146
      %5244 = vmatpush.bf16.msra.mxu0 %v4139
      %5245 = vmatpush.bf16.msra.mxu0 %v4132
      %5246 = vmatpush.bf16.msra.mxu0 %v4125
      %5247 = vmatpush.bf16.msra.mxu0 %v4118
      %5248 = vmatpush.bf16.msra.mxu0 %v4111
      %5249 = vmatpush.bf16.msra.mxu0 %v4104
      %5250 = vmatpush.bf16.msra.mxu0 %v4097
      %5251 = vmatmul.bf16.gmra.mxu0 %v754
      %v5252 = vpop.f32.mrf.mxu0
      %v5253 = vadd.f32 %v5240, %v5252
      %v5254 = vpop.f32.mrf.mxu0
      %5255 = vdwg.mxu0
      %5256 = vmatpush.bf16.msra.mxu0 %v4202
      %5257 = vmatpush.bf16.msra.mxu0 %v4195
      %5258 = vmatpush.bf16.msra.mxu0 %v4188
      %5259 = vmatpush.bf16.msra.mxu0 %v4181
      %5260 = vmatpush.bf16.msra.mxu0 %v4174
      %5261 = vmatpush.bf16.msra.mxu0 %v4167
      %5262 = vmatpush.bf16.msra.mxu0 %v4160
      %5263 = vmatpush.bf16.msra.mxu0 %v4153
      %5264 = vmatmul.bf16.gmra.mxu0 %v755
      %v5265 = vpop.f32.mrf.mxu0
      %v5266 = vadd.f32 %v5253, %v5265
      %v5267 = vpop.f32.mrf.mxu0
      %5268 = vdwg.mxu0
      %5269 = vmatpush.bf16.msra.mxu0 %v4258
      %5270 = vmatpush.bf16.msra.mxu0 %v4251
      %5271 = vmatpush.bf16.msra.mxu0 %v4244
      %5272 = vmatpush.bf16.msra.mxu0 %v4237
      %5273 = vmatpush.bf16.msra.mxu0 %v4230
      %5274 = vmatpush.bf16.msra.mxu0 %v4223
      %5275 = vmatpush.bf16.msra.mxu0 %v4216
      %5276 = vmatpush.bf16.msra.mxu0 %v4209
      %5277 = vmatmul.bf16.gmra.mxu0 %v756
      %v5278 = vpop.f32.mrf.mxu0
      %v5279 = vadd.f32 %v5266, %v5278
      %v5280 = vpop.f32.mrf.mxu0
      %5281 = vdwg.mxu0
      %5282 = vmatpush.bf16.msra.mxu0 %v4314
      %5283 = vmatpush.bf16.msra.mxu0 %v4307
      %5284 = vmatpush.bf16.msra.mxu0 %v4300
      %5285 = vmatpush.bf16.msra.mxu0 %v4293
      %5286 = vmatpush.bf16.msra.mxu0 %v4286
      %5287 = vmatpush.bf16.msra.mxu0 %v4279
      %5288 = vmatpush.bf16.msra.mxu0 %v4272
      %5289 = vmatpush.bf16.msra.mxu0 %v4265
      %5290 = vmatmul.bf16.gmra.mxu0 %v757
      %v5291 = vpop.f32.mrf.mxu0
      %v5292 = vadd.f32 %v5279, %v5291
      %v5293 = vpop.f32.mrf.mxu0
      %5294 = vdwg.mxu0
      %5295 = vmatpush.bf16.msra.mxu0 %v4370
      %5296 = vmatpush.bf16.msra.mxu0 %v4363
      %5297 = vmatpush.bf16.msra.mxu0 %v4356
      %5298 = vmatpush.bf16.msra.mxu0 %v4349
      %5299 = vmatpush.bf16.msra.mxu0 %v4342
      %5300 = vmatpush.bf16.msra.mxu0 %v4335
      %5301 = vmatpush.bf16.msra.mxu0 %v4328
      %5302 = vmatpush.bf16.msra.mxu0 %v4321
      %5303 = vmatmul.bf16.gmra.mxu0 %v758
      %v5304 = vpop.f32.mrf.mxu0
      %v5305 = vadd.f32 %v5292, %v5304
      %v5306 = vpop.f32.mrf.mxu0
      %5307 = vdwg.mxu0
      %5308 = vmatpush.bf16.msra.mxu0 %v4426
      %5309 = vmatpush.bf16.msra.mxu0 %v4419
      %5310 = vmatpush.bf16.msra.mxu0 %v4412
      %5311 = vmatpush.bf16.msra.mxu0 %v4405
      %5312 = vmatpush.bf16.msra.mxu0 %v4398
      %5313 = vmatpush.bf16.msra.mxu0 %v4391
      %5314 = vmatpush.bf16.msra.mxu0 %v4384
      %5315 = vmatpush.bf16.msra.mxu0 %v4377
      %5316 = vmatmul.bf16.gmra.mxu0 %v759
      %v5317 = vpop.f32.mrf.mxu0
      %v5318 = vadd.f32 %v5305, %v5317
      %v5319 = vpop.f32.mrf.mxu0
      %5320 = vdwg.mxu0
      %5321 = vmatpush.bf16.msra.mxu0 0
      %5322 = vmatpush.bf16.msra.mxu0 0
      %5323 = vmatpush.bf16.msra.mxu0 0
      %5324 = vmatpush.bf16.msra.mxu0 0
      %5325 = vmatpush.bf16.msra.mxu0 %v4454
      %5326 = vmatpush.bf16.msra.mxu0 %v4447
      %5327 = vmatpush.bf16.msra.mxu0 %v4440
      %5328 = vmatpush.bf16.msra.mxu0 %v4433
      %5329 = vmatmul.bf16.gmra.mxu0 %v5163
      %v5330 = vpop.f32.mrf.mxu0
      %v5331 = vadd.f32 %v5318, %v5330
      %v5332 = vpop.f32.mrf.mxu0
      %5333 = vdwg.mxu0
      %5334 = vmatpush.bf16.msra.mxu0 %v3811
      %5335 = vmatpush.bf16.msra.mxu0 %v3804
      %5336 = vmatpush.bf16.msra.mxu0 %v3797
      %5337 = vmatpush.bf16.msra.mxu0 %v3790
      %5338 = vmatpush.bf16.msra.mxu0 %v3783
      %5339 = vmatpush.bf16.msra.mxu0 %v3776
      %5340 = vmatpush.bf16.msra.mxu0 %v3769
      %5341 = vmatpush.bf16.msra.mxu0 %v3762
      %5342 = vmatmul.bf16.gmra.mxu0 %v748
      %v5343 = vpop.f32.mrf.mxu0
      %v5344 = vadd.f32 0.0, %v5343
      %v5345 = vpop.f32.mrf.mxu0
      %5346 = vdwg.mxu0
      %5347 = vmatpush.bf16.msra.mxu0 %v3867
      %5348 = vmatpush.bf16.msra.mxu0 %v3860
      %5349 = vmatpush.bf16.msra.mxu0 %v3853
      %5350 = vmatpush.bf16.msra.mxu0 %v3846
      %5351 = vmatpush.bf16.msra.mxu0 %v3839
      %5352 = vmatpush.bf16.msra.mxu0 %v3832
      %5353 = vmatpush.bf16.msra.mxu0 %v3825
      %5354 = vmatpush.bf16.msra.mxu0 %v3818
      %5355 = vmatmul.bf16.gmra.mxu0 %v749
      %v5356 = vpop.f32.mrf.mxu0
      %v5357 = vadd.f32 %v5344, %v5356
      %v5358 = vpop.f32.mrf.mxu0
      %5359 = vdwg.mxu0
      %5360 = vmatpush.bf16.msra.mxu0 %v3923
      %5361 = vmatpush.bf16.msra.mxu0 %v3916
      %5362 = vmatpush.bf16.msra.mxu0 %v3909
      %5363 = vmatpush.bf16.msra.mxu0 %v3902
      %5364 = vmatpush.bf16.msra.mxu0 %v3895
      %5365 = vmatpush.bf16.msra.mxu0 %v3888
      %5366 = vmatpush.bf16.msra.mxu0 %v3881
      %5367 = vmatpush.bf16.msra.mxu0 %v3874
      %5368 = vmatmul.bf16.gmra.mxu0 %v750
      %v5369 = vpop.f32.mrf.mxu0
      %v5370 = vadd.f32 %v5357, %v5369
      %v5371 = vpop.f32.mrf.mxu0
      %5372 = vdwg.mxu0
      %5373 = vmatpush.bf16.msra.mxu0 %v3979
      %5374 = vmatpush.bf16.msra.mxu0 %v3972
      %5375 = vmatpush.bf16.msra.mxu0 %v3965
      %5376 = vmatpush.bf16.msra.mxu0 %v3958
      %5377 = vmatpush.bf16.msra.mxu0 %v3951
      %5378 = vmatpush.bf16.msra.mxu0 %v3944
      %5379 = vmatpush.bf16.msra.mxu0 %v3937
      %5380 = vmatpush.bf16.msra.mxu0 %v3930
      %5381 = vmatmul.bf16.gmra.mxu0 %v751
      %v5382 = vpop.f32.mrf.mxu0
      %v5383 = vadd.f32 %v5370, %v5382
      %v5384 = vpop.f32.mrf.mxu0
      %5385 = vdwg.mxu0
      %5386 = vmatpush.bf16.msra.mxu0 %v4035
      %5387 = vmatpush.bf16.msra.mxu0 %v4028
      %5388 = vmatpush.bf16.msra.mxu0 %v4021
      %5389 = vmatpush.bf16.msra.mxu0 %v4014
      %5390 = vmatpush.bf16.msra.mxu0 %v4007
      %5391 = vmatpush.bf16.msra.mxu0 %v4000
      %5392 = vmatpush.bf16.msra.mxu0 %v3993
      %5393 = vmatpush.bf16.msra.mxu0 %v3986
      %5394 = vmatmul.bf16.gmra.mxu0 %v752
      %v5395 = vpop.f32.mrf.mxu0
      %v5396 = vadd.f32 %v5383, %v5395
      %v5397 = vpop.f32.mrf.mxu0
      %5398 = vdwg.mxu0
      %5399 = vmatpush.bf16.msra.mxu0 %v4091
      %5400 = vmatpush.bf16.msra.mxu0 %v4084
      %5401 = vmatpush.bf16.msra.mxu0 %v4077
      %5402 = vmatpush.bf16.msra.mxu0 %v4070
      %5403 = vmatpush.bf16.msra.mxu0 %v4063
      %5404 = vmatpush.bf16.msra.mxu0 %v4056
      %5405 = vmatpush.bf16.msra.mxu0 %v4049
      %5406 = vmatpush.bf16.msra.mxu0 %v4042
      %5407 = vmatmul.bf16.gmra.mxu0 %v753
      %v5408 = vpop.f32.mrf.mxu0
      %v5409 = vadd.f32 %v5396, %v5408
      %v5410 = vpop.f32.mrf.mxu0
      %5411 = vdwg.mxu0
      %5412 = vmatpush.bf16.msra.mxu0 %v4147
      %5413 = vmatpush.bf16.msra.mxu0 %v4140
      %5414 = vmatpush.bf16.msra.mxu0 %v4133
      %5415 = vmatpush.bf16.msra.mxu0 %v4126
      %5416 = vmatpush.bf16.msra.mxu0 %v4119
      %5417 = vmatpush.bf16.msra.mxu0 %v4112
      %5418 = vmatpush.bf16.msra.mxu0 %v4105
      %5419 = vmatpush.bf16.msra.mxu0 %v4098
      %5420 = vmatmul.bf16.gmra.mxu0 %v754
      %v5421 = vpop.f32.mrf.mxu0
      %v5422 = vadd.f32 %v5409, %v5421
      %v5423 = vpop.f32.mrf.mxu0
      %5424 = vdwg.mxu0
      %5425 = vmatpush.bf16.msra.mxu0 %v4203
      %5426 = vmatpush.bf16.msra.mxu0 %v4196
      %5427 = vmatpush.bf16.msra.mxu0 %v4189
      %5428 = vmatpush.bf16.msra.mxu0 %v4182
      %5429 = vmatpush.bf16.msra.mxu0 %v4175
      %5430 = vmatpush.bf16.msra.mxu0 %v4168
      %5431 = vmatpush.bf16.msra.mxu0 %v4161
      %5432 = vmatpush.bf16.msra.mxu0 %v4154
      %5433 = vmatmul.bf16.gmra.mxu0 %v755
      %v5434 = vpop.f32.mrf.mxu0
      %v5435 = vadd.f32 %v5422, %v5434
      %v5436 = vpop.f32.mrf.mxu0
      %5437 = vdwg.mxu0
      %5438 = vmatpush.bf16.msra.mxu0 %v4259
      %5439 = vmatpush.bf16.msra.mxu0 %v4252
      %5440 = vmatpush.bf16.msra.mxu0 %v4245
      %5441 = vmatpush.bf16.msra.mxu0 %v4238
      %5442 = vmatpush.bf16.msra.mxu0 %v4231
      %5443 = vmatpush.bf16.msra.mxu0 %v4224
      %5444 = vmatpush.bf16.msra.mxu0 %v4217
      %5445 = vmatpush.bf16.msra.mxu0 %v4210
      %5446 = vmatmul.bf16.gmra.mxu0 %v756
      %v5447 = vpop.f32.mrf.mxu0
      %v5448 = vadd.f32 %v5435, %v5447
      %v5449 = vpop.f32.mrf.mxu0
      %5450 = vdwg.mxu0
      %5451 = vmatpush.bf16.msra.mxu0 %v4315
      %5452 = vmatpush.bf16.msra.mxu0 %v4308
      %5453 = vmatpush.bf16.msra.mxu0 %v4301
      %5454 = vmatpush.bf16.msra.mxu0 %v4294
      %5455 = vmatpush.bf16.msra.mxu0 %v4287
      %5456 = vmatpush.bf16.msra.mxu0 %v4280
      %5457 = vmatpush.bf16.msra.mxu0 %v4273
      %5458 = vmatpush.bf16.msra.mxu0 %v4266
      %5459 = vmatmul.bf16.gmra.mxu0 %v757
      %v5460 = vpop.f32.mrf.mxu0
      %v5461 = vadd.f32 %v5448, %v5460
      %v5462 = vpop.f32.mrf.mxu0
      %5463 = vdwg.mxu0
      %5464 = vmatpush.bf16.msra.mxu0 %v4371
      %5465 = vmatpush.bf16.msra.mxu0 %v4364
      %5466 = vmatpush.bf16.msra.mxu0 %v4357
      %5467 = vmatpush.bf16.msra.mxu0 %v4350
      %5468 = vmatpush.bf16.msra.mxu0 %v4343
      %5469 = vmatpush.bf16.msra.mxu0 %v4336
      %5470 = vmatpush.bf16.msra.mxu0 %v4329
      %5471 = vmatpush.bf16.msra.mxu0 %v4322
      %5472 = vmatmul.bf16.gmra.mxu0 %v758
      %v5473 = vpop.f32.mrf.mxu0
      %v5474 = vadd.f32 %v5461, %v5473
      %v5475 = vpop.f32.mrf.mxu0
      %5476 = vdwg.mxu0
      %5477 = vmatpush.bf16.msra.mxu0 %v4427
      %5478 = vmatpush.bf16.msra.mxu0 %v4420
      %5479 = vmatpush.bf16.msra.mxu0 %v4413
      %5480 = vmatpush.bf16.msra.mxu0 %v4406
      %5481 = vmatpush.bf16.msra.mxu0 %v4399
      %5482 = vmatpush.bf16.msra.mxu0 %v4392
      %5483 = vmatpush.bf16.msra.mxu0 %v4385
      %5484 = vmatpush.bf16.msra.mxu0 %v4378
      %5485 = vmatmul.bf16.gmra.mxu0 %v759
      %v5486 = vpop.f32.mrf.mxu0
      %v5487 = vadd.f32 %v5474, %v5486
      %v5488 = vpop.f32.mrf.mxu0
      %5489 = vdwg.mxu0
      %5490 = vmatpush.bf16.msra.mxu0 0
      %5491 = vmatpush.bf16.msra.mxu0 0
      %5492 = vmatpush.bf16.msra.mxu0 0
      %5493 = vmatpush.bf16.msra.mxu0 0
      %5494 = vmatpush.bf16.msra.mxu0 %v4455
      %5495 = vmatpush.bf16.msra.mxu0 %v4448
      %5496 = vmatpush.bf16.msra.mxu0 %v4441
      %5497 = vmatpush.bf16.msra.mxu0 %v4434
      %5498 = vmatmul.bf16.gmra.mxu0 %v5163
      %v5499 = vpop.f32.mrf.mxu0
      %v5500 = vadd.f32 %v5487, %v5499
      %v5501 = vpop.f32.mrf.mxu0
      %5502 = vdwg.mxu0
      %5503 = vmatpush.bf16.msra.mxu0 %v3812
      %5504 = vmatpush.bf16.msra.mxu0 %v3805
      %5505 = vmatpush.bf16.msra.mxu0 %v3798
      %5506 = vmatpush.bf16.msra.mxu0 %v3791
      %5507 = vmatpush.bf16.msra.mxu0 %v3784
      %5508 = vmatpush.bf16.msra.mxu0 %v3777
      %5509 = vmatpush.bf16.msra.mxu0 %v3770
      %5510 = vmatpush.bf16.msra.mxu0 %v3763
      %5511 = vmatmul.bf16.gmra.mxu0 %v748
      %v5512 = vpop.f32.mrf.mxu0
      %v5513 = vadd.f32 0.0, %v5512
      %v5514 = vpop.f32.mrf.mxu0
      %5515 = vdwg.mxu0
      %5516 = vmatpush.bf16.msra.mxu0 %v3868
      %5517 = vmatpush.bf16.msra.mxu0 %v3861
      %5518 = vmatpush.bf16.msra.mxu0 %v3854
      %5519 = vmatpush.bf16.msra.mxu0 %v3847
      %5520 = vmatpush.bf16.msra.mxu0 %v3840
      %5521 = vmatpush.bf16.msra.mxu0 %v3833
      %5522 = vmatpush.bf16.msra.mxu0 %v3826
      %5523 = vmatpush.bf16.msra.mxu0 %v3819
      %5524 = vmatmul.bf16.gmra.mxu0 %v749
      %v5525 = vpop.f32.mrf.mxu0
      %v5526 = vadd.f32 %v5513, %v5525
      %v5527 = vpop.f32.mrf.mxu0
      %5528 = vdwg.mxu0
      %5529 = vmatpush.bf16.msra.mxu0 %v3924
      %5530 = vmatpush.bf16.msra.mxu0 %v3917
      %5531 = vmatpush.bf16.msra.mxu0 %v3910
      %5532 = vmatpush.bf16.msra.mxu0 %v3903
      %5533 = vmatpush.bf16.msra.mxu0 %v3896
      %5534 = vmatpush.bf16.msra.mxu0 %v3889
      %5535 = vmatpush.bf16.msra.mxu0 %v3882
      %5536 = vmatpush.bf16.msra.mxu0 %v3875
      %5537 = vmatmul.bf16.gmra.mxu0 %v750
      %v5538 = vpop.f32.mrf.mxu0
      %v5539 = vadd.f32 %v5526, %v5538
      %v5540 = vpop.f32.mrf.mxu0
      %5541 = vdwg.mxu0
      %5542 = vmatpush.bf16.msra.mxu0 %v3980
      %5543 = vmatpush.bf16.msra.mxu0 %v3973
      %5544 = vmatpush.bf16.msra.mxu0 %v3966
      %5545 = vmatpush.bf16.msra.mxu0 %v3959
      %5546 = vmatpush.bf16.msra.mxu0 %v3952
      %5547 = vmatpush.bf16.msra.mxu0 %v3945
      %5548 = vmatpush.bf16.msra.mxu0 %v3938
      %5549 = vmatpush.bf16.msra.mxu0 %v3931
      %5550 = vmatmul.bf16.gmra.mxu0 %v751
      %v5551 = vpop.f32.mrf.mxu0
      %v5552 = vadd.f32 %v5539, %v5551
      %v5553 = vpop.f32.mrf.mxu0
      %5554 = vdwg.mxu0
      %5555 = vmatpush.bf16.msra.mxu0 %v4036
      %5556 = vmatpush.bf16.msra.mxu0 %v4029
      %5557 = vmatpush.bf16.msra.mxu0 %v4022
      %5558 = vmatpush.bf16.msra.mxu0 %v4015
      %5559 = vmatpush.bf16.msra.mxu0 %v4008
      %5560 = vmatpush.bf16.msra.mxu0 %v4001
      %5561 = vmatpush.bf16.msra.mxu0 %v3994
      %5562 = vmatpush.bf16.msra.mxu0 %v3987
      %5563 = vmatmul.bf16.gmra.mxu0 %v752
      %v5564 = vpop.f32.mrf.mxu0
      %v5565 = vadd.f32 %v5552, %v5564
      %v5566 = vpop.f32.mrf.mxu0
      %5567 = vdwg.mxu0
      %5568 = vmatpush.bf16.msra.mxu0 %v4092
      %5569 = vmatpush.bf16.msra.mxu0 %v4085
      %5570 = vmatpush.bf16.msra.mxu0 %v4078
      %5571 = vmatpush.bf16.msra.mxu0 %v4071
      %5572 = vmatpush.bf16.msra.mxu0 %v4064
      %5573 = vmatpush.bf16.msra.mxu0 %v4057
      %5574 = vmatpush.bf16.msra.mxu0 %v4050
      %5575 = vmatpush.bf16.msra.mxu0 %v4043
      %5576 = vmatmul.bf16.gmra.mxu0 %v753
      %v5577 = vpop.f32.mrf.mxu0
      %v5578 = vadd.f32 %v5565, %v5577
      %v5579 = vpop.f32.mrf.mxu0
      %5580 = vdwg.mxu0
      %5581 = vmatpush.bf16.msra.mxu0 %v4148
      %5582 = vmatpush.bf16.msra.mxu0 %v4141
      %5583 = vmatpush.bf16.msra.mxu0 %v4134
      %5584 = vmatpush.bf16.msra.mxu0 %v4127
      %5585 = vmatpush.bf16.msra.mxu0 %v4120
      %5586 = vmatpush.bf16.msra.mxu0 %v4113
      %5587 = vmatpush.bf16.msra.mxu0 %v4106
      %5588 = vmatpush.bf16.msra.mxu0 %v4099
      %5589 = vmatmul.bf16.gmra.mxu0 %v754
      %v5590 = vpop.f32.mrf.mxu0
      %v5591 = vadd.f32 %v5578, %v5590
      %v5592 = vpop.f32.mrf.mxu0
      %5593 = vdwg.mxu0
      %5594 = vmatpush.bf16.msra.mxu0 %v4204
      %5595 = vmatpush.bf16.msra.mxu0 %v4197
      %5596 = vmatpush.bf16.msra.mxu0 %v4190
      %5597 = vmatpush.bf16.msra.mxu0 %v4183
      %5598 = vmatpush.bf16.msra.mxu0 %v4176
      %5599 = vmatpush.bf16.msra.mxu0 %v4169
      %5600 = vmatpush.bf16.msra.mxu0 %v4162
      %5601 = vmatpush.bf16.msra.mxu0 %v4155
      %5602 = vmatmul.bf16.gmra.mxu0 %v755
      %v5603 = vpop.f32.mrf.mxu0
      %v5604 = vadd.f32 %v5591, %v5603
      %v5605 = vpop.f32.mrf.mxu0
      %5606 = vdwg.mxu0
      %5607 = vmatpush.bf16.msra.mxu0 %v4260
      %5608 = vmatpush.bf16.msra.mxu0 %v4253
      %5609 = vmatpush.bf16.msra.mxu0 %v4246
      %5610 = vmatpush.bf16.msra.mxu0 %v4239
      %5611 = vmatpush.bf16.msra.mxu0 %v4232
      %5612 = vmatpush.bf16.msra.mxu0 %v4225
      %5613 = vmatpush.bf16.msra.mxu0 %v4218
      %5614 = vmatpush.bf16.msra.mxu0 %v4211
      %5615 = vmatmul.bf16.gmra.mxu0 %v756
      %v5616 = vpop.f32.mrf.mxu0
      %v5617 = vadd.f32 %v5604, %v5616
      %v5618 = vpop.f32.mrf.mxu0
      %5619 = vdwg.mxu0
      %5620 = vmatpush.bf16.msra.mxu0 %v4316
      %5621 = vmatpush.bf16.msra.mxu0 %v4309
      %5622 = vmatpush.bf16.msra.mxu0 %v4302
      %5623 = vmatpush.bf16.msra.mxu0 %v4295
      %5624 = vmatpush.bf16.msra.mxu0 %v4288
      %5625 = vmatpush.bf16.msra.mxu0 %v4281
      %5626 = vmatpush.bf16.msra.mxu0 %v4274
      %5627 = vmatpush.bf16.msra.mxu0 %v4267
      %5628 = vmatmul.bf16.gmra.mxu0 %v757
      %v5629 = vpop.f32.mrf.mxu0
      %v5630 = vadd.f32 %v5617, %v5629
      %v5631 = vpop.f32.mrf.mxu0
      %5632 = vdwg.mxu0
      %5633 = vmatpush.bf16.msra.mxu0 %v4372
      %5634 = vmatpush.bf16.msra.mxu0 %v4365
      %5635 = vmatpush.bf16.msra.mxu0 %v4358
      %5636 = vmatpush.bf16.msra.mxu0 %v4351
      %5637 = vmatpush.bf16.msra.mxu0 %v4344
      %5638 = vmatpush.bf16.msra.mxu0 %v4337
      %5639 = vmatpush.bf16.msra.mxu0 %v4330
      %5640 = vmatpush.bf16.msra.mxu0 %v4323
      %5641 = vmatmul.bf16.gmra.mxu0 %v758
      %v5642 = vpop.f32.mrf.mxu0
      %v5643 = vadd.f32 %v5630, %v5642
      %v5644 = vpop.f32.mrf.mxu0
      %5645 = vdwg.mxu0
      %5646 = vmatpush.bf16.msra.mxu0 %v4428
      %5647 = vmatpush.bf16.msra.mxu0 %v4421
      %5648 = vmatpush.bf16.msra.mxu0 %v4414
      %5649 = vmatpush.bf16.msra.mxu0 %v4407
      %5650 = vmatpush.bf16.msra.mxu0 %v4400
      %5651 = vmatpush.bf16.msra.mxu0 %v4393
      %5652 = vmatpush.bf16.msra.mxu0 %v4386
      %5653 = vmatpush.bf16.msra.mxu0 %v4379
      %5654 = vmatmul.bf16.gmra.mxu0 %v759
      %v5655 = vpop.f32.mrf.mxu0
      %v5656 = vadd.f32 %v5643, %v5655
      %v5657 = vpop.f32.mrf.mxu0
      %5658 = vdwg.mxu0
      %5659 = vmatpush.bf16.msra.mxu0 0
      %5660 = vmatpush.bf16.msra.mxu0 0
      %5661 = vmatpush.bf16.msra.mxu0 0
      %5662 = vmatpush.bf16.msra.mxu0 0
      %5663 = vmatpush.bf16.msra.mxu0 %v4456
      %5664 = vmatpush.bf16.msra.mxu0 %v4449
      %5665 = vmatpush.bf16.msra.mxu0 %v4442
      %5666 = vmatpush.bf16.msra.mxu0 %v4435
      %5667 = vmatmul.bf16.gmra.mxu0 %v5163
      %v5668 = vpop.f32.mrf.mxu0
      %v5669 = vadd.f32 %v5656, %v5668
      %v5670 = vpop.f32.mrf.mxu0
      %5671 = vdwg.mxu0
      %5672 = vmatpush.bf16.msra.mxu0 %v3813
      %5673 = vmatpush.bf16.msra.mxu0 %v3806
      %5674 = vmatpush.bf16.msra.mxu0 %v3799
      %5675 = vmatpush.bf16.msra.mxu0 %v3792
      %5676 = vmatpush.bf16.msra.mxu0 %v3785
      %5677 = vmatpush.bf16.msra.mxu0 %v3778
      %5678 = vmatpush.bf16.msra.mxu0 %v3771
      %5679 = vmatpush.bf16.msra.mxu0 %v3764
      %5680 = vmatmul.bf16.gmra.mxu0 %v748
      %v5681 = vpop.f32.mrf.mxu0
      %v5682 = vadd.f32 0.0, %v5681
      %v5683 = vpop.f32.mrf.mxu0
      %5684 = vdwg.mxu0
      %5685 = vmatpush.bf16.msra.mxu0 %v3869
      %5686 = vmatpush.bf16.msra.mxu0 %v3862
      %5687 = vmatpush.bf16.msra.mxu0 %v3855
      %5688 = vmatpush.bf16.msra.mxu0 %v3848
      %5689 = vmatpush.bf16.msra.mxu0 %v3841
      %5690 = vmatpush.bf16.msra.mxu0 %v3834
      %5691 = vmatpush.bf16.msra.mxu0 %v3827
      %5692 = vmatpush.bf16.msra.mxu0 %v3820
      %5693 = vmatmul.bf16.gmra.mxu0 %v749
      %v5694 = vpop.f32.mrf.mxu0
      %v5695 = vadd.f32 %v5682, %v5694
      %v5696 = vpop.f32.mrf.mxu0
      %5697 = vdwg.mxu0
      %5698 = vmatpush.bf16.msra.mxu0 %v3925
      %5699 = vmatpush.bf16.msra.mxu0 %v3918
      %5700 = vmatpush.bf16.msra.mxu0 %v3911
      %5701 = vmatpush.bf16.msra.mxu0 %v3904
      %5702 = vmatpush.bf16.msra.mxu0 %v3897
      %5703 = vmatpush.bf16.msra.mxu0 %v3890
      %5704 = vmatpush.bf16.msra.mxu0 %v3883
      %5705 = vmatpush.bf16.msra.mxu0 %v3876
      %5706 = vmatmul.bf16.gmra.mxu0 %v750
      %v5707 = vpop.f32.mrf.mxu0
      %v5708 = vadd.f32 %v5695, %v5707
      %v5709 = vpop.f32.mrf.mxu0
      %5710 = vdwg.mxu0
      %5711 = vmatpush.bf16.msra.mxu0 %v3981
      %5712 = vmatpush.bf16.msra.mxu0 %v3974
      %5713 = vmatpush.bf16.msra.mxu0 %v3967
      %5714 = vmatpush.bf16.msra.mxu0 %v3960
      %5715 = vmatpush.bf16.msra.mxu0 %v3953
      %5716 = vmatpush.bf16.msra.mxu0 %v3946
      %5717 = vmatpush.bf16.msra.mxu0 %v3939
      %5718 = vmatpush.bf16.msra.mxu0 %v3932
      %5719 = vmatmul.bf16.gmra.mxu0 %v751
      %v5720 = vpop.f32.mrf.mxu0
      %v5721 = vadd.f32 %v5708, %v5720
      %v5722 = vpop.f32.mrf.mxu0
      %5723 = vdwg.mxu0
      %5724 = vmatpush.bf16.msra.mxu0 %v4037
      %5725 = vmatpush.bf16.msra.mxu0 %v4030
      %5726 = vmatpush.bf16.msra.mxu0 %v4023
      %5727 = vmatpush.bf16.msra.mxu0 %v4016
      %5728 = vmatpush.bf16.msra.mxu0 %v4009
      %5729 = vmatpush.bf16.msra.mxu0 %v4002
      %5730 = vmatpush.bf16.msra.mxu0 %v3995
      %5731 = vmatpush.bf16.msra.mxu0 %v3988
      %5732 = vmatmul.bf16.gmra.mxu0 %v752
      %v5733 = vpop.f32.mrf.mxu0
      %v5734 = vadd.f32 %v5721, %v5733
      %v5735 = vpop.f32.mrf.mxu0
      %5736 = vdwg.mxu0
      %5737 = vmatpush.bf16.msra.mxu0 %v4093
      %5738 = vmatpush.bf16.msra.mxu0 %v4086
      %5739 = vmatpush.bf16.msra.mxu0 %v4079
      %5740 = vmatpush.bf16.msra.mxu0 %v4072
      %5741 = vmatpush.bf16.msra.mxu0 %v4065
      %5742 = vmatpush.bf16.msra.mxu0 %v4058
      %5743 = vmatpush.bf16.msra.mxu0 %v4051
      %5744 = vmatpush.bf16.msra.mxu0 %v4044
      %5745 = vmatmul.bf16.gmra.mxu0 %v753
      %v5746 = vpop.f32.mrf.mxu0
      %v5747 = vadd.f32 %v5734, %v5746
      %v5748 = vpop.f32.mrf.mxu0
      %5749 = vdwg.mxu0
      %5750 = vmatpush.bf16.msra.mxu0 %v4149
      %5751 = vmatpush.bf16.msra.mxu0 %v4142
      %5752 = vmatpush.bf16.msra.mxu0 %v4135
      %5753 = vmatpush.bf16.msra.mxu0 %v4128
      %5754 = vmatpush.bf16.msra.mxu0 %v4121
      %5755 = vmatpush.bf16.msra.mxu0 %v4114
      %5756 = vmatpush.bf16.msra.mxu0 %v4107
      %5757 = vmatpush.bf16.msra.mxu0 %v4100
      %5758 = vmatmul.bf16.gmra.mxu0 %v754
      %v5759 = vpop.f32.mrf.mxu0
      %v5760 = vadd.f32 %v5747, %v5759
      %v5761 = vpop.f32.mrf.mxu0
      %5762 = vdwg.mxu0
      %5763 = vmatpush.bf16.msra.mxu0 %v4205
      %5764 = vmatpush.bf16.msra.mxu0 %v4198
      %5765 = vmatpush.bf16.msra.mxu0 %v4191
      %5766 = vmatpush.bf16.msra.mxu0 %v4184
      %5767 = vmatpush.bf16.msra.mxu0 %v4177
      %5768 = vmatpush.bf16.msra.mxu0 %v4170
      %5769 = vmatpush.bf16.msra.mxu0 %v4163
      %5770 = vmatpush.bf16.msra.mxu0 %v4156
      %5771 = vmatmul.bf16.gmra.mxu0 %v755
      %v5772 = vpop.f32.mrf.mxu0
      %v5773 = vadd.f32 %v5760, %v5772
      %v5774 = vpop.f32.mrf.mxu0
      %5775 = vdwg.mxu0
      %5776 = vmatpush.bf16.msra.mxu0 %v4261
      %5777 = vmatpush.bf16.msra.mxu0 %v4254
      %5778 = vmatpush.bf16.msra.mxu0 %v4247
      %5779 = vmatpush.bf16.msra.mxu0 %v4240
      %5780 = vmatpush.bf16.msra.mxu0 %v4233
      %5781 = vmatpush.bf16.msra.mxu0 %v4226
      %5782 = vmatpush.bf16.msra.mxu0 %v4219
      %5783 = vmatpush.bf16.msra.mxu0 %v4212
      %5784 = vmatmul.bf16.gmra.mxu0 %v756
      %v5785 = vpop.f32.mrf.mxu0
      %v5786 = vadd.f32 %v5773, %v5785
      %v5787 = vpop.f32.mrf.mxu0
      %5788 = vdwg.mxu0
      %5789 = vmatpush.bf16.msra.mxu0 %v4317
      %5790 = vmatpush.bf16.msra.mxu0 %v4310
      %5791 = vmatpush.bf16.msra.mxu0 %v4303
      %5792 = vmatpush.bf16.msra.mxu0 %v4296
      %5793 = vmatpush.bf16.msra.mxu0 %v4289
      %5794 = vmatpush.bf16.msra.mxu0 %v4282
      %5795 = vmatpush.bf16.msra.mxu0 %v4275
      %5796 = vmatpush.bf16.msra.mxu0 %v4268
      %5797 = vmatmul.bf16.gmra.mxu0 %v757
      %v5798 = vpop.f32.mrf.mxu0
      %v5799 = vadd.f32 %v5786, %v5798
      %v5800 = vpop.f32.mrf.mxu0
      %5801 = vdwg.mxu0
      %5802 = vmatpush.bf16.msra.mxu0 %v4373
      %5803 = vmatpush.bf16.msra.mxu0 %v4366
      %5804 = vmatpush.bf16.msra.mxu0 %v4359
      %5805 = vmatpush.bf16.msra.mxu0 %v4352
      %5806 = vmatpush.bf16.msra.mxu0 %v4345
      %5807 = vmatpush.bf16.msra.mxu0 %v4338
      %5808 = vmatpush.bf16.msra.mxu0 %v4331
      %5809 = vmatpush.bf16.msra.mxu0 %v4324
      %5810 = vmatmul.bf16.gmra.mxu0 %v758
      %v5811 = vpop.f32.mrf.mxu0
      %v5812 = vadd.f32 %v5799, %v5811
      %v5813 = vpop.f32.mrf.mxu0
      %5814 = vdwg.mxu0
      %5815 = vmatpush.bf16.msra.mxu0 %v4429
      %5816 = vmatpush.bf16.msra.mxu0 %v4422
      %5817 = vmatpush.bf16.msra.mxu0 %v4415
      %5818 = vmatpush.bf16.msra.mxu0 %v4408
      %5819 = vmatpush.bf16.msra.mxu0 %v4401
      %5820 = vmatpush.bf16.msra.mxu0 %v4394
      %5821 = vmatpush.bf16.msra.mxu0 %v4387
      %5822 = vmatpush.bf16.msra.mxu0 %v4380
      %5823 = vmatmul.bf16.gmra.mxu0 %v759
      %v5824 = vpop.f32.mrf.mxu0
      %v5825 = vadd.f32 %v5812, %v5824
      %v5826 = vpop.f32.mrf.mxu0
      %5827 = vdwg.mxu0
      %5828 = vmatpush.bf16.msra.mxu0 0
      %5829 = vmatpush.bf16.msra.mxu0 0
      %5830 = vmatpush.bf16.msra.mxu0 0
      %5831 = vmatpush.bf16.msra.mxu0 0
      %5832 = vmatpush.bf16.msra.mxu0 %v4457
      %5833 = vmatpush.bf16.msra.mxu0 %v4450
      %5834 = vmatpush.bf16.msra.mxu0 %v4443
      %5835 = vmatpush.bf16.msra.mxu0 %v4436
      %5836 = vmatmul.bf16.gmra.mxu0 %v5163
      %v5837 = vpop.f32.mrf.mxu0
      %v5838 = vadd.f32 %v5825, %v5837
      %v5839 = vpop.f32.mrf.mxu0
      %5840 = vdwg.mxu0
      %5841 = vmatpush.bf16.msra.mxu0 %v3814
      %5842 = vmatpush.bf16.msra.mxu0 %v3807
      %5843 = vmatpush.bf16.msra.mxu0 %v3800
      %5844 = vmatpush.bf16.msra.mxu0 %v3793
      %5845 = vmatpush.bf16.msra.mxu0 %v3786
      %5846 = vmatpush.bf16.msra.mxu0 %v3779
      %5847 = vmatpush.bf16.msra.mxu0 %v3772
      %5848 = vmatpush.bf16.msra.mxu0 %v3765
      %5849 = vmatmul.bf16.gmra.mxu0 %v748
      %v5850 = vpop.f32.mrf.mxu0
      %v5851 = vadd.f32 0.0, %v5850
      %v5852 = vpop.f32.mrf.mxu0
      %5853 = vdwg.mxu0
      %5854 = vmatpush.bf16.msra.mxu0 %v3870
      %5855 = vmatpush.bf16.msra.mxu0 %v3863
      %5856 = vmatpush.bf16.msra.mxu0 %v3856
      %5857 = vmatpush.bf16.msra.mxu0 %v3849
      %5858 = vmatpush.bf16.msra.mxu0 %v3842
      %5859 = vmatpush.bf16.msra.mxu0 %v3835
      %5860 = vmatpush.bf16.msra.mxu0 %v3828
      %5861 = vmatpush.bf16.msra.mxu0 %v3821
      %5862 = vmatmul.bf16.gmra.mxu0 %v749
      %v5863 = vpop.f32.mrf.mxu0
      %v5864 = vadd.f32 %v5851, %v5863
      %v5865 = vpop.f32.mrf.mxu0
      %5866 = vdwg.mxu0
      %5867 = vmatpush.bf16.msra.mxu0 %v3926
      %5868 = vmatpush.bf16.msra.mxu0 %v3919
      %5869 = vmatpush.bf16.msra.mxu0 %v3912
      %5870 = vmatpush.bf16.msra.mxu0 %v3905
      %5871 = vmatpush.bf16.msra.mxu0 %v3898
      %5872 = vmatpush.bf16.msra.mxu0 %v3891
      %5873 = vmatpush.bf16.msra.mxu0 %v3884
      %5874 = vmatpush.bf16.msra.mxu0 %v3877
      %5875 = vmatmul.bf16.gmra.mxu0 %v750
      %v5876 = vpop.f32.mrf.mxu0
      %v5877 = vadd.f32 %v5864, %v5876
      %v5878 = vpop.f32.mrf.mxu0
      %5879 = vdwg.mxu0
      %5880 = vmatpush.bf16.msra.mxu0 %v3982
      %5881 = vmatpush.bf16.msra.mxu0 %v3975
      %5882 = vmatpush.bf16.msra.mxu0 %v3968
      %5883 = vmatpush.bf16.msra.mxu0 %v3961
      %5884 = vmatpush.bf16.msra.mxu0 %v3954
      %5885 = vmatpush.bf16.msra.mxu0 %v3947
      %5886 = vmatpush.bf16.msra.mxu0 %v3940
      %5887 = vmatpush.bf16.msra.mxu0 %v3933
      %5888 = vmatmul.bf16.gmra.mxu0 %v751
      %v5889 = vpop.f32.mrf.mxu0
      %v5890 = vadd.f32 %v5877, %v5889
      %v5891 = vpop.f32.mrf.mxu0
      %5892 = vdwg.mxu0
      %5893 = vmatpush.bf16.msra.mxu0 %v4038
      %5894 = vmatpush.bf16.msra.mxu0 %v4031
      %5895 = vmatpush.bf16.msra.mxu0 %v4024
      %5896 = vmatpush.bf16.msra.mxu0 %v4017
      %5897 = vmatpush.bf16.msra.mxu0 %v4010
      %5898 = vmatpush.bf16.msra.mxu0 %v4003
      %5899 = vmatpush.bf16.msra.mxu0 %v3996
      %5900 = vmatpush.bf16.msra.mxu0 %v3989
      %5901 = vmatmul.bf16.gmra.mxu0 %v752
      %v5902 = vpop.f32.mrf.mxu0
      %v5903 = vadd.f32 %v5890, %v5902
      %v5904 = vpop.f32.mrf.mxu0
      %5905 = vdwg.mxu0
      %5906 = vmatpush.bf16.msra.mxu0 %v4094
      %5907 = vmatpush.bf16.msra.mxu0 %v4087
      %5908 = vmatpush.bf16.msra.mxu0 %v4080
      %5909 = vmatpush.bf16.msra.mxu0 %v4073
      %5910 = vmatpush.bf16.msra.mxu0 %v4066
      %5911 = vmatpush.bf16.msra.mxu0 %v4059
      %5912 = vmatpush.bf16.msra.mxu0 %v4052
      %5913 = vmatpush.bf16.msra.mxu0 %v4045
      %5914 = vmatmul.bf16.gmra.mxu0 %v753
      %v5915 = vpop.f32.mrf.mxu0
      %v5916 = vadd.f32 %v5903, %v5915
      %v5917 = vpop.f32.mrf.mxu0
      %5918 = vdwg.mxu0
      %5919 = vmatpush.bf16.msra.mxu0 %v4150
      %5920 = vmatpush.bf16.msra.mxu0 %v4143
      %5921 = vmatpush.bf16.msra.mxu0 %v4136
      %5922 = vmatpush.bf16.msra.mxu0 %v4129
      %5923 = vmatpush.bf16.msra.mxu0 %v4122
      %5924 = vmatpush.bf16.msra.mxu0 %v4115
      %5925 = vmatpush.bf16.msra.mxu0 %v4108
      %5926 = vmatpush.bf16.msra.mxu0 %v4101
      %5927 = vmatmul.bf16.gmra.mxu0 %v754
      %v5928 = vpop.f32.mrf.mxu0
      %v5929 = vadd.f32 %v5916, %v5928
      %v5930 = vpop.f32.mrf.mxu0
      %5931 = vdwg.mxu0
      %5932 = vmatpush.bf16.msra.mxu0 %v4206
      %5933 = vmatpush.bf16.msra.mxu0 %v4199
      %5934 = vmatpush.bf16.msra.mxu0 %v4192
      %5935 = vmatpush.bf16.msra.mxu0 %v4185
      %5936 = vmatpush.bf16.msra.mxu0 %v4178
      %5937 = vmatpush.bf16.msra.mxu0 %v4171
      %5938 = vmatpush.bf16.msra.mxu0 %v4164
      %5939 = vmatpush.bf16.msra.mxu0 %v4157
      %5940 = vmatmul.bf16.gmra.mxu0 %v755
      %v5941 = vpop.f32.mrf.mxu0
      %v5942 = vadd.f32 %v5929, %v5941
      %v5943 = vpop.f32.mrf.mxu0
      %5944 = vdwg.mxu0
      %5945 = vmatpush.bf16.msra.mxu0 %v4262
      %5946 = vmatpush.bf16.msra.mxu0 %v4255
      %5947 = vmatpush.bf16.msra.mxu0 %v4248
      %5948 = vmatpush.bf16.msra.mxu0 %v4241
      %5949 = vmatpush.bf16.msra.mxu0 %v4234
      %5950 = vmatpush.bf16.msra.mxu0 %v4227
      %5951 = vmatpush.bf16.msra.mxu0 %v4220
      %5952 = vmatpush.bf16.msra.mxu0 %v4213
      %5953 = vmatmul.bf16.gmra.mxu0 %v756
      %v5954 = vpop.f32.mrf.mxu0
      %v5955 = vadd.f32 %v5942, %v5954
      %v5956 = vpop.f32.mrf.mxu0
      %5957 = vdwg.mxu0
      %5958 = vmatpush.bf16.msra.mxu0 %v4318
      %5959 = vmatpush.bf16.msra.mxu0 %v4311
      %5960 = vmatpush.bf16.msra.mxu0 %v4304
      %5961 = vmatpush.bf16.msra.mxu0 %v4297
      %5962 = vmatpush.bf16.msra.mxu0 %v4290
      %5963 = vmatpush.bf16.msra.mxu0 %v4283
      %5964 = vmatpush.bf16.msra.mxu0 %v4276
      %5965 = vmatpush.bf16.msra.mxu0 %v4269
      %5966 = vmatmul.bf16.gmra.mxu0 %v757
      %v5967 = vpop.f32.mrf.mxu0
      %v5968 = vadd.f32 %v5955, %v5967
      %v5969 = vpop.f32.mrf.mxu0
      %5970 = vdwg.mxu0
      %5971 = vmatpush.bf16.msra.mxu0 %v4374
      %5972 = vmatpush.bf16.msra.mxu0 %v4367
      %5973 = vmatpush.bf16.msra.mxu0 %v4360
      %5974 = vmatpush.bf16.msra.mxu0 %v4353
      %5975 = vmatpush.bf16.msra.mxu0 %v4346
      %5976 = vmatpush.bf16.msra.mxu0 %v4339
      %5977 = vmatpush.bf16.msra.mxu0 %v4332
      %5978 = vmatpush.bf16.msra.mxu0 %v4325
      %5979 = vmatmul.bf16.gmra.mxu0 %v758
      %v5980 = vpop.f32.mrf.mxu0
      %v5981 = vadd.f32 %v5968, %v5980
      %v5982 = vpop.f32.mrf.mxu0
      %5983 = vdwg.mxu0
      %5984 = vmatpush.bf16.msra.mxu0 %v4430
      %5985 = vmatpush.bf16.msra.mxu0 %v4423
      %5986 = vmatpush.bf16.msra.mxu0 %v4416
      %5987 = vmatpush.bf16.msra.mxu0 %v4409
      %5988 = vmatpush.bf16.msra.mxu0 %v4402
      %5989 = vmatpush.bf16.msra.mxu0 %v4395
      %5990 = vmatpush.bf16.msra.mxu0 %v4388
      %5991 = vmatpush.bf16.msra.mxu0 %v4381
      %5992 = vmatmul.bf16.gmra.mxu0 %v759
      %v5993 = vpop.f32.mrf.mxu0
      %v5994 = vadd.f32 %v5981, %v5993
      %v5995 = vpop.f32.mrf.mxu0
      %5996 = vdwg.mxu0
      %5997 = vmatpush.bf16.msra.mxu0 0
      %5998 = vmatpush.bf16.msra.mxu0 0
      %5999 = vmatpush.bf16.msra.mxu0 0
      %6000 = vmatpush.bf16.msra.mxu0 0
      %6001 = vmatpush.bf16.msra.mxu0 %v4458
      %6002 = vmatpush.bf16.msra.mxu0 %v4451
      %6003 = vmatpush.bf16.msra.mxu0 %v4444
      %6004 = vmatpush.bf16.msra.mxu0 %v4437
      %6005 = vmatmul.bf16.gmra.mxu0 %v5163
      %v6006 = vpop.f32.mrf.mxu0
      %v6007 = vadd.f32 %v5994, %v6006
      %v6008 = vpop.f32.mrf.mxu0
      %6009 = vdwg.mxu0
      %6010 = vmatpush.bf16.msra.mxu0 %v3815
      %6011 = vmatpush.bf16.msra.mxu0 %v3808
      %6012 = vmatpush.bf16.msra.mxu0 %v3801
      %6013 = vmatpush.bf16.msra.mxu0 %v3794
      %6014 = vmatpush.bf16.msra.mxu0 %v3787
      %6015 = vmatpush.bf16.msra.mxu0 %v3780
      %6016 = vmatpush.bf16.msra.mxu0 %v3773
      %6017 = vmatpush.bf16.msra.mxu0 %v3766
      %6018 = vmatmul.bf16.gmra.mxu0 %v748
      %v6019 = vpop.f32.mrf.mxu0
      %v6020 = vadd.f32 0.0, %v6019
      %v6021 = vpop.f32.mrf.mxu0
      %6022 = vdwg.mxu0
      %6023 = vmatpush.bf16.msra.mxu0 %v3871
      %6024 = vmatpush.bf16.msra.mxu0 %v3864
      %6025 = vmatpush.bf16.msra.mxu0 %v3857
      %6026 = vmatpush.bf16.msra.mxu0 %v3850
      %6027 = vmatpush.bf16.msra.mxu0 %v3843
      %6028 = vmatpush.bf16.msra.mxu0 %v3836
      %6029 = vmatpush.bf16.msra.mxu0 %v3829
      %6030 = vmatpush.bf16.msra.mxu0 %v3822
      %6031 = vmatmul.bf16.gmra.mxu0 %v749
      %v6032 = vpop.f32.mrf.mxu0
      %v6033 = vadd.f32 %v6020, %v6032
      %v6034 = vpop.f32.mrf.mxu0
      %6035 = vdwg.mxu0
      %6036 = vmatpush.bf16.msra.mxu0 %v3927
      %6037 = vmatpush.bf16.msra.mxu0 %v3920
      %6038 = vmatpush.bf16.msra.mxu0 %v3913
      %6039 = vmatpush.bf16.msra.mxu0 %v3906
      %6040 = vmatpush.bf16.msra.mxu0 %v3899
      %6041 = vmatpush.bf16.msra.mxu0 %v3892
      %6042 = vmatpush.bf16.msra.mxu0 %v3885
      %6043 = vmatpush.bf16.msra.mxu0 %v3878
      %6044 = vmatmul.bf16.gmra.mxu0 %v750
      %v6045 = vpop.f32.mrf.mxu0
      %v6046 = vadd.f32 %v6033, %v6045
      %v6047 = vpop.f32.mrf.mxu0
      %6048 = vdwg.mxu0
      %6049 = vmatpush.bf16.msra.mxu0 %v3983
      %6050 = vmatpush.bf16.msra.mxu0 %v3976
      %6051 = vmatpush.bf16.msra.mxu0 %v3969
      %6052 = vmatpush.bf16.msra.mxu0 %v3962
      %6053 = vmatpush.bf16.msra.mxu0 %v3955
      %6054 = vmatpush.bf16.msra.mxu0 %v3948
      %6055 = vmatpush.bf16.msra.mxu0 %v3941
      %6056 = vmatpush.bf16.msra.mxu0 %v3934
      %6057 = vmatmul.bf16.gmra.mxu0 %v751
      %v6058 = vpop.f32.mrf.mxu0
      %v6059 = vadd.f32 %v6046, %v6058
      %v6060 = vpop.f32.mrf.mxu0
      %6061 = vdwg.mxu0
      %6062 = vmatpush.bf16.msra.mxu0 %v4039
      %6063 = vmatpush.bf16.msra.mxu0 %v4032
      %6064 = vmatpush.bf16.msra.mxu0 %v4025
      %6065 = vmatpush.bf16.msra.mxu0 %v4018
      %6066 = vmatpush.bf16.msra.mxu0 %v4011
      %6067 = vmatpush.bf16.msra.mxu0 %v4004
      %6068 = vmatpush.bf16.msra.mxu0 %v3997
      %6069 = vmatpush.bf16.msra.mxu0 %v3990
      %6070 = vmatmul.bf16.gmra.mxu0 %v752
      %v6071 = vpop.f32.mrf.mxu0
      %v6072 = vadd.f32 %v6059, %v6071
      %v6073 = vpop.f32.mrf.mxu0
      %6074 = vdwg.mxu0
      %6075 = vmatpush.bf16.msra.mxu0 %v4095
      %6076 = vmatpush.bf16.msra.mxu0 %v4088
      %6077 = vmatpush.bf16.msra.mxu0 %v4081
      %6078 = vmatpush.bf16.msra.mxu0 %v4074
      %6079 = vmatpush.bf16.msra.mxu0 %v4067
      %6080 = vmatpush.bf16.msra.mxu0 %v4060
      %6081 = vmatpush.bf16.msra.mxu0 %v4053
      %6082 = vmatpush.bf16.msra.mxu0 %v4046
      %6083 = vmatmul.bf16.gmra.mxu0 %v753
      %v6084 = vpop.f32.mrf.mxu0
      %v6085 = vadd.f32 %v6072, %v6084
      %v6086 = vpop.f32.mrf.mxu0
      %6087 = vdwg.mxu0
      %6088 = vmatpush.bf16.msra.mxu0 %v4151
      %6089 = vmatpush.bf16.msra.mxu0 %v4144
      %6090 = vmatpush.bf16.msra.mxu0 %v4137
      %6091 = vmatpush.bf16.msra.mxu0 %v4130
      %6092 = vmatpush.bf16.msra.mxu0 %v4123
      %6093 = vmatpush.bf16.msra.mxu0 %v4116
      %6094 = vmatpush.bf16.msra.mxu0 %v4109
      %6095 = vmatpush.bf16.msra.mxu0 %v4102
      %6096 = vmatmul.bf16.gmra.mxu0 %v754
      %v6097 = vpop.f32.mrf.mxu0
      %v6098 = vadd.f32 %v6085, %v6097
      %v6099 = vpop.f32.mrf.mxu0
      %6100 = vdwg.mxu0
      %6101 = vmatpush.bf16.msra.mxu0 %v4207
      %6102 = vmatpush.bf16.msra.mxu0 %v4200
      %6103 = vmatpush.bf16.msra.mxu0 %v4193
      %6104 = vmatpush.bf16.msra.mxu0 %v4186
      %6105 = vmatpush.bf16.msra.mxu0 %v4179
      %6106 = vmatpush.bf16.msra.mxu0 %v4172
      %6107 = vmatpush.bf16.msra.mxu0 %v4165
      %6108 = vmatpush.bf16.msra.mxu0 %v4158
      %6109 = vmatmul.bf16.gmra.mxu0 %v755
      %v6110 = vpop.f32.mrf.mxu0
      %v6111 = vadd.f32 %v6098, %v6110
      %v6112 = vpop.f32.mrf.mxu0
      %6113 = vdwg.mxu0
      %6114 = vmatpush.bf16.msra.mxu0 %v4263
      %6115 = vmatpush.bf16.msra.mxu0 %v4256
      %6116 = vmatpush.bf16.msra.mxu0 %v4249
      %6117 = vmatpush.bf16.msra.mxu0 %v4242
      %6118 = vmatpush.bf16.msra.mxu0 %v4235
      %6119 = vmatpush.bf16.msra.mxu0 %v4228
      %6120 = vmatpush.bf16.msra.mxu0 %v4221
      %6121 = vmatpush.bf16.msra.mxu0 %v4214
      %6122 = vmatmul.bf16.gmra.mxu0 %v756
      %v6123 = vpop.f32.mrf.mxu0
      %v6124 = vadd.f32 %v6111, %v6123
      %v6125 = vpop.f32.mrf.mxu0
      %6126 = vdwg.mxu0
      %6127 = vmatpush.bf16.msra.mxu0 %v4319
      %6128 = vmatpush.bf16.msra.mxu0 %v4312
      %6129 = vmatpush.bf16.msra.mxu0 %v4305
      %6130 = vmatpush.bf16.msra.mxu0 %v4298
      %6131 = vmatpush.bf16.msra.mxu0 %v4291
      %6132 = vmatpush.bf16.msra.mxu0 %v4284
      %6133 = vmatpush.bf16.msra.mxu0 %v4277
      %6134 = vmatpush.bf16.msra.mxu0 %v4270
      %6135 = vmatmul.bf16.gmra.mxu0 %v757
      %v6136 = vpop.f32.mrf.mxu0
      %v6137 = vadd.f32 %v6124, %v6136
      %v6138 = vpop.f32.mrf.mxu0
      %6139 = vdwg.mxu0
      %6140 = vmatpush.bf16.msra.mxu0 %v4375
      %6141 = vmatpush.bf16.msra.mxu0 %v4368
      %6142 = vmatpush.bf16.msra.mxu0 %v4361
      %6143 = vmatpush.bf16.msra.mxu0 %v4354
      %6144 = vmatpush.bf16.msra.mxu0 %v4347
      %6145 = vmatpush.bf16.msra.mxu0 %v4340
      %6146 = vmatpush.bf16.msra.mxu0 %v4333
      %6147 = vmatpush.bf16.msra.mxu0 %v4326
      %6148 = vmatmul.bf16.gmra.mxu0 %v758
      %v6149 = vpop.f32.mrf.mxu0
      %v6150 = vadd.f32 %v6137, %v6149
      %v6151 = vpop.f32.mrf.mxu0
      %6152 = vdwg.mxu0
      %6153 = vmatpush.bf16.msra.mxu0 %v4431
      %6154 = vmatpush.bf16.msra.mxu0 %v4424
      %6155 = vmatpush.bf16.msra.mxu0 %v4417
      %6156 = vmatpush.bf16.msra.mxu0 %v4410
      %6157 = vmatpush.bf16.msra.mxu0 %v4403
      %6158 = vmatpush.bf16.msra.mxu0 %v4396
      %6159 = vmatpush.bf16.msra.mxu0 %v4389
      %6160 = vmatpush.bf16.msra.mxu0 %v4382
      %6161 = vmatmul.bf16.gmra.mxu0 %v759
      %v6162 = vpop.f32.mrf.mxu0
      %v6163 = vadd.f32 %v6150, %v6162
      %v6164 = vpop.f32.mrf.mxu0
      %6165 = vdwg.mxu0
      %6166 = vmatpush.bf16.msra.mxu0 0
      %6167 = vmatpush.bf16.msra.mxu0 0
      %6168 = vmatpush.bf16.msra.mxu0 0
      %6169 = vmatpush.bf16.msra.mxu0 0
      %6170 = vmatpush.bf16.msra.mxu0 %v4459
      %6171 = vmatpush.bf16.msra.mxu0 %v4452
      %6172 = vmatpush.bf16.msra.mxu0 %v4445
      %6173 = vmatpush.bf16.msra.mxu0 %v4438
      %6174 = vmatmul.bf16.gmra.mxu0 %v5163
      %v6175 = vpop.f32.mrf.mxu0
      %v6176 = vadd.f32 %v6163, %v6175
      %v6177 = vpop.f32.mrf.mxu0
      %6178 = vdwg.mxu0
      %6179 = vmatpush.bf16.msra.mxu0 %v3816
      %6180 = vmatpush.bf16.msra.mxu0 %v3809
      %6181 = vmatpush.bf16.msra.mxu0 %v3802
      %6182 = vmatpush.bf16.msra.mxu0 %v3795
      %6183 = vmatpush.bf16.msra.mxu0 %v3788
      %6184 = vmatpush.bf16.msra.mxu0 %v3781
      %6185 = vmatpush.bf16.msra.mxu0 %v3774
      %6186 = vmatpush.bf16.msra.mxu0 %v3767
      %6187 = vmatmul.bf16.gmra.mxu0 %v748
      %v6188 = vpop.f32.mrf.mxu0
      %v6189 = vadd.f32 0.0, %v6188
      %v6190 = vpop.f32.mrf.mxu0
      %6191 = vdwg.mxu0
      %6192 = vmatpush.bf16.msra.mxu0 %v3872
      %6193 = vmatpush.bf16.msra.mxu0 %v3865
      %6194 = vmatpush.bf16.msra.mxu0 %v3858
      %6195 = vmatpush.bf16.msra.mxu0 %v3851
      %6196 = vmatpush.bf16.msra.mxu0 %v3844
      %6197 = vmatpush.bf16.msra.mxu0 %v3837
      %6198 = vmatpush.bf16.msra.mxu0 %v3830
      %6199 = vmatpush.bf16.msra.mxu0 %v3823
      %6200 = vmatmul.bf16.gmra.mxu0 %v749
      %v6201 = vpop.f32.mrf.mxu0
      %v6202 = vadd.f32 %v6189, %v6201
      %v6203 = vpop.f32.mrf.mxu0
      %6204 = vdwg.mxu0
      %6205 = vmatpush.bf16.msra.mxu0 %v3928
      %6206 = vmatpush.bf16.msra.mxu0 %v3921
      %6207 = vmatpush.bf16.msra.mxu0 %v3914
      %6208 = vmatpush.bf16.msra.mxu0 %v3907
      %6209 = vmatpush.bf16.msra.mxu0 %v3900
      %6210 = vmatpush.bf16.msra.mxu0 %v3893
      %6211 = vmatpush.bf16.msra.mxu0 %v3886
      %6212 = vmatpush.bf16.msra.mxu0 %v3879
      %6213 = vmatmul.bf16.gmra.mxu0 %v750
      %v6214 = vpop.f32.mrf.mxu0
      %v6215 = vadd.f32 %v6202, %v6214
      %v6216 = vpop.f32.mrf.mxu0
      %6217 = vdwg.mxu0
      %6218 = vmatpush.bf16.msra.mxu0 %v3984
      %6219 = vmatpush.bf16.msra.mxu0 %v3977
      %6220 = vmatpush.bf16.msra.mxu0 %v3970
      %6221 = vmatpush.bf16.msra.mxu0 %v3963
      %6222 = vmatpush.bf16.msra.mxu0 %v3956
      %6223 = vmatpush.bf16.msra.mxu0 %v3949
      %6224 = vmatpush.bf16.msra.mxu0 %v3942
      %6225 = vmatpush.bf16.msra.mxu0 %v3935
      %6226 = vmatmul.bf16.gmra.mxu0 %v751
      %v6227 = vpop.f32.mrf.mxu0
      %v6228 = vadd.f32 %v6215, %v6227
      %v6229 = vpop.f32.mrf.mxu0
      %6230 = vdwg.mxu0
      %6231 = vmatpush.bf16.msra.mxu0 %v4040
      %6232 = vmatpush.bf16.msra.mxu0 %v4033
      %6233 = vmatpush.bf16.msra.mxu0 %v4026
      %6234 = vmatpush.bf16.msra.mxu0 %v4019
      %6235 = vmatpush.bf16.msra.mxu0 %v4012
      %6236 = vmatpush.bf16.msra.mxu0 %v4005
      %6237 = vmatpush.bf16.msra.mxu0 %v3998
      %6238 = vmatpush.bf16.msra.mxu0 %v3991
      %6239 = vmatmul.bf16.gmra.mxu0 %v752
      %v6240 = vpop.f32.mrf.mxu0
      %v6241 = vadd.f32 %v6228, %v6240
      %v6242 = vpop.f32.mrf.mxu0
      %6243 = vdwg.mxu0
      %6244 = vmatpush.bf16.msra.mxu0 %v4096
      %6245 = vmatpush.bf16.msra.mxu0 %v4089
      %6246 = vmatpush.bf16.msra.mxu0 %v4082
      %6247 = vmatpush.bf16.msra.mxu0 %v4075
      %6248 = vmatpush.bf16.msra.mxu0 %v4068
      %6249 = vmatpush.bf16.msra.mxu0 %v4061
      %6250 = vmatpush.bf16.msra.mxu0 %v4054
      %6251 = vmatpush.bf16.msra.mxu0 %v4047
      %6252 = vmatmul.bf16.gmra.mxu0 %v753
      %v6253 = vpop.f32.mrf.mxu0
      %v6254 = vadd.f32 %v6241, %v6253
      %v6255 = vpop.f32.mrf.mxu0
      %6256 = vdwg.mxu0
      %6257 = vmatpush.bf16.msra.mxu0 %v4152
      %6258 = vmatpush.bf16.msra.mxu0 %v4145
      %6259 = vmatpush.bf16.msra.mxu0 %v4138
      %6260 = vmatpush.bf16.msra.mxu0 %v4131
      %6261 = vmatpush.bf16.msra.mxu0 %v4124
      %6262 = vmatpush.bf16.msra.mxu0 %v4117
      %6263 = vmatpush.bf16.msra.mxu0 %v4110
      %6264 = vmatpush.bf16.msra.mxu0 %v4103
      %6265 = vmatmul.bf16.gmra.mxu0 %v754
      %v6266 = vpop.f32.mrf.mxu0
      %v6267 = vadd.f32 %v6254, %v6266
      %v6268 = vpop.f32.mrf.mxu0
      %6269 = vdwg.mxu0
      %6270 = vmatpush.bf16.msra.mxu0 %v4208
      %6271 = vmatpush.bf16.msra.mxu0 %v4201
      %6272 = vmatpush.bf16.msra.mxu0 %v4194
      %6273 = vmatpush.bf16.msra.mxu0 %v4187
      %6274 = vmatpush.bf16.msra.mxu0 %v4180
      %6275 = vmatpush.bf16.msra.mxu0 %v4173
      %6276 = vmatpush.bf16.msra.mxu0 %v4166
      %6277 = vmatpush.bf16.msra.mxu0 %v4159
      %6278 = vmatmul.bf16.gmra.mxu0 %v755
      %v6279 = vpop.f32.mrf.mxu0
      %v6280 = vadd.f32 %v6267, %v6279
      %v6281 = vpop.f32.mrf.mxu0
      %6282 = vdwg.mxu0
      %6283 = vmatpush.bf16.msra.mxu0 %v4264
      %6284 = vmatpush.bf16.msra.mxu0 %v4257
      %6285 = vmatpush.bf16.msra.mxu0 %v4250
      %6286 = vmatpush.bf16.msra.mxu0 %v4243
      %6287 = vmatpush.bf16.msra.mxu0 %v4236
      %6288 = vmatpush.bf16.msra.mxu0 %v4229
      %6289 = vmatpush.bf16.msra.mxu0 %v4222
      %6290 = vmatpush.bf16.msra.mxu0 %v4215
      %6291 = vmatmul.bf16.gmra.mxu0 %v756
      %v6292 = vpop.f32.mrf.mxu0
      %v6293 = vadd.f32 %v6280, %v6292
      %v6294 = vpop.f32.mrf.mxu0
      %6295 = vdwg.mxu0
      %6296 = vmatpush.bf16.msra.mxu0 %v4320
      %6297 = vmatpush.bf16.msra.mxu0 %v4313
      %6298 = vmatpush.bf16.msra.mxu0 %v4306
      %6299 = vmatpush.bf16.msra.mxu0 %v4299
      %6300 = vmatpush.bf16.msra.mxu0 %v4292
      %6301 = vmatpush.bf16.msra.mxu0 %v4285
      %6302 = vmatpush.bf16.msra.mxu0 %v4278
      %6303 = vmatpush.bf16.msra.mxu0 %v4271
      %6304 = vmatmul.bf16.gmra.mxu0 %v757
      %v6305 = vpop.f32.mrf.mxu0
      %v6306 = vadd.f32 %v6293, %v6305
      %v6307 = vpop.f32.mrf.mxu0
      %6308 = vdwg.mxu0
      %6309 = vmatpush.bf16.msra.mxu0 %v4376
      %6310 = vmatpush.bf16.msra.mxu0 %v4369
      %6311 = vmatpush.bf16.msra.mxu0 %v4362
      %6312 = vmatpush.bf16.msra.mxu0 %v4355
      %6313 = vmatpush.bf16.msra.mxu0 %v4348
      %6314 = vmatpush.bf16.msra.mxu0 %v4341
      %6315 = vmatpush.bf16.msra.mxu0 %v4334
      %6316 = vmatpush.bf16.msra.mxu0 %v4327
      %6317 = vmatmul.bf16.gmra.mxu0 %v758
      %v6318 = vpop.f32.mrf.mxu0
      %v6319 = vadd.f32 %v6306, %v6318
      %v6320 = vpop.f32.mrf.mxu0
      %6321 = vdwg.mxu0
      %6322 = vmatpush.bf16.msra.mxu0 %v4432
      %6323 = vmatpush.bf16.msra.mxu0 %v4425
      %6324 = vmatpush.bf16.msra.mxu0 %v4418
      %6325 = vmatpush.bf16.msra.mxu0 %v4411
      %6326 = vmatpush.bf16.msra.mxu0 %v4404
      %6327 = vmatpush.bf16.msra.mxu0 %v4397
      %6328 = vmatpush.bf16.msra.mxu0 %v4390
      %6329 = vmatpush.bf16.msra.mxu0 %v4383
      %6330 = vmatmul.bf16.gmra.mxu0 %v759
      %v6331 = vpop.f32.mrf.mxu0
      %v6332 = vadd.f32 %v6319, %v6331
      %v6333 = vpop.f32.mrf.mxu0
      %6334 = vdwg.mxu0
      %6335 = vmatpush.bf16.msra.mxu0 0
      %6336 = vmatpush.bf16.msra.mxu0 0
      %6337 = vmatpush.bf16.msra.mxu0 0
      %6338 = vmatpush.bf16.msra.mxu0 0
      %6339 = vmatpush.bf16.msra.mxu0 %v4460
      %6340 = vmatpush.bf16.msra.mxu0 %v4453
      %6341 = vmatpush.bf16.msra.mxu0 %v4446
      %6342 = vmatpush.bf16.msra.mxu0 %v4439
      %6343 = vmatmul.bf16.gmra.mxu0 %v5163
      %v6344 = vpop.f32.mrf.mxu0
      %v6345 = vadd.f32 %v6332, %v6344
      %v6346 = vpop.f32.mrf.mxu0
      %6347 = vdwg.mxu0
      %v6348 = vld [vmem:[%s303] sm:$0x7f]
      %v6350 = vperm.slane %v6348, 0
      %v6351 = vperm.slane %v6348, 1
      %v6352 = vperm.slane %v6348, 2
      %v6353 = vperm.slane %v6348, 3
      %v6354 = vperm.slane %v6348, 4
      %v6355 = vperm.slane %v6348, 5
      %v6356 = vperm.slane %v6348, 6
      %v6364 = vmul.f32 %v5331, %v6350
      %v6365 = vmul.f32 %v5500, %v6351
      %v6366 = vmul.f32 %v5669, %v6352
      %v6367 = vmul.f32 %v5838, %v6353
      %v6368 = vmul.f32 %v6007, %v6354
      %v6369 = vmul.f32 %v6176, %v6355
      %v6370 = vmul.f32 %v6345, %v6356
      %v6371 = vld [vmem:[%s307] sm:$0x7f]
      %v6373 = vperm.slane %v6371, 0
      %v6374 = vperm.slane %v6371, 1
      %v6375 = vperm.slane %v6371, 2
      %v6376 = vperm.slane %v6371, 3
      %v6377 = vperm.slane %v6371, 4
      %v6378 = vperm.slane %v6371, 5
      %v6379 = vperm.slane %v6371, 6
      %v6387 = vadd.f32 %v6364, %v6373
      %v6388 = vadd.f32 %v6365, %v6374
      %v6389 = vadd.f32 %v6366, %v6375
      %v6390 = vadd.f32 %v6367, %v6376
      %v6391 = vadd.f32 %v6368, %v6377
      %v6392 = vadd.f32 %v6369, %v6378
      %v6393 = vadd.f32 %v6370, %v6379
      %v6394 = vmax.f32 %v6387, 0.0
      %v6395 = vmax.f32 %v6388, 0.0
      %v6396 = vmax.f32 %v6389, 0.0
      %v6397 = vmax.f32 %v6390, 0.0
      %v6398 = vmax.f32 %v6391, 0.0
      %v6399 = vmax.f32 %v6392, 0.0
      %v6400 = vmax.f32 %v6393, 0.0
      %v6408 = vrot.slane %v6395, 6
      %v6409 = vrot.slane %v6396, 4
      %v6410 = vrot.slane %v6397, 2
      %v6411 = vrot.slane %v6399, 6
      %v6412 = vrot.slane %v6400, 4
      %vm6413 = vcmask 1041408
      %v6414 = vsel %vm6413, %v6394, %v6408
      %vm6415 = vcmask 1045508
      %v6416 = vsel %vm6415, %v6409, %v6410
      %vm6417 = vcmask 1043456
      %v6418 = vsel %vm6417, %v6414, %v6416
      %v6419 = vsel %vm6413, %v6398, %v6411
      %v6420 = vsel %vm6417, %v6419, %v6412
      %6423 = vst [vmem:[%s312] sm:$0xff] %v6418
      %vm6424 = vcmask 1043458
      %vm6425 = vmor %vm6424, %vm6413
      %vm6426 = vcmask 259076
      %vm6427 = vmor %vm6426, %vm6425
      %6428 = vst.msk [vmem:[%s312 + $0x8] sm:$0x3f] %vm6427, %v6420
      %p6429 = scmp.lt.s32.totalorder %s18, 1
      %s6430 = scalar_select %p6429, %s18, 1
      %s6431 = smul.addr %s6430, 7
      %s6432 = smul.addr %s6431, 2
      %s6433 = scalar_lea.vmem %s7, %s6432
      // Predicated region
      $region49: #{decoder_forward.2} parent=47 // pred_check
        %p6434 = pneg %p198
      $region50: #{decoder_forward.2} parent=47 // pred_check_branch
        %6436 = sbr.rel (%p6434) target = $region52
      $region51: #{decoder_forward.2} parent=47 // pred_region
        _
      $region52: #{decoder_forward.2} parent=47 // pred_fallthru
        _
    $region48: #{decoder_forward.2} parent=5 // pred_fallthru
      _
    %p6437 = scmp.le.s32.totalorder 2, %s13
    // Predicated region
    $region53: #{decoder_forward.2} parent=5 // pred_check
      %p6438 = pneg %p6437
    $region54: #{decoder_forward.2} parent=5 // pred_check_branch
      %6440 = sbr.rel (%p6438) target = $region56
    $region55: #{decoder_forward.2} parent=5 // pred_region
      %s6441 = ssub.s32 %s13, 2
      // Predicated region
      $region57: #{decoder_forward.2} parent=55 // pred_check
        %p6442 = pneg %p204
      $region58: #{decoder_forward.2} parent=55 // pred_check_branch
        %6444 = sbr.rel (%p6442) target = $region60
      $region59: #{decoder_forward.2} parent=55 // pred_region
        %p6445 = scmp.lt.s32.totalorder %s19, 1
        %s6446 = scalar_select %p6445, %s19, 1
        %s6447 = smul.addr %s6446, 7
        %s6448 = smul.addr %s6447, 2
        %s6449 = scalar_lea.vmem %s7, %s6448
      $region60: #{decoder_forward.2} parent=55 // pred_fallthru
        _
    $region56: #{decoder_forward.2} parent=5 // pred_fallthru
      _
  $region6: #{decoder_forward.2} parent=0 // loop_footer
    %s17 = sadd.s32 1, %s13
  $region7: #{decoder_forward.2} parent=0 // loop_footer_branch
    %12 = sbr.rel target = $region3
  $region8: #{decoder_forward.2} parent=0 // loop_exit
    _

</llo_original>
